<compile_context>
chip_gen: v7x
topology: tpu7x:2x2x1
jax: 0.10.0
libtpu: 0.0.40
codegen_flags: <defaults>
</compile_context>

<pallas_src>
import functools
import math

import numpy as np
import jax
import jax.numpy as jnp
from jax.experimental import pallas as pl
from jax.experimental.pallas import tpu as pltpu

HIDDEN = 256
CONV_CH = 32
KSIZE = 3
STRIDE = 2
PAD = 1
GROUP_W = 3          # output columns handled per banded group matmul


def _conv_out(n):
    return (n + 2 * PAD - KSIZE) // STRIDE + 1


# ----------------------------------------------------------------------------
# One-time weight packing (runs once, host side; no per-call XLA glue)
# ----------------------------------------------------------------------------
def prepare_params(params, num_inputs, spatial, group_width=GROUP_W):
    """Pack weights into the fused-kernel operand layout.

    In-kernel activation layout (per batch element): X[y, x*C + c]  (2-D).
    A 3x3 / stride-2 / pad-1 conv becomes
        A   = Rstack @ X                    (one exact 0/1 row-select matmul,
                                             rows ordered (ky, oy))
        y_g = [A_ky[:, c0*Cin:c1*Cin]]_ky  @  Wg       per output-column group
        X'  = ELU( concat_g(y_g) + bias_row )
    where Wg only contains the (banded) weight rows a group can touch, so the
    ~85% structural zeros of the full Kronecker matrix are never stored.
    """
    sizes = [spatial]
    for _ in range(4):
        sizes.append(_conv_out(sizes[-1]))              # [42, 21, 11, 6, 3]
    chans = [num_inputs] + [CONV_CH] * 4

    conv_packed = []
    for layer, (w, b) in enumerate(params["convs"]):
        hin, hout = sizes[layer], sizes[layer + 1]
        win, wout = hin, hout
        cin, cout = chans[layer], chans[layer + 1]
        w_np = np.asarray(w, np.float32)                # (cout, cin, 3, 3)

        # Row (ky) selectors, stacked along rows: (3*hout, hin).  Exact in bf16.
        r_stack = np.zeros((KSIZE * hout, hin), np.float32)
        for ky in range(KSIZE):
            for oy in range(hout):
                h = STRIDE * oy + ky - PAD
                if 0 <= h < hin:
                    r_stack[ky * hout + oy, h] = 1.0

        # Full banded matrices per ky (host side only) — same construction
        # that validated in v1 — then slice out the compact per-group blocks.
        bmats = np.zeros((KSIZE, win * cin, wout * cout), np.float32)
        for ky in range(KSIZE):
            for kx in range(KSIZE):
                csel = np.zeros((win, wout), np.float32)
                for ox in range(wout):
                    wcol = STRIDE * ox + kx - PAD
                    if 0 <= wcol < win:
                        csel[wcol, ox] = 1.0
                bmats[ky] += np.kron(csel, w_np[:, :, ky, kx].T)

        groups, gweights = [], []
        for o0 in range(0, wout, group_width):
            o1 = min(o0 + group_width, wout)
            c0 = max(0, STRIDE * o0 - PAD)              # first input col touched
            c1 = min(win, STRIDE * o1)                  # one past last col touched
            gw = np.concatenate(
                [bmats[ky][c0 * cin:c1 * cin, o0 * cout:o1 * cout]
                 for ky in range(KSIZE)], axis=0)       # (3*(c1-c0)*cin, (o1-o0)*cout)
            groups.append((c0, c1))
            gweights.append(jnp.asarray(gw, jnp.bfloat16))

        bias_row = np.tile(np.asarray(b, np.float32), wout).reshape(1, wout * cout)
        conv_packed.append({
            "r": jnp.asarray(r_stack, jnp.bfloat16),
            "gw": gweights,
            "bias": jnp.asarray(bias_row, jnp.float32),
            "groups": groups,
        })

    # Flatten (NCHW view(-1, 288)) + W_ih + W_hh packed into ONE (544, 1024)
    # lane-dense bf16 matrix; biases pre-summed in f32.
    hl, cl = sizes[4], CONV_CH                          # 3, 32
    w_ih = np.asarray(params["lstm_w_ih"], np.float32)  # (1024, 288)
    w_ih_r = w_ih.reshape(4 * HIDDEN, cl, hl, hl)       # [gate, c, y, x]
    wih_rows = np.concatenate(
        [np.transpose(w_ih_r[:, :, y, :], (2, 1, 0)).reshape(hl * cl, 4 * HIDDEN)
         for y in range(hl)], axis=0)                   # rows ordered (y, x, c)
    whh_t = np.asarray(params["lstm_w_hh"], np.float32).T          # (256, 1024)
    lstm_w = jnp.asarray(np.concatenate([wih_rows, whh_t], axis=0), jnp.bfloat16)
    lstm_b = jnp.asarray(
        (np.asarray(params["lstm_b_ih"], np.float32)
         + np.asarray(params["lstm_b_hh"], np.float32)).reshape(1, 4 * HIDDEN),
        jnp.float32)

    # Critic + actor packed into one lane-dense (256, 128) head.
    num_actions = int(params["actor_w"].shape[0])
    head_cols = 1 + num_actions
    head_pad = max(128, -(-head_cols // 128) * 128)
    head_w = np.zeros((HIDDEN, head_pad), np.float32)
    head_w[:, 0:1] = np.asarray(params["critic_w"], np.float32).T
    head_w[:, 1:1 + num_actions] = np.asarray(params["actor_w"], np.float32).T
    head_b = np.zeros((1, head_pad), np.float32)
    head_b[0, 0] = float(np.asarray(params["critic_b"])[0])
    head_b[0, 1:1 + num_actions] = np.asarray(params["actor_b"], np.float32)

    return {
        "conv_packed": conv_packed,
        "lstm_w": lstm_w, "lstm_b": lstm_b,
        "head_w": jnp.asarray(head_w, jnp.bfloat16),
        "head_b": jnp.asarray(head_b, jnp.float32),
        "num_actions": num_actions,
        "sizes": sizes, "chans": chans,
    }


# ----------------------------------------------------------------------------
# Fused kernel: convs + flatten + LSTMCell + heads  (one grid step = one batch
# element; weights are shared across steps via constant index_maps)
# ----------------------------------------------------------------------------
def make_kernel(groups_per_layer):
    def kernel(*refs):
        it = iter(refs)
        x_ref = next(it)
        conv_args = []
        for groups in groups_per_layer:
            r_ref = next(it)
            g_refs = [next(it) for _ in groups]
            b_ref = next(it)
            conv_args.append((r_ref, g_refs, b_ref))
        lstm_w_ref = next(it)
        lstm_b_ref = next(it)
        hx_ref = next(it)
        cx_ref = next(it)
        head_w_ref = next(it)
        head_b_ref = next(it)
        heads_out = next(it)
        hx_out = next(it)
        cx_out = next(it)

        x = x_ref[0]                                     # (Hin, Win*Cin) bf16
        for (r_ref, g_refs, b_ref), groups in zip(conv_args, groups_per_layer):
            hout = r_ref.shape[0] // KSIZE
            win = r_ref.shape[1]
            cin = x.shape[1] // win
            # One exact 0/1 row-selection matmul for all three ky taps.
            a_all = jnp.dot(r_ref[...], x,
                            preferred_element_type=jnp.float32).astype(jnp.bfloat16)
            a = [a_all[ky * hout:(ky + 1) * hout, :] for ky in range(KSIZE)]
            outs = []
            for g_ref, (c0, c1) in zip(g_refs, groups):
                # K-concat of the three ky taps -> single banded group matmul.
                lhs = jnp.concatenate(
                    [ak[:, c0 * cin:c1 * cin] for ak in a], axis=1)
                outs.append(jnp.dot(lhs, g_ref[...],
                                    preferred_element_type=jnp.float32))
            y = (jnp.concatenate(outs, axis=1) if len(outs) > 1 else outs[0])
            y = y + b_ref[...]
            # ELU(alpha=1) in f32 (v5e-safe); clamp exp arg of the dead branch.
            y = jnp.where(y > 0.0, y, jnp.exp(jnp.minimum(y, 0.0)) - 1.0)
            x = y.astype(jnp.bfloat16)

        # Flatten (3, 96) -> (1, 288); NCHW ordering is folded into lstm_w.
        xrow = jnp.concatenate(
            [x[yy:yy + 1, :] for yy in range(x.shape[0])], axis=1)
        hx_b = hx_ref[0].astype(jnp.bfloat16)            # (1, 256)
        lstm_in = jnp.concatenate([xrow, hx_b], axis=1)  # (1, 544)
        gates = (jnp.dot(lstm_in, lstm_w_ref[...],
                         preferred_element_type=jnp.float32)
                 + lstm_b_ref[...])                      # (1, 1024) f32

        H = HIDDEN
        i = jax.nn.sigmoid(gates[:, 0 * H:1 * H])
        f = jax.nn.sigmoid(gates[:, 1 * H:2 * H])
        g = jnp.tanh(gates[:, 2 * H:3 * H])
        o = jax.nn.sigmoid(gates[:, 3 * H:4 * H])

        cx_new = f * cx_ref[0] + i * g
        hx_new = o * jnp.tanh(cx_new)

        cx_out[0] = cx_new
        hx_out[0] = hx_new
        # Both heads as one lane-dense (1, 128) matmul + unmasked store.
        heads_out[0] = (jnp.dot(hx_new.astype(jnp.bfloat16), head_w_ref[...],
                                preferred_element_type=jnp.float32)
                        + head_b_ref[...])
    return kernel


def _cost_estimate(prep, batch, in_arrays, head_pad):
    sizes, chans = prep["sizes"], prep["chans"]
    flops = 0
    for l, cp in enumerate(prep["conv_packed"]):
        hin, hout = sizes[l], sizes[l + 1]
        lanes_in = sizes[l] * chans[l]
        flops += 2 * (KSIZE * hout) * hin * lanes_in          # row-select matmul
        for gw in cp["gw"]:
            flops += 2 * hout * gw.shape[0] * gw.shape[1]     # group matmuls
    flops += 2 * prep["lstm_w"].shape[0] * prep["lstm_w"].shape[1]
    flops += 2 * HIDDEN * head_pad
    trans = sum(sizes[l + 1] ** 2 * chans[l + 1] for l in range(4)) + 5 * HIDDEN
    bytes_accessed = sum(int(np.prod(a.shape)) * a.dtype.itemsize
                         for a in in_arrays)
    bytes_accessed += batch * (head_pad + 2 * HIDDEN) * 4
    return pl.CostEstimate(flops=int(batch * flops),
                           transcendentals=int(batch * trans),
                           bytes_accessed=int(bytes_accessed))


def actor_critic_forward(prep, inputs_nchw, hx, cx):
    B, C, Hs, Ws = inputs_nchw.shape
    # Only per-call layout work: NCHW -> (b, y, x*c) lane-dense rows, bf16.
    x0 = jnp.transpose(inputs_nchw, (0, 2, 3, 1)).reshape(B, Hs, Ws * C)
    x0 = x0.astype(jnp.bfloat16)
    hx3 = hx.reshape(B, 1, HIDDEN).astype(jnp.float32)
    cx3 = cx.reshape(B, 1, HIDDEN).astype(jnp.float32)

    args, in_specs = [], []

    def add_const(a):
        args.append(a)
        in_specs.append(pl.BlockSpec(a.shape, lambda b, n=a.ndim: (0,) * n))

    def add_batched(a):
        args.append(a)
        in_specs.append(pl.BlockSpec(
            (1,) + a.shape[1:], lambda b, n=a.ndim: (b,) + (0,) * (n - 1)))

    add_batched(x0)
    groups_per_layer = []
    for cp in prep["conv_packed"]:
        add_const(cp["r"])
        for gw in cp["gw"]:
            add_const(gw)
        add_const(cp["bias"])
        groups_per_layer.append(cp["groups"])
    add_const(prep["lstm_w"])
    add_const(prep["lstm_b"])
    add_batched(hx3)
    add_batched(cx3)
    add_const(prep["head_w"])
    add_const(prep["head_b"])

    head_pad = prep["head_w"].shape[1]
    out_shape = (
        jax.ShapeDtypeStruct((B, 1, head_pad), jnp.float32),   # packed heads
        jax.ShapeDtypeStruct((B, 1, HIDDEN), jnp.float32),     # hx'
        jax.ShapeDtypeStruct((B, 1, HIDDEN), jnp.float32),     # cx'
    )
    out_specs = (
        pl.BlockSpec((1, 1, head_pad), lambda b: (b, 0, 0)),
        pl.BlockSpec((1, 1, HIDDEN), lambda b: (b, 0, 0)),
        pl.BlockSpec((1, 1, HIDDEN), lambda b: (b, 0, 0)),
    )

    heads, hx_new, cx_new = pl.pallas_call(
        make_kernel(groups_per_layer),
        grid=(B,),
        out_shape=out_shape,
        in_specs=in_specs,
        out_specs=out_specs,
        compiler_params=pltpu.CompilerParams(
            dimension_semantics=("parallel",)),
        cost_estimate=_cost_estimate(prep, B, args, head_pad),
    )(*args)

    A = prep["num_actions"]
    heads = heads.reshape(B, head_pad)
    critic = heads[:, 0:1]
    actor = heads[:, 1:1 + A]
    return critic, actor, (hx_new.reshape(B, HIDDEN), cx_new.reshape(B, HIDDEN))


# ----------------------------------------------------------------------------
# Pure-JAX f32 reference (same math as the PyTorch module) for correctness
# ----------------------------------------------------------------------------
def reference_forward(params, inputs_nchw, hx, cx):
    hi = jax.lax.Precision.HIGHEST
    x = inputs_nchw
    for w, b in params["convs"]:
        x = jax.lax.conv_general_dilated(
            x, w, window_strides=(STRIDE, STRIDE),
            padding=((PAD, PAD), (PAD, PAD)),
            dimension_numbers=("NCHW", "OIHW", "NCHW"), precision=hi)
        x = x + b.reshape(1, -1, 1, 1)
        x = jnp.where(x > 0, x, jnp.exp(jnp.minimum(x, 0.0)) - 1.0)
    B = x.shape[0]
    x_flat = x.reshape(B, -1)                        # NCHW flatten = view(-1, 288)
    gates = (jnp.dot(x_flat, params["lstm_w_ih"].T, precision=hi)
             + params["lstm_b_ih"]
             + jnp.dot(hx, params["lstm_w_hh"].T, precision=hi)
             + params["lstm_b_hh"])
    H = HIDDEN
    i = jax.nn.sigmoid(gates[:, 0 * H:1 * H])
    f = jax.nn.sigmoid(gates[:, 1 * H:2 * H])
    g = jnp.tanh(gates[:, 2 * H:3 * H])
    o = jax.nn.sigmoid(gates[:, 3 * H:4 * H])
    cx_new = f * cx + i * g
    hx_new = o * jnp.tanh(cx_new)
    critic = jnp.dot(hx_new, params["critic_w"].T, precision=hi) + params["critic_b"]
    actor = jnp.dot(hx_new, params["actor_w"].T, precision=hi) + params["actor_b"]
    return critic, actor, (hx_new, cx_new)


# ----------------------------------------------------------------------------
# Deterministic parameter init (mirrors weights_init / normalized_columns)
# ----------------------------------------------------------------------------
def normalized_columns_init(key, shape, std):
    out = jax.random.normal(key, shape, dtype=jnp.float32)
    out = out * (std / jnp.sqrt(jnp.sum(out * out, axis=1, keepdims=True)))
    return out


def init_params(key, num_inputs, num_actions):
    keys = jax.random.split(key, 10)

    def conv_init(k, out_c, in_c):
        fan_in = in_c * 3 * 3
        fan_out = 3 * 3 * out_c
        bound = math.sqrt(6.0 / (fan_in + fan_out))
        w = jax.random.uniform(k, (out_c, in_c, 3, 3), jnp.float32, -bound, bound)
        b = jnp.zeros((out_c,), jnp.float32)
        return w, b

    convs = [
        conv_init(keys[0], CONV_CH, num_inputs),
        conv_init(keys[1], CONV_CH, CONV_CH),
        conv_init(keys[2], CONV_CH, CONV_CH),
        conv_init(keys[3], CONV_CH, CONV_CH),
    ]

    flat = CONV_CH * 3 * 3
    k_lstm = 1.0 / math.sqrt(HIDDEN)
    lstm_w_ih = jax.random.uniform(keys[4], (4 * HIDDEN, flat), jnp.float32, -k_lstm, k_lstm)
    lstm_w_hh = jax.random.uniform(keys[5], (4 * HIDDEN, HIDDEN), jnp.float32, -k_lstm, k_lstm)
    lstm_b_ih = jnp.zeros((4 * HIDDEN,), jnp.float32)
    lstm_b_hh = jnp.zeros((4 * HIDDEN,), jnp.float32)

    critic_w = normalized_columns_init(keys[6], (1, HIDDEN), 1.0)
    critic_b = jnp.zeros((1,), jnp.float32)
    actor_w = normalized_columns_init(keys[7], (num_actions, HIDDEN), 0.01)
    actor_b = jnp.zeros((num_actions,), jnp.float32)

    return {
        "convs": convs,
        "lstm_w_ih": lstm_w_ih, "lstm_w_hh": lstm_w_hh,
        "lstm_b_ih": lstm_b_ih, "lstm_b_hh": lstm_b_hh,
        "critic_w": critic_w, "critic_b": critic_b,
        "actor_w": actor_w, "actor_b": actor_b,
    }


if __name__ == "__main__":
    key = jax.random.PRNGKey(0)
    k_param, k_x, k_h, k_c = jax.random.split(key, 4)

    batch = 2
    num_inputs = 4          # input channels
    num_actions = 6         # action_space.n
    spatial = 42            # 42 -> 21 -> 11 -> 6 -> 3  => flatten = 32*3*3 = 288

    params = init_params(k_param, num_inputs, num_actions)
    prep = prepare_params(params, num_inputs, spatial)   # one-time packing

    x = jax.random.normal(k_x, (batch, num_inputs, spatial, spatial), jnp.float32)
    hx = jax.random.normal(k_h, (batch, HIDDEN), jnp.float32) * 0.1
    cx = jax.random.normal(k_c, (batch, HIDDEN), jnp.float32) * 0.1

    fwd = jax.jit(functools.partial(actor_critic_forward, prep))
    critic, actor, (hx_new, cx_new) = fwd(x, hx, cx)
    jax.block_until_ready((critic, actor, hx_new, cx_new))

    assert critic.shape == (batch, 1)
    assert actor.shape == (batch, num_actions)
    assert hx_new.shape == (batch, HIDDEN) and cx_new.shape == (batch, HIDDEN)

    # Correctness check against an f32 pure-JAX version of the same module.
    # The kernel runs its matmuls in bf16 (f32 accumulation), so the tolerance
    # is the bf16-appropriate one.
    rc, ra, (rh, rcx) = jax.jit(reference_forward)(params, x, hx, cx)
    for got, want in ((critic, rc), (actor, ra), (hx_new, rh), (cx_new, rcx)):
        max_diff = float(jnp.max(jnp.abs(got - want)))
        assert jnp.allclose(got, want, atol=1e-1, rtol=1e-1), max_diff

    print("KERNEL_OK")
</pallas_src>

<mosaic_0001>
module attributes {stable_mosaic.version = 11 : i64} {
  func.func @kernel(%arg0: i32, %arg1: memref<1x42x168xbf16, #tpu.memory_space<vmem>>, %arg2: memref<63x42xbf16, #tpu.memory_space<vmem>>, %arg3: memref<72x96xbf16, #tpu.memory_space<vmem>>, %arg4: memref<84x96xbf16, #tpu.memory_space<vmem>>, %arg5: memref<84x96xbf16, #tpu.memory_space<vmem>>, %arg6: memref<84x96xbf16, #tpu.memory_space<vmem>>, %arg7: memref<84x96xbf16, #tpu.memory_space<vmem>>, %arg8: memref<84x96xbf16, #tpu.memory_space<vmem>>, %arg9: memref<84x96xbf16, #tpu.memory_space<vmem>>, %arg10: memref<1x672xf32, #tpu.memory_space<vmem>>, %arg11: memref<33x21xbf16, #tpu.memory_space<vmem>>, %arg12: memref<576x96xbf16, #tpu.memory_space<vmem>>, %arg13: memref<672x96xbf16, #tpu.memory_space<vmem>>, %arg14: memref<672x96xbf16, #tpu.memory_space<vmem>>, %arg15: memref<384x64xbf16, #tpu.memory_space<vmem>>, %arg16: memref<1x352xf32, #tpu.memory_space<vmem>>, %arg17: memref<18x11xbf16, #tpu.memory_space<vmem>>, %arg18: memref<576x96xbf16, #tpu.memory_space<vmem>>, %arg19: memref<576x96xbf16, #tpu.memory_space<vmem>>, %arg20: memref<1x192xf32, #tpu.memory_space<vmem>>, %arg21: memref<9x6xbf16, #tpu.memory_space<vmem>>, %arg22: memref<576x96xbf16, #tpu.memory_space<vmem>>, %arg23: memref<1x96xf32, #tpu.memory_space<vmem>>, %arg24: memref<544x1024xbf16, #tpu.memory_space<vmem>>, %arg25: memref<1x1024xf32, #tpu.memory_space<vmem>>, %arg26: memref<1x1x256xf32, #tpu.memory_space<vmem>>, %arg27: memref<1x1x256xf32, #tpu.memory_space<vmem>>, %arg28: memref<256x128xbf16, #tpu.memory_space<vmem>>, %arg29: memref<1x128xf32, #tpu.memory_space<vmem>>, %arg30: memref<1x1x128xf32, #tpu.memory_space<vmem>>, %arg31: memref<1x1x256xf32, #tpu.memory_space<vmem>>, %arg32: memref<1x1x256xf32, #tpu.memory_space<vmem>>) attributes {dimension_semantics = [#tpu.dimension_semantics<parallel>], iteration_bounds = array<i64: 2>, scalar_prefetch = 0 : i64, scratch_operands = 0 : i64, tpu.core_type = #tpu.core_type<tc>, window_params = [{transform_indices = @transform_0, window_bounds = array<i64: 1, 42, 168>}, {pipeline_mode = #tpu.pipeline_mode<synchronous>, transform_indices = @transform_1, window_bounds = array<i64: 63, 42>}, {pipeline_mode = #tpu.pipeline_mode<synchronous>, transform_indices = @transform_2, window_bounds = array<i64: 72, 96>}, {pipeline_mode = #tpu.pipeline_mode<synchronous>, transform_indices = @transform_3, window_bounds = array<i64: 84, 96>}, {pipeline_mode = #tpu.pipeline_mode<synchronous>, transform_indices = @transform_4, window_bounds = array<i64: 84, 96>}, {pipeline_mode = #tpu.pipeline_mode<synchronous>, transform_indices = @transform_5, window_bounds = array<i64: 84, 96>}, {pipeline_mode = #tpu.pipeline_mode<synchronous>, transform_indices = @transform_6, window_bounds = array<i64: 84, 96>}, {pipeline_mode = #tpu.pipeline_mode<synchronous>, transform_indices = @transform_7, window_bounds = array<i64: 84, 96>}, {pipeline_mode = #tpu.pipeline_mode<synchronous>, transform_indices = @transform_8, window_bounds = array<i64: 84, 96>}, {pipeline_mode = #tpu.pipeline_mode<synchronous>, transform_indices = @transform_9, window_bounds = array<i64: 1, 672>}, {pipeline_mode = #tpu.pipeline_mode<synchronous>, transform_indices = @transform_10, window_bounds = array<i64: 33, 21>}, {pipeline_mode = #tpu.pipeline_mode<synchronous>, transform_indices = @transform_11, window_bounds = array<i64: 576, 96>}, {pipeline_mode = #tpu.pipeline_mode<synchronous>, transform_indices = @transform_12, window_bounds = array<i64: 672, 96>}, {pipeline_mode = #tpu.pipeline_mode<synchronous>, transform_indices = @transform_13, window_bounds = array<i64: 672, 96>}, {pipeline_mode = #tpu.pipeline_mode<synchronous>, transform_indices = @transform_14, window_bounds = array<i64: 384, 64>}, {pipeline_mode = #tpu.pipeline_mode<synchronous>, transform_indices = @transform_15, window_bounds = array<i64: 1, 352>}, {pipeline_mode = #tpu.pipeline_mode<synchronous>, transform_indices = @transform_16, window_bounds = array<i64: 18, 11>}, {pipeline_mode = #tpu.pipeline_mode<synchronous>, transform_indices = @transform_17, window_bounds = array<i64: 576, 96>}, {pipeline_mode = #tpu.pipeline_mode<synchronous>, transform_indices = @transform_18, window_bounds = array<i64: 576, 96>}, {pipeline_mode = #tpu.pipeline_mode<synchronous>, transform_indices = @transform_19, window_bounds = array<i64: 1, 192>}, {pipeline_mode = #tpu.pipeline_mode<synchronous>, transform_indices = @transform_20, window_bounds = array<i64: 9, 6>}, {pipeline_mode = #tpu.pipeline_mode<synchronous>, transform_indices = @transform_21, window_bounds = array<i64: 576, 96>}, {pipeline_mode = #tpu.pipeline_mode<synchronous>, transform_indices = @transform_22, window_bounds = array<i64: 1, 96>}, {pipeline_mode = #tpu.pipeline_mode<synchronous>, transform_indices = @transform_23, window_bounds = array<i64: 544, 1024>}, {pipeline_mode = #tpu.pipeline_mode<synchronous>, transform_indices = @transform_24, window_bounds = array<i64: 1, 1024>}, {transform_indices = @transform_25, window_bounds = array<i64: 1, 1, 256>}, {transform_indices = @transform_26, window_bounds = array<i64: 1, 1, 256>}, {pipeline_mode = #tpu.pipeline_mode<synchronous>, transform_indices = @transform_27, window_bounds = array<i64: 256, 128>}, {pipeline_mode = #tpu.pipeline_mode<synchronous>, transform_indices = @transform_28, window_bounds = array<i64: 1, 128>}, {transform_indices = @transform_29, window_bounds = array<i64: 1, 1, 128>}, {transform_indices = @transform_30, window_bounds = array<i64: 1, 1, 256>}, {transform_indices = @transform_31, window_bounds = array<i64: 1, 1, 256>}]} {
    %c0 = arith.constant 0 : index
    %c0_0 = arith.constant 0 : index
    %c0_1 = arith.constant 0 : index
    %0 = vector.load %arg1[%c0, %c0_0, %c0_1] : memref<1x42x168xbf16, #tpu.memory_space<vmem>>, vector<1x42x168xbf16>
    %1 = vector.shape_cast %0 : vector<1x42x168xbf16> to vector<42x168xbf16>
    %c0_2 = arith.constant 0 : index
    %c0_3 = arith.constant 0 : index
    %2 = vector.load %arg2[%c0_2, %c0_3] : memref<63x42xbf16, #tpu.memory_space<vmem>>, vector<63x42xbf16>
    %cst = arith.constant dense<0.000000e+00> : vector<63x168xf32>
    %3 = tpu.matmul %2, %1, %cst {dimension_numbers = #tpu.dot_dimension_numbers<[1], [0], [0], [1], [0, 0, 1, 1], [], []>} : vector<63x42xbf16>, vector<42x168xbf16>, vector<63x168xf32> -> vector<63x168xf32>
    %4 = arith.truncf %3 : vector<63x168xf32> to vector<63x168xbf16>
    %5 = vector.extract_strided_slice %4 {offsets = [0, 0], sizes = [21, 168], strides = [1, 1]} : vector<63x168xbf16> to vector<21x168xbf16>
    %6 = vector.extract_strided_slice %4 {offsets = [21, 0], sizes = [21, 168], strides = [1, 1]} : vector<63x168xbf16> to vector<21x168xbf16>
    %7 = vector.extract_strided_slice %4 {offsets = [42, 0], sizes = [21, 168], strides = [1, 1]} : vector<63x168xbf16> to vector<21x168xbf16>
    %8 = vector.extract_strided_slice %5 {offsets = [0, 0], sizes = [21, 24], strides = [1, 1]} : vector<21x168xbf16> to vector<21x24xbf16>
    %9 = vector.extract_strided_slice %6 {offsets = [0, 0], sizes = [21, 24], strides = [1, 1]} : vector<21x168xbf16> to vector<21x24xbf16>
    %10 = vector.extract_strided_slice %7 {offsets = [0, 0], sizes = [21, 24], strides = [1, 1]} : vector<21x168xbf16> to vector<21x24xbf16>
    %11 = tpu.concatenate %8, %9, %10 in 1 : vector<21x24xbf16>, vector<21x24xbf16>, vector<21x24xbf16> -> vector<21x72xbf16>
    %c0_4 = arith.constant 0 : index
    %c0_5 = arith.constant 0 : index
    %12 = vector.load %arg3[%c0_4, %c0_5] : memref<72x96xbf16, #tpu.memory_space<vmem>>, vector<72x96xbf16>
    %cst_6 = arith.constant dense<0.000000e+00> : vector<21x96xf32>
    %13 = tpu.matmul %11, %12, %cst_6 {dimension_numbers = #tpu.dot_dimension_numbers<[1], [0], [0], [1], [0, 0, 1, 1], [], []>} : vector<21x72xbf16>, vector<72x96xbf16>, vector<21x96xf32> -> vector<21x96xf32>
    %14 = vector.extract_strided_slice %5 {offsets = [0, 20], sizes = [21, 28], strides = [1, 1]} : vector<21x168xbf16> to vector<21x28xbf16>
    %15 = vector.extract_strided_slice %6 {offsets = [0, 20], sizes = [21, 28], strides = [1, 1]} : vector<21x168xbf16> to vector<21x28xbf16>
    %16 = vector.extract_strided_slice %7 {offsets = [0, 20], sizes = [21, 28], strides = [1, 1]} : vector<21x168xbf16> to vector<21x28xbf16>
    %17 = tpu.concatenate %14, %15, %16 in 1 : vector<21x28xbf16>, vector<21x28xbf16>, vector<21x28xbf16> -> vector<21x84xbf16>
    %c0_7 = arith.constant 0 : index
    %c0_8 = arith.constant 0 : index
    %18 = vector.load %arg4[%c0_7, %c0_8] : memref<84x96xbf16, #tpu.memory_space<vmem>>, vector<84x96xbf16>
    %cst_9 = arith.constant dense<0.000000e+00> : vector<21x96xf32>
    %19 = tpu.matmul %17, %18, %cst_9 {dimension_numbers = #tpu.dot_dimension_numbers<[1], [0], [0], [1], [0, 0, 1, 1], [], []>} : vector<21x84xbf16>, vector<84x96xbf16>, vector<21x96xf32> -> vector<21x96xf32>
    %20 = vector.extract_strided_slice %5 {offsets = [0, 44], sizes = [21, 28], strides = [1, 1]} : vector<21x168xbf16> to vector<21x28xbf16>
    %21 = vector.extract_strided_slice %6 {offsets = [0, 44], sizes = [21, 28], strides = [1, 1]} : vector<21x168xbf16> to vector<21x28xbf16>
    %22 = vector.extract_strided_slice %7 {offsets = [0, 44], sizes = [21, 28], strides = [1, 1]} : vector<21x168xbf16> to vector<21x28xbf16>
    %23 = tpu.concatenate %20, %21, %22 in 1 : vector<21x28xbf16>, vector<21x28xbf16>, vector<21x28xbf16> -> vector<21x84xbf16>
    %c0_10 = arith.constant 0 : index
    %c0_11 = arith.constant 0 : index
    %24 = vector.load %arg5[%c0_10, %c0_11] : memref<84x96xbf16, #tpu.memory_space<vmem>>, vector<84x96xbf16>
    %cst_12 = arith.constant dense<0.000000e+00> : vector<21x96xf32>
    %25 = tpu.matmul %23, %24, %cst_12 {dimension_numbers = #tpu.dot_dimension_numbers<[1], [0], [0], [1], [0, 0, 1, 1], [], []>} : vector<21x84xbf16>, vector<84x96xbf16>, vector<21x96xf32> -> vector<21x96xf32>
    %26 = vector.extract_strided_slice %5 {offsets = [0, 68], sizes = [21, 28], strides = [1, 1]} : vector<21x168xbf16> to vector<21x28xbf16>
    %27 = vector.extract_strided_slice %6 {offsets = [0, 68], sizes = [21, 28], strides = [1, 1]} : vector<21x168xbf16> to vector<21x28xbf16>
    %28 = vector.extract_strided_slice %7 {offsets = [0, 68], sizes = [21, 28], strides = [1, 1]} : vector<21x168xbf16> to vector<21x28xbf16>
    %29 = tpu.concatenate %26, %27, %28 in 1 : vector<21x28xbf16>, vector<21x28xbf16>, vector<21x28xbf16> -> vector<21x84xbf16>
    %c0_13 = arith.constant 0 : index
    %c0_14 = arith.constant 0 : index
    %30 = vector.load %arg6[%c0_13, %c0_14] : memref<84x96xbf16, #tpu.memory_space<vmem>>, vector<84x96xbf16>
    %cst_15 = arith.constant dense<0.000000e+00> : vector<21x96xf32>
    %31 = tpu.matmul %29, %30, %cst_15 {dimension_numbers = #tpu.dot_dimension_numbers<[1], [0], [0], [1], [0, 0, 1, 1], [], []>} : vector<21x84xbf16>, vector<84x96xbf16>, vector<21x96xf32> -> vector<21x96xf32>
    %32 = vector.extract_strided_slice %5 {offsets = [0, 92], sizes = [21, 28], strides = [1, 1]} : vector<21x168xbf16> to vector<21x28xbf16>
    %33 = vector.extract_strided_slice %6 {offsets = [0, 92], sizes = [21, 28], strides = [1, 1]} : vector<21x168xbf16> to vector<21x28xbf16>
    %34 = vector.extract_strided_slice %7 {offsets = [0, 92], sizes = [21, 28], strides = [1, 1]} : vector<21x168xbf16> to vector<21x28xbf16>
    %35 = tpu.concatenate %32, %33, %34 in 1 : vector<21x28xbf16>, vector<21x28xbf16>, vector<21x28xbf16> -> vector<21x84xbf16>
    %c0_16 = arith.constant 0 : index
    %c0_17 = arith.constant 0 : index
    %36 = vector.load %arg7[%c0_16, %c0_17] : memref<84x96xbf16, #tpu.memory_space<vmem>>, vector<84x96xbf16>
    %cst_18 = arith.constant dense<0.000000e+00> : vector<21x96xf32>
    %37 = tpu.matmul %35, %36, %cst_18 {dimension_numbers = #tpu.dot_dimension_numbers<[1], [0], [0], [1], [0, 0, 1, 1], [], []>} : vector<21x84xbf16>, vector<84x96xbf16>, vector<21x96xf32> -> vector<21x96xf32>
    %38 = vector.extract_strided_slice %5 {offsets = [0, 116], sizes = [21, 28], strides = [1, 1]} : vector<21x168xbf16> to vector<21x28xbf16>
    %39 = vector.extract_strided_slice %6 {offsets = [0, 116], sizes = [21, 28], strides = [1, 1]} : vector<21x168xbf16> to vector<21x28xbf16>
    %40 = vector.extract_strided_slice %7 {offsets = [0, 116], sizes = [21, 28], strides = [1, 1]} : vector<21x168xbf16> to vector<21x28xbf16>
    %41 = tpu.concatenate %38, %39, %40 in 1 : vector<21x28xbf16>, vector<21x28xbf16>, vector<21x28xbf16> -> vector<21x84xbf16>
    %c0_19 = arith.constant 0 : index
    %c0_20 = arith.constant 0 : index
    %42 = vector.load %arg8[%c0_19, %c0_20] : memref<84x96xbf16, #tpu.memory_space<vmem>>, vector<84x96xbf16>
    %cst_21 = arith.constant dense<0.000000e+00> : vector<21x96xf32>
    %43 = tpu.matmul %41, %42, %cst_21 {dimension_numbers = #tpu.dot_dimension_numbers<[1], [0], [0], [1], [0, 0, 1, 1], [], []>} : vector<21x84xbf16>, vector<84x96xbf16>, vector<21x96xf32> -> vector<21x96xf32>
    %44 = vector.extract_strided_slice %5 {offsets = [0, 140], sizes = [21, 28], strides = [1, 1]} : vector<21x168xbf16> to vector<21x28xbf16>
    %45 = vector.extract_strided_slice %6 {offsets = [0, 140], sizes = [21, 28], strides = [1, 1]} : vector<21x168xbf16> to vector<21x28xbf16>
    %46 = vector.extract_strided_slice %7 {offsets = [0, 140], sizes = [21, 28], strides = [1, 1]} : vector<21x168xbf16> to vector<21x28xbf16>
    %47 = tpu.concatenate %44, %45, %46 in 1 : vector<21x28xbf16>, vector<21x28xbf16>, vector<21x28xbf16> -> vector<21x84xbf16>
    %c0_22 = arith.constant 0 : index
    %c0_23 = arith.constant 0 : index
    %48 = vector.load %arg9[%c0_22, %c0_23] : memref<84x96xbf16, #tpu.memory_space<vmem>>, vector<84x96xbf16>
    %cst_24 = arith.constant dense<0.000000e+00> : vector<21x96xf32>
    %49 = tpu.matmul %47, %48, %cst_24 {dimension_numbers = #tpu.dot_dimension_numbers<[1], [0], [0], [1], [0, 0, 1, 1], [], []>} : vector<21x84xbf16>, vector<84x96xbf16>, vector<21x96xf32> -> vector<21x96xf32>
    %50 = tpu.concatenate %13, %19, %25, %31, %37, %43, %49 in 1 : vector<21x96xf32>, vector<21x96xf32>, vector<21x96xf32>, vector<21x96xf32>, vector<21x96xf32>, vector<21x96xf32>, vector<21x96xf32> -> vector<21x672xf32>
    %c0_25 = arith.constant 0 : index
    %c0_26 = arith.constant 0 : index
    %51 = vector.load %arg10[%c0_25, %c0_26] : memref<1x672xf32, #tpu.memory_space<vmem>>, vector<1x672xf32>
    %52 = vector.broadcast %51 : vector<1x672xf32> to vector<21x672xf32>
    %53 = arith.addf %50, %52 : vector<21x672xf32>
    %cst_27 = arith.constant 0.000000e+00 : f32
    %54 = vector.broadcast %cst_27 : f32 to vector<21x672xf32>
    %55 = arith.cmpf ogt, %53, %54 : vector<21x672xf32>
    %cst_28 = arith.constant 0.000000e+00 : f32
    %56 = vector.broadcast %cst_28 : f32 to vector<21x672xf32>
    %57 = arith.minimumf %53, %56 : vector<21x672xf32>
    %58 = math.exp %57 : vector<21x672xf32>
    %cst_29 = arith.constant 1.000000e+00 : f32
    %59 = vector.broadcast %cst_29 : f32 to vector<21x672xf32>
    %60 = arith.subf %58, %59 : vector<21x672xf32>
    %61 = arith.select %55, %53, %60 : vector<21x672xi1>, vector<21x672xf32>
    %62 = arith.truncf %61 : vector<21x672xf32> to vector<21x672xbf16>
    %c0_30 = arith.constant 0 : index
    %c0_31 = arith.constant 0 : index
    %63 = vector.load %arg11[%c0_30, %c0_31] : memref<33x21xbf16, #tpu.memory_space<vmem>>, vector<33x21xbf16>
    %cst_32 = arith.constant dense<0.000000e+00> : vector<33x672xf32>
    %64 = tpu.matmul %63, %62, %cst_32 {dimension_numbers = #tpu.dot_dimension_numbers<[1], [0], [0], [1], [0, 0, 1, 1], [], []>} : vector<33x21xbf16>, vector<21x672xbf16>, vector<33x672xf32> -> vector<33x672xf32>
    %65 = arith.truncf %64 : vector<33x672xf32> to vector<33x672xbf16>
    %66 = vector.extract_strided_slice %65 {offsets = [0, 0], sizes = [11, 672], strides = [1, 1]} : vector<33x672xbf16> to vector<11x672xbf16>
    %67 = vector.extract_strided_slice %65 {offsets = [11, 0], sizes = [11, 672], strides = [1, 1]} : vector<33x672xbf16> to vector<11x672xbf16>
    %68 = vector.extract_strided_slice %65 {offsets = [22, 0], sizes = [11, 672], strides = [1, 1]} : vector<33x672xbf16> to vector<11x672xbf16>
    %69 = vector.extract_strided_slice %66 {offsets = [0, 0], sizes = [11, 192], strides = [1, 1]} : vector<11x672xbf16> to vector<11x192xbf16>
    %70 = vector.extract_strided_slice %67 {offsets = [0, 0], sizes = [11, 192], strides = [1, 1]} : vector<11x672xbf16> to vector<11x192xbf16>
    %71 = vector.extract_strided_slice %68 {offsets = [0, 0], sizes = [11, 192], strides = [1, 1]} : vector<11x672xbf16> to vector<11x192xbf16>
    %72 = tpu.concatenate %69, %70, %71 in 1 : vector<11x192xbf16>, vector<11x192xbf16>, vector<11x192xbf16> -> vector<11x576xbf16>
    %c0_33 = arith.constant 0 : index
    %c0_34 = arith.constant 0 : index
    %73 = vector.load %arg12[%c0_33, %c0_34] : memref<576x96xbf16, #tpu.memory_space<vmem>>, vector<576x96xbf16>
    %cst_35 = arith.constant dense<0.000000e+00> : vector<11x96xf32>
    %74 = tpu.matmul %72, %73, %cst_35 {dimension_numbers = #tpu.dot_dimension_numbers<[1], [0], [0], [1], [0, 0, 1, 1], [], []>} : vector<11x576xbf16>, vector<576x96xbf16>, vector<11x96xf32> -> vector<11x96xf32>
    %75 = vector.extract_strided_slice %66 {offsets = [0, 160], sizes = [11, 224], strides = [1, 1]} : vector<11x672xbf16> to vector<11x224xbf16>
    %76 = vector.extract_strided_slice %67 {offsets = [0, 160], sizes = [11, 224], strides = [1, 1]} : vector<11x672xbf16> to vector<11x224xbf16>
    %77 = vector.extract_strided_slice %68 {offsets = [0, 160], sizes = [11, 224], strides = [1, 1]} : vector<11x672xbf16> to vector<11x224xbf16>
    %78 = tpu.concatenate %75, %76, %77 in 1 : vector<11x224xbf16>, vector<11x224xbf16>, vector<11x224xbf16> -> vector<11x672xbf16>
    %c0_36 = arith.constant 0 : index
    %c0_37 = arith.constant 0 : index
    %79 = vector.load %arg13[%c0_36, %c0_37] : memref<672x96xbf16, #tpu.memory_space<vmem>>, vector<672x96xbf16>
    %cst_38 = arith.constant dense<0.000000e+00> : vector<11x96xf32>
    %80 = tpu.matmul %78, %79, %cst_38 {dimension_numbers = #tpu.dot_dimension_numbers<[1], [0], [0], [1], [0, 0, 1, 1], [], []>} : vector<11x672xbf16>, vector<672x96xbf16>, vector<11x96xf32> -> vector<11x96xf32>
    %81 = vector.extract_strided_slice %66 {offsets = [0, 352], sizes = [11, 224], strides = [1, 1]} : vector<11x672xbf16> to vector<11x224xbf16>
    %82 = vector.extract_strided_slice %67 {offsets = [0, 352], sizes = [11, 224], strides = [1, 1]} : vector<11x672xbf16> to vector<11x224xbf16>
    %83 = vector.extract_strided_slice %68 {offsets = [0, 352], sizes = [11, 224], strides = [1, 1]} : vector<11x672xbf16> to vector<11x224xbf16>
    %84 = tpu.concatenate %81, %82, %83 in 1 : vector<11x224xbf16>, vector<11x224xbf16>, vector<11x224xbf16> -> vector<11x672xbf16>
    %c0_39 = arith.constant 0 : index
    %c0_40 = arith.constant 0 : index
    %85 = vector.load %arg14[%c0_39, %c0_40] : memref<672x96xbf16, #tpu.memory_space<vmem>>, vector<672x96xbf16>
    %cst_41 = arith.constant dense<0.000000e+00> : vector<11x96xf32>
    %86 = tpu.matmul %84, %85, %cst_41 {dimension_numbers = #tpu.dot_dimension_numbers<[1], [0], [0], [1], [0, 0, 1, 1], [], []>} : vector<11x672xbf16>, vector<672x96xbf16>, vector<11x96xf32> -> vector<11x96xf32>
    %87 = vector.extract_strided_slice %66 {offsets = [0, 544], sizes = [11, 128], strides = [1, 1]} : vector<11x672xbf16> to vector<11x128xbf16>
    %88 = vector.extract_strided_slice %67 {offsets = [0, 544], sizes = [11, 128], strides = [1, 1]} : vector<11x672xbf16> to vector<11x128xbf16>
    %89 = vector.extract_strided_slice %68 {offsets = [0, 544], sizes = [11, 128], strides = [1, 1]} : vector<11x672xbf16> to vector<11x128xbf16>
    %90 = tpu.concatenate %87, %88, %89 in 1 : vector<11x128xbf16>, vector<11x128xbf16>, vector<11x128xbf16> -> vector<11x384xbf16>
    %c0_42 = arith.constant 0 : index
    %c0_43 = arith.constant 0 : index
    %91 = vector.load %arg15[%c0_42, %c0_43] : memref<384x64xbf16, #tpu.memory_space<vmem>>, vector<384x64xbf16>
    %cst_44 = arith.constant dense<0.000000e+00> : vector<11x64xf32>
    %92 = tpu.matmul %90, %91, %cst_44 {dimension_numbers = #tpu.dot_dimension_numbers<[1], [0], [0], [1], [0, 0, 1, 1], [], []>} : vector<11x384xbf16>, vector<384x64xbf16>, vector<11x64xf32> -> vector<11x64xf32>
    %93 = tpu.concatenate %74, %80, %86, %92 in 1 : vector<11x96xf32>, vector<11x96xf32>, vector<11x96xf32>, vector<11x64xf32> -> vector<11x352xf32>
    %c0_45 = arith.constant 0 : index
    %c0_46 = arith.constant 0 : index
    %94 = vector.load %arg16[%c0_45, %c0_46] : memref<1x352xf32, #tpu.memory_space<vmem>>, vector<1x352xf32>
    %95 = vector.broadcast %94 : vector<1x352xf32> to vector<11x352xf32>
    %96 = arith.addf %93, %95 : vector<11x352xf32>
    %cst_47 = arith.constant 0.000000e+00 : f32
    %97 = vector.broadcast %cst_47 : f32 to vector<11x352xf32>
    %98 = arith.cmpf ogt, %96, %97 : vector<11x352xf32>
    %cst_48 = arith.constant 0.000000e+00 : f32
    %99 = vector.broadcast %cst_48 : f32 to vector<11x352xf32>
    %100 = arith.minimumf %96, %99 : vector<11x352xf32>
    %101 = math.exp %100 : vector<11x352xf32>
    %cst_49 = arith.constant 1.000000e+00 : f32
    %102 = vector.broadcast %cst_49 : f32 to vector<11x352xf32>
    %103 = arith.subf %101, %102 : vector<11x352xf32>
    %104 = arith.select %98, %96, %103 : vector<11x352xi1>, vector<11x352xf32>
    %105 = arith.truncf %104 : vector<11x352xf32> to vector<11x352xbf16>
    %c0_50 = arith.constant 0 : index
    %c0_51 = arith.constant 0 : index
    %106 = vector.load %arg17[%c0_50, %c0_51] : memref<18x11xbf16, #tpu.memory_space<vmem>>, vector<18x11xbf16>
    %cst_52 = arith.constant dense<0.000000e+00> : vector<18x352xf32>
    %107 = tpu.matmul %106, %105, %cst_52 {dimension_numbers = #tpu.dot_dimension_numbers<[1], [0], [0], [1], [0, 0, 1, 1], [], []>} : vector<18x11xbf16>, vector<11x352xbf16>, vector<18x352xf32> -> vector<18x352xf32>
    %108 = arith.truncf %107 : vector<18x352xf32> to vector<18x352xbf16>
    %109 = vector.extract_strided_slice %108 {offsets = [0, 0], sizes = [6, 352], strides = [1, 1]} : vector<18x352xbf16> to vector<6x352xbf16>
    %110 = vector.extract_strided_slice %108 {offsets = [6, 0], sizes = [6, 352], strides = [1, 1]} : vector<18x352xbf16> to vector<6x352xbf16>
    %111 = vector.extract_strided_slice %108 {offsets = [12, 0], sizes = [6, 352], strides = [1, 1]} : vector<18x352xbf16> to vector<6x352xbf16>
    %112 = vector.extract_strided_slice %109 {offsets = [0, 0], sizes = [6, 192], strides = [1, 1]} : vector<6x352xbf16> to vector<6x192xbf16>
    %113 = vector.extract_strided_slice %110 {offsets = [0, 0], sizes = [6, 192], strides = [1, 1]} : vector<6x352xbf16> to vector<6x192xbf16>
    %114 = vector.extract_strided_slice %111 {offsets = [0, 0], sizes = [6, 192], strides = [1, 1]} : vector<6x352xbf16> to vector<6x192xbf16>
    %115 = tpu.concatenate %112, %113, %114 in 1 : vector<6x192xbf16>, vector<6x192xbf16>, vector<6x192xbf16> -> vector<6x576xbf16>
    %c0_53 = arith.constant 0 : index
    %c0_54 = arith.constant 0 : index
    %116 = vector.load %arg18[%c0_53, %c0_54] : memref<576x96xbf16, #tpu.memory_space<vmem>>, vector<576x96xbf16>
    %cst_55 = arith.constant dense<0.000000e+00> : vector<6x96xf32>
    %117 = tpu.matmul %115, %116, %cst_55 {dimension_numbers = #tpu.dot_dimension_numbers<[1], [0], [0], [1], [0, 0, 1, 1], [], []>} : vector<6x576xbf16>, vector<576x96xbf16>, vector<6x96xf32> -> vector<6x96xf32>
    %118 = vector.extract_strided_slice %109 {offsets = [0, 160], sizes = [6, 192], strides = [1, 1]} : vector<6x352xbf16> to vector<6x192xbf16>
    %119 = vector.extract_strided_slice %110 {offsets = [0, 160], sizes = [6, 192], strides = [1, 1]} : vector<6x352xbf16> to vector<6x192xbf16>
    %120 = vector.extract_strided_slice %111 {offsets = [0, 160], sizes = [6, 192], strides = [1, 1]} : vector<6x352xbf16> to vector<6x192xbf16>
    %121 = tpu.concatenate %118, %119, %120 in 1 : vector<6x192xbf16>, vector<6x192xbf16>, vector<6x192xbf16> -> vector<6x576xbf16>
    %c0_56 = arith.constant 0 : index
    %c0_57 = arith.constant 0 : index
    %122 = vector.load %arg19[%c0_56, %c0_57] : memref<576x96xbf16, #tpu.memory_space<vmem>>, vector<576x96xbf16>
    %cst_58 = arith.constant dense<0.000000e+00> : vector<6x96xf32>
    %123 = tpu.matmul %121, %122, %cst_58 {dimension_numbers = #tpu.dot_dimension_numbers<[1], [0], [0], [1], [0, 0, 1, 1], [], []>} : vector<6x576xbf16>, vector<576x96xbf16>, vector<6x96xf32> -> vector<6x96xf32>
    %124 = tpu.concatenate %117, %123 in 1 : vector<6x96xf32>, vector<6x96xf32> -> vector<6x192xf32>
    %c0_59 = arith.constant 0 : index
    %c0_60 = arith.constant 0 : index
    %125 = vector.load %arg20[%c0_59, %c0_60] : memref<1x192xf32, #tpu.memory_space<vmem>>, vector<1x192xf32>
    %126 = vector.broadcast %125 : vector<1x192xf32> to vector<6x192xf32>
    %127 = arith.addf %124, %126 : vector<6x192xf32>
    %cst_61 = arith.constant 0.000000e+00 : f32
    %128 = vector.broadcast %cst_61 : f32 to vector<6x192xf32>
    %129 = arith.cmpf ogt, %127, %128 : vector<6x192xf32>
    %cst_62 = arith.constant 0.000000e+00 : f32
    %130 = vector.broadcast %cst_62 : f32 to vector<6x192xf32>
    %131 = arith.minimumf %127, %130 : vector<6x192xf32>
    %132 = math.exp %131 : vector<6x192xf32>
    %cst_63 = arith.constant 1.000000e+00 : f32
    %133 = vector.broadcast %cst_63 : f32 to vector<6x192xf32>
    %134 = arith.subf %132, %133 : vector<6x192xf32>
    %135 = arith.select %129, %127, %134 : vector<6x192xi1>, vector<6x192xf32>
    %136 = arith.truncf %135 : vector<6x192xf32> to vector<6x192xbf16>
    %c0_64 = arith.constant 0 : index
    %c0_65 = arith.constant 0 : index
    %137 = vector.load %arg21[%c0_64, %c0_65] : memref<9x6xbf16, #tpu.memory_space<vmem>>, vector<9x6xbf16>
    %cst_66 = arith.constant dense<0.000000e+00> : vector<9x192xf32>
    %138 = tpu.matmul %137, %136, %cst_66 {dimension_numbers = #tpu.dot_dimension_numbers<[1], [0], [0], [1], [0, 0, 1, 1], [], []>} : vector<9x6xbf16>, vector<6x192xbf16>, vector<9x192xf32> -> vector<9x192xf32>
    %139 = arith.truncf %138 : vector<9x192xf32> to vector<9x192xbf16>
    %140 = vector.extract_strided_slice %139 {offsets = [0, 0], sizes = [3, 192], strides = [1, 1]} : vector<9x192xbf16> to vector<3x192xbf16>
    %141 = vector.extract_strided_slice %139 {offsets = [3, 0], sizes = [3, 192], strides = [1, 1]} : vector<9x192xbf16> to vector<3x192xbf16>
    %142 = vector.extract_strided_slice %139 {offsets = [6, 0], sizes = [3, 192], strides = [1, 1]} : vector<9x192xbf16> to vector<3x192xbf16>
    %143 = tpu.concatenate %140, %141, %142 in 1 : vector<3x192xbf16>, vector<3x192xbf16>, vector<3x192xbf16> -> vector<3x576xbf16>
    %c0_67 = arith.constant 0 : index
    %c0_68 = arith.constant 0 : index
    %144 = vector.load %arg22[%c0_67, %c0_68] : memref<576x96xbf16, #tpu.memory_space<vmem>>, vector<576x96xbf16>
    %cst_69 = arith.constant dense<0.000000e+00> : vector<3x96xf32>
    %145 = tpu.matmul %143, %144, %cst_69 {dimension_numbers = #tpu.dot_dimension_numbers<[1], [0], [0], [1], [0, 0, 1, 1], [], []>} : vector<3x576xbf16>, vector<576x96xbf16>, vector<3x96xf32> -> vector<3x96xf32>
    %c0_70 = arith.constant 0 : index
    %c0_71 = arith.constant 0 : index
    %146 = vector.load %arg23[%c0_70, %c0_71] : memref<1x96xf32, #tpu.memory_space<vmem>>, vector<1x96xf32>
    %147 = vector.broadcast %146 : vector<1x96xf32> to vector<3x96xf32>
    %148 = arith.addf %145, %147 : vector<3x96xf32>
    %cst_72 = arith.constant 0.000000e+00 : f32
    %149 = vector.broadcast %cst_72 : f32 to vector<3x96xf32>
    %150 = arith.cmpf ogt, %148, %149 : vector<3x96xf32>
    %cst_73 = arith.constant 0.000000e+00 : f32
    %151 = vector.broadcast %cst_73 : f32 to vector<3x96xf32>
    %152 = arith.minimumf %148, %151 : vector<3x96xf32>
    %153 = math.exp %152 : vector<3x96xf32>
    %cst_74 = arith.constant 1.000000e+00 : f32
    %154 = vector.broadcast %cst_74 : f32 to vector<3x96xf32>
    %155 = arith.subf %153, %154 : vector<3x96xf32>
    %156 = arith.select %150, %148, %155 : vector<3x96xi1>, vector<3x96xf32>
    %157 = arith.truncf %156 : vector<3x96xf32> to vector<3x96xbf16>
    %158 = vector.extract_strided_slice %157 {offsets = [0, 0], sizes = [1, 96], strides = [1, 1]} : vector<3x96xbf16> to vector<1x96xbf16>
    %159 = vector.extract_strided_slice %157 {offsets = [1, 0], sizes = [1, 96], strides = [1, 1]} : vector<3x96xbf16> to vector<1x96xbf16>
    %160 = vector.extract_strided_slice %157 {offsets = [2, 0], sizes = [1, 96], strides = [1, 1]} : vector<3x96xbf16> to vector<1x96xbf16>
    %161 = tpu.concatenate %158, %159, %160 in 1 : vector<1x96xbf16>, vector<1x96xbf16>, vector<1x96xbf16> -> vector<1x288xbf16>
    %c0_75 = arith.constant 0 : index
    %c0_76 = arith.constant 0 : index
    %c0_77 = arith.constant 0 : index
    %162 = vector.load %arg26[%c0_75, %c0_76, %c0_77] : memref<1x1x256xf32, #tpu.memory_space<vmem>>, vector<1x1x256xf32>
    %163 = vector.shape_cast %162 : vector<1x1x256xf32> to vector<1x256xf32>
    %164 = arith.truncf %163 : vector<1x256xf32> to vector<1x256xbf16>
    %165 = tpu.concatenate %161, %164 in 1 : vector<1x288xbf16>, vector<1x256xbf16> -> vector<1x544xbf16>
    %c0_78 = arith.constant 0 : index
    %c0_79 = arith.constant 0 : index
    %166 = vector.load %arg24[%c0_78, %c0_79] : memref<544x1024xbf16, #tpu.memory_space<vmem>>, vector<544x1024xbf16>
    %cst_80 = arith.constant dense<0.000000e+00> : vector<1x1024xf32>
    %167 = tpu.matmul %165, %166, %cst_80 {dimension_numbers = #tpu.dot_dimension_numbers<[1], [0], [0], [1], [0, 0, 1, 1], [], []>} : vector<1x544xbf16>, vector<544x1024xbf16>, vector<1x1024xf32> -> vector<1x1024xf32>
    %c0_81 = arith.constant 0 : index
    %c0_82 = arith.constant 0 : index
    %168 = vector.load %arg25[%c0_81, %c0_82] : memref<1x1024xf32, #tpu.memory_space<vmem>>, vector<1x1024xf32>
    %169 = arith.addf %167, %168 : vector<1x1024xf32>
    %170 = vector.extract_strided_slice %169 {offsets = [0, 0], sizes = [1, 256], strides = [1, 1]} : vector<1x1024xf32> to vector<1x256xf32>
    %171 = arith.negf %170 : vector<1x256xf32>
    %172 = math.exp %171 : vector<1x256xf32>
    %cst_83 = arith.constant 1.000000e+00 : f32
    %173 = vector.broadcast %cst_83 : f32 to vector<1x256xf32>
    %174 = arith.addf %173, %172 : vector<1x256xf32>
    %175 = arith.divf %173, %174 : vector<1x256xf32>
    %176 = vector.extract_strided_slice %169 {offsets = [0, 256], sizes = [1, 256], strides = [1, 1]} : vector<1x1024xf32> to vector<1x256xf32>
    %177 = arith.negf %176 : vector<1x256xf32>
    %178 = math.exp %177 : vector<1x256xf32>
    %cst_84 = arith.constant 1.000000e+00 : f32
    %179 = vector.broadcast %cst_84 : f32 to vector<1x256xf32>
    %180 = arith.addf %179, %178 : vector<1x256xf32>
    %181 = arith.divf %179, %180 : vector<1x256xf32>
    %182 = vector.extract_strided_slice %169 {offsets = [0, 512], sizes = [1, 256], strides = [1, 1]} : vector<1x1024xf32> to vector<1x256xf32>
    %183 = math.tanh %182 : vector<1x256xf32>
    %184 = vector.extract_strided_slice %169 {offsets = [0, 768], sizes = [1, 256], strides = [1, 1]} : vector<1x1024xf32> to vector<1x256xf32>
    %185 = arith.negf %184 : vector<1x256xf32>
    %186 = math.exp %185 : vector<1x256xf32>
    %cst_85 = arith.constant 1.000000e+00 : f32
    %187 = vector.broadcast %cst_85 : f32 to vector<1x256xf32>
    %188 = arith.addf %187, %186 : vector<1x256xf32>
    %189 = arith.divf %187, %188 : vector<1x256xf32>
    %c0_86 = arith.constant 0 : index
    %c0_87 = arith.constant 0 : index
    %c0_88 = arith.constant 0 : index
    %190 = vector.load %arg27[%c0_86, %c0_87, %c0_88] : memref<1x1x256xf32, #tpu.memory_space<vmem>>, vector<1x1x256xf32>
    %191 = vector.shape_cast %190 : vector<1x1x256xf32> to vector<1x256xf32>
    %192 = arith.mulf %181, %191 : vector<1x256xf32>
    %193 = arith.mulf %175, %183 : vector<1x256xf32>
    %194 = arith.addf %192, %193 : vector<1x256xf32>
    %195 = math.tanh %194 : vector<1x256xf32>
    %196 = arith.mulf %189, %195 : vector<1x256xf32>
    %c0_89 = arith.constant 0 : index
    %c0_90 = arith.constant 0 : index
    %c0_91 = arith.constant 0 : index
    %197 = vector.load %arg32[%c0_89, %c0_90, %c0_91] : memref<1x1x256xf32, #tpu.memory_space<vmem>>, vector<1x1x256xf32>
    %198 = vector.shape_cast %197 : vector<1x1x256xf32> to vector<1x256xf32>
    %199 = vector.shape_cast %194 : vector<1x256xf32> to vector<1x1x256xf32>
    tpu.vector_store %arg32[%c0_89, %c0_90, %c0_91], %199 {strides = array<i32>} : memref<1x1x256xf32, #tpu.memory_space<vmem>>, vector<1x1x256xf32>,
    %c0_92 = arith.constant 0 : index
    %c0_93 = arith.constant 0 : index
    %c0_94 = arith.constant 0 : index
    %200 = vector.load %arg31[%c0_92, %c0_93, %c0_94] : memref<1x1x256xf32, #tpu.memory_space<vmem>>, vector<1x1x256xf32>
    %201 = vector.shape_cast %200 : vector<1x1x256xf32> to vector<1x256xf32>
    %202 = vector.shape_cast %196 : vector<1x256xf32> to vector<1x1x256xf32>
    tpu.vector_store %arg31[%c0_92, %c0_93, %c0_94], %202 {strides = array<i32>} : memref<1x1x256xf32, #tpu.memory_space<vmem>>, vector<1x1x256xf32>,
    %203 = arith.truncf %196 : vector<1x256xf32> to vector<1x256xbf16>
    %c0_95 = arith.constant 0 : index
    %c0_96 = arith.constant 0 : index
    %204 = vector.load %arg28[%c0_95, %c0_96] : memref<256x128xbf16, #tpu.memory_space<vmem>>, vector<256x128xbf16>
    %cst_97 = arith.constant dense<0.000000e+00> : vector<1x128xf32>
    %205 = tpu.matmul %203, %204, %cst_97 {dimension_numbers = #tpu.dot_dimension_numbers<[1], [0], [0], [1], [0, 0, 1, 1], [], []>} : vector<1x256xbf16>, vector<256x128xbf16>, vector<1x128xf32> -> vector<1x128xf32>
    %c0_98 = arith.constant 0 : index
    %c0_99 = arith.constant 0 : index
    %206 = vector.load %arg29[%c0_98, %c0_99] : memref<1x128xf32, #tpu.memory_space<vmem>>, vector<1x128xf32>
    %207 = arith.addf %205, %206 : vector<1x128xf32>
    %c0_100 = arith.constant 0 : index
    %c0_101 = arith.constant 0 : index
    %c0_102 = arith.constant 0 : index
    %208 = vector.load %arg30[%c0_100, %c0_101, %c0_102] : memref<1x1x128xf32, #tpu.memory_space<vmem>>, vector<1x1x128xf32>
    %209 = vector.shape_cast %208 : vector<1x1x128xf32> to vector<1x128xf32>
    %210 = vector.shape_cast %207 : vector<1x128xf32> to vector<1x1x128xf32>
    tpu.vector_store %arg30[%c0_100, %c0_101, %c0_102], %210 {strides = array<i32>} : memref<1x1x128xf32, #tpu.memory_space<vmem>>, vector<1x1x128xf32>,
    return
  }
  func.func @transform_0(%arg0: i32) -> (i32, i32, i32) {
    %c0_i32 = arith.constant 0 : i32
    %c0_i32_0 = arith.constant 0 : i32
    %c0_i32_1 = arith.constant 0 : i32
    return %arg0, %c0_i32, %c0_i32_0 : i32, i32, i32
  }
  func.func @transform_1(%arg0: i32) -> (i32, i32) {
    %c0_i32 = arith.constant 0 : i32
    %c0_i32_0 = arith.constant 0 : i32
    %c0_i32_1 = arith.constant 0 : i32
    return %c0_i32, %c0_i32_0 : i32, i32
  }
  func.func @transform_2(%arg0: i32) -> (i32, i32) {
    %c0_i32 = arith.constant 0 : i32
    %c0_i32_0 = arith.constant 0 : i32
    %c0_i32_1 = arith.constant 0 : i32
    return %c0_i32, %c0_i32_0 : i32, i32
  }
  func.func @transform_3(%arg0: i32) -> (i32, i32) {
    %c0_i32 = arith.constant 0 : i32
    %c0_i32_0 = arith.constant 0 : i32
    %c0_i32_1 = arith.constant 0 : i32
    return %c0_i32, %c0_i32_0 : i32, i32
  }
  func.func @transform_4(%arg0: i32) -> (i32, i32) {
    %c0_i32 = arith.constant 0 : i32
    %c0_i32_0 = arith.constant 0 : i32
    %c0_i32_1 = arith.constant 0 : i32
    return %c0_i32, %c0_i32_0 : i32, i32
  }
  func.func @transform_5(%arg0: i32) -> (i32, i32) {
    %c0_i32 = arith.constant 0 : i32
    %c0_i32_0 = arith.constant 0 : i32
    %c0_i32_1 = arith.constant 0 : i32
    return %c0_i32, %c0_i32_0 : i32, i32
  }
  func.func @transform_6(%arg0: i32) -> (i32, i32) {
    %c0_i32 = arith.constant 0 : i32
    %c0_i32_0 = arith.constant 0 : i32
    %c0_i32_1 = arith.constant 0 : i32
    return %c0_i32, %c0_i32_0 : i32, i32
  }
  func.func @transform_7(%arg0: i32) -> (i32, i32) {
    %c0_i32 = arith.constant 0 : i32
    %c0_i32_0 = arith.constant 0 : i32
    %c0_i32_1 = arith.constant 0 : i32
    return %c0_i32, %c0_i32_0 : i32, i32
  }
  func.func @transform_8(%arg0: i32) -> (i32, i32) {
    %c0_i32 = arith.constant 0 : i32
    %c0_i32_0 = arith.constant 0 : i32
    %c0_i32_1 = arith.constant 0 : i32
    return %c0_i32, %c0_i32_0 : i32, i32
  }
  func.func @transform_9(%arg0: i32) -> (i32, i32) {
    %c0_i32 = arith.constant 0 : i32
    %c0_i32_0 = arith.constant 0 : i32
    %c0_i32_1 = arith.constant 0 : i32
    return %c0_i32, %c0_i32_0 : i32, i32
  }
  func.func @transform_10(%arg0: i32) -> (i32, i32) {
    %c0_i32 = arith.constant 0 : i32
    %c0_i32_0 = arith.constant 0 : i32
    %c0_i32_1 = arith.constant 0 : i32
    return %c0_i32, %c0_i32_0 : i32, i32
  }
  func.func @transform_11(%arg0: i32) -> (i32, i32) {
    %c0_i32 = arith.constant 0 : i32
    %c0_i32_0 = arith.constant 0 : i32
    %c0_i32_1 = arith.constant 0 : i32
    return %c0_i32, %c0_i32_0 : i32, i32
  }
  func.func @transform_12(%arg0: i32) -> (i32, i32) {
    %c0_i32 = arith.constant 0 : i32
    %c0_i32_0 = arith.constant 0 : i32
    %c0_i32_1 = arith.constant 0 : i32
    return %c0_i32, %c0_i32_0 : i32, i32
  }
  func.func @transform_13(%arg0: i32) -> (i32, i32) {
    %c0_i32 = arith.constant 0 : i32
    %c0_i32_0 = arith.constant 0 : i32
    %c0_i32_1 = arith.constant 0 : i32
    return %c0_i32, %c0_i32_0 : i32, i32
  }
  func.func @transform_14(%arg0: i32) -> (i32, i32) {
    %c0_i32 = arith.constant 0 : i32
    %c0_i32_0 = arith.constant 0 : i32
    %c0_i32_1 = arith.constant 0 : i32
    return %c0_i32, %c0_i32_0 : i32, i32
  }
  func.func @transform_15(%arg0: i32) -> (i32, i32) {
    %c0_i32 = arith.constant 0 : i32
    %c0_i32_0 = arith.constant 0 : i32
    %c0_i32_1 = arith.constant 0 : i32
    return %c0_i32, %c0_i32_0 : i32, i32
  }
  func.func @transform_16(%arg0: i32) -> (i32, i32) {
    %c0_i32 = arith.constant 0 : i32
    %c0_i32_0 = arith.constant 0 : i32
    %c0_i32_1 = arith.constant 0 : i32
    return %c0_i32, %c0_i32_0 : i32, i32
  }
  func.func @transform_17(%arg0: i32) -> (i32, i32) {
    %c0_i32 = arith.constant 0 : i32
    %c0_i32_0 = arith.constant 0 : i32
    %c0_i32_1 = arith.constant 0 : i32
    return %c0_i32, %c0_i32_0 : i32, i32
  }
  func.func @transform_18(%arg0: i32) -> (i32, i32) {
    %c0_i32 = arith.constant 0 : i32
    %c0_i32_0 = arith.constant 0 : i32
    %c0_i32_1 = arith.constant 0 : i32
    return %c0_i32, %c0_i32_0 : i32, i32
  }
  func.func @transform_19(%arg0: i32) -> (i32, i32) {
    %c0_i32 = arith.constant 0 : i32
    %c0_i32_0 = arith.constant 0 : i32
    %c0_i32_1 = arith.constant 0 : i32
    return %c0_i32, %c0_i32_0 : i32, i32
  }
  func.func @transform_20(%arg0: i32) -> (i32, i32) {
    %c0_i32 = arith.constant 0 : i32
    %c0_i32_0 = arith.constant 0 : i32
    %c0_i32_1 = arith.constant 0 : i32
    return %c0_i32, %c0_i32_0 : i32, i32
  }
  func.func @transform_21(%arg0: i32) -> (i32, i32) {
    %c0_i32 = arith.constant 0 : i32
    %c0_i32_0 = arith.constant 0 : i32
    %c0_i32_1 = arith.constant 0 : i32
    return %c0_i32, %c0_i32_0 : i32, i32
  }
  func.func @transform_22(%arg0: i32) -> (i32, i32) {
    %c0_i32 = arith.constant 0 : i32
    %c0_i32_0 = arith.constant 0 : i32
    %c0_i32_1 = arith.constant 0 : i32
    return %c0_i32, %c0_i32_0 : i32, i32
  }
  func.func @transform_23(%arg0: i32) -> (i32, i32) {
    %c0_i32 = arith.constant 0 : i32
    %c0_i32_0 = arith.constant 0 : i32
    %c0_i32_1 = arith.constant 0 : i32
    return %c0_i32, %c0_i32_0 : i32, i32
  }
  func.func @transform_24(%arg0: i32) -> (i32, i32) {
    %c0_i32 = arith.constant 0 : i32
    %c0_i32_0 = arith.constant 0 : i32
    %c0_i32_1 = arith.constant 0 : i32
    return %c0_i32, %c0_i32_0 : i32, i32
  }
  func.func @transform_25(%arg0: i32) -> (i32, i32, i32) {
    %c0_i32 = arith.constant 0 : i32
    %c0_i32_0 = arith.constant 0 : i32
    %c0_i32_1 = arith.constant 0 : i32
    return %arg0, %c0_i32, %c0_i32_0 : i32, i32, i32
  }
  func.func @transform_26(%arg0: i32) -> (i32, i32, i32) {
    %c0_i32 = arith.constant 0 : i32
    %c0_i32_0 = arith.constant 0 : i32
    %c0_i32_1 = arith.constant 0 : i32
    return %arg0, %c0_i32, %c0_i32_0 : i32, i32, i32
  }
  func.func @transform_27(%arg0: i32) -> (i32, i32) {
    %c0_i32 = arith.constant 0 : i32
    %c0_i32_0 = arith.constant 0 : i32
    %c0_i32_1 = arith.constant 0 : i32
    return %c0_i32, %c0_i32_0 : i32, i32
  }
  func.func @transform_28(%arg0: i32) -> (i32, i32) {
    %c0_i32 = arith.constant 0 : i32
    %c0_i32_0 = arith.constant 0 : i32
    %c0_i32_1 = arith.constant 0 : i32
    return %c0_i32, %c0_i32_0 : i32, i32
  }
  func.func @transform_29(%arg0: i32) -> (i32, i32, i32) {
    %c0_i32 = arith.constant 0 : i32
    %c0_i32_0 = arith.constant 0 : i32
    %c0_i32_1 = arith.constant 0 : i32
    return %arg0, %c0_i32, %c0_i32_0 : i32, i32, i32
  }
  func.func @transform_30(%arg0: i32) -> (i32, i32, i32) {
    %c0_i32 = arith.constant 0 : i32
    %c0_i32_0 = arith.constant 0 : i32
    %c0_i32_1 = arith.constant 0 : i32
    return %arg0, %c0_i32, %c0_i32_0 : i32, i32, i32
  }
  func.func @transform_31(%arg0: i32) -> (i32, i32, i32) {
    %c0_i32 = arith.constant 0 : i32
    %c0_i32_0 = arith.constant 0 : i32
    %c0_i32_1 = arith.constant 0 : i32
    return %arg0, %c0_i32, %c0_i32_0 : i32, i32, i32
  }
}

</mosaic_0001>

<llo_original>
// kernel: actor_critic_forward.1
$region0: #{actor_critic_forward.1}
  #allocation0 [shape = 'u32[]', space=smem, size = 0x4, offset = 0x4, fixed_abs, tag = 'smem constant byte address 0x4 - core index']
  #allocation1 [shape = 'u32[144,128]{1,0:T(1,128)}', space=vmem, size = 0x12000, scoped, tag = 'internal scratch']
  %s0 = inlined_call_operand.smem [shape: u32[32], index: -1, kind: input, shape index: {}]
  %s1 = sld [smem:[%s0]]
  %s2 = scalar_lea.smem %s0, 1
  %s3 = sld [smem:[%s2]]
  %s4 = scalar_lea.smem %s0, 2
  %s5 = sld [smem:[%s4]]
  %s6 = scalar_lea.smem %s0, 3
  %s7 = sld [smem:[%s6]]
  %s8 = scalar_lea.smem %s0, 4
  %s9 = sld [smem:[%s8]]
  %s10 = scalar_lea.smem %s0, 5
  %s11 = sld [smem:[%s10]]
  %s12 = scalar_lea.smem %s0, 6
  %s13 = sld [smem:[%s12]]
  %s14 = scalar_lea.smem %s0, 7
  %s15 = sld [smem:[%s14]]
  %s16 = scalar_lea.smem %s0, 8
  %s17 = sld [smem:[%s16]]
  %s18 = scalar_lea.smem %s0, 9
  %s19 = sld [smem:[%s18]]
  %s20 = scalar_lea.smem %s0, 10
  %s21 = sld [smem:[%s20]]
  %s22 = scalar_lea.smem %s0, 11
  %s23 = sld [smem:[%s22]]
  %s24 = scalar_lea.smem %s0, 12
  %s25 = sld [smem:[%s24]]
  %s26 = scalar_lea.smem %s0, 13
  %s27 = sld [smem:[%s26]]
  %s28 = scalar_lea.smem %s0, 14
  %s29 = sld [smem:[%s28]]
  %s30 = scalar_lea.smem %s0, 15
  %s31 = sld [smem:[%s30]]
  %s32 = scalar_lea.smem %s0, 16
  %s33 = sld [smem:[%s32]]
  %s34 = scalar_lea.smem %s0, 17
  %s35 = sld [smem:[%s34]]
  %s36 = scalar_lea.smem %s0, 18
  %s37 = sld [smem:[%s36]]
  %s38 = scalar_lea.smem %s0, 19
  %s39 = sld [smem:[%s38]]
  %s40 = scalar_lea.smem %s0, 20
  %s41 = sld [smem:[%s40]]
  %s42 = scalar_lea.smem %s0, 21
  %s43 = sld [smem:[%s42]]
  %s44 = scalar_lea.smem %s0, 22
  %s45 = sld [smem:[%s44]]
  %s46 = scalar_lea.smem %s0, 23
  %s47 = sld [smem:[%s46]]
  %s48 = scalar_lea.smem %s0, 24
  %s49 = sld [smem:[%s48]]
  %s50 = scalar_lea.smem %s0, 25
  %s51 = sld [smem:[%s50]]
  %s52 = scalar_lea.smem %s0, 26
  %s53 = sld [smem:[%s52]]
  %s54 = scalar_lea.smem %s0, 27
  %s55 = sld [smem:[%s54]]
  %s56 = scalar_lea.smem %s0, 28
  %s57 = sld [smem:[%s56]]
  %s58 = scalar_lea.smem %s0, 29
  %s59 = sld [smem:[%s58]]
  %s60 = scalar_lea.smem %s0, 30
  %s61 = sld [smem:[%s60]]
  %s62 = scalar_lea.smem %s0, 31
  %s63 = sld [smem:[%s62]]
  %64 = xla_tuple %s59, %s61, %s63
  %s65 = sld [smem:[#allocation0]]
  $region165: #{actor_critic_forward.1} parent=0
    _
  %s67 = ssub.s32 1, %s65
  %s68 = scalar_select 0, %s67, %s65
  loop: start=0, step=1, limit=4
  $region2: #{actor_critic_forward.1} parent=0 // loop_pre_header
    _
  $region3: #{actor_critic_forward.1} parent=0 // loop_header
    %s70 = sphi 0, %s74
    %p71 = scmp.ge.s32.totalorder %s70, 4
    %s80 = sphi 0, %s82
    %s83 = sphi 0, %s80
    %s84 = sphi 0, %s83
    %s100 = sphi 0, %s84
    %s104 = sphi 0, %s104
    %s106 = sphi 0, %s104
    %s107 = sphi 0, %s106
    %s121 = sphi 0, %s107
    %s125 = sphi 0, %s125
    %s127 = sphi 0, %s125
    %s128 = sphi 0, %s127
    %s142 = sphi 0, %s128
    %s146 = sphi 0, %s146
    %s148 = sphi 0, %s146
    %s149 = sphi 0, %s148
    %s163 = sphi 0, %s149
    %s167 = sphi 0, %s167
    %s169 = sphi 0, %s167
    %s170 = sphi 0, %s169
    %s184 = sphi 0, %s170
    %s188 = sphi 0, %s188
    %s190 = sphi 0, %s188
    %s191 = sphi 0, %s190
    %s205 = sphi 0, %s191
    %s209 = sphi 0, %s209
    %s211 = sphi 0, %s209
    %s212 = sphi 0, %s211
    %s226 = sphi 0, %s212
    %s230 = sphi 0, %s230
    %s232 = sphi 0, %s230
    %s233 = sphi 0, %s232
    %s247 = sphi 0, %s233
    %s251 = sphi 0, %s251
    %s253 = sphi 0, %s251
    %s254 = sphi 0, %s253
    %s268 = sphi 0, %s254
    %s272 = sphi 0, %s272
    %s274 = sphi 0, %s272
    %s275 = sphi 0, %s274
    %s289 = sphi 0, %s275
    %s293 = sphi 0, %s293
    %s295 = sphi 0, %s293
    %s296 = sphi 0, %s295
    %s310 = sphi 0, %s296
    %s314 = sphi 0, %s314
    %s316 = sphi 0, %s314
    %s317 = sphi 0, %s316
    %s331 = sphi 0, %s317
    %s335 = sphi 0, %s335
    %s337 = sphi 0, %s335
    %s338 = sphi 0, %s337
    %s352 = sphi 0, %s338
    %s356 = sphi 0, %s356
    %s358 = sphi 0, %s356
    %s359 = sphi 0, %s358
    %s373 = sphi 0, %s359
    %s377 = sphi 0, %s377
    %s379 = sphi 0, %s377
    %s380 = sphi 0, %s379
    %s394 = sphi 0, %s380
    %s398 = sphi 0, %s398
    %s400 = sphi 0, %s398
    %s401 = sphi 0, %s400
    %s415 = sphi 0, %s401
    %s419 = sphi 0, %s419
    %s421 = sphi 0, %s419
    %s422 = sphi 0, %s421
    %s436 = sphi 0, %s422
    %s440 = sphi 0, %s440
    %s442 = sphi 0, %s440
    %s443 = sphi 0, %s442
    %s457 = sphi 0, %s443
    %s461 = sphi 0, %s461
    %s463 = sphi 0, %s461
    %s464 = sphi 0, %s463
    %s478 = sphi 0, %s464
    %s482 = sphi 0, %s482
    %s484 = sphi 0, %s482
    %s485 = sphi 0, %s484
    %s499 = sphi 0, %s485
    %s503 = sphi 0, %s503
    %s505 = sphi 0, %s503
    %s506 = sphi 0, %s505
    %s520 = sphi 0, %s506
    %s524 = sphi 0, %s524
    %s526 = sphi 0, %s524
    %s527 = sphi 0, %s526
    %s541 = sphi 0, %s527
    %s545 = sphi 0, %s545
    %s547 = sphi 0, %s545
    %s548 = sphi 0, %s547
    %s562 = sphi 0, %s548
    %s566 = sphi 0, %s566
    %s568 = sphi 0, %s566
    %s569 = sphi 0, %s568
    %s583 = sphi 0, %s569
    %s587 = sphi 0, %s587
    %s589 = sphi 0, %s587
    %s590 = sphi 0, %s589
    %s604 = sphi 0, %s590
    %s610 = sphi 0, %s612
    %s613 = sphi 0, %s610
    %s614 = sphi 0, %s613
    %s630 = sphi 0, %s614
    %s636 = sphi 0, %s638
    %s639 = sphi 0, %s636
    %s640 = sphi 0, %s639
    %s656 = sphi 0, %s640
    %s660 = sphi 0, %s660
    %s662 = sphi 0, %s660
    %s663 = sphi 0, %s662
    %s677 = sphi 0, %s663
    %s681 = sphi 0, %s681
    %s683 = sphi 0, %s681
    %s684 = sphi 0, %s683
    %s698 = sphi 0, %s684
    %s704 = sphi 0, %s706
    %s707 = sphi 0, %s704
    %s708 = sphi 0, %s707
    %s724 = sphi 0, %s708
    %s730 = sphi 0, %s732
    %s733 = sphi 0, %s730
    %s734 = sphi 0, %s733
    %s750 = sphi 0, %s734
    %s756 = sphi 0, %s758
    %s759 = sphi 0, %s756
    %s760 = sphi 0, %s759
    %s776 = sphi 0, %s760
  $region4: #{actor_critic_forward.1} parent=0 // loop_header_branch
    %73 = sbr.rel (%p71) target = $region8
  $region5: #{actor_critic_forward.1} parent=0 // loop_body
    %s75 = ssub.s32 %s70, 1
    %s76 = ssub.s32 %s70, 2
    %s77 = sadd.s32 %s70, 1
    %s78 = ssub.s32 %s70, %s77
    %p79 = scmp.eq.s32.totalorder %s78, 0
    %s81 = sadd.s32 %s80, 1
    %s82 = scalar_select %p79, %s80, %s81
    %p85 = pneg %p79
    %p86 = scmp.eq.s32.totalorder %s70, 1
    %p87 = por %p85, %p86
    %p88 = scmp.ne.s32.totalorder %s80, %s83
    %p89 = scmp.eq.s32.totalorder %s70, 0
    %p90 = por %p88, %p89
    %p91 = scmp.ne.s32.totalorder %s80, %s83
    %p92 = scmp.eq.s32.totalorder %s75, 1
    %p93 = por %p91, %p92
    %p94 = scmp.ne.s32.totalorder %s83, %s84
    %p95 = scmp.eq.s32.totalorder %s75, 0
    %p96 = por %p94, %p95
    %p97 = scmp.ne.s32.totalorder %s83, %s84
    %p98 = scmp.eq.s32.totalorder %s76, 1
    %p99 = por %p97, %p98
    %p101 = scmp.ne.s32.totalorder %s84, %s100
    %p102 = scmp.eq.s32.totalorder %s76, 0
    %p103 = por %p101, %p102
    %s105 = sadd.s32 %s104, 1
    %p108 = scmp.eq.s32.totalorder %s70, 1
    %p109 = scmp.ne.s32.totalorder %s104, %s106
    %p110 = scmp.eq.s32.totalorder %s70, 0
    %p111 = por %p109, %p110
    %p112 = scmp.ne.s32.totalorder %s104, %s106
    %p113 = scmp.eq.s32.totalorder %s75, 1
    %p114 = por %p112, %p113
    %p115 = scmp.ne.s32.totalorder %s106, %s107
    %p116 = scmp.eq.s32.totalorder %s75, 0
    %p117 = por %p115, %p116
    %p118 = scmp.ne.s32.totalorder %s106, %s107
    %p119 = scmp.eq.s32.totalorder %s76, 1
    %p120 = por %p118, %p119
    %p122 = scmp.ne.s32.totalorder %s107, %s121
    %p123 = scmp.eq.s32.totalorder %s76, 0
    %p124 = por %p122, %p123
    %s126 = sadd.s32 %s125, 1
    %p129 = scmp.eq.s32.totalorder %s70, 1
    %p130 = scmp.ne.s32.totalorder %s125, %s127
    %p131 = scmp.eq.s32.totalorder %s70, 0
    %p132 = por %p130, %p131
    %p133 = scmp.ne.s32.totalorder %s125, %s127
    %p134 = scmp.eq.s32.totalorder %s75, 1
    %p135 = por %p133, %p134
    %p136 = scmp.ne.s32.totalorder %s127, %s128
    %p137 = scmp.eq.s32.totalorder %s75, 0
    %p138 = por %p136, %p137
    %p139 = scmp.ne.s32.totalorder %s127, %s128
    %p140 = scmp.eq.s32.totalorder %s76, 1
    %p141 = por %p139, %p140
    %p143 = scmp.ne.s32.totalorder %s128, %s142
    %p144 = scmp.eq.s32.totalorder %s76, 0
    %p145 = por %p143, %p144
    %s147 = sadd.s32 %s146, 1
    %p150 = scmp.eq.s32.totalorder %s70, 1
    %p151 = scmp.ne.s32.totalorder %s146, %s148
    %p152 = scmp.eq.s32.totalorder %s70, 0
    %p153 = por %p151, %p152
    %p154 = scmp.ne.s32.totalorder %s146, %s148
    %p155 = scmp.eq.s32.totalorder %s75, 1
    %p156 = por %p154, %p155
    %p157 = scmp.ne.s32.totalorder %s148, %s149
    %p158 = scmp.eq.s32.totalorder %s75, 0
    %p159 = por %p157, %p158
    %p160 = scmp.ne.s32.totalorder %s148, %s149
    %p161 = scmp.eq.s32.totalorder %s76, 1
    %p162 = por %p160, %p161
    %p164 = scmp.ne.s32.totalorder %s149, %s163
    %p165 = scmp.eq.s32.totalorder %s76, 0
    %p166 = por %p164, %p165
    %s168 = sadd.s32 %s167, 1
    %p171 = scmp.eq.s32.totalorder %s70, 1
    %p172 = scmp.ne.s32.totalorder %s167, %s169
    %p173 = scmp.eq.s32.totalorder %s70, 0
    %p174 = por %p172, %p173
    %p175 = scmp.ne.s32.totalorder %s167, %s169
    %p176 = scmp.eq.s32.totalorder %s75, 1
    %p177 = por %p175, %p176
    %p178 = scmp.ne.s32.totalorder %s169, %s170
    %p179 = scmp.eq.s32.totalorder %s75, 0
    %p180 = por %p178, %p179
    %p181 = scmp.ne.s32.totalorder %s169, %s170
    %p182 = scmp.eq.s32.totalorder %s76, 1
    %p183 = por %p181, %p182
    %p185 = scmp.ne.s32.totalorder %s170, %s184
    %p186 = scmp.eq.s32.totalorder %s76, 0
    %p187 = por %p185, %p186
    %s189 = sadd.s32 %s188, 1
    %p192 = scmp.eq.s32.totalorder %s70, 1
    %p193 = scmp.ne.s32.totalorder %s188, %s190
    %p194 = scmp.eq.s32.totalorder %s70, 0
    %p195 = por %p193, %p194
    %p196 = scmp.ne.s32.totalorder %s188, %s190
    %p197 = scmp.eq.s32.totalorder %s75, 1
    %p198 = por %p196, %p197
    %p199 = scmp.ne.s32.totalorder %s190, %s191
    %p200 = scmp.eq.s32.totalorder %s75, 0
    %p201 = por %p199, %p200
    %p202 = scmp.ne.s32.totalorder %s190, %s191
    %p203 = scmp.eq.s32.totalorder %s76, 1
    %p204 = por %p202, %p203
    %p206 = scmp.ne.s32.totalorder %s191, %s205
    %p207 = scmp.eq.s32.totalorder %s76, 0
    %p208 = por %p206, %p207
    %s210 = sadd.s32 %s209, 1
    %p213 = scmp.eq.s32.totalorder %s70, 1
    %p214 = scmp.ne.s32.totalorder %s209, %s211
    %p215 = scmp.eq.s32.totalorder %s70, 0
    %p216 = por %p214, %p215
    %p217 = scmp.ne.s32.totalorder %s209, %s211
    %p218 = scmp.eq.s32.totalorder %s75, 1
    %p219 = por %p217, %p218
    %p220 = scmp.ne.s32.totalorder %s211, %s212
    %p221 = scmp.eq.s32.totalorder %s75, 0
    %p222 = por %p220, %p221
    %p223 = scmp.ne.s32.totalorder %s211, %s212
    %p224 = scmp.eq.s32.totalorder %s76, 1
    %p225 = por %p223, %p224
    %p227 = scmp.ne.s32.totalorder %s212, %s226
    %p228 = scmp.eq.s32.totalorder %s76, 0
    %p229 = por %p227, %p228
    %s231 = sadd.s32 %s230, 1
    %p234 = scmp.eq.s32.totalorder %s70, 1
    %p235 = scmp.ne.s32.totalorder %s230, %s232
    %p236 = scmp.eq.s32.totalorder %s70, 0
    %p237 = por %p235, %p236
    %p238 = scmp.ne.s32.totalorder %s230, %s232
    %p239 = scmp.eq.s32.totalorder %s75, 1
    %p240 = por %p238, %p239
    %p241 = scmp.ne.s32.totalorder %s232, %s233
    %p242 = scmp.eq.s32.totalorder %s75, 0
    %p243 = por %p241, %p242
    %p244 = scmp.ne.s32.totalorder %s232, %s233
    %p245 = scmp.eq.s32.totalorder %s76, 1
    %p246 = por %p244, %p245
    %p248 = scmp.ne.s32.totalorder %s233, %s247
    %p249 = scmp.eq.s32.totalorder %s76, 0
    %p250 = por %p248, %p249
    %s252 = sadd.s32 %s251, 1
    %p255 = scmp.eq.s32.totalorder %s70, 1
    %p256 = scmp.ne.s32.totalorder %s251, %s253
    %p257 = scmp.eq.s32.totalorder %s70, 0
    %p258 = por %p256, %p257
    %p259 = scmp.ne.s32.totalorder %s251, %s253
    %p260 = scmp.eq.s32.totalorder %s75, 1
    %p261 = por %p259, %p260
    %p262 = scmp.ne.s32.totalorder %s253, %s254
    %p263 = scmp.eq.s32.totalorder %s75, 0
    %p264 = por %p262, %p263
    %p265 = scmp.ne.s32.totalorder %s253, %s254
    %p266 = scmp.eq.s32.totalorder %s76, 1
    %p267 = por %p265, %p266
    %p269 = scmp.ne.s32.totalorder %s254, %s268
    %p270 = scmp.eq.s32.totalorder %s76, 0
    %p271 = por %p269, %p270
    %s273 = sadd.s32 %s272, 1
    %p276 = scmp.eq.s32.totalorder %s70, 1
    %p277 = scmp.ne.s32.totalorder %s272, %s274
    %p278 = scmp.eq.s32.totalorder %s70, 0
    %p279 = por %p277, %p278
    %p280 = scmp.ne.s32.totalorder %s272, %s274
    %p281 = scmp.eq.s32.totalorder %s75, 1
    %p282 = por %p280, %p281
    %p283 = scmp.ne.s32.totalorder %s274, %s275
    %p284 = scmp.eq.s32.totalorder %s75, 0
    %p285 = por %p283, %p284
    %p286 = scmp.ne.s32.totalorder %s274, %s275
    %p287 = scmp.eq.s32.totalorder %s76, 1
    %p288 = por %p286, %p287
    %p290 = scmp.ne.s32.totalorder %s275, %s289
    %p291 = scmp.eq.s32.totalorder %s76, 0
    %p292 = por %p290, %p291
    %s294 = sadd.s32 %s293, 1
    %p297 = scmp.eq.s32.totalorder %s70, 1
    %p298 = scmp.ne.s32.totalorder %s293, %s295
    %p299 = scmp.eq.s32.totalorder %s70, 0
    %p300 = por %p298, %p299
    %p301 = scmp.ne.s32.totalorder %s293, %s295
    %p302 = scmp.eq.s32.totalorder %s75, 1
    %p303 = por %p301, %p302
    %p304 = scmp.ne.s32.totalorder %s295, %s296
    %p305 = scmp.eq.s32.totalorder %s75, 0
    %p306 = por %p304, %p305
    %p307 = scmp.ne.s32.totalorder %s295, %s296
    %p308 = scmp.eq.s32.totalorder %s76, 1
    %p309 = por %p307, %p308
    %p311 = scmp.ne.s32.totalorder %s296, %s310
    %p312 = scmp.eq.s32.totalorder %s76, 0
    %p313 = por %p311, %p312
    %s315 = sadd.s32 %s314, 1
    %p318 = scmp.eq.s32.totalorder %s70, 1
    %p319 = scmp.ne.s32.totalorder %s314, %s316
    %p320 = scmp.eq.s32.totalorder %s70, 0
    %p321 = por %p319, %p320
    %p322 = scmp.ne.s32.totalorder %s314, %s316
    %p323 = scmp.eq.s32.totalorder %s75, 1
    %p324 = por %p322, %p323
    %p325 = scmp.ne.s32.totalorder %s316, %s317
    %p326 = scmp.eq.s32.totalorder %s75, 0
    %p327 = por %p325, %p326
    %p328 = scmp.ne.s32.totalorder %s316, %s317
    %p329 = scmp.eq.s32.totalorder %s76, 1
    %p330 = por %p328, %p329
    %p332 = scmp.ne.s32.totalorder %s317, %s331
    %p333 = scmp.eq.s32.totalorder %s76, 0
    %p334 = por %p332, %p333
    %s336 = sadd.s32 %s335, 1
    %p339 = scmp.eq.s32.totalorder %s70, 1
    %p340 = scmp.ne.s32.totalorder %s335, %s337
    %p341 = scmp.eq.s32.totalorder %s70, 0
    %p342 = por %p340, %p341
    %p343 = scmp.ne.s32.totalorder %s335, %s337
    %p344 = scmp.eq.s32.totalorder %s75, 1
    %p345 = por %p343, %p344
    %p346 = scmp.ne.s32.totalorder %s337, %s338
    %p347 = scmp.eq.s32.totalorder %s75, 0
    %p348 = por %p346, %p347
    %p349 = scmp.ne.s32.totalorder %s337, %s338
    %p350 = scmp.eq.s32.totalorder %s76, 1
    %p351 = por %p349, %p350
    %p353 = scmp.ne.s32.totalorder %s338, %s352
    %p354 = scmp.eq.s32.totalorder %s76, 0
    %p355 = por %p353, %p354
    %s357 = sadd.s32 %s356, 1
    %p360 = scmp.eq.s32.totalorder %s70, 1
    %p361 = scmp.ne.s32.totalorder %s356, %s358
    %p362 = scmp.eq.s32.totalorder %s70, 0
    %p363 = por %p361, %p362
    %p364 = scmp.ne.s32.totalorder %s356, %s358
    %p365 = scmp.eq.s32.totalorder %s75, 1
    %p366 = por %p364, %p365
    %p367 = scmp.ne.s32.totalorder %s358, %s359
    %p368 = scmp.eq.s32.totalorder %s75, 0
    %p369 = por %p367, %p368
    %p370 = scmp.ne.s32.totalorder %s358, %s359
    %p371 = scmp.eq.s32.totalorder %s76, 1
    %p372 = por %p370, %p371
    %p374 = scmp.ne.s32.totalorder %s359, %s373
    %p375 = scmp.eq.s32.totalorder %s76, 0
    %p376 = por %p374, %p375
    %s378 = sadd.s32 %s377, 1
    %p381 = scmp.eq.s32.totalorder %s70, 1
    %p382 = scmp.ne.s32.totalorder %s377, %s379
    %p383 = scmp.eq.s32.totalorder %s70, 0
    %p384 = por %p382, %p383
    %p385 = scmp.ne.s32.totalorder %s377, %s379
    %p386 = scmp.eq.s32.totalorder %s75, 1
    %p387 = por %p385, %p386
    %p388 = scmp.ne.s32.totalorder %s379, %s380
    %p389 = scmp.eq.s32.totalorder %s75, 0
    %p390 = por %p388, %p389
    %p391 = scmp.ne.s32.totalorder %s379, %s380
    %p392 = scmp.eq.s32.totalorder %s76, 1
    %p393 = por %p391, %p392
    %p395 = scmp.ne.s32.totalorder %s380, %s394
    %p396 = scmp.eq.s32.totalorder %s76, 0
    %p397 = por %p395, %p396
    %s399 = sadd.s32 %s398, 1
    %p402 = scmp.eq.s32.totalorder %s70, 1
    %p403 = scmp.ne.s32.totalorder %s398, %s400
    %p404 = scmp.eq.s32.totalorder %s70, 0
    %p405 = por %p403, %p404
    %p406 = scmp.ne.s32.totalorder %s398, %s400
    %p407 = scmp.eq.s32.totalorder %s75, 1
    %p408 = por %p406, %p407
    %p409 = scmp.ne.s32.totalorder %s400, %s401
    %p410 = scmp.eq.s32.totalorder %s75, 0
    %p411 = por %p409, %p410
    %p412 = scmp.ne.s32.totalorder %s400, %s401
    %p413 = scmp.eq.s32.totalorder %s76, 1
    %p414 = por %p412, %p413
    %p416 = scmp.ne.s32.totalorder %s401, %s415
    %p417 = scmp.eq.s32.totalorder %s76, 0
    %p418 = por %p416, %p417
    %s420 = sadd.s32 %s419, 1
    %p423 = scmp.eq.s32.totalorder %s70, 1
    %p424 = scmp.ne.s32.totalorder %s419, %s421
    %p425 = scmp.eq.s32.totalorder %s70, 0
    %p426 = por %p424, %p425
    %p427 = scmp.ne.s32.totalorder %s419, %s421
    %p428 = scmp.eq.s32.totalorder %s75, 1
    %p429 = por %p427, %p428
    %p430 = scmp.ne.s32.totalorder %s421, %s422
    %p431 = scmp.eq.s32.totalorder %s75, 0
    %p432 = por %p430, %p431
    %p433 = scmp.ne.s32.totalorder %s421, %s422
    %p434 = scmp.eq.s32.totalorder %s76, 1
    %p435 = por %p433, %p434
    %p437 = scmp.ne.s32.totalorder %s422, %s436
    %p438 = scmp.eq.s32.totalorder %s76, 0
    %p439 = por %p437, %p438
    %s441 = sadd.s32 %s440, 1
    %p444 = scmp.eq.s32.totalorder %s70, 1
    %p445 = scmp.ne.s32.totalorder %s440, %s442
    %p446 = scmp.eq.s32.totalorder %s70, 0
    %p447 = por %p445, %p446
    %p448 = scmp.ne.s32.totalorder %s440, %s442
    %p449 = scmp.eq.s32.totalorder %s75, 1
    %p450 = por %p448, %p449
    %p451 = scmp.ne.s32.totalorder %s442, %s443
    %p452 = scmp.eq.s32.totalorder %s75, 0
    %p453 = por %p451, %p452
    %p454 = scmp.ne.s32.totalorder %s442, %s443
    %p455 = scmp.eq.s32.totalorder %s76, 1
    %p456 = por %p454, %p455
    %p458 = scmp.ne.s32.totalorder %s443, %s457
    %p459 = scmp.eq.s32.totalorder %s76, 0
    %p460 = por %p458, %p459
    %s462 = sadd.s32 %s461, 1
    %p465 = scmp.eq.s32.totalorder %s70, 1
    %p466 = scmp.ne.s32.totalorder %s461, %s463
    %p467 = scmp.eq.s32.totalorder %s70, 0
    %p468 = por %p466, %p467
    %p469 = scmp.ne.s32.totalorder %s461, %s463
    %p470 = scmp.eq.s32.totalorder %s75, 1
    %p471 = por %p469, %p470
    %p472 = scmp.ne.s32.totalorder %s463, %s464
    %p473 = scmp.eq.s32.totalorder %s75, 0
    %p474 = por %p472, %p473
    %p475 = scmp.ne.s32.totalorder %s463, %s464
    %p476 = scmp.eq.s32.totalorder %s76, 1
    %p477 = por %p475, %p476
    %p479 = scmp.ne.s32.totalorder %s464, %s478
    %p480 = scmp.eq.s32.totalorder %s76, 0
    %p481 = por %p479, %p480
    %s483 = sadd.s32 %s482, 1
    %p486 = scmp.eq.s32.totalorder %s70, 1
    %p487 = scmp.ne.s32.totalorder %s482, %s484
    %p488 = scmp.eq.s32.totalorder %s70, 0
    %p489 = por %p487, %p488
    %p490 = scmp.ne.s32.totalorder %s482, %s484
    %p491 = scmp.eq.s32.totalorder %s75, 1
    %p492 = por %p490, %p491
    %p493 = scmp.ne.s32.totalorder %s484, %s485
    %p494 = scmp.eq.s32.totalorder %s75, 0
    %p495 = por %p493, %p494
    %p496 = scmp.ne.s32.totalorder %s484, %s485
    %p497 = scmp.eq.s32.totalorder %s76, 1
    %p498 = por %p496, %p497
    %p500 = scmp.ne.s32.totalorder %s485, %s499
    %p501 = scmp.eq.s32.totalorder %s76, 0
    %p502 = por %p500, %p501
    %s504 = sadd.s32 %s503, 1
    %p507 = scmp.eq.s32.totalorder %s70, 1
    %p508 = scmp.ne.s32.totalorder %s503, %s505
    %p509 = scmp.eq.s32.totalorder %s70, 0
    %p510 = por %p508, %p509
    %p511 = scmp.ne.s32.totalorder %s503, %s505
    %p512 = scmp.eq.s32.totalorder %s75, 1
    %p513 = por %p511, %p512
    %p514 = scmp.ne.s32.totalorder %s505, %s506
    %p515 = scmp.eq.s32.totalorder %s75, 0
    %p516 = por %p514, %p515
    %p517 = scmp.ne.s32.totalorder %s505, %s506
    %p518 = scmp.eq.s32.totalorder %s76, 1
    %p519 = por %p517, %p518
    %p521 = scmp.ne.s32.totalorder %s506, %s520
    %p522 = scmp.eq.s32.totalorder %s76, 0
    %p523 = por %p521, %p522
    %s525 = sadd.s32 %s524, 1
    %p528 = scmp.eq.s32.totalorder %s70, 1
    %p529 = scmp.ne.s32.totalorder %s524, %s526
    %p530 = scmp.eq.s32.totalorder %s70, 0
    %p531 = por %p529, %p530
    %p532 = scmp.ne.s32.totalorder %s524, %s526
    %p533 = scmp.eq.s32.totalorder %s75, 1
    %p534 = por %p532, %p533
    %p535 = scmp.ne.s32.totalorder %s526, %s527
    %p536 = scmp.eq.s32.totalorder %s75, 0
    %p537 = por %p535, %p536
    %p538 = scmp.ne.s32.totalorder %s526, %s527
    %p539 = scmp.eq.s32.totalorder %s76, 1
    %p540 = por %p538, %p539
    %p542 = scmp.ne.s32.totalorder %s527, %s541
    %p543 = scmp.eq.s32.totalorder %s76, 0
    %p544 = por %p542, %p543
    %s546 = sadd.s32 %s545, 1
    %p549 = scmp.eq.s32.totalorder %s70, 1
    %p550 = scmp.ne.s32.totalorder %s545, %s547
    %p551 = scmp.eq.s32.totalorder %s70, 0
    %p552 = por %p550, %p551
    %p553 = scmp.ne.s32.totalorder %s545, %s547
    %p554 = scmp.eq.s32.totalorder %s75, 1
    %p555 = por %p553, %p554
    %p556 = scmp.ne.s32.totalorder %s547, %s548
    %p557 = scmp.eq.s32.totalorder %s75, 0
    %p558 = por %p556, %p557
    %p559 = scmp.ne.s32.totalorder %s547, %s548
    %p560 = scmp.eq.s32.totalorder %s76, 1
    %p561 = por %p559, %p560
    %p563 = scmp.ne.s32.totalorder %s548, %s562
    %p564 = scmp.eq.s32.totalorder %s76, 0
    %p565 = por %p563, %p564
    %s567 = sadd.s32 %s566, 1
    %p570 = scmp.eq.s32.totalorder %s70, 1
    %p571 = scmp.ne.s32.totalorder %s566, %s568
    %p572 = scmp.eq.s32.totalorder %s70, 0
    %p573 = por %p571, %p572
    %p574 = scmp.ne.s32.totalorder %s566, %s568
    %p575 = scmp.eq.s32.totalorder %s75, 1
    %p576 = por %p574, %p575
    %p577 = scmp.ne.s32.totalorder %s568, %s569
    %p578 = scmp.eq.s32.totalorder %s75, 0
    %p579 = por %p577, %p578
    %p580 = scmp.ne.s32.totalorder %s568, %s569
    %p581 = scmp.eq.s32.totalorder %s76, 1
    %p582 = por %p580, %p581
    %p584 = scmp.ne.s32.totalorder %s569, %s583
    %p585 = scmp.eq.s32.totalorder %s76, 0
    %p586 = por %p584, %p585
    %s588 = sadd.s32 %s587, 1
    %p591 = scmp.eq.s32.totalorder %s70, 1
    %p592 = scmp.ne.s32.totalorder %s587, %s589
    %p593 = scmp.eq.s32.totalorder %s70, 0
    %p594 = por %p592, %p593
    %p595 = scmp.ne.s32.totalorder %s587, %s589
    %p596 = scmp.eq.s32.totalorder %s75, 1
    %p597 = por %p595, %p596
    %p598 = scmp.ne.s32.totalorder %s589, %s590
    %p599 = scmp.eq.s32.totalorder %s75, 0
    %p600 = por %p598, %p599
    %p601 = scmp.ne.s32.totalorder %s589, %s590
    %p602 = scmp.eq.s32.totalorder %s76, 1
    %p603 = por %p601, %p602
    %p605 = scmp.ne.s32.totalorder %s590, %s604
    %p606 = scmp.eq.s32.totalorder %s76, 0
    %p607 = por %p605, %p606
    %s608 = ssub.s32 %s70, %s77
    %p609 = scmp.eq.s32.totalorder %s608, 0
    %s611 = sadd.s32 %s610, 1
    %s612 = scalar_select %p609, %s610, %s611
    %p615 = pneg %p609
    %p616 = scmp.eq.s32.totalorder %s70, 1
    %p617 = por %p615, %p616
    %p618 = scmp.ne.s32.totalorder %s610, %s613
    %p619 = scmp.eq.s32.totalorder %s70, 0
    %p620 = por %p618, %p619
    %p621 = scmp.ne.s32.totalorder %s610, %s613
    %p622 = scmp.eq.s32.totalorder %s75, 1
    %p623 = por %p621, %p622
    %p624 = scmp.ne.s32.totalorder %s613, %s614
    %p625 = scmp.eq.s32.totalorder %s75, 0
    %p626 = por %p624, %p625
    %p627 = scmp.ne.s32.totalorder %s613, %s614
    %p628 = scmp.eq.s32.totalorder %s76, 1
    %p629 = por %p627, %p628
    %p631 = scmp.ne.s32.totalorder %s614, %s630
    %p632 = scmp.eq.s32.totalorder %s76, 0
    %p633 = por %p631, %p632
    %s634 = ssub.s32 %s70, %s77
    %p635 = scmp.eq.s32.totalorder %s634, 0
    %s637 = sadd.s32 %s636, 1
    %s638 = scalar_select %p635, %s636, %s637
    %p641 = pneg %p635
    %p642 = scmp.eq.s32.totalorder %s70, 1
    %p643 = por %p641, %p642
    %p644 = scmp.ne.s32.totalorder %s636, %s639
    %p645 = scmp.eq.s32.totalorder %s70, 0
    %p646 = por %p644, %p645
    %p647 = scmp.ne.s32.totalorder %s636, %s639
    %p648 = scmp.eq.s32.totalorder %s75, 1
    %p649 = por %p647, %p648
    %p650 = scmp.ne.s32.totalorder %s639, %s640
    %p651 = scmp.eq.s32.totalorder %s75, 0
    %p652 = por %p650, %p651
    %p653 = scmp.ne.s32.totalorder %s639, %s640
    %p654 = scmp.eq.s32.totalorder %s76, 1
    %p655 = por %p653, %p654
    %p657 = scmp.ne.s32.totalorder %s640, %s656
    %p658 = scmp.eq.s32.totalorder %s76, 0
    %p659 = por %p657, %p658
    %s661 = sadd.s32 %s660, 1
    %p664 = scmp.eq.s32.totalorder %s70, 1
    %p665 = scmp.ne.s32.totalorder %s660, %s662
    %p666 = scmp.eq.s32.totalorder %s70, 0
    %p667 = por %p665, %p666
    %p668 = scmp.ne.s32.totalorder %s660, %s662
    %p669 = scmp.eq.s32.totalorder %s75, 1
    %p670 = por %p668, %p669
    %p671 = scmp.ne.s32.totalorder %s662, %s663
    %p672 = scmp.eq.s32.totalorder %s75, 0
    %p673 = por %p671, %p672
    %p674 = scmp.ne.s32.totalorder %s662, %s663
    %p675 = scmp.eq.s32.totalorder %s76, 1
    %p676 = por %p674, %p675
    %p678 = scmp.ne.s32.totalorder %s663, %s677
    %p679 = scmp.eq.s32.totalorder %s76, 0
    %p680 = por %p678, %p679
    %s682 = sadd.s32 %s681, 1
    %p685 = scmp.eq.s32.totalorder %s70, 1
    %p686 = scmp.ne.s32.totalorder %s681, %s683
    %p687 = scmp.eq.s32.totalorder %s70, 0
    %p688 = por %p686, %p687
    %p689 = scmp.ne.s32.totalorder %s681, %s683
    %p690 = scmp.eq.s32.totalorder %s75, 1
    %p691 = por %p689, %p690
    %p692 = scmp.ne.s32.totalorder %s683, %s684
    %p693 = scmp.eq.s32.totalorder %s75, 0
    %p694 = por %p692, %p693
    %p695 = scmp.ne.s32.totalorder %s683, %s684
    %p696 = scmp.eq.s32.totalorder %s76, 1
    %p697 = por %p695, %p696
    %p699 = scmp.ne.s32.totalorder %s684, %s698
    %p700 = scmp.eq.s32.totalorder %s76, 0
    %p701 = por %p699, %p700
    %s702 = ssub.s32 %s70, %s77
    %p703 = scmp.eq.s32.totalorder %s702, 0
    %s705 = sadd.s32 %s704, 1
    %s706 = scalar_select %p703, %s704, %s705
    %p709 = pneg %p703
    %p710 = scmp.eq.s32.totalorder %s70, 1
    %p711 = por %p709, %p710
    %p712 = scmp.ne.s32.totalorder %s704, %s707
    %p713 = scmp.eq.s32.totalorder %s70, 0
    %p714 = por %p712, %p713
    %p715 = scmp.ne.s32.totalorder %s704, %s707
    %p716 = scmp.eq.s32.totalorder %s75, 1
    %p717 = por %p715, %p716
    %p718 = scmp.ne.s32.totalorder %s707, %s708
    %p719 = scmp.eq.s32.totalorder %s75, 0
    %p720 = por %p718, %p719
    %p721 = scmp.ne.s32.totalorder %s707, %s708
    %p722 = scmp.eq.s32.totalorder %s76, 1
    %p723 = por %p721, %p722
    %p725 = scmp.ne.s32.totalorder %s708, %s724
    %p726 = scmp.eq.s32.totalorder %s76, 0
    %p727 = por %p725, %p726
    %s728 = ssub.s32 %s70, %s77
    %p729 = scmp.eq.s32.totalorder %s728, 0
    %s731 = sadd.s32 %s730, 1
    %s732 = scalar_select %p729, %s730, %s731
    %p735 = pneg %p729
    %p736 = scmp.eq.s32.totalorder %s70, 1
    %p737 = por %p735, %p736
    %p738 = scmp.ne.s32.totalorder %s730, %s733
    %p739 = scmp.eq.s32.totalorder %s70, 0
    %p740 = por %p738, %p739
    %p741 = scmp.ne.s32.totalorder %s730, %s733
    %p742 = scmp.eq.s32.totalorder %s75, 1
    %p743 = por %p741, %p742
    %p744 = scmp.ne.s32.totalorder %s733, %s734
    %p745 = scmp.eq.s32.totalorder %s75, 0
    %p746 = por %p744, %p745
    %p747 = scmp.ne.s32.totalorder %s733, %s734
    %p748 = scmp.eq.s32.totalorder %s76, 1
    %p749 = por %p747, %p748
    %p751 = scmp.ne.s32.totalorder %s734, %s750
    %p752 = scmp.eq.s32.totalorder %s76, 0
    %p753 = por %p751, %p752
    %s754 = ssub.s32 %s70, %s77
    %p755 = scmp.eq.s32.totalorder %s754, 0
    %s757 = sadd.s32 %s756, 1
    %s758 = scalar_select %p755, %s756, %s757
    %p761 = pneg %p755
    %p762 = scmp.eq.s32.totalorder %s70, 1
    %p763 = por %p761, %p762
    %p764 = scmp.ne.s32.totalorder %s756, %s759
    %p765 = scmp.eq.s32.totalorder %s70, 0
    %p766 = por %p764, %p765
    %p767 = scmp.ne.s32.totalorder %s756, %s759
    %p768 = scmp.eq.s32.totalorder %s75, 1
    %p769 = por %p767, %p768
    %p770 = scmp.ne.s32.totalorder %s759, %s760
    %p771 = scmp.eq.s32.totalorder %s75, 0
    %p772 = por %p770, %p771
    %p773 = scmp.ne.s32.totalorder %s759, %s760
    %p774 = scmp.eq.s32.totalorder %s76, 1
    %p775 = por %p773, %p774
    %p777 = scmp.ne.s32.totalorder %s760, %s776
    %p778 = scmp.eq.s32.totalorder %s76, 0
    %p779 = por %p777, %p778
    %p780 = scmp.le.s32.totalorder 1, %s70
    %p781 = scmp.lt.s32.totalorder %s70, 3
    %p782 = pnand %p780, %p781
    %p783 = pneg %p782
    // Predicated region
    $region9: #{actor_critic_forward.1} parent=5 // pred_check
      _
    $region10: #{actor_critic_forward.1} parent=5 // pred_check_branch
      %785 = sbr.rel (%p782) target = $region12
    $region11: #{actor_critic_forward.1} parent=5 // pred_region
      %s786 = ssub.s32 %s70, 1
      // Predicated region
      $region13: #{actor_critic_forward.1} parent=11 // pred_check
        %p787 = pneg %p117
      $region14: #{actor_critic_forward.1} parent=11 // pred_check_branch
        %789 = sbr.rel (%p787) target = $region16
      $region15: #{actor_critic_forward.1} parent=11 // pred_region
        _
      $region16: #{actor_critic_forward.1} parent=11 // pred_fallthru
        _
      // Predicated region
      $region17: #{actor_critic_forward.1} parent=11 // pred_check
        %p790 = pneg %p138
      $region18: #{actor_critic_forward.1} parent=11 // pred_check_branch
        %792 = sbr.rel (%p790) target = $region20
      $region19: #{actor_critic_forward.1} parent=11 // pred_region
        _
      $region20: #{actor_critic_forward.1} parent=11 // pred_fallthru
        _
      // Predicated region
      $region21: #{actor_critic_forward.1} parent=11 // pred_check
        %p793 = pneg %p159
      $region22: #{actor_critic_forward.1} parent=11 // pred_check_branch
        %795 = sbr.rel (%p793) target = $region24
      $region23: #{actor_critic_forward.1} parent=11 // pred_region
        _
      $region24: #{actor_critic_forward.1} parent=11 // pred_fallthru
        _
      // Predicated region
      $region25: #{actor_critic_forward.1} parent=11 // pred_check
        %p796 = pneg %p180
      $region26: #{actor_critic_forward.1} parent=11 // pred_check_branch
        %798 = sbr.rel (%p796) target = $region28
      $region27: #{actor_critic_forward.1} parent=11 // pred_region
        _
      $region28: #{actor_critic_forward.1} parent=11 // pred_fallthru
        _
      // Predicated region
      $region29: #{actor_critic_forward.1} parent=11 // pred_check
        %p799 = pneg %p201
      $region30: #{actor_critic_forward.1} parent=11 // pred_check_branch
        %801 = sbr.rel (%p799) target = $region32
      $region31: #{actor_critic_forward.1} parent=11 // pred_region
        _
      $region32: #{actor_critic_forward.1} parent=11 // pred_fallthru
        _
      // Predicated region
      $region33: #{actor_critic_forward.1} parent=11 // pred_check
        %p802 = pneg %p222
      $region34: #{actor_critic_forward.1} parent=11 // pred_check_branch
        %804 = sbr.rel (%p802) target = $region36
      $region35: #{actor_critic_forward.1} parent=11 // pred_region
        _
      $region36: #{actor_critic_forward.1} parent=11 // pred_fallthru
        _
      // Predicated region
      $region37: #{actor_critic_forward.1} parent=11 // pred_check
        %p805 = pneg %p243
      $region38: #{actor_critic_forward.1} parent=11 // pred_check_branch
        %807 = sbr.rel (%p805) target = $region40
      $region39: #{actor_critic_forward.1} parent=11 // pred_region
        _
      $region40: #{actor_critic_forward.1} parent=11 // pred_fallthru
        _
      // Predicated region
      $region41: #{actor_critic_forward.1} parent=11 // pred_check
        %p808 = pneg %p264
      $region42: #{actor_critic_forward.1} parent=11 // pred_check_branch
        %810 = sbr.rel (%p808) target = $region44
      $region43: #{actor_critic_forward.1} parent=11 // pred_region
        _
      $region44: #{actor_critic_forward.1} parent=11 // pred_fallthru
        _
      // Predicated region
      $region45: #{actor_critic_forward.1} parent=11 // pred_check
        %p811 = pneg %p285
      $region46: #{actor_critic_forward.1} parent=11 // pred_check_branch
        %813 = sbr.rel (%p811) target = $region48
      $region47: #{actor_critic_forward.1} parent=11 // pred_region
        _
      $region48: #{actor_critic_forward.1} parent=11 // pred_fallthru
        _
      // Predicated region
      $region49: #{actor_critic_forward.1} parent=11 // pred_check
        %p814 = pneg %p306
      $region50: #{actor_critic_forward.1} parent=11 // pred_check_branch
        %816 = sbr.rel (%p814) target = $region52
      $region51: #{actor_critic_forward.1} parent=11 // pred_region
        _
      $region52: #{actor_critic_forward.1} parent=11 // pred_fallthru
        _
      // Predicated region
      $region53: #{actor_critic_forward.1} parent=11 // pred_check
        %p817 = pneg %p327
      $region54: #{actor_critic_forward.1} parent=11 // pred_check_branch
        %819 = sbr.rel (%p817) target = $region56
      $region55: #{actor_critic_forward.1} parent=11 // pred_region
        _
      $region56: #{actor_critic_forward.1} parent=11 // pred_fallthru
        _
      // Predicated region
      $region57: #{actor_critic_forward.1} parent=11 // pred_check
        %p820 = pneg %p348
      $region58: #{actor_critic_forward.1} parent=11 // pred_check_branch
        %822 = sbr.rel (%p820) target = $region60
      $region59: #{actor_critic_forward.1} parent=11 // pred_region
        _
      $region60: #{actor_critic_forward.1} parent=11 // pred_fallthru
        _
      // Predicated region
      $region61: #{actor_critic_forward.1} parent=11 // pred_check
        %p823 = pneg %p369
      $region62: #{actor_critic_forward.1} parent=11 // pred_check_branch
        %825 = sbr.rel (%p823) target = $region64
      $region63: #{actor_critic_forward.1} parent=11 // pred_region
        _
      $region64: #{actor_critic_forward.1} parent=11 // pred_fallthru
        _
      // Predicated region
      $region65: #{actor_critic_forward.1} parent=11 // pred_check
        %p826 = pneg %p390
      $region66: #{actor_critic_forward.1} parent=11 // pred_check_branch
        %828 = sbr.rel (%p826) target = $region68
      $region67: #{actor_critic_forward.1} parent=11 // pred_region
        _
      $region68: #{actor_critic_forward.1} parent=11 // pred_fallthru
        _
      // Predicated region
      $region69: #{actor_critic_forward.1} parent=11 // pred_check
        %p829 = pneg %p411
      $region70: #{actor_critic_forward.1} parent=11 // pred_check_branch
        %831 = sbr.rel (%p829) target = $region72
      $region71: #{actor_critic_forward.1} parent=11 // pred_region
        _
      $region72: #{actor_critic_forward.1} parent=11 // pred_fallthru
        _
      // Predicated region
      $region73: #{actor_critic_forward.1} parent=11 // pred_check
        %p832 = pneg %p432
      $region74: #{actor_critic_forward.1} parent=11 // pred_check_branch
        %834 = sbr.rel (%p832) target = $region76
      $region75: #{actor_critic_forward.1} parent=11 // pred_region
        _
      $region76: #{actor_critic_forward.1} parent=11 // pred_fallthru
        _
      // Predicated region
      $region77: #{actor_critic_forward.1} parent=11 // pred_check
        %p835 = pneg %p453
      $region78: #{actor_critic_forward.1} parent=11 // pred_check_branch
        %837 = sbr.rel (%p835) target = $region80
      $region79: #{actor_critic_forward.1} parent=11 // pred_region
        _
      $region80: #{actor_critic_forward.1} parent=11 // pred_fallthru
        _
      // Predicated region
      $region81: #{actor_critic_forward.1} parent=11 // pred_check
        %p838 = pneg %p474
      $region82: #{actor_critic_forward.1} parent=11 // pred_check_branch
        %840 = sbr.rel (%p838) target = $region84
      $region83: #{actor_critic_forward.1} parent=11 // pred_region
        _
      $region84: #{actor_critic_forward.1} parent=11 // pred_fallthru
        _
      // Predicated region
      $region85: #{actor_critic_forward.1} parent=11 // pred_check
        %p841 = pneg %p495
      $region86: #{actor_critic_forward.1} parent=11 // pred_check_branch
        %843 = sbr.rel (%p841) target = $region88
      $region87: #{actor_critic_forward.1} parent=11 // pred_region
        _
      $region88: #{actor_critic_forward.1} parent=11 // pred_fallthru
        _
      // Predicated region
      $region89: #{actor_critic_forward.1} parent=11 // pred_check
        %p844 = pneg %p516
      $region90: #{actor_critic_forward.1} parent=11 // pred_check_branch
        %846 = sbr.rel (%p844) target = $region92
      $region91: #{actor_critic_forward.1} parent=11 // pred_region
        _
      $region92: #{actor_critic_forward.1} parent=11 // pred_fallthru
        _
      // Predicated region
      $region93: #{actor_critic_forward.1} parent=11 // pred_check
        %p847 = pneg %p537
      $region94: #{actor_critic_forward.1} parent=11 // pred_check_branch
        %849 = sbr.rel (%p847) target = $region96
      $region95: #{actor_critic_forward.1} parent=11 // pred_region
        _
      $region96: #{actor_critic_forward.1} parent=11 // pred_fallthru
        _
      // Predicated region
      $region97: #{actor_critic_forward.1} parent=11 // pred_check
        %p850 = pneg %p558
      $region98: #{actor_critic_forward.1} parent=11 // pred_check_branch
        %852 = sbr.rel (%p850) target = $region100
      $region99: #{actor_critic_forward.1} parent=11 // pred_region
        _
      $region100: #{actor_critic_forward.1} parent=11 // pred_fallthru
        _
      // Predicated region
      $region101: #{actor_critic_forward.1} parent=11 // pred_check
        %p853 = pneg %p579
      $region102: #{actor_critic_forward.1} parent=11 // pred_check_branch
        %855 = sbr.rel (%p853) target = $region104
      $region103: #{actor_critic_forward.1} parent=11 // pred_region
        _
      $region104: #{actor_critic_forward.1} parent=11 // pred_fallthru
        _
      // Predicated region
      $region105: #{actor_critic_forward.1} parent=11 // pred_check
        %p856 = pneg %p600
      $region106: #{actor_critic_forward.1} parent=11 // pred_check_branch
        %858 = sbr.rel (%p856) target = $region108
      $region107: #{actor_critic_forward.1} parent=11 // pred_region
        _
      $region108: #{actor_critic_forward.1} parent=11 // pred_fallthru
        _
      // Predicated region
      $region109: #{actor_critic_forward.1} parent=11 // pred_check
        %p859 = pneg %p673
      $region110: #{actor_critic_forward.1} parent=11 // pred_check_branch
        %861 = sbr.rel (%p859) target = $region112
      $region111: #{actor_critic_forward.1} parent=11 // pred_region
        _
      $region112: #{actor_critic_forward.1} parent=11 // pred_fallthru
        _
      // Predicated region
      $region113: #{actor_critic_forward.1} parent=11 // pred_check
        %p862 = pneg %p694
      $region114: #{actor_critic_forward.1} parent=11 // pred_check_branch
        %864 = sbr.rel (%p862) target = $region116
      $region115: #{actor_critic_forward.1} parent=11 // pred_region
        _
      $region116: #{actor_critic_forward.1} parent=11 // pred_fallthru
        _
    $region12: #{actor_critic_forward.1} parent=5 // pred_fallthru
      _
    %p865 = scmp.lt.s32.totalorder %s70, 2
    // Predicated region
    $region117: #{actor_critic_forward.1} parent=5 // pred_check
      %p866 = pneg %p865
    $region118: #{actor_critic_forward.1} parent=5 // pred_check_branch
      %868 = sbr.rel (%p866) target = $region120
    $region119: #{actor_critic_forward.1} parent=5 // pred_region
      // Predicated region
      $region121: #{actor_critic_forward.1} parent=119 // pred_check
        %p869 = pneg %p90
      $region122: #{actor_critic_forward.1} parent=119 // pred_check_branch
        %871 = sbr.rel (%p869) target = $region124
      $region123: #{actor_critic_forward.1} parent=119 // pred_region
        %p872 = scmp.lt.s32.totalorder %s70, 1
        %s873 = scalar_select %p872, %s70, 1
        %s874 = smul.addr %s873, 12
        %s875 = smul.addr %s874, 4
        %s876 = scalar_lea.vmem %s1, %s875
      $region124: #{actor_critic_forward.1} parent=119 // pred_fallthru
        _
      // Predicated region
      $region125: #{actor_critic_forward.1} parent=119 // pred_check
        %p877 = pneg %p620
      $region126: #{actor_critic_forward.1} parent=119 // pred_check_branch
        %879 = sbr.rel (%p877) target = $region128
      $region127: #{actor_critic_forward.1} parent=119 // pred_region
        %p880 = scmp.lt.s32.totalorder %s70, 1
        %s881 = scalar_select %p880, %s70, 1
        %s882 = smul.addr %s881, 2
        %s883 = scalar_lea.vmem %s51, %s882
      $region128: #{actor_critic_forward.1} parent=119 // pred_fallthru
        _
      // Predicated region
      $region129: #{actor_critic_forward.1} parent=119 // pred_check
        %p884 = pneg %p646
      $region130: #{actor_critic_forward.1} parent=119 // pred_check_branch
        %886 = sbr.rel (%p884) target = $region132
      $region131: #{actor_critic_forward.1} parent=119 // pred_region
        %p887 = scmp.lt.s32.totalorder %s70, 1
        %s888 = scalar_select %p887, %s70, 1
        %s889 = smul.addr %s888, 2
        %s890 = scalar_lea.vmem %s53, %s889
      $region132: #{actor_critic_forward.1} parent=119 // pred_fallthru
        _
    $region120: #{actor_critic_forward.1} parent=5 // pred_fallthru
      _
    %p891 = scmp.le.s32.totalorder 1, %s70
    %p892 = scmp.lt.s32.totalorder %s70, 3
    %p893 = pnand %p891, %p892
    %p894 = pneg %p893
    // Predicated region
    $region133: #{actor_critic_forward.1} parent=5 // pred_check
      _
    $region134: #{actor_critic_forward.1} parent=5 // pred_check_branch
      %896 = sbr.rel (%p893) target = $region136
    $region135: #{actor_critic_forward.1} parent=5 // pred_region
      %s897 = ssub.s32 %s70, 1
      %p898 = scmp.lt.s32.totalorder %s75, 1
      %s899 = scalar_select %p898, %s75, 1
      %s900 = smul.addr %s899, 12
      %s901 = smul.addr %s900, 4
      %s902 = scalar_lea.vmem %s1, %s901
      %p903 = pneg %p96
      %p904 = pneg %p93
      %p905 = pneg %p117
      %p906 = pneg %p114
      %p907 = pneg %p138
      %p908 = pneg %p135
      %p909 = pneg %p159
      %p910 = pneg %p156
      %p911 = pneg %p180
      %p912 = pneg %p177
      %p913 = pneg %p201
      %p914 = pneg %p198
      %p915 = pneg %p222
      %p916 = pneg %p219
      %p917 = pneg %p243
      %p918 = pneg %p240
      %p919 = pneg %p264
      %p920 = pneg %p261
      %p921 = pneg %p285
      %p922 = pneg %p282
      %p923 = pneg %p306
      %p924 = pneg %p303
      %p925 = pneg %p327
      %p926 = pneg %p324
      %p927 = pneg %p348
      %p928 = pneg %p345
      %p929 = pneg %p369
      %p930 = pneg %p366
      %p931 = pneg %p390
      %p932 = pneg %p387
      %p933 = pneg %p411
      %p934 = pneg %p408
      %p935 = pneg %p432
      %p936 = pneg %p429
      %p937 = pneg %p453
      %p938 = pneg %p450
      %p939 = pneg %p474
      %p940 = pneg %p471
      %p941 = pneg %p495
      %p942 = pneg %p492
      %p943 = pneg %p516
      %p944 = pneg %p513
      %p945 = pneg %p537
      %p946 = pneg %p534
      %p947 = pneg %p558
      %p948 = pneg %p555
      %p949 = pneg %p579
      %p950 = pneg %p576
      %p951 = pneg %p600
      %p952 = pneg %p597
      %p953 = scmp.lt.s32.totalorder %s75, 1
      %s954 = scalar_select %p953, %s75, 1
      %s955 = smul.addr %s954, 2
      %s956 = scalar_lea.vmem %s51, %s955
      %p957 = pneg %p626
      %p958 = pneg %p623
      %p959 = scmp.lt.s32.totalorder %s75, 1
      %s960 = scalar_select %p959, %s75, 1
      %s961 = smul.addr %s960, 2
      %s962 = scalar_lea.vmem %s53, %s961
      %p963 = pneg %p652
      %p964 = pneg %p649
      %p965 = pneg %p673
      %p966 = pneg %p670
      %p967 = pneg %p694
      %p968 = pneg %p691
      %p969 = pneg %p720
      %p970 = pneg %p717
      %p971 = scmp.lt.s32.totalorder %s75, 1
      %s972 = scalar_select %p971, %s75, 1
      %s973 = scalar_lea.vmem %s59, %s972
      %p974 = pneg %p746
      %p975 = pneg %p743
      %p976 = scmp.lt.s32.totalorder %s75, 1
      %s977 = scalar_select %p976, %s75, 1
      %s978 = smul.addr %s977, 2
      %s979 = scalar_lea.vmem %s61, %s978
      %p980 = pneg %p772
      %p981 = pneg %p769
      %p982 = scmp.lt.s32.totalorder %s75, 1
      %s983 = scalar_select %p982, %s75, 1
      %s984 = smul.addr %s983, 2
      %s985 = scalar_lea.vmem %s63, %s984
      %p986 = scmp.lt.s32.totalorder %s75, 1
      %s987 = scalar_select %p986, %s75, 1
      %s988 = smul.addr %s987, 12
      %s989 = smul.addr %s988, 4
      %s990 = scalar_lea.vmem %s1, %s989
      %p991 = scmp.lt.s32.totalorder %s75, 1
      %s992 = scalar_select %p991, %s75, 1
      %s993 = smul.addr %s992, 2
      %s994 = scalar_lea.vmem %s51, %s993
      %p995 = scmp.lt.s32.totalorder %s75, 1
      %s996 = scalar_select %p995, %s75, 1
      %s997 = smul.addr %s996, 2
      %s998 = scalar_lea.vmem %s53, %s997
      %p999 = scmp.lt.s32.totalorder %s75, 1
      %s1000 = scalar_select %p999, %s75, 1
      %s1001 = scalar_lea.vmem %s59, %s1000
      %p1002 = scmp.lt.s32.totalorder %s75, 1
      %s1003 = scalar_select %p1002, %s75, 1
      %s1004 = smul.addr %s1003, 2
      %s1005 = scalar_lea.vmem %s61, %s1004
      %p1006 = scmp.lt.s32.totalorder %s75, 1
      %s1007 = scalar_select %p1006, %s75, 1
      %s1008 = smul.addr %s1007, 2
      %s1009 = scalar_lea.vmem %s63, %s1008
      %v1011 = vld [vmem:[%s990] sm:$0xff]
      %v1012 = vld [vmem:[%s990 + $0x8] sm:$0xff]
      %v1013 = vld [vmem:[%s990 + $0x10] sm:$0xff]
      %v1014 = vld [vmem:[%s990 + $0x18] sm:$0xff]
      %v1015 = vld [vmem:[%s990 + $0x20] sm:$0xff]
      %v1016 = vld [vmem:[%s990 + $0x28] sm:$0x11]
      %v1017 = vld [vmem:[%s3] sm:$0xf]
      %v1018 = vld [vmem:[%s3 + $0x4] sm:$0xf]
      %v1019 = vld [vmem:[%s3 + $0x8] sm:$0xf]
      %v1020 = vld [vmem:[%s3 + $0xc] sm:$0xf]
      %v1021 = vld [vmem:[%s3 + $0x10] sm:$0xf]
      %v1022 = vld [vmem:[%s3 + $0x14] sm:$0xf]
      %v1023 = vld [vmem:[%s3 + $0x18] sm:$0xf]
      %v1024 = vld [vmem:[%s3 + $0x1c] sm:$0xf]
      %v1033 = vunpack.c.l.b16 %v1017
      %v1034 = vunpack.c.l.b16 %v1018
      %v1035 = vunpack.c.l.b16 %v1019
      %v1036 = vunpack.c.l.b16 %v1020
      %v1037 = vunpack.c.l.b16 %v1021
      %v1038 = vunpack.c.l.b16 %v1022
      %v1039 = vunpack.c.l.b16 %v1023
      %v1040 = vunpack.c.l.b16 %v1024
      %v1041 = vpack.c.b16 %v1034, %v1033
      %v1042 = vpack.c.b16 %v1036, %v1035
      %v1043 = vpack.c.b16 %v1038, %v1037
      %v1044 = vpack.c.b16 %v1040, %v1039
      %v1051 = vunpack.c.l.b16 %v1011
      %v1052 = vunpack.c.h.b16 %v1011
      %v1053 = vunpack.c.l.b16 %v1012
      %v1054 = vunpack.c.h.b16 %v1012
      %v1055 = vunpack.c.l.b16 %v1013
      %v1056 = vunpack.c.h.b16 %v1013
      %v1057 = vunpack.c.l.b16 %v1014
      %v1058 = vunpack.c.h.b16 %v1014
      %v1059 = vunpack.c.l.b16 %v1015
      %v1060 = vunpack.c.h.b16 %v1015
      %v1061 = vunpack.c.l.b16 %v1016
      %v1062 = vunpack.c.h.b16 %v1016
      %v1063 = vpack.c.b16 %v1053, %v1051
      %v1064 = vpack.c.b16 %v1054, %v1052
      %v1065 = vpack.c.b16 %v1057, %v1055
      %v1066 = vpack.c.b16 %v1058, %v1056
      %v1067 = vpack.c.b16 %v1061, %v1059
      %v1068 = vpack.c.b16 %v1062, %v1060
      %vm1073 = vcmask 343040
      %v1075 = vsel %vm1073, %v1041, 0
      %v1078 = vsel %vm1073, %v1042, 0
      %v1081 = vsel %vm1073, %v1043, 0
      %v1084 = vsel %vm1073, %v1044, 0
      %vm1086 = vcmask 1044480
      %v1088 = vsel %vm1086, %v1067, 0
      %v1091 = vsel %vm1086, %v1068, 0
      %1093 = vmatprep.subr.bf16.mxu0 %v1064
      %1094 = vmatpush1.bf16.msra.mxu0 %v1063
      %1095 = vmatprep.subr.bf16.mxu0 %v1066
      %1096 = vmatpush1.bf16.msra.mxu0 %v1065
      %1097 = vmatprep.subr.bf16.mxu0 %v1091
      %1098 = vmatpush1.bf16.msra.mxu0 %v1088
      %1099 = vmatprep.subr.bf16.mxu0 0
      %1100 = vmatpush1.bf16.msra.mxu0 0
      %1101 = vmatprep.subr.bf16.mxu0 0
      %1102 = vmatpush1.bf16.msra.mxu0 0
      %1103 = vmatprep.subr.bf16.mxu0 0
      %1104 = vmatpush1.bf16.msra.mxu0 0
      %1105 = vmatprep.subr.bf16.mxu0 0
      %1106 = vmatpush1.bf16.msra.mxu0 0
      %1107 = vmatprep.subr.bf16.mxu0 0
      %1108 = vmatpush1.bf16.msra.mxu0 0
      %1109 = vmatprep.subr.bf16.mxu0 0
      %1110 = vmatpush1.bf16.msra.mxu0 0
      %1111 = vmatprep.subr.bf16.mxu0 0
      %1112 = vmatpush1.bf16.msra.mxu0 0
      %1113 = vmatprep.subr.bf16.mxu0 0
      %1114 = vmatpush1.bf16.msra.mxu0 0
      %1115 = vmatprep.subr.bf16.mxu0 0
      %1116 = vmatpush1.bf16.msra.mxu0 0
      %1117 = vmatprep.subr.bf16.mxu0 0
      %1118 = vmatpush1.bf16.msra.mxu0 0
      %1119 = vmatprep.subr.bf16.mxu0 0
      %1120 = vmatpush1.bf16.msra.mxu0 0
      %1121 = vmatprep.subr.bf16.mxu0 0
      %1122 = vmatpush1.bf16.msra.mxu0 0
      %1123 = vmatprep.subr.bf16.mxu0 0
      %1124 = vmatpush1.bf16.msra.mxu0 0
      %1125 = vmatprep.mubr.bf16.mxu0 0
      %1126 = vmatmul.mubr.bf16.gmra.mrb[0].mxu0 %v1075
      %v1127 = vpop.f32.mrb[0].mxu0
      %v1128 = vadd.f32 0.0, %v1127
      %v1129 = vpop.f32.mrb[0].mxu0
      %v1130 = vadd.f32 0.0, %v1129
      %v1131 = vpop.f32.mrb[0].mxu0
      %v1132 = vadd.f32 0.0, %v1131
      %v1133 = vpop.f32.mrb[0].mxu0
      %v1134 = vadd.f32 0.0, %v1133
      %1135 = vmatprep.mubr.bf16.mxu0 0
      %1136 = vmatmul.mubr.bf16.gmra.mrb[0].mxu0 %v1078
      %v1137 = vpop.f32.mrb[0].mxu0
      %v1138 = vadd.f32 0.0, %v1137
      %v1139 = vpop.f32.mrb[0].mxu0
      %v1140 = vadd.f32 0.0, %v1139
      %v1141 = vpop.f32.mrb[0].mxu0
      %v1142 = vadd.f32 0.0, %v1141
      %v1143 = vpop.f32.mrb[0].mxu0
      %v1144 = vadd.f32 0.0, %v1143
      %1145 = vmatprep.mubr.bf16.mxu0 0
      %1146 = vmatmul.mubr.bf16.gmra.mrb[0].mxu0 %v1081
      %v1147 = vpop.f32.mrb[0].mxu0
      %v1148 = vadd.f32 0.0, %v1147
      %v1149 = vpop.f32.mrb[0].mxu0
      %v1150 = vadd.f32 0.0, %v1149
      %v1151 = vpop.f32.mrb[0].mxu0
      %v1152 = vadd.f32 0.0, %v1151
      %v1153 = vpop.f32.mrb[0].mxu0
      %v1154 = vadd.f32 0.0, %v1153
      %1155 = vmatprep.mubr.bf16.mxu0 0
      %1156 = vmatmul.mubr.bf16.gmra.mrb[0].mxu0 %v1084
      %v1157 = vpop.f32.mrb[0].mxu0
      %v1158 = vadd.f32 0.0, %v1157
      %v1159 = vpop.f32.mrb[0].mxu0
      %v1160 = vadd.f32 0.0, %v1159
      %v1161 = vpop.f32.mrb[0].mxu0
      %v1162 = vadd.f32 0.0, %v1161
      %v1163 = vpop.f32.mrb[0].mxu0
      %v1164 = vadd.f32 0.0, %v1163
      %1165 = vdwg.mxu0
      %v1166 = vpack.c.bf16 %v1132, %v1128
      %v1167 = vpack.c.bf16 %v1134, %v1130
      %v1168 = vpack.c.bf16 %v1142, %v1138
      %v1169 = vpack.c.bf16 %v1144, %v1140
      %v1170 = vpack.c.bf16 %v1152, %v1148
      %v1171 = vpack.c.bf16 %v1154, %v1150
      %v1172 = vpack.c.bf16 %v1162, %v1158
      %v1173 = vpack.c.bf16 %v1164, %v1160
      %vm1174 = vsmask.f32 5376
      %v1176 = vshrl.u32 %v1168, 16
      %v1178 = vrot.slane %v1176, 2
      %v1179 = vshll.u32 %v1168, 16
      %v1181 = vrot.slane %v1179, 3
      %v1182 = vor.u32 %v1178, %v1181
      %v1184 = vshrl.u32 %v1170, 16
      %v1186 = vrot.slane %v1184, 2
      %v1187 = vshll.u32 %v1170, 16
      %v1189 = vrot.slane %v1187, 3
      %v1190 = vor.u32 %v1186, %v1189
      %v1191 = vsel %vm1174, %v1182, %v1190
      %1192 = vrot.lane.b32.xlu0 %v1191, 24
      %v1193 = vpop.permute.xlu0 %1192
      %1194 = vrot.lane.b32.xlu0 %v1190, 24
      %v1195 = vpop.permute.xlu0 %1194
      %vm1198 = vcmask 1042432
      %v1199 = vrot.slane %v1170, 5
      %v1200 = vrot.slane %v1172, 5
      %v1201 = vsel %vm1198, %v1199, %v1200
      %1202 = vrot.lane.b32.xlu0 %v1201, 48
      %v1203 = vpop.permute.xlu0 %1202
      %1204 = vrot.lane.b32.xlu0 %v1200, 48
      %v1205 = vpop.permute.xlu0 %1204
      %vm1206 = vcmask 195584
      %v1209 = vsel %vm1206, %v1166, %v1193
      %v1211 = vsel %vm1206, %v1168, %v1195
      %vm1212 = vcmask 392192
      %v1214 = vsel %vm1212, %v1209, %v1203
      %v1216 = vsel %vm1212, %v1211, %v1205
      %v1217 = vld [vmem:[%s5] sm:$0xf]
      %v1218 = vld [vmem:[%s5 + $0x4] sm:$0xf]
      %v1219 = vld [vmem:[%s5 + $0x8] sm:$0xf]
      %v1220 = vld [vmem:[%s5 + $0xc] sm:$0xf]
      %v1221 = vld [vmem:[%s5 + $0x10] sm:$0xf]
      %v1222 = vld [vmem:[%s5 + $0x14] sm:$0xf]
      %v1223 = vld [vmem:[%s5 + $0x18] sm:$0xf]
      %v1224 = vld [vmem:[%s5 + $0x1c] sm:$0xf]
      %v1225 = vld [vmem:[%s5 + $0x20] sm:$0xf]
      %v1235 = vunpack.c.l.b16 %v1217
      %v1236 = vunpack.c.l.b16 %v1218
      %v1237 = vunpack.c.l.b16 %v1219
      %v1238 = vunpack.c.l.b16 %v1220
      %v1239 = vunpack.c.l.b16 %v1221
      %v1240 = vunpack.c.l.b16 %v1222
      %v1241 = vunpack.c.l.b16 %v1223
      %v1242 = vunpack.c.l.b16 %v1224
      %v1243 = vunpack.c.l.b16 %v1225
      %v1244 = vpack.c.b16 %v1236, %v1235
      %v1245 = vpack.c.b16 %v1238, %v1237
      %v1246 = vpack.c.b16 %v1240, %v1239
      %v1247 = vpack.c.b16 %v1242, %v1241
      %v1248 = vpack.c.b16 %v1243, %v1243
      %vm1253 = vcmask 588800
      %v1254 = vsel %vm1253, %v1214, 0
      %v1256 = vsel %vm1253, %v1216, 0
      %vm1258 = vcmask 1043456
      %v1260 = vsel %vm1258, %v1248, 0
      %1262 = vmatprep.subr.bf16.mxu0 0
      %1263 = vmatpush1.bf16.msra.mxu0 %v1244
      %1264 = vmatprep.subr.bf16.mxu0 0
      %1265 = vmatpush1.bf16.msra.mxu0 %v1245
      %1266 = vmatprep.subr.bf16.mxu0 0
      %1267 = vmatpush1.bf16.msra.mxu0 %v1246
      %1268 = vmatprep.subr.bf16.mxu0 0
      %1269 = vmatpush1.bf16.msra.mxu0 %v1247
      %1270 = vmatprep.subr.bf16.mxu0 0
      %1271 = vmatpush1.bf16.msra.mxu0 %v1260
      %1272 = vmatprep.subr.bf16.mxu0 0
      %1273 = vmatpush1.bf16.msra.mxu0 0
      %1274 = vmatprep.subr.bf16.mxu0 0
      %1275 = vmatpush1.bf16.msra.mxu0 0
      %1276 = vmatprep.subr.bf16.mxu0 0
      %1277 = vmatpush1.bf16.msra.mxu0 0
      %1278 = vmatprep.subr.bf16.mxu0 0
      %1279 = vmatpush1.bf16.msra.mxu0 0
      %1280 = vmatprep.subr.bf16.mxu0 0
      %1281 = vmatpush1.bf16.msra.mxu0 0
      %1282 = vmatprep.subr.bf16.mxu0 0
      %1283 = vmatpush1.bf16.msra.mxu0 0
      %1284 = vmatprep.subr.bf16.mxu0 0
      %1285 = vmatpush1.bf16.msra.mxu0 0
      %1286 = vmatprep.subr.bf16.mxu0 0
      %1287 = vmatpush1.bf16.msra.mxu0 0
      %1288 = vmatprep.subr.bf16.mxu0 0
      %1289 = vmatpush1.bf16.msra.mxu0 0
      %1290 = vmatprep.subr.bf16.mxu0 0
      %1291 = vmatpush1.bf16.msra.mxu0 0
      %1292 = vmatprep.subr.bf16.mxu0 0
      %1293 = vmatpush1.bf16.msra.mxu0 0
      %1294 = vmatprep.mubr.bf16.mxu0 0
      %1295 = vmatmul.mubr.bf16.gmra.mrb[0].mxu0 %v1254
      %v1296 = vpop.f32.mrb[0].mxu0
      %v1297 = vadd.f32 0.0, %v1296
      %v1298 = vpop.f32.mrb[0].mxu0
      %v1299 = vpop.f32.mrb[0].mxu0
      %v1300 = vadd.f32 0.0, %v1299
      %v1301 = vpop.f32.mrb[0].mxu0
      %1302 = vmatprep.mubr.bf16.mxu0 0
      %1303 = vmatmul.mubr.bf16.gmra.mrb[0].mxu0 %v1256
      %v1304 = vpop.f32.mrb[0].mxu0
      %v1305 = vadd.f32 0.0, %v1304
      %v1306 = vpop.f32.mrb[0].mxu0
      %v1307 = vpop.f32.mrb[0].mxu0
      %v1308 = vpop.f32.mrb[0].mxu0
      %1309 = vdwg.mxu0
      %1312 = vrot.lane.b32.xlu0 %v1166, 108
      %v1313 = vpop.permute.xlu0 %1312
      %1314 = vrot.lane.b32.xlu0 %v1168, 108
      %v1315 = vpop.permute.xlu0 %1314
      %1316 = vrot.lane.b32.xlu0 %v1191, 8
      %v1317 = vpop.permute.xlu0 %1316
      %1318 = vrot.lane.b32.xlu0 %v1190, 8
      %v1319 = vpop.permute.xlu0 %1318
      %1320 = vrot.lane.b32.xlu0 %v1201, 36
      %v1321 = vpop.permute.xlu0 %1320
      %1322 = vrot.lane.b32.xlu0 %v1200, 36
      %v1323 = vpop.permute.xlu0 %1322
      %vm1324 = vcmask 228352
      %v1327 = vsel %vm1324, %v1313, %v1317
      %v1330 = vsel %vm1324, %v1315, %v1319
      %vm1331 = vcmask 457728
      %v1333 = vsel %vm1331, %v1327, %v1321
      %v1335 = vsel %vm1331, %v1330, %v1323
      %v1336 = vld [vmem:[%s7] sm:$0xf]
      %v1337 = vld [vmem:[%s7 + $0x4] sm:$0xf]
      %v1338 = vld [vmem:[%s7 + $0x8] sm:$0xf]
      %v1339 = vld [vmem:[%s7 + $0xc] sm:$0xf]
      %v1340 = vld [vmem:[%s7 + $0x10] sm:$0xf]
      %v1341 = vld [vmem:[%s7 + $0x14] sm:$0xf]
      %v1342 = vld [vmem:[%s7 + $0x18] sm:$0xf]
      %v1343 = vld [vmem:[%s7 + $0x1c] sm:$0xf]
      %v1344 = vld [vmem:[%s7 + $0x20] sm:$0xf]
      %v1345 = vld [vmem:[%s7 + $0x24] sm:$0xf]
      %v1346 = vld [vmem:[%s7 + $0x28] sm:$0x3]
      %v1358 = vunpack.c.l.b16 %v1336
      %v1359 = vunpack.c.l.b16 %v1337
      %v1360 = vunpack.c.l.b16 %v1338
      %v1361 = vunpack.c.l.b16 %v1339
      %v1362 = vunpack.c.l.b16 %v1340
      %v1363 = vunpack.c.l.b16 %v1341
      %v1364 = vunpack.c.l.b16 %v1342
      %v1365 = vunpack.c.l.b16 %v1343
      %v1366 = vunpack.c.l.b16 %v1344
      %v1367 = vunpack.c.l.b16 %v1345
      %v1368 = vunpack.c.l.b16 %v1346
      %v1369 = vpack.c.b16 %v1359, %v1358
      %v1370 = vpack.c.b16 %v1361, %v1360
      %v1371 = vpack.c.b16 %v1363, %v1362
      %v1372 = vpack.c.b16 %v1365, %v1364
      %v1373 = vpack.c.b16 %v1367, %v1366
      %v1374 = vpack.c.b16 %v1368, %v1368
      %vm1380 = vcmask 687104
      %v1381 = vsel %vm1380, %v1333, 0
      %v1383 = vsel %vm1380, %v1335, 0
      %vm1385 = vcmask 1041408
      %v1387 = vsel %vm1385, %v1374, 0
      %1389 = vmatprep.subr.bf16.mxu0 0
      %1390 = vmatpush1.bf16.msra.mxu0 %v1369
      %1391 = vmatprep.subr.bf16.mxu0 0
      %1392 = vmatpush1.bf16.msra.mxu0 %v1370
      %1393 = vmatprep.subr.bf16.mxu0 0
      %1394 = vmatpush1.bf16.msra.mxu0 %v1371
      %1395 = vmatprep.subr.bf16.mxu0 0
      %1396 = vmatpush1.bf16.msra.mxu0 %v1372
      %1397 = vmatprep.subr.bf16.mxu0 0
      %1398 = vmatpush1.bf16.msra.mxu0 %v1373
      %1399 = vmatprep.subr.bf16.mxu0 0
      %1400 = vmatpush1.bf16.msra.mxu0 %v1387
      %1401 = vmatprep.subr.bf16.mxu0 0
      %1402 = vmatpush1.bf16.msra.mxu0 0
      %1403 = vmatprep.subr.bf16.mxu0 0
      %1404 = vmatpush1.bf16.msra.mxu0 0
      %1405 = vmatprep.subr.bf16.mxu0 0
      %1406 = vmatpush1.bf16.msra.mxu0 0
      %1407 = vmatprep.subr.bf16.mxu0 0
      %1408 = vmatpush1.bf16.msra.mxu0 0
      %1409 = vmatprep.subr.bf16.mxu0 0
      %1410 = vmatpush1.bf16.msra.mxu0 0
      %1411 = vmatprep.subr.bf16.mxu0 0
      %1412 = vmatpush1.bf16.msra.mxu0 0
      %1413 = vmatprep.subr.bf16.mxu0 0
      %1414 = vmatpush1.bf16.msra.mxu0 0
      %1415 = vmatprep.subr.bf16.mxu0 0
      %1416 = vmatpush1.bf16.msra.mxu0 0
      %1417 = vmatprep.subr.bf16.mxu0 0
      %1418 = vmatpush1.bf16.msra.mxu0 0
      %1419 = vmatprep.subr.bf16.mxu0 0
      %1420 = vmatpush1.bf16.msra.mxu0 0
      %1421 = vmatprep.mubr.bf16.mxu0 0
      %1422 = vmatmul.mubr.bf16.gmra.mrb[0].mxu0 %v1381
      %v1423 = vpop.f32.mrb[0].mxu0
      %v1424 = vadd.f32 0.0, %v1423
      %v1425 = vpop.f32.mrb[0].mxu0
      %v1426 = vpop.f32.mrb[0].mxu0
      %v1427 = vadd.f32 0.0, %v1426
      %v1428 = vpop.f32.mrb[0].mxu0
      %1429 = vmatprep.mubr.bf16.mxu0 0
      %1430 = vmatmul.mubr.bf16.gmra.mrb[0].mxu0 %v1383
      %v1431 = vpop.f32.mrb[0].mxu0
      %v1432 = vadd.f32 0.0, %v1431
      %v1433 = vpop.f32.mrb[0].mxu0
      %v1434 = vpop.f32.mrb[0].mxu0
      %v1435 = vpop.f32.mrb[0].mxu0
      %1436 = vdwg.mxu0
      %1437 = vrot.lane.b32.xlu0 %v1166, 84
      %v1438 = vpop.permute.xlu0 %1437
      %1439 = vrot.lane.b32.xlu0 %v1168, 84
      %v1440 = vpop.permute.xlu0 %1439
      %1441 = vrot.lane.b32.xlu0 %v1191, 112
      %v1442 = vpop.permute.xlu0 %1441
      %1443 = vrot.lane.b32.xlu0 %v1190, 112
      %v1444 = vpop.permute.xlu0 %1443
      %1445 = vrot.lane.b32.xlu0 %v1201, 12
      %v1446 = vpop.permute.xlu0 %1445
      %1447 = vrot.lane.b32.xlu0 %v1200, 12
      %v1448 = vpop.permute.xlu0 %1447
      %v1451 = vsel %vm1324, %v1438, %v1442
      %v1454 = vsel %vm1324, %v1440, %v1444
      %v1456 = vsel %vm1331, %v1451, %v1446
      %v1458 = vsel %vm1331, %v1454, %v1448
      %v1459 = vld [vmem:[%s9] sm:$0xf]
      %v1460 = vld [vmem:[%s9 + $0x4] sm:$0xf]
      %v1461 = vld [vmem:[%s9 + $0x8] sm:$0xf]
      %v1462 = vld [vmem:[%s9 + $0xc] sm:$0xf]
      %v1463 = vld [vmem:[%s9 + $0x10] sm:$0xf]
      %v1464 = vld [vmem:[%s9 + $0x14] sm:$0xf]
      %v1465 = vld [vmem:[%s9 + $0x18] sm:$0xf]
      %v1466 = vld [vmem:[%s9 + $0x1c] sm:$0xf]
      %v1467 = vld [vmem:[%s9 + $0x20] sm:$0xf]
      %v1468 = vld [vmem:[%s9 + $0x24] sm:$0xf]
      %v1469 = vld [vmem:[%s9 + $0x28] sm:$0x3]
      %v1481 = vunpack.c.l.b16 %v1459
      %v1482 = vunpack.c.l.b16 %v1460
      %v1483 = vunpack.c.l.b16 %v1461
      %v1484 = vunpack.c.l.b16 %v1462
      %v1485 = vunpack.c.l.b16 %v1463
      %v1486 = vunpack.c.l.b16 %v1464
      %v1487 = vunpack.c.l.b16 %v1465
      %v1488 = vunpack.c.l.b16 %v1466
      %v1489 = vunpack.c.l.b16 %v1467
      %v1490 = vunpack.c.l.b16 %v1468
      %v1491 = vunpack.c.l.b16 %v1469
      %v1492 = vpack.c.b16 %v1482, %v1481
      %v1493 = vpack.c.b16 %v1484, %v1483
      %v1494 = vpack.c.b16 %v1486, %v1485
      %v1495 = vpack.c.b16 %v1488, %v1487
      %v1496 = vpack.c.b16 %v1490, %v1489
      %v1497 = vpack.c.b16 %v1491, %v1491
      %v1503 = vsel %vm1380, %v1456, 0
      %v1505 = vsel %vm1380, %v1458, 0
      %v1508 = vsel %vm1385, %v1497, 0
      %1510 = vmatprep.subr.bf16.mxu0 0
      %1511 = vmatpush1.bf16.msra.mxu0 %v1492
      %1512 = vmatprep.subr.bf16.mxu0 0
      %1513 = vmatpush1.bf16.msra.mxu0 %v1493
      %1514 = vmatprep.subr.bf16.mxu0 0
      %1515 = vmatpush1.bf16.msra.mxu0 %v1494
      %1516 = vmatprep.subr.bf16.mxu0 0
      %1517 = vmatpush1.bf16.msra.mxu0 %v1495
      %1518 = vmatprep.subr.bf16.mxu0 0
      %1519 = vmatpush1.bf16.msra.mxu0 %v1496
      %1520 = vmatprep.subr.bf16.mxu0 0
      %1521 = vmatpush1.bf16.msra.mxu0 %v1508
      %1522 = vmatprep.subr.bf16.mxu0 0
      %1523 = vmatpush1.bf16.msra.mxu0 0
      %1524 = vmatprep.subr.bf16.mxu0 0
      %1525 = vmatpush1.bf16.msra.mxu0 0
      %1526 = vmatprep.subr.bf16.mxu0 0
      %1527 = vmatpush1.bf16.msra.mxu0 0
      %1528 = vmatprep.subr.bf16.mxu0 0
      %1529 = vmatpush1.bf16.msra.mxu0 0
      %1530 = vmatprep.subr.bf16.mxu0 0
      %1531 = vmatpush1.bf16.msra.mxu0 0
      %1532 = vmatprep.subr.bf16.mxu0 0
      %1533 = vmatpush1.bf16.msra.mxu0 0
      %1534 = vmatprep.subr.bf16.mxu0 0
      %1535 = vmatpush1.bf16.msra.mxu0 0
      %1536 = vmatprep.subr.bf16.mxu0 0
      %1537 = vmatpush1.bf16.msra.mxu0 0
      %1538 = vmatprep.subr.bf16.mxu0 0
      %1539 = vmatpush1.bf16.msra.mxu0 0
      %1540 = vmatprep.subr.bf16.mxu0 0
      %1541 = vmatpush1.bf16.msra.mxu0 0
      %1542 = vmatprep.mubr.bf16.mxu0 0
      %1543 = vmatmul.mubr.bf16.gmra.mrb[0].mxu0 %v1503
      %v1544 = vpop.f32.mrb[0].mxu0
      %v1545 = vadd.f32 0.0, %v1544
      %v1546 = vpop.f32.mrb[0].mxu0
      %v1547 = vpop.f32.mrb[0].mxu0
      %v1548 = vadd.f32 0.0, %v1547
      %v1549 = vpop.f32.mrb[0].mxu0
      %1550 = vmatprep.mubr.bf16.mxu0 0
      %1551 = vmatmul.mubr.bf16.gmra.mrb[0].mxu0 %v1505
      %v1552 = vpop.f32.mrb[0].mxu0
      %v1553 = vadd.f32 0.0, %v1552
      %v1554 = vpop.f32.mrb[0].mxu0
      %v1555 = vpop.f32.mrb[0].mxu0
      %v1556 = vpop.f32.mrb[0].mxu0
      %1557 = vdwg.mxu0
      %1558 = vrot.lane.b32.xlu0 %v1166, 60
      %v1559 = vpop.permute.xlu0 %1558
      %1560 = vrot.lane.b32.xlu0 %v1168, 60
      %v1561 = vpop.permute.xlu0 %1560
      %1562 = vrot.lane.b32.xlu0 %v1191, 88
      %v1563 = vpop.permute.xlu0 %1562
      %1564 = vrot.lane.b32.xlu0 %v1190, 88
      %v1565 = vpop.permute.xlu0 %1564
      %1566 = vrot.lane.b32.xlu0 %v1201, 116
      %v1567 = vpop.permute.xlu0 %1566
      %1568 = vrot.lane.b32.xlu0 %v1200, 116
      %v1569 = vpop.permute.xlu0 %1568
      %v1572 = vsel %vm1324, %v1559, %v1563
      %v1575 = vsel %vm1324, %v1561, %v1565
      %v1577 = vsel %vm1331, %v1572, %v1567
      %v1579 = vsel %vm1331, %v1575, %v1569
      %v1580 = vld [vmem:[%s11] sm:$0xf]
      %v1581 = vld [vmem:[%s11 + $0x4] sm:$0xf]
      %v1582 = vld [vmem:[%s11 + $0x8] sm:$0xf]
      %v1583 = vld [vmem:[%s11 + $0xc] sm:$0xf]
      %v1584 = vld [vmem:[%s11 + $0x10] sm:$0xf]
      %v1585 = vld [vmem:[%s11 + $0x14] sm:$0xf]
      %v1586 = vld [vmem:[%s11 + $0x18] sm:$0xf]
      %v1587 = vld [vmem:[%s11 + $0x1c] sm:$0xf]
      %v1588 = vld [vmem:[%s11 + $0x20] sm:$0xf]
      %v1589 = vld [vmem:[%s11 + $0x24] sm:$0xf]
      %v1590 = vld [vmem:[%s11 + $0x28] sm:$0x3]
      %v1602 = vunpack.c.l.b16 %v1580
      %v1603 = vunpack.c.l.b16 %v1581
      %v1604 = vunpack.c.l.b16 %v1582
      %v1605 = vunpack.c.l.b16 %v1583
      %v1606 = vunpack.c.l.b16 %v1584
      %v1607 = vunpack.c.l.b16 %v1585
      %v1608 = vunpack.c.l.b16 %v1586
      %v1609 = vunpack.c.l.b16 %v1587
      %v1610 = vunpack.c.l.b16 %v1588
      %v1611 = vunpack.c.l.b16 %v1589
      %v1612 = vunpack.c.l.b16 %v1590
      %v1613 = vpack.c.b16 %v1603, %v1602
      %v1614 = vpack.c.b16 %v1605, %v1604
      %v1615 = vpack.c.b16 %v1607, %v1606
      %v1616 = vpack.c.b16 %v1609, %v1608
      %v1617 = vpack.c.b16 %v1611, %v1610
      %v1618 = vpack.c.b16 %v1612, %v1612
      %v1624 = vsel %vm1380, %v1577, 0
      %v1626 = vsel %vm1380, %v1579, 0
      %v1629 = vsel %vm1385, %v1618, 0
      %1631 = vmatprep.subr.bf16.mxu0 0
      %1632 = vmatpush1.bf16.msra.mxu0 %v1613
      %1633 = vmatprep.subr.bf16.mxu0 0
      %1634 = vmatpush1.bf16.msra.mxu0 %v1614
      %1635 = vmatprep.subr.bf16.mxu0 0
      %1636 = vmatpush1.bf16.msra.mxu0 %v1615
      %1637 = vmatprep.subr.bf16.mxu0 0
      %1638 = vmatpush1.bf16.msra.mxu0 %v1616
      %1639 = vmatprep.subr.bf16.mxu0 0
      %1640 = vmatpush1.bf16.msra.mxu0 %v1617
      %1641 = vmatprep.subr.bf16.mxu0 0
      %1642 = vmatpush1.bf16.msra.mxu0 %v1629
      %1643 = vmatprep.subr.bf16.mxu0 0
      %1644 = vmatpush1.bf16.msra.mxu0 0
      %1645 = vmatprep.subr.bf16.mxu0 0
      %1646 = vmatpush1.bf16.msra.mxu0 0
      %1647 = vmatprep.subr.bf16.mxu0 0
      %1648 = vmatpush1.bf16.msra.mxu0 0
      %1649 = vmatprep.subr.bf16.mxu0 0
      %1650 = vmatpush1.bf16.msra.mxu0 0
      %1651 = vmatprep.subr.bf16.mxu0 0
      %1652 = vmatpush1.bf16.msra.mxu0 0
      %1653 = vmatprep.subr.bf16.mxu0 0
      %1654 = vmatpush1.bf16.msra.mxu0 0
      %1655 = vmatprep.subr.bf16.mxu0 0
      %1656 = vmatpush1.bf16.msra.mxu0 0
      %1657 = vmatprep.subr.bf16.mxu0 0
      %1658 = vmatpush1.bf16.msra.mxu0 0
      %1659 = vmatprep.subr.bf16.mxu0 0
      %1660 = vmatpush1.bf16.msra.mxu0 0
      %1661 = vmatprep.subr.bf16.mxu0 0
      %1662 = vmatpush1.bf16.msra.mxu0 0
      %1663 = vmatprep.mubr.bf16.mxu0 0
      %1664 = vmatmul.mubr.bf16.gmra.mrb[0].mxu0 %v1624
      %v1665 = vpop.f32.mrb[0].mxu0
      %v1666 = vadd.f32 0.0, %v1665
      %v1667 = vpop.f32.mrb[0].mxu0
      %v1668 = vpop.f32.mrb[0].mxu0
      %v1669 = vadd.f32 0.0, %v1668
      %v1670 = vpop.f32.mrb[0].mxu0
      %1671 = vmatprep.mubr.bf16.mxu0 0
      %1672 = vmatmul.mubr.bf16.gmra.mrb[0].mxu0 %v1626
      %v1673 = vpop.f32.mrb[0].mxu0
      %v1674 = vadd.f32 0.0, %v1673
      %v1675 = vpop.f32.mrb[0].mxu0
      %v1676 = vpop.f32.mrb[0].mxu0
      %v1677 = vpop.f32.mrb[0].mxu0
      %1678 = vdwg.mxu0
      %1679 = vrot.lane.b32.xlu0 %v1166, 36
      %v1680 = vpop.permute.xlu0 %1679
      %1681 = vrot.lane.b32.xlu0 %v1168, 36
      %v1682 = vpop.permute.xlu0 %1681
      %1683 = vrot.lane.b32.xlu0 %v1191, 64
      %v1684 = vpop.permute.xlu0 %1683
      %1685 = vrot.lane.b32.xlu0 %v1190, 64
      %v1686 = vpop.permute.xlu0 %1685
      %1687 = vrot.lane.b32.xlu0 %v1201, 92
      %v1688 = vpop.permute.xlu0 %1687
      %1689 = vrot.lane.b32.xlu0 %v1200, 92
      %v1690 = vpop.permute.xlu0 %1689
      %v1693 = vsel %vm1324, %v1680, %v1684
      %v1696 = vsel %vm1324, %v1682, %v1686
      %v1698 = vsel %vm1331, %v1693, %v1688
      %v1700 = vsel %vm1331, %v1696, %v1690
      %v1701 = vld [vmem:[%s13] sm:$0xf]
      %v1702 = vld [vmem:[%s13 + $0x4] sm:$0xf]
      %v1703 = vld [vmem:[%s13 + $0x8] sm:$0xf]
      %v1704 = vld [vmem:[%s13 + $0xc] sm:$0xf]
      %v1705 = vld [vmem:[%s13 + $0x10] sm:$0xf]
      %v1706 = vld [vmem:[%s13 + $0x14] sm:$0xf]
      %v1707 = vld [vmem:[%s13 + $0x18] sm:$0xf]
      %v1708 = vld [vmem:[%s13 + $0x1c] sm:$0xf]
      %v1709 = vld [vmem:[%s13 + $0x20] sm:$0xf]
      %v1710 = vld [vmem:[%s13 + $0x24] sm:$0xf]
      %v1711 = vld [vmem:[%s13 + $0x28] sm:$0x3]
      %v1723 = vunpack.c.l.b16 %v1701
      %v1724 = vunpack.c.l.b16 %v1702
      %v1725 = vunpack.c.l.b16 %v1703
      %v1726 = vunpack.c.l.b16 %v1704
      %v1727 = vunpack.c.l.b16 %v1705
      %v1728 = vunpack.c.l.b16 %v1706
      %v1729 = vunpack.c.l.b16 %v1707
      %v1730 = vunpack.c.l.b16 %v1708
      %v1731 = vunpack.c.l.b16 %v1709
      %v1732 = vunpack.c.l.b16 %v1710
      %v1733 = vunpack.c.l.b16 %v1711
      %v1734 = vpack.c.b16 %v1724, %v1723
      %v1735 = vpack.c.b16 %v1726, %v1725
      %v1736 = vpack.c.b16 %v1728, %v1727
      %v1737 = vpack.c.b16 %v1730, %v1729
      %v1738 = vpack.c.b16 %v1732, %v1731
      %v1739 = vpack.c.b16 %v1733, %v1733
      %v1745 = vsel %vm1380, %v1698, 0
      %v1747 = vsel %vm1380, %v1700, 0
      %v1750 = vsel %vm1385, %v1739, 0
      %1752 = vmatprep.subr.bf16.mxu0 0
      %1753 = vmatpush1.bf16.msra.mxu0 %v1734
      %1754 = vmatprep.subr.bf16.mxu0 0
      %1755 = vmatpush1.bf16.msra.mxu0 %v1735
      %1756 = vmatprep.subr.bf16.mxu0 0
      %1757 = vmatpush1.bf16.msra.mxu0 %v1736
      %1758 = vmatprep.subr.bf16.mxu0 0
      %1759 = vmatpush1.bf16.msra.mxu0 %v1737
      %1760 = vmatprep.subr.bf16.mxu0 0
      %1761 = vmatpush1.bf16.msra.mxu0 %v1738
      %1762 = vmatprep.subr.bf16.mxu0 0
      %1763 = vmatpush1.bf16.msra.mxu0 %v1750
      %1764 = vmatprep.subr.bf16.mxu0 0
      %1765 = vmatpush1.bf16.msra.mxu0 0
      %1766 = vmatprep.subr.bf16.mxu0 0
      %1767 = vmatpush1.bf16.msra.mxu0 0
      %1768 = vmatprep.subr.bf16.mxu0 0
      %1769 = vmatpush1.bf16.msra.mxu0 0
      %1770 = vmatprep.subr.bf16.mxu0 0
      %1771 = vmatpush1.bf16.msra.mxu0 0
      %1772 = vmatprep.subr.bf16.mxu0 0
      %1773 = vmatpush1.bf16.msra.mxu0 0
      %1774 = vmatprep.subr.bf16.mxu0 0
      %1775 = vmatpush1.bf16.msra.mxu0 0
      %1776 = vmatprep.subr.bf16.mxu0 0
      %1777 = vmatpush1.bf16.msra.mxu0 0
      %1778 = vmatprep.subr.bf16.mxu0 0
      %1779 = vmatpush1.bf16.msra.mxu0 0
      %1780 = vmatprep.subr.bf16.mxu0 0
      %1781 = vmatpush1.bf16.msra.mxu0 0
      %1782 = vmatprep.subr.bf16.mxu0 0
      %1783 = vmatpush1.bf16.msra.mxu0 0
      %1784 = vmatprep.mubr.bf16.mxu0 0
      %1785 = vmatmul.mubr.bf16.gmra.mrb[0].mxu0 %v1745
      %v1786 = vpop.f32.mrb[0].mxu0
      %v1787 = vadd.f32 0.0, %v1786
      %v1788 = vpop.f32.mrb[0].mxu0
      %v1789 = vpop.f32.mrb[0].mxu0
      %v1790 = vadd.f32 0.0, %v1789
      %v1791 = vpop.f32.mrb[0].mxu0
      %1792 = vmatprep.mubr.bf16.mxu0 0
      %1793 = vmatmul.mubr.bf16.gmra.mrb[0].mxu0 %v1747
      %v1794 = vpop.f32.mrb[0].mxu0
      %v1795 = vadd.f32 0.0, %v1794
      %v1796 = vpop.f32.mrb[0].mxu0
      %v1797 = vpop.f32.mrb[0].mxu0
      %v1798 = vpop.f32.mrb[0].mxu0
      %1799 = vdwg.mxu0
      %1802 = vrot.lane.b32.xlu0 %v1166, 12
      %v1803 = vpop.permute.xlu0 %1802
      %1804 = vrot.lane.b32.xlu0 %v1167, 12
      %v1805 = vpop.permute.xlu0 %1804
      %1806 = vrot.lane.b32.xlu0 %v1168, 12
      %v1807 = vpop.permute.xlu0 %1806
      %1808 = vrot.lane.b32.xlu0 %v1169, 12
      %v1809 = vpop.permute.xlu0 %1808
      %vm1810 = vcmask 97280
      %v1811 = vsel %vm1810, %v1803, %v1805
      %v1812 = vsel %vm1810, %v1807, %v1809
      %v1814 = vshrl.u32 %v1169, 16
      %v1816 = vrot.slane %v1814, 2
      %v1817 = vshll.u32 %v1169, 16
      %v1819 = vrot.slane %v1817, 3
      %v1820 = vor.u32 %v1816, %v1819
      %v1822 = vshrl.u32 %v1171, 16
      %v1824 = vrot.slane %v1822, 2
      %v1825 = vshll.u32 %v1171, 16
      %v1827 = vrot.slane %v1825, 3
      %v1828 = vor.u32 %v1824, %v1827
      %v1829 = vsel %vm1174, %v1820, %v1828
      %1830 = vrot.lane.b32.xlu0 %v1191, 40
      %v1831 = vpop.permute.xlu0 %1830
      %1832 = vrot.lane.b32.xlu0 %v1829, 40
      %v1833 = vpop.permute.xlu0 %1832
      %1834 = vrot.lane.b32.xlu0 %v1190, 40
      %v1835 = vpop.permute.xlu0 %1834
      %1836 = vrot.lane.b32.xlu0 %v1828, 40
      %v1837 = vpop.permute.xlu0 %1836
      %vm1838 = vcmask 326656
      %v1839 = vsel %vm1838, %v1831, %v1833
      %v1840 = vsel %vm1838, %v1835, %v1837
      %v1843 = vrot.slane %v1171, 5
      %v1844 = vrot.slane %v1173, 5
      %v1845 = vsel %vm1198, %v1843, %v1844
      %1846 = vrot.lane.b32.xlu0 %v1201, 68
      %v1847 = vpop.permute.xlu0 %1846
      %1848 = vrot.lane.b32.xlu0 %v1845, 68
      %v1849 = vpop.permute.xlu0 %1848
      %1850 = vrot.lane.b32.xlu0 %v1200, 68
      %v1851 = vpop.permute.xlu0 %1850
      %1852 = vrot.lane.b32.xlu0 %v1844, 68
      %v1853 = vpop.permute.xlu0 %1852
      %vm1854 = vcmask 556032
      %v1855 = vsel %vm1854, %v1847, %v1849
      %v1856 = vsel %vm1854, %v1851, %v1853
      %v1859 = vsel %vm1324, %v1811, %v1839
      %v1862 = vsel %vm1324, %v1812, %v1840
      %v1864 = vsel %vm1331, %v1859, %v1855
      %v1866 = vsel %vm1331, %v1862, %v1856
      %v1867 = vld [vmem:[%s15] sm:$0xf]
      %v1868 = vld [vmem:[%s15 + $0x4] sm:$0xf]
      %v1869 = vld [vmem:[%s15 + $0x8] sm:$0xf]
      %v1870 = vld [vmem:[%s15 + $0xc] sm:$0xf]
      %v1871 = vld [vmem:[%s15 + $0x10] sm:$0xf]
      %v1872 = vld [vmem:[%s15 + $0x14] sm:$0xf]
      %v1873 = vld [vmem:[%s15 + $0x18] sm:$0xf]
      %v1874 = vld [vmem:[%s15 + $0x1c] sm:$0xf]
      %v1875 = vld [vmem:[%s15 + $0x20] sm:$0xf]
      %v1876 = vld [vmem:[%s15 + $0x24] sm:$0xf]
      %v1877 = vld [vmem:[%s15 + $0x28] sm:$0x3]
      %v1889 = vunpack.c.l.b16 %v1867
      %v1890 = vunpack.c.l.b16 %v1868
      %v1891 = vunpack.c.l.b16 %v1869
      %v1892 = vunpack.c.l.b16 %v1870
      %v1893 = vunpack.c.l.b16 %v1871
      %v1894 = vunpack.c.l.b16 %v1872
      %v1895 = vunpack.c.l.b16 %v1873
      %v1896 = vunpack.c.l.b16 %v1874
      %v1897 = vunpack.c.l.b16 %v1875
      %v1898 = vunpack.c.l.b16 %v1876
      %v1899 = vunpack.c.l.b16 %v1877
      %v1900 = vpack.c.b16 %v1890, %v1889
      %v1901 = vpack.c.b16 %v1892, %v1891
      %v1902 = vpack.c.b16 %v1894, %v1893
      %v1903 = vpack.c.b16 %v1896, %v1895
      %v1904 = vpack.c.b16 %v1898, %v1897
      %v1905 = vpack.c.b16 %v1899, %v1899
      %v1911 = vsel %vm1380, %v1864, 0
      %v1913 = vsel %vm1380, %v1866, 0
      %v1916 = vsel %vm1385, %v1905, 0
      %1918 = vmatprep.subr.bf16.mxu0 0
      %1919 = vmatpush1.bf16.msra.mxu0 %v1900
      %1920 = vmatprep.subr.bf16.mxu0 0
      %1921 = vmatpush1.bf16.msra.mxu0 %v1901
      %1922 = vmatprep.subr.bf16.mxu0 0
      %1923 = vmatpush1.bf16.msra.mxu0 %v1902
      %1924 = vmatprep.subr.bf16.mxu0 0
      %1925 = vmatpush1.bf16.msra.mxu0 %v1903
      %1926 = vmatprep.subr.bf16.mxu0 0
      %1927 = vmatpush1.bf16.msra.mxu0 %v1904
      %1928 = vmatprep.subr.bf16.mxu0 0
      %1929 = vmatpush1.bf16.msra.mxu0 %v1916
      %1930 = vmatprep.subr.bf16.mxu0 0
      %1931 = vmatpush1.bf16.msra.mxu0 0
      %1932 = vmatprep.subr.bf16.mxu0 0
      %1933 = vmatpush1.bf16.msra.mxu0 0
      %1934 = vmatprep.subr.bf16.mxu0 0
      %1935 = vmatpush1.bf16.msra.mxu0 0
      %1936 = vmatprep.subr.bf16.mxu0 0
      %1937 = vmatpush1.bf16.msra.mxu0 0
      %1938 = vmatprep.subr.bf16.mxu0 0
      %1939 = vmatpush1.bf16.msra.mxu0 0
      %1940 = vmatprep.subr.bf16.mxu0 0
      %1941 = vmatpush1.bf16.msra.mxu0 0
      %1942 = vmatprep.subr.bf16.mxu0 0
      %1943 = vmatpush1.bf16.msra.mxu0 0
      %1944 = vmatprep.subr.bf16.mxu0 0
      %1945 = vmatpush1.bf16.msra.mxu0 0
      %1946 = vmatprep.subr.bf16.mxu0 0
      %1947 = vmatpush1.bf16.msra.mxu0 0
      %1948 = vmatprep.subr.bf16.mxu0 0
      %1949 = vmatpush1.bf16.msra.mxu0 0
      %1950 = vmatprep.mubr.bf16.mxu0 0
      %1951 = vmatmul.mubr.bf16.gmra.mrb[0].mxu0 %v1911
      %v1952 = vpop.f32.mrb[0].mxu0
      %v1953 = vadd.f32 0.0, %v1952
      %v1954 = vpop.f32.mrb[0].mxu0
      %v1955 = vpop.f32.mrb[0].mxu0
      %v1956 = vadd.f32 0.0, %v1955
      %v1957 = vpop.f32.mrb[0].mxu0
      %1958 = vmatprep.mubr.bf16.mxu0 0
      %1959 = vmatmul.mubr.bf16.gmra.mrb[0].mxu0 %v1913
      %v1960 = vpop.f32.mrb[0].mxu0
      %v1961 = vadd.f32 0.0, %v1960
      %v1962 = vpop.f32.mrb[0].mxu0
      %v1963 = vpop.f32.mrb[0].mxu0
      %v1964 = vpop.f32.mrb[0].mxu0
      %1965 = vdwg.mxu0
      %1966 = vrot.lane.b32.xlu0 %v1167, 116
      %v1967 = vpop.permute.xlu0 %1966
      %1968 = vrot.lane.b32.xlu0 %v1169, 116
      %v1969 = vpop.permute.xlu0 %1968
      %1970 = vrot.lane.b32.xlu0 %v1829, 16
      %v1971 = vpop.permute.xlu0 %1970
      %1972 = vrot.lane.b32.xlu0 %v1828, 16
      %v1973 = vpop.permute.xlu0 %1972
      %1974 = vrot.lane.b32.xlu0 %v1845, 44
      %v1975 = vpop.permute.xlu0 %1974
      %1976 = vrot.lane.b32.xlu0 %v1844, 44
      %v1977 = vpop.permute.xlu0 %1976
      %v1980 = vsel %vm1324, %v1967, %v1971
      %v1983 = vsel %vm1324, %v1969, %v1973
      %v1985 = vsel %vm1331, %v1980, %v1975
      %v1987 = vsel %vm1331, %v1983, %v1977
      %v1988 = vld [vmem:[%s17] sm:$0xf]
      %v1989 = vld [vmem:[%s17 + $0x4] sm:$0xf]
      %v1990 = vld [vmem:[%s17 + $0x8] sm:$0xf]
      %v1991 = vld [vmem:[%s17 + $0xc] sm:$0xf]
      %v1992 = vld [vmem:[%s17 + $0x10] sm:$0xf]
      %v1993 = vld [vmem:[%s17 + $0x14] sm:$0xf]
      %v1994 = vld [vmem:[%s17 + $0x18] sm:$0xf]
      %v1995 = vld [vmem:[%s17 + $0x1c] sm:$0xf]
      %v1996 = vld [vmem:[%s17 + $0x20] sm:$0xf]
      %v1997 = vld [vmem:[%s17 + $0x24] sm:$0xf]
      %v1998 = vld [vmem:[%s17 + $0x28] sm:$0x3]
      %v2010 = vunpack.c.l.b16 %v1988
      %v2011 = vunpack.c.l.b16 %v1989
      %v2012 = vunpack.c.l.b16 %v1990
      %v2013 = vunpack.c.l.b16 %v1991
      %v2014 = vunpack.c.l.b16 %v1992
      %v2015 = vunpack.c.l.b16 %v1993
      %v2016 = vunpack.c.l.b16 %v1994
      %v2017 = vunpack.c.l.b16 %v1995
      %v2018 = vunpack.c.l.b16 %v1996
      %v2019 = vunpack.c.l.b16 %v1997
      %v2020 = vunpack.c.l.b16 %v1998
      %v2021 = vpack.c.b16 %v2011, %v2010
      %v2022 = vpack.c.b16 %v2013, %v2012
      %v2023 = vpack.c.b16 %v2015, %v2014
      %v2024 = vpack.c.b16 %v2017, %v2016
      %v2025 = vpack.c.b16 %v2019, %v2018
      %v2026 = vpack.c.b16 %v2020, %v2020
      %v2032 = vsel %vm1380, %v1985, 0
      %v2034 = vsel %vm1380, %v1987, 0
      %v2037 = vsel %vm1385, %v2026, 0
      %2039 = vmatprep.subr.bf16.mxu0 0
      %2040 = vmatpush1.bf16.msra.mxu0 %v2021
      %2041 = vmatprep.subr.bf16.mxu0 0
      %2042 = vmatpush1.bf16.msra.mxu0 %v2022
      %2043 = vmatprep.subr.bf16.mxu0 0
      %2044 = vmatpush1.bf16.msra.mxu0 %v2023
      %2045 = vmatprep.subr.bf16.mxu0 0
      %2046 = vmatpush1.bf16.msra.mxu0 %v2024
      %2047 = vmatprep.subr.bf16.mxu0 0
      %2048 = vmatpush1.bf16.msra.mxu0 %v2025
      %2049 = vmatprep.subr.bf16.mxu0 0
      %2050 = vmatpush1.bf16.msra.mxu0 %v2037
      %2051 = vmatprep.subr.bf16.mxu0 0
      %2052 = vmatpush1.bf16.msra.mxu0 0
      %2053 = vmatprep.subr.bf16.mxu0 0
      %2054 = vmatpush1.bf16.msra.mxu0 0
      %2055 = vmatprep.subr.bf16.mxu0 0
      %2056 = vmatpush1.bf16.msra.mxu0 0
      %2057 = vmatprep.subr.bf16.mxu0 0
      %2058 = vmatpush1.bf16.msra.mxu0 0
      %2059 = vmatprep.subr.bf16.mxu0 0
      %2060 = vmatpush1.bf16.msra.mxu0 0
      %2061 = vmatprep.subr.bf16.mxu0 0
      %2062 = vmatpush1.bf16.msra.mxu0 0
      %2063 = vmatprep.subr.bf16.mxu0 0
      %2064 = vmatpush1.bf16.msra.mxu0 0
      %2065 = vmatprep.subr.bf16.mxu0 0
      %2066 = vmatpush1.bf16.msra.mxu0 0
      %2067 = vmatprep.subr.bf16.mxu0 0
      %2068 = vmatpush1.bf16.msra.mxu0 0
      %2069 = vmatprep.subr.bf16.mxu0 0
      %2070 = vmatpush1.bf16.msra.mxu0 0
      %2071 = vmatprep.mubr.bf16.mxu0 0
      %2072 = vmatmul.mubr.bf16.gmra.mrb[0].mxu0 %v2032
      %v2073 = vpop.f32.mrb[0].mxu0
      %v2074 = vadd.f32 0.0, %v2073
      %v2075 = vpop.f32.mrb[0].mxu0
      %v2076 = vpop.f32.mrb[0].mxu0
      %v2077 = vadd.f32 0.0, %v2076
      %v2078 = vpop.f32.mrb[0].mxu0
      %2079 = vmatprep.mubr.bf16.mxu0 0
      %2080 = vmatmul.mubr.bf16.gmra.mrb[0].mxu0 %v2034
      %v2081 = vpop.f32.mrb[0].mxu0
      %v2082 = vadd.f32 0.0, %v2081
      %v2083 = vpop.f32.mrb[0].mxu0
      %v2084 = vpop.f32.mrb[0].mxu0
      %v2085 = vpop.f32.mrb[0].mxu0
      %2086 = vdwg.mxu0
      %2090 = vrot.lane.b32.xlu0 %v1424, 96
      %v2091 = vpop.permute.xlu0 %2090
      %2092 = vrot.lane.b32.xlu0 %v1427, 96
      %v2093 = vpop.permute.xlu0 %2092
      %2094 = vrot.lane.b32.xlu0 %v1432, 96
      %v2095 = vpop.permute.xlu0 %2094
      %2102 = vrot.lane.b32.xlu0 %v1545, 64
      %v2103 = vpop.permute.xlu0 %2102
      %2104 = vrot.lane.b32.xlu0 %v1548, 64
      %v2105 = vpop.permute.xlu0 %2104
      %2106 = vrot.lane.b32.xlu0 %v1553, 64
      %v2107 = vpop.permute.xlu0 %2106
      %2114 = vrot.lane.b32.xlu0 %v1666, 32
      %v2115 = vpop.permute.xlu0 %2114
      %2116 = vrot.lane.b32.xlu0 %v1669, 32
      %v2117 = vpop.permute.xlu0 %2116
      %2118 = vrot.lane.b32.xlu0 %v1674, 32
      %v2119 = vpop.permute.xlu0 %2118
      %2126 = vrot.lane.b32.xlu0 %v1953, 96
      %v2127 = vpop.permute.xlu0 %2126
      %2128 = vrot.lane.b32.xlu0 %v1956, 96
      %v2129 = vpop.permute.xlu0 %2128
      %2130 = vrot.lane.b32.xlu0 %v1961, 96
      %v2131 = vpop.permute.xlu0 %2130
      %2138 = vrot.lane.b32.xlu0 %v2074, 64
      %v2139 = vpop.permute.xlu0 %2138
      %2140 = vrot.lane.b32.xlu0 %v2077, 64
      %v2141 = vpop.permute.xlu0 %2140
      %2142 = vrot.lane.b32.xlu0 %v2082, 64
      %v2143 = vpop.permute.xlu0 %2142
      %vm2147 = vcmask 785408
      %v2148 = vsel %vm2147, %v1297, %v2091
      %v2149 = vsel %vm2147, %v1300, %v2093
      %v2150 = vsel %vm2147, %v1305, %v2095
      %vm2151 = vcmask 523264
      %v2152 = vsel %vm2151, %v2091, %v2103
      %v2153 = vsel %vm2151, %v2093, %v2105
      %v2154 = vsel %vm2151, %v2095, %v2107
      %vm2155 = vcmask 261120
      %v2156 = vsel %vm2155, %v2103, %v2115
      %v2157 = vsel %vm2155, %v2105, %v2117
      %v2158 = vsel %vm2155, %v2107, %v2119
      %v2159 = vsel %vm2147, %v1787, %v2127
      %v2160 = vsel %vm2147, %v1790, %v2129
      %v2161 = vsel %vm2147, %v1795, %v2131
      %v2162 = vsel %vm2151, %v2127, %v2139
      %v2163 = vsel %vm2151, %v2129, %v2141
      %v2164 = vsel %vm2151, %v2131, %v2143
      %v2165 = vld [vmem:[%s19] sm:$0x3f]
      %v2167 = vlaneseq
      %v2168 = vshrl.u32 %v2167, 7
      %v2169 = vsub.s32 0, %v2168
      %v2170 = vrot.slane %v2165, %v2169
      %v2171 = vlaneseq
      %v2172 = vshrl.u32 %v2171, 7
      %v2173 = vsub.s32 1, %v2172
      %v2174 = vrot.slane %v2165, %v2173
      %v2175 = vlaneseq
      %v2176 = vshrl.u32 %v2175, 7
      %v2177 = vsub.s32 2, %v2176
      %v2178 = vrot.slane %v2165, %v2177
      %v2179 = vlaneseq
      %v2180 = vshrl.u32 %v2179, 7
      %v2181 = vsub.s32 3, %v2180
      %v2182 = vrot.slane %v2165, %v2181
      %v2183 = vlaneseq
      %v2184 = vshrl.u32 %v2183, 7
      %v2185 = vsub.s32 4, %v2184
      %v2186 = vrot.slane %v2165, %v2185
      %v2187 = vlaneseq
      %v2188 = vshrl.u32 %v2187, 7
      %v2189 = vsub.s32 5, %v2188
      %v2190 = vrot.slane %v2165, %v2189
      %v2197 = vadd.f32 %v2148, %v2170
      %v2198 = vadd.f32 %v2152, %v2174
      %v2199 = vadd.f32 %v2156, %v2178
      %v2200 = vadd.f32 %v2159, %v2182
      %v2201 = vadd.f32 %v2162, %v2186
      %v2202 = vadd.f32 %v2139, %v2190
      %v2203 = vadd.f32 %v2149, %v2170
      %v2204 = vadd.f32 %v2153, %v2174
      %v2205 = vadd.f32 %v2157, %v2178
      %v2206 = vadd.f32 %v2160, %v2182
      %v2207 = vadd.f32 %v2163, %v2186
      %v2208 = vadd.f32 %v2141, %v2190
      %v2209 = vadd.f32 %v2150, %v2170
      %v2210 = vadd.f32 %v2154, %v2174
      %v2211 = vadd.f32 %v2158, %v2178
      %v2212 = vadd.f32 %v2161, %v2182
      %v2213 = vadd.f32 %v2164, %v2186
      %v2214 = vadd.f32 %v2143, %v2190
      %vm2215 = vcmp.gt.f32.partialorder %v2197, 0.0
      %vm2216 = vcmp.gt.f32.partialorder %v2198, 0.0
      %vm2217 = vcmp.gt.f32.partialorder %v2199, 0.0
      %vm2218 = vcmp.gt.f32.partialorder %v2200, 0.0
      %vm2219 = vcmp.gt.f32.partialorder %v2201, 0.0
      %vm2220 = vcmp.gt.f32.partialorder %v2202, 0.0
      %vm2221 = vcmp.gt.f32.partialorder %v2203, 0.0
      %vm2222 = vcmp.gt.f32.partialorder %v2204, 0.0
      %vm2223 = vcmp.gt.f32.partialorder %v2205, 0.0
      %vm2224 = vcmp.gt.f32.partialorder %v2206, 0.0
      %vm2225 = vcmp.gt.f32.partialorder %v2207, 0.0
      %vm2226 = vcmp.gt.f32.partialorder %v2208, 0.0
      %vm2227 = vcmp.gt.f32.partialorder %v2209, 0.0
      %vm2228 = vcmp.gt.f32.partialorder %v2210, 0.0
      %vm2229 = vcmp.gt.f32.partialorder %v2211, 0.0
      %vm2230 = vcmp.gt.f32.partialorder %v2212, 0.0
      %vm2231 = vcmp.gt.f32.partialorder %v2213, 0.0
      %vm2232 = vcmp.gt.f32.partialorder %v2214, 0.0
      %v2233 = vmin.f32 %v2197, 0.0
      %v2234 = vmin.f32 %v2198, 0.0
      %v2235 = vmin.f32 %v2199, 0.0
      %v2236 = vmin.f32 %v2200, 0.0
      %v2237 = vmin.f32 %v2201, 0.0
      %v2238 = vmin.f32 %v2202, 0.0
      %v2239 = vmin.f32 %v2203, 0.0
      %v2240 = vmin.f32 %v2204, 0.0
      %v2241 = vmin.f32 %v2205, 0.0
      %v2242 = vmin.f32 %v2206, 0.0
      %v2243 = vmin.f32 %v2207, 0.0
      %v2244 = vmin.f32 %v2208, 0.0
      %v2245 = vmin.f32 %v2209, 0.0
      %v2246 = vmin.f32 %v2210, 0.0
      %v2247 = vmin.f32 %v2211, 0.0
      %v2248 = vmin.f32 %v2212, 0.0
      %v2249 = vmin.f32 %v2213, 0.0
      %v2250 = vmin.f32 %v2214, 0.0
      %v2251 = vmul.f32 %v2233, 1.442695
      %v2252 = vpow.pop %v2251
      %v2253 = vmul.f32 %v2234, 1.442695
      %v2254 = vpow.pop %v2253
      %v2255 = vmul.f32 %v2235, 1.442695
      %v2256 = vpow.pop %v2255
      %v2257 = vmul.f32 %v2236, 1.442695
      %v2258 = vpow.pop %v2257
      %v2259 = vmul.f32 %v2237, 1.442695
      %v2260 = vpow.pop %v2259
      %v2261 = vmul.f32 %v2238, 1.442695
      %v2262 = vpow.pop %v2261
      %v2263 = vmul.f32 %v2239, 1.442695
      %v2264 = vpow.pop %v2263
      %v2265 = vmul.f32 %v2240, 1.442695
      %v2266 = vpow.pop %v2265
      %v2267 = vmul.f32 %v2241, 1.442695
      %v2268 = vpow.pop %v2267
      %v2269 = vmul.f32 %v2242, 1.442695
      %v2270 = vpow.pop %v2269
      %v2271 = vmul.f32 %v2243, 1.442695
      %v2272 = vpow.pop %v2271
      %v2273 = vmul.f32 %v2244, 1.442695
      %v2274 = vpow.pop %v2273
      %v2275 = vmul.f32 %v2245, 1.442695
      %v2276 = vpow.pop %v2275
      %v2277 = vmul.f32 %v2246, 1.442695
      %v2278 = vpow.pop %v2277
      %v2279 = vmul.f32 %v2247, 1.442695
      %v2280 = vpow.pop %v2279
      %v2281 = vmul.f32 %v2248, 1.442695
      %v2282 = vpow.pop %v2281
      %v2283 = vmul.f32 %v2249, 1.442695
      %v2284 = vpow.pop %v2283
      %v2285 = vmul.f32 %v2250, 1.442695
      %v2286 = vpow.pop %v2285
      %v2287 = vsub.f32 %v2252, 1.0
      %v2288 = vsub.f32 %v2254, 1.0
      %v2289 = vsub.f32 %v2256, 1.0
      %v2290 = vsub.f32 %v2258, 1.0
      %v2291 = vsub.f32 %v2260, 1.0
      %v2292 = vsub.f32 %v2262, 1.0
      %v2293 = vsub.f32 %v2264, 1.0
      %v2294 = vsub.f32 %v2266, 1.0
      %v2295 = vsub.f32 %v2268, 1.0
      %v2296 = vsub.f32 %v2270, 1.0
      %v2297 = vsub.f32 %v2272, 1.0
      %v2298 = vsub.f32 %v2274, 1.0
      %v2299 = vsub.f32 %v2276, 1.0
      %v2300 = vsub.f32 %v2278, 1.0
      %v2301 = vsub.f32 %v2280, 1.0
      %v2302 = vsub.f32 %v2282, 1.0
      %v2303 = vsub.f32 %v2284, 1.0
      %v2304 = vsub.f32 %v2286, 1.0
      %v2305 = vsel %vm2215, %v2197, %v2287
      %v2306 = vsel %vm2216, %v2198, %v2288
      %v2307 = vsel %vm2217, %v2199, %v2289
      %v2308 = vsel %vm2218, %v2200, %v2290
      %v2309 = vsel %vm2219, %v2201, %v2291
      %v2310 = vsel %vm2220, %v2202, %v2292
      %v2311 = vsel %vm2221, %v2203, %v2293
      %v2312 = vsel %vm2222, %v2204, %v2294
      %v2313 = vsel %vm2223, %v2205, %v2295
      %v2314 = vsel %vm2224, %v2206, %v2296
      %v2315 = vsel %vm2225, %v2207, %v2297
      %v2316 = vsel %vm2226, %v2208, %v2298
      %v2317 = vsel %vm2227, %v2209, %v2299
      %v2318 = vsel %vm2228, %v2210, %v2300
      %v2319 = vsel %vm2229, %v2211, %v2301
      %v2320 = vsel %vm2230, %v2212, %v2302
      %v2321 = vsel %vm2231, %v2213, %v2303
      %v2322 = vsel %vm2232, %v2214, %v2304
      %v2323 = vpack.c.bf16 %v2311, %v2305
      %v2324 = vpack.c.bf16 %v2312, %v2306
      %v2325 = vpack.c.bf16 %v2313, %v2307
      %v2326 = vpack.c.bf16 %v2314, %v2308
      %v2327 = vpack.c.bf16 %v2315, %v2309
      %v2328 = vpack.c.bf16 %v2316, %v2310
      %v2329 = vpack.c.bf16 %v2317, %v2317
      %v2330 = vpack.c.bf16 %v2318, %v2318
      %v2331 = vpack.c.bf16 %v2319, %v2319
      %v2332 = vpack.c.bf16 %v2320, %v2320
      %v2333 = vpack.c.bf16 %v2321, %v2321
      %v2334 = vpack.c.bf16 %v2322, %v2322
      %v2335 = vld [vmem:[%s21] sm:$0xf]
      %v2336 = vld [vmem:[%s21 + $0x4] sm:$0xf]
      %v2337 = vld [vmem:[%s21 + $0x8] sm:$0xf]
      %v2338 = vld [vmem:[%s21 + $0xc] sm:$0xf]
      %v2339 = vld [vmem:[%s21 + $0x10] sm:$0x1]
      %v2345 = vunpack.c.l.b16 %v2335
      %v2346 = vunpack.c.l.b16 %v2336
      %v2347 = vunpack.c.l.b16 %v2337
      %v2348 = vunpack.c.l.b16 %v2338
      %v2349 = vunpack.c.l.b16 %v2339
      %v2350 = vpack.c.b16 %v2346, %v2345
      %v2351 = vpack.c.b16 %v2348, %v2347
      %v2352 = vpack.c.b16 %v2349, %v2349
      %vm2353 = vcmask 171008
      %v2355 = vsel %vm2353, %v2350, 0
      %v2358 = vsel %vm2353, %v2351, 0
      %v2361 = vsel %vm2353, %v2352, 0
      %vm2363 = vcmask 1042432
      %v2364 = vsel %vm1385, 4294967295, 65535
      %v2365 = vsel %vm2363, %v2364, 0
      %v2367 = vand.u32 %v2329, %v2365
      %v2370 = vand.u32 %v2330, %v2365
      %v2373 = vand.u32 %v2331, %v2365
      %v2376 = vand.u32 %v2332, %v2365
      %v2379 = vand.u32 %v2333, %v2365
      %v2382 = vand.u32 %v2334, %v2365
      %2384 = vmatprep.subr.bf16.mxu0 %v2324
      %2385 = vmatpush1.bf16.msra.mxu0 %v2323
      %2386 = vmatprep.subr.bf16.mxu0 %v2370
      %2387 = vmatpush1.bf16.msra.mxu0 %v2367
      %2388 = vmatprep.subr.bf16.mxu0 0
      %2389 = vmatpush1.bf16.msra.mxu0 0
      %2390 = vmatprep.subr.bf16.mxu0 0
      %2391 = vmatpush1.bf16.msra.mxu0 0
      %2392 = vmatprep.subr.bf16.mxu0 0
      %2393 = vmatpush1.bf16.msra.mxu0 0
      %2394 = vmatprep.subr.bf16.mxu0 0
      %2395 = vmatpush1.bf16.msra.mxu0 0
      %2396 = vmatprep.subr.bf16.mxu0 0
      %2397 = vmatpush1.bf16.msra.mxu0 0
      %2398 = vmatprep.subr.bf16.mxu0 0
      %2399 = vmatpush1.bf16.msra.mxu0 0
      %2400 = vmatprep.subr.bf16.mxu0 0
      %2401 = vmatpush1.bf16.msra.mxu0 0
      %2402 = vmatprep.subr.bf16.mxu0 0
      %2403 = vmatpush1.bf16.msra.mxu0 0
      %2404 = vmatprep.subr.bf16.mxu0 0
      %2405 = vmatpush1.bf16.msra.mxu0 0
      %2406 = vmatprep.subr.bf16.mxu0 0
      %2407 = vmatpush1.bf16.msra.mxu0 0
      %2408 = vmatprep.subr.bf16.mxu0 0
      %2409 = vmatpush1.bf16.msra.mxu0 0
      %2410 = vmatprep.subr.bf16.mxu0 0
      %2411 = vmatpush1.bf16.msra.mxu0 0
      %2412 = vmatprep.subr.bf16.mxu0 0
      %2413 = vmatpush1.bf16.msra.mxu0 0
      %2414 = vmatprep.subr.bf16.mxu0 0
      %2415 = vmatpush1.bf16.msra.mxu0 0
      %2416 = vmatprep.mubr.bf16.mxu0 0
      %2417 = vmatmul.mubr.bf16.gmra.mrb[0].mxu0 %v2355
      %v2418 = vpop.f32.mrb[0].mxu0
      %v2419 = vadd.f32 0.0, %v2418
      %v2420 = vpop.f32.mrb[0].mxu0
      %v2421 = vadd.f32 0.0, %v2420
      %v2422 = vpop.f32.mrb[0].mxu0
      %v2423 = vadd.f32 0.0, %v2422
      %v2424 = vpop.f32.mrb[0].mxu0
      %v2425 = vadd.f32 0.0, %v2424
      %2426 = vmatprep.mubr.bf16.mxu0 0
      %2427 = vmatmul.mubr.bf16.gmra.mrb[0].mxu0 %v2358
      %v2428 = vpop.f32.mrb[0].mxu0
      %v2429 = vadd.f32 0.0, %v2428
      %v2430 = vpop.f32.mrb[0].mxu0
      %v2431 = vadd.f32 0.0, %v2430
      %v2432 = vpop.f32.mrb[0].mxu0
      %v2433 = vadd.f32 0.0, %v2432
      %v2434 = vpop.f32.mrb[0].mxu0
      %v2435 = vadd.f32 0.0, %v2434
      %2436 = vmatprep.mubr.bf16.mxu0 0
      %2437 = vmatmul.mubr.bf16.gmra.mrb[0].mxu0 %v2361
      %v2438 = vpop.f32.mrb[0].mxu0
      %v2439 = vadd.f32 0.0, %v2438
      %v2440 = vpop.f32.mrb[0].mxu0
      %v2441 = vadd.f32 0.0, %v2440
      %v2442 = vpop.f32.mrb[0].mxu0
      %v2443 = vpop.f32.mrb[0].mxu0
      %2444 = vdwg.mxu0
      %2445 = vmatprep.subr.bf16.mxu0 %v2326
      %2446 = vmatpush1.bf16.msra.mxu0 %v2325
      %2447 = vmatprep.subr.bf16.mxu0 %v2376
      %2448 = vmatpush1.bf16.msra.mxu0 %v2373
      %2449 = vmatprep.subr.bf16.mxu0 0
      %2450 = vmatpush1.bf16.msra.mxu0 0
      %2451 = vmatprep.subr.bf16.mxu0 0
      %2452 = vmatpush1.bf16.msra.mxu0 0
      %2453 = vmatprep.subr.bf16.mxu0 0
      %2454 = vmatpush1.bf16.msra.mxu0 0
      %2455 = vmatprep.subr.bf16.mxu0 0
      %2456 = vmatpush1.bf16.msra.mxu0 0
      %2457 = vmatprep.subr.bf16.mxu0 0
      %2458 = vmatpush1.bf16.msra.mxu0 0
      %2459 = vmatprep.subr.bf16.mxu0 0
      %2460 = vmatpush1.bf16.msra.mxu0 0
      %2461 = vmatprep.subr.bf16.mxu0 0
      %2462 = vmatpush1.bf16.msra.mxu0 0
      %2463 = vmatprep.subr.bf16.mxu0 0
      %2464 = vmatpush1.bf16.msra.mxu0 0
      %2465 = vmatprep.subr.bf16.mxu0 0
      %2466 = vmatpush1.bf16.msra.mxu0 0
      %2467 = vmatprep.subr.bf16.mxu0 0
      %2468 = vmatpush1.bf16.msra.mxu0 0
      %2469 = vmatprep.subr.bf16.mxu0 0
      %2470 = vmatpush1.bf16.msra.mxu0 0
      %2471 = vmatprep.subr.bf16.mxu0 0
      %2472 = vmatpush1.bf16.msra.mxu0 0
      %2473 = vmatprep.subr.bf16.mxu0 0
      %2474 = vmatpush1.bf16.msra.mxu0 0
      %2475 = vmatprep.subr.bf16.mxu0 0
      %2476 = vmatpush1.bf16.msra.mxu0 0
      %2477 = vmatprep.mubr.bf16.mxu0 0
      %2478 = vmatmul.mubr.bf16.gmra.mrb[0].mxu0 %v2355
      %v2479 = vpop.f32.mrb[0].mxu0
      %v2480 = vadd.f32 0.0, %v2479
      %v2481 = vpop.f32.mrb[0].mxu0
      %v2482 = vadd.f32 0.0, %v2481
      %v2483 = vpop.f32.mrb[0].mxu0
      %v2484 = vadd.f32 0.0, %v2483
      %v2485 = vpop.f32.mrb[0].mxu0
      %v2486 = vadd.f32 0.0, %v2485
      %2487 = vmatprep.mubr.bf16.mxu0 0
      %2488 = vmatmul.mubr.bf16.gmra.mrb[0].mxu0 %v2358
      %v2489 = vpop.f32.mrb[0].mxu0
      %v2490 = vadd.f32 0.0, %v2489
      %v2491 = vpop.f32.mrb[0].mxu0
      %v2492 = vadd.f32 0.0, %v2491
      %v2493 = vpop.f32.mrb[0].mxu0
      %v2494 = vadd.f32 0.0, %v2493
      %v2495 = vpop.f32.mrb[0].mxu0
      %v2496 = vadd.f32 0.0, %v2495
      %2497 = vmatprep.mubr.bf16.mxu0 0
      %2498 = vmatmul.mubr.bf16.gmra.mrb[0].mxu0 %v2361
      %v2499 = vpop.f32.mrb[0].mxu0
      %v2500 = vadd.f32 0.0, %v2499
      %v2501 = vpop.f32.mrb[0].mxu0
      %v2502 = vadd.f32 0.0, %v2501
      %v2503 = vpop.f32.mrb[0].mxu0
      %v2504 = vpop.f32.mrb[0].mxu0
      %2505 = vdwg.mxu0
      %2506 = vmatprep.subr.bf16.mxu0 %v2328
      %2507 = vmatpush1.bf16.msra.mxu0 %v2327
      %2508 = vmatprep.subr.bf16.mxu0 %v2382
      %2509 = vmatpush1.bf16.msra.mxu0 %v2379
      %2510 = vmatprep.subr.bf16.mxu0 0
      %2511 = vmatpush1.bf16.msra.mxu0 0
      %2512 = vmatprep.subr.bf16.mxu0 0
      %2513 = vmatpush1.bf16.msra.mxu0 0
      %2514 = vmatprep.subr.bf16.mxu0 0
      %2515 = vmatpush1.bf16.msra.mxu0 0
      %2516 = vmatprep.subr.bf16.mxu0 0
      %2517 = vmatpush1.bf16.msra.mxu0 0
      %2518 = vmatprep.subr.bf16.mxu0 0
      %2519 = vmatpush1.bf16.msra.mxu0 0
      %2520 = vmatprep.subr.bf16.mxu0 0
      %2521 = vmatpush1.bf16.msra.mxu0 0
      %2522 = vmatprep.subr.bf16.mxu0 0
      %2523 = vmatpush1.bf16.msra.mxu0 0
      %2524 = vmatprep.subr.bf16.mxu0 0
      %2525 = vmatpush1.bf16.msra.mxu0 0
      %2526 = vmatprep.subr.bf16.mxu0 0
      %2527 = vmatpush1.bf16.msra.mxu0 0
      %2528 = vmatprep.subr.bf16.mxu0 0
      %2529 = vmatpush1.bf16.msra.mxu0 0
      %2530 = vmatprep.subr.bf16.mxu0 0
      %2531 = vmatpush1.bf16.msra.mxu0 0
      %2532 = vmatprep.subr.bf16.mxu0 0
      %2533 = vmatpush1.bf16.msra.mxu0 0
      %2534 = vmatprep.subr.bf16.mxu0 0
      %2535 = vmatpush1.bf16.msra.mxu0 0
      %2536 = vmatprep.subr.bf16.mxu0 0
      %2537 = vmatpush1.bf16.msra.mxu0 0
      %2538 = vmatprep.mubr.bf16.mxu0 0
      %2539 = vmatmul.mubr.bf16.gmra.mrb[0].mxu0 %v2355
      %v2540 = vpop.f32.mrb[0].mxu0
      %v2541 = vadd.f32 0.0, %v2540
      %v2542 = vpop.f32.mrb[0].mxu0
      %v2543 = vadd.f32 0.0, %v2542
      %v2544 = vpop.f32.mrb[0].mxu0
      %v2545 = vadd.f32 0.0, %v2544
      %v2546 = vpop.f32.mrb[0].mxu0
      %v2547 = vadd.f32 0.0, %v2546
      %2548 = vmatprep.mubr.bf16.mxu0 0
      %2549 = vmatmul.mubr.bf16.gmra.mrb[0].mxu0 %v2358
      %v2550 = vpop.f32.mrb[0].mxu0
      %v2551 = vadd.f32 0.0, %v2550
      %v2552 = vpop.f32.mrb[0].mxu0
      %v2553 = vadd.f32 0.0, %v2552
      %v2554 = vpop.f32.mrb[0].mxu0
      %v2555 = vadd.f32 0.0, %v2554
      %v2556 = vpop.f32.mrb[0].mxu0
      %v2557 = vadd.f32 0.0, %v2556
      %2558 = vmatprep.mubr.bf16.mxu0 0
      %2559 = vmatmul.mubr.bf16.gmra.mrb[0].mxu0 %v2361
      %v2560 = vpop.f32.mrb[0].mxu0
      %v2561 = vadd.f32 0.0, %v2560
      %v2562 = vpop.f32.mrb[0].mxu0
      %v2563 = vadd.f32 0.0, %v2562
      %v2564 = vpop.f32.mrb[0].mxu0
      %v2565 = vpop.f32.mrb[0].mxu0
      %2566 = vdwg.mxu0
      %v2567 = vpack.c.bf16 %v2423, %v2419
      %v2568 = vpack.c.bf16 %v2425, %v2421
      %v2569 = vpack.c.bf16 %v2484, %v2480
      %v2570 = vpack.c.bf16 %v2486, %v2482
      %v2571 = vpack.c.bf16 %v2545, %v2541
      %v2572 = vpack.c.bf16 %v2547, %v2543
      %v2573 = vpack.c.bf16 %v2433, %v2429
      %v2574 = vpack.c.bf16 %v2435, %v2431
      %v2575 = vpack.c.bf16 %v2494, %v2490
      %v2576 = vpack.c.bf16 %v2496, %v2492
      %v2577 = vpack.c.bf16 %v2555, %v2551
      %v2578 = vpack.c.bf16 %v2557, %v2553
      %v2579 = vpack.c.bf16 %v2439, %v2439
      %v2580 = vpack.c.bf16 %v2441, %v2441
      %v2581 = vpack.c.bf16 %v2500, %v2500
      %v2582 = vpack.c.bf16 %v2502, %v2502
      %v2583 = vpack.c.bf16 %v2561, %v2561
      %v2584 = vpack.c.bf16 %v2563, %v2563
      %vm2585 = vsmask.f32 2304
      %v2587 = vshrl.u32 %v2567, 16
      %v2589 = vrot.slane %v2587, 5
      %v2590 = vshll.u32 %v2567, 16
      %v2592 = vrot.slane %v2590, 6
      %v2593 = vor.u32 %v2589, %v2592
      %v2595 = vshrl.u32 %v2573, 16
      %v2597 = vrot.slane %v2595, 5
      %v2598 = vshll.u32 %v2573, 16
      %v2600 = vrot.slane %v2598, 6
      %v2601 = vor.u32 %v2597, %v2600
      %v2602 = vsel %vm2585, %v2593, %v2601
      %v2604 = vshrl.u32 %v2568, 16
      %v2606 = vrot.slane %v2604, 5
      %v2607 = vshll.u32 %v2568, 16
      %v2609 = vrot.slane %v2607, 6
      %v2610 = vor.u32 %v2606, %v2609
      %v2612 = vshrl.u32 %v2574, 16
      %v2614 = vrot.slane %v2612, 5
      %v2615 = vshll.u32 %v2574, 16
      %v2617 = vrot.slane %v2615, 6
      %v2618 = vor.u32 %v2614, %v2617
      %v2619 = vsel %vm2585, %v2610, %v2618
      %2620 = vrot.lane.b32.xlu0 %v2602, 64
      %v2621 = vpop.permute.xlu0 %2620
      %2622 = vrot.lane.b32.xlu0 %v2619, 64
      %v2623 = vpop.permute.xlu0 %2622
      %vm2624 = vcmask 523264
      %v2625 = vsel %vm2624, %v2621, %v2623
      %vm2631 = vcmask 1044480
      %v2632 = vrot.slane %v2573, 3
      %v2633 = vrot.slane %v2579, 3
      %v2634 = vsel %vm2631, %v2632, %v2633
      %v2635 = vrot.slane %v2574, 3
      %v2636 = vrot.slane %v2580, 3
      %v2637 = vsel %vm2631, %v2635, %v2636
      %v2640 = vsel %vm2151, %v2568, %v2621
      %v2642 = vld [vmem:[%s23] sm:$0xf]
      %v2643 = vld [vmem:[%s23 + $0x4] sm:$0xf]
      %v2644 = vld [vmem:[%s23 + $0x8] sm:$0xf]
      %v2645 = vld [vmem:[%s23 + $0xc] sm:$0xf]
      %v2646 = vld [vmem:[%s23 + $0x10] sm:$0xf]
      %v2647 = vld [vmem:[%s23 + $0x14] sm:$0xf]
      %v2648 = vld [vmem:[%s23 + $0x18] sm:$0xf]
      %v2649 = vld [vmem:[%s23 + $0x1c] sm:$0xf]
      %v2650 = vld [vmem:[%s23 + $0x20] sm:$0xf]
      %v2651 = vld [vmem:[%s23 + $0x24] sm:$0xf]
      %v2652 = vld [vmem:[%s23 + $0x28] sm:$0xf]
      %v2653 = vld [vmem:[%s23 + $0x2c] sm:$0xf]
      %v2654 = vld [vmem:[%s23 + $0x30] sm:$0xf]
      %v2655 = vld [vmem:[%s23 + $0x34] sm:$0xf]
      %v2656 = vld [vmem:[%s23 + $0x38] sm:$0xf]
      %v2657 = vld [vmem:[%s23 + $0x3c] sm:$0xf]
      %v2658 = vld [vmem:[%s23 + $0x40] sm:$0xf]
      %v2659 = vld [vmem:[%s23 + $0x44] sm:$0xf]
      %v2660 = vld [vmem:[%s23 + $0x48] sm:$0xf]
      %v2661 = vld [vmem:[%s23 + $0x4c] sm:$0xf]
      %v2662 = vld [vmem:[%s23 + $0x50] sm:$0xf]
      %v2663 = vld [vmem:[%s23 + $0x54] sm:$0xf]
      %v2664 = vld [vmem:[%s23 + $0x58] sm:$0xf]
      %v2665 = vld [vmem:[%s23 + $0x5c] sm:$0xf]
      %v2666 = vld [vmem:[%s23 + $0x60] sm:$0xf]
      %v2667 = vld [vmem:[%s23 + $0x64] sm:$0xf]
      %v2668 = vld [vmem:[%s23 + $0x68] sm:$0xf]
      %v2669 = vld [vmem:[%s23 + $0x6c] sm:$0xf]
      %v2670 = vld [vmem:[%s23 + $0x70] sm:$0xf]
      %v2671 = vld [vmem:[%s23 + $0x74] sm:$0xf]
      %v2672 = vld [vmem:[%s23 + $0x78] sm:$0xf]
      %v2673 = vld [vmem:[%s23 + $0x7c] sm:$0xf]
      %v2674 = vld [vmem:[%s23 + $0x80] sm:$0xf]
      %v2675 = vld [vmem:[%s23 + $0x84] sm:$0xf]
      %v2676 = vld [vmem:[%s23 + $0x88] sm:$0xf]
      %v2677 = vld [vmem:[%s23 + $0x8c] sm:$0xf]
      %v2678 = vld [vmem:[%s23 + $0x90] sm:$0xf]
      %v2679 = vld [vmem:[%s23 + $0x94] sm:$0xf]
      %v2680 = vld [vmem:[%s23 + $0x98] sm:$0xf]
      %v2681 = vld [vmem:[%s23 + $0x9c] sm:$0xf]
      %v2682 = vld [vmem:[%s23 + $0xa0] sm:$0xf]
      %v2683 = vld [vmem:[%s23 + $0xa4] sm:$0xf]
      %v2684 = vld [vmem:[%s23 + $0xa8] sm:$0xf]
      %v2685 = vld [vmem:[%s23 + $0xac] sm:$0xf]
      %v2686 = vld [vmem:[%s23 + $0xb0] sm:$0xf]
      %v2687 = vld [vmem:[%s23 + $0xb4] sm:$0xf]
      %v2688 = vld [vmem:[%s23 + $0xb8] sm:$0xf]
      %v2689 = vld [vmem:[%s23 + $0xbc] sm:$0xf]
      %v2690 = vld [vmem:[%s23 + $0xc0] sm:$0xf]
      %v2691 = vld [vmem:[%s23 + $0xc4] sm:$0xf]
      %v2692 = vld [vmem:[%s23 + $0xc8] sm:$0xf]
      %v2693 = vld [vmem:[%s23 + $0xcc] sm:$0xf]
      %v2694 = vld [vmem:[%s23 + $0xd0] sm:$0xf]
      %v2695 = vld [vmem:[%s23 + $0xd4] sm:$0xf]
      %v2696 = vld [vmem:[%s23 + $0xd8] sm:$0xf]
      %v2697 = vld [vmem:[%s23 + $0xdc] sm:$0xf]
      %v2698 = vld [vmem:[%s23 + $0xe0] sm:$0xf]
      %v2699 = vld [vmem:[%s23 + $0xe4] sm:$0xf]
      %v2700 = vld [vmem:[%s23 + $0xe8] sm:$0xf]
      %v2701 = vld [vmem:[%s23 + $0xec] sm:$0xf]
      %v2702 = vld [vmem:[%s23 + $0xf0] sm:$0xf]
      %v2703 = vld [vmem:[%s23 + $0xf4] sm:$0xf]
      %v2704 = vld [vmem:[%s23 + $0xf8] sm:$0xf]
      %v2705 = vld [vmem:[%s23 + $0xfc] sm:$0xf]
      %v2706 = vld [vmem:[%s23 + $0x100] sm:$0xf]
      %v2707 = vld [vmem:[%s23 + $0x104] sm:$0xf]
      %v2708 = vld [vmem:[%s23 + $0x108] sm:$0xf]
      %v2709 = vld [vmem:[%s23 + $0x10c] sm:$0xf]
      %v2710 = vld [vmem:[%s23 + $0x110] sm:$0xf]
      %v2711 = vld [vmem:[%s23 + $0x114] sm:$0xf]
      %v2712 = vld [vmem:[%s23 + $0x118] sm:$0xf]
      %v2713 = vld [vmem:[%s23 + $0x11c] sm:$0xf]
      %v2786 = vunpack.c.l.b16 %v2642
      %v2787 = vunpack.c.l.b16 %v2643
      %v2788 = vunpack.c.l.b16 %v2644
      %v2789 = vunpack.c.l.b16 %v2645
      %v2790 = vunpack.c.l.b16 %v2646
      %v2791 = vunpack.c.l.b16 %v2647
      %v2792 = vunpack.c.l.b16 %v2648
      %v2793 = vunpack.c.l.b16 %v2649
      %v2794 = vunpack.c.l.b16 %v2650
      %v2795 = vunpack.c.l.b16 %v2651
      %v2796 = vunpack.c.l.b16 %v2652
      %v2797 = vunpack.c.l.b16 %v2653
      %v2798 = vunpack.c.l.b16 %v2654
      %v2799 = vunpack.c.l.b16 %v2655
      %v2800 = vunpack.c.l.b16 %v2656
      %v2801 = vunpack.c.l.b16 %v2657
      %v2802 = vunpack.c.l.b16 %v2658
      %v2803 = vunpack.c.l.b16 %v2659
      %v2804 = vunpack.c.l.b16 %v2660
      %v2805 = vunpack.c.l.b16 %v2661
      %v2806 = vunpack.c.l.b16 %v2662
      %v2807 = vunpack.c.l.b16 %v2663
      %v2808 = vunpack.c.l.b16 %v2664
      %v2809 = vunpack.c.l.b16 %v2665
      %v2810 = vunpack.c.l.b16 %v2666
      %v2811 = vunpack.c.l.b16 %v2667
      %v2812 = vunpack.c.l.b16 %v2668
      %v2813 = vunpack.c.l.b16 %v2669
      %v2814 = vunpack.c.l.b16 %v2670
      %v2815 = vunpack.c.l.b16 %v2671
      %v2816 = vunpack.c.l.b16 %v2672
      %v2817 = vunpack.c.l.b16 %v2673
      %v2818 = vunpack.c.l.b16 %v2674
      %v2819 = vunpack.c.l.b16 %v2675
      %v2820 = vunpack.c.l.b16 %v2676
      %v2821 = vunpack.c.l.b16 %v2677
      %v2822 = vunpack.c.l.b16 %v2678
      %v2823 = vunpack.c.l.b16 %v2679
      %v2824 = vunpack.c.l.b16 %v2680
      %v2825 = vunpack.c.l.b16 %v2681
      %v2826 = vunpack.c.l.b16 %v2682
      %v2827 = vunpack.c.l.b16 %v2683
      %v2828 = vunpack.c.l.b16 %v2684
      %v2829 = vunpack.c.l.b16 %v2685
      %v2830 = vunpack.c.l.b16 %v2686
      %v2831 = vunpack.c.l.b16 %v2687
      %v2832 = vunpack.c.l.b16 %v2688
      %v2833 = vunpack.c.l.b16 %v2689
      %v2834 = vunpack.c.l.b16 %v2690
      %v2835 = vunpack.c.l.b16 %v2691
      %v2836 = vunpack.c.l.b16 %v2692
      %v2837 = vunpack.c.l.b16 %v2693
      %v2838 = vunpack.c.l.b16 %v2694
      %v2839 = vunpack.c.l.b16 %v2695
      %v2840 = vunpack.c.l.b16 %v2696
      %v2841 = vunpack.c.l.b16 %v2697
      %v2842 = vunpack.c.l.b16 %v2698
      %v2843 = vunpack.c.l.b16 %v2699
      %v2844 = vunpack.c.l.b16 %v2700
      %v2845 = vunpack.c.l.b16 %v2701
      %v2846 = vunpack.c.l.b16 %v2702
      %v2847 = vunpack.c.l.b16 %v2703
      %v2848 = vunpack.c.l.b16 %v2704
      %v2849 = vunpack.c.l.b16 %v2705
      %v2850 = vunpack.c.l.b16 %v2706
      %v2851 = vunpack.c.l.b16 %v2707
      %v2852 = vunpack.c.l.b16 %v2708
      %v2853 = vunpack.c.l.b16 %v2709
      %v2854 = vunpack.c.l.b16 %v2710
      %v2855 = vunpack.c.l.b16 %v2711
      %v2856 = vunpack.c.l.b16 %v2712
      %v2857 = vunpack.c.l.b16 %v2713
      %v2858 = vpack.c.b16 %v2787, %v2786
      %v2859 = vpack.c.b16 %v2789, %v2788
      %v2860 = vpack.c.b16 %v2791, %v2790
      %v2861 = vpack.c.b16 %v2793, %v2792
      %v2862 = vpack.c.b16 %v2795, %v2794
      %v2863 = vpack.c.b16 %v2797, %v2796
      %v2864 = vpack.c.b16 %v2799, %v2798
      %v2865 = vpack.c.b16 %v2801, %v2800
      %v2866 = vpack.c.b16 %v2803, %v2802
      %v2867 = vpack.c.b16 %v2805, %v2804
      %v2868 = vpack.c.b16 %v2807, %v2806
      %v2869 = vpack.c.b16 %v2809, %v2808
      %v2870 = vpack.c.b16 %v2811, %v2810
      %v2871 = vpack.c.b16 %v2813, %v2812
      %v2872 = vpack.c.b16 %v2815, %v2814
      %v2873 = vpack.c.b16 %v2817, %v2816
      %v2874 = vpack.c.b16 %v2819, %v2818
      %v2875 = vpack.c.b16 %v2821, %v2820
      %v2876 = vpack.c.b16 %v2823, %v2822
      %v2877 = vpack.c.b16 %v2825, %v2824
      %v2878 = vpack.c.b16 %v2827, %v2826
      %v2879 = vpack.c.b16 %v2829, %v2828
      %v2880 = vpack.c.b16 %v2831, %v2830
      %v2881 = vpack.c.b16 %v2833, %v2832
      %v2882 = vpack.c.b16 %v2835, %v2834
      %v2883 = vpack.c.b16 %v2837, %v2836
      %v2884 = vpack.c.b16 %v2839, %v2838
      %v2885 = vpack.c.b16 %v2841, %v2840
      %v2886 = vpack.c.b16 %v2843, %v2842
      %v2887 = vpack.c.b16 %v2845, %v2844
      %v2888 = vpack.c.b16 %v2847, %v2846
      %v2889 = vpack.c.b16 %v2849, %v2848
      %v2890 = vpack.c.b16 %v2851, %v2850
      %v2891 = vpack.c.b16 %v2853, %v2852
      %v2892 = vpack.c.b16 %v2855, %v2854
      %v2893 = vpack.c.b16 %v2857, %v2856
      %v2931 = vsel %vm2151, %v2637, 0
      %2933 = vmatprep.subr.bf16.mxu0 0
      %2934 = vmatpush1.bf16.msra.mxu0 %v2858
      %2935 = vmatprep.subr.bf16.mxu0 0
      %2936 = vmatpush1.bf16.msra.mxu0 %v2859
      %2937 = vmatprep.subr.bf16.mxu0 0
      %2938 = vmatpush1.bf16.msra.mxu0 %v2860
      %2939 = vmatprep.subr.bf16.mxu0 0
      %2940 = vmatpush1.bf16.msra.mxu0 %v2861
      %2941 = vmatprep.subr.bf16.mxu0 0
      %2942 = vmatpush1.bf16.msra.mxu0 %v2862
      %2943 = vmatprep.subr.bf16.mxu0 0
      %2944 = vmatpush1.bf16.msra.mxu0 %v2863
      %2945 = vmatprep.subr.bf16.mxu0 0
      %2946 = vmatpush1.bf16.msra.mxu0 %v2864
      %2947 = vmatprep.subr.bf16.mxu0 0
      %2948 = vmatpush1.bf16.msra.mxu0 %v2865
      %2949 = vmatprep.subr.bf16.mxu0 0
      %2950 = vmatpush1.bf16.msra.mxu0 %v2866
      %2951 = vmatprep.subr.bf16.mxu0 0
      %2952 = vmatpush1.bf16.msra.mxu0 %v2867
      %2953 = vmatprep.subr.bf16.mxu0 0
      %2954 = vmatpush1.bf16.msra.mxu0 %v2868
      %2955 = vmatprep.subr.bf16.mxu0 0
      %2956 = vmatpush1.bf16.msra.mxu0 %v2869
      %2957 = vmatprep.subr.bf16.mxu0 0
      %2958 = vmatpush1.bf16.msra.mxu0 %v2870
      %2959 = vmatprep.subr.bf16.mxu0 0
      %2960 = vmatpush1.bf16.msra.mxu0 %v2871
      %2961 = vmatprep.subr.bf16.mxu0 0
      %2962 = vmatpush1.bf16.msra.mxu0 %v2872
      %2963 = vmatprep.subr.bf16.mxu0 0
      %2964 = vmatpush1.bf16.msra.mxu0 %v2873
      %2965 = vmatprep.mubr.bf16.mxu0 %v2640
      %2966 = vmatmul.mubr.bf16.gmra.mrb[0].mxu0 %v2567
      %v2967 = vpop.f32.mrb[0].mxu0
      %v2968 = vadd.f32 0.0, %v2967
      %v2969 = vpop.f32.mrb[0].mxu0
      %v2970 = vpop.f32.mrb[0].mxu0
      %v2971 = vadd.f32 0.0, %v2970
      %v2972 = vpop.f32.mrb[0].mxu0
      %2973 = vdwg.mxu0
      %2974 = vmatprep.subr.bf16.mxu0 0
      %2975 = vmatpush1.bf16.msra.mxu0 %v2874
      %2976 = vmatprep.subr.bf16.mxu0 0
      %2977 = vmatpush1.bf16.msra.mxu0 %v2875
      %2978 = vmatprep.subr.bf16.mxu0 0
      %2979 = vmatpush1.bf16.msra.mxu0 %v2876
      %2980 = vmatprep.subr.bf16.mxu0 0
      %2981 = vmatpush1.bf16.msra.mxu0 %v2877
      %2982 = vmatprep.subr.bf16.mxu0 0
      %2983 = vmatpush1.bf16.msra.mxu0 %v2878
      %2984 = vmatprep.subr.bf16.mxu0 0
      %2985 = vmatpush1.bf16.msra.mxu0 %v2879
      %2986 = vmatprep.subr.bf16.mxu0 0
      %2987 = vmatpush1.bf16.msra.mxu0 %v2880
      %2988 = vmatprep.subr.bf16.mxu0 0
      %2989 = vmatpush1.bf16.msra.mxu0 %v2881
      %2990 = vmatprep.subr.bf16.mxu0 0
      %2991 = vmatpush1.bf16.msra.mxu0 %v2882
      %2992 = vmatprep.subr.bf16.mxu0 0
      %2993 = vmatpush1.bf16.msra.mxu0 %v2883
      %2994 = vmatprep.subr.bf16.mxu0 0
      %2995 = vmatpush1.bf16.msra.mxu0 %v2884
      %2996 = vmatprep.subr.bf16.mxu0 0
      %2997 = vmatpush1.bf16.msra.mxu0 %v2885
      %2998 = vmatprep.subr.bf16.mxu0 0
      %2999 = vmatpush1.bf16.msra.mxu0 %v2886
      %3000 = vmatprep.subr.bf16.mxu0 0
      %3001 = vmatpush1.bf16.msra.mxu0 %v2887
      %3002 = vmatprep.subr.bf16.mxu0 0
      %3003 = vmatpush1.bf16.msra.mxu0 %v2888
      %3004 = vmatprep.subr.bf16.mxu0 0
      %3005 = vmatpush1.bf16.msra.mxu0 %v2889
      %3006 = vmatprep.mubr.bf16.mxu0 %v2634
      %3007 = vmatmul.mubr.bf16.gmra.mrb[0].mxu0 %v2625
      %v3008 = vpop.f32.mrb[0].mxu0
      %v3009 = vadd.f32 %v2968, %v3008
      %v3010 = vpop.f32.mrb[0].mxu0
      %v3011 = vpop.f32.mrb[0].mxu0
      %v3012 = vadd.f32 %v2971, %v3011
      %v3013 = vpop.f32.mrb[0].mxu0
      %3014 = vdwg.mxu0
      %3015 = vmatprep.subr.bf16.mxu0 0
      %3016 = vmatpush1.bf16.msra.mxu0 %v2890
      %3017 = vmatprep.subr.bf16.mxu0 0
      %3018 = vmatpush1.bf16.msra.mxu0 %v2891
      %3019 = vmatprep.subr.bf16.mxu0 0
      %3020 = vmatpush1.bf16.msra.mxu0 %v2892
      %3021 = vmatprep.subr.bf16.mxu0 0
      %3022 = vmatpush1.bf16.msra.mxu0 %v2893
      %3023 = vmatprep.subr.bf16.mxu0 0
      %3024 = vmatpush1.bf16.msra.mxu0 0
      %3025 = vmatprep.subr.bf16.mxu0 0
      %3026 = vmatpush1.bf16.msra.mxu0 0
      %3027 = vmatprep.subr.bf16.mxu0 0
      %3028 = vmatpush1.bf16.msra.mxu0 0
      %3029 = vmatprep.subr.bf16.mxu0 0
      %3030 = vmatpush1.bf16.msra.mxu0 0
      %3031 = vmatprep.subr.bf16.mxu0 0
      %3032 = vmatpush1.bf16.msra.mxu0 0
      %3033 = vmatprep.subr.bf16.mxu0 0
      %3034 = vmatpush1.bf16.msra.mxu0 0
      %3035 = vmatprep.subr.bf16.mxu0 0
      %3036 = vmatpush1.bf16.msra.mxu0 0
      %3037 = vmatprep.subr.bf16.mxu0 0
      %3038 = vmatpush1.bf16.msra.mxu0 0
      %3039 = vmatprep.subr.bf16.mxu0 0
      %3040 = vmatpush1.bf16.msra.mxu0 0
      %3041 = vmatprep.subr.bf16.mxu0 0
      %3042 = vmatpush1.bf16.msra.mxu0 0
      %3043 = vmatprep.subr.bf16.mxu0 0
      %3044 = vmatpush1.bf16.msra.mxu0 0
      %3045 = vmatprep.subr.bf16.mxu0 0
      %3046 = vmatpush1.bf16.msra.mxu0 0
      %3047 = vmatprep.mubr.bf16.mxu0 0
      %3048 = vmatmul.mubr.bf16.gmra.mrb[0].mxu0 %v2931
      %v3049 = vpop.f32.mrb[0].mxu0
      %v3050 = vadd.f32 %v3009, %v3049
      %v3051 = vpop.f32.mrb[0].mxu0
      %v3052 = vpop.f32.mrb[0].mxu0
      %v3053 = vadd.f32 %v3012, %v3052
      %v3054 = vpop.f32.mrb[0].mxu0
      %3055 = vdwg.mxu0
      %3058 = vrot.lane.b32.xlu0 %v2568, 96
      %v3059 = vpop.permute.xlu0 %3058
      %3060 = vrot.lane.b32.xlu0 %v2569, 96
      %v3061 = vpop.permute.xlu0 %3060
      %vm3062 = vcmask 785408
      %v3063 = vsel %vm3062, %v3059, %v3061
      %v3066 = vshrl.u32 %v2569, 16
      %v3068 = vrot.slane %v3066, 5
      %v3069 = vshll.u32 %v2569, 16
      %v3071 = vrot.slane %v3069, 6
      %v3072 = vor.u32 %v3068, %v3071
      %v3074 = vshrl.u32 %v2575, 16
      %v3076 = vrot.slane %v3074, 5
      %v3077 = vshll.u32 %v2575, 16
      %v3079 = vrot.slane %v3077, 6
      %v3080 = vor.u32 %v3076, %v3079
      %v3081 = vsel %vm2585, %v3072, %v3080
      %3082 = vrot.lane.b32.xlu0 %v3081, 64
      %v3083 = vpop.permute.xlu0 %3082
      %v3084 = vsel %vm2624, %v2623, %v3083
      %v3088 = vrot.slane %v2575, 3
      %v3089 = vrot.slane %v2581, 3
      %v3090 = vsel %vm2631, %v3088, %v3089
      %3091 = vrot.lane.b32.xlu0 %v2637, 32
      %v3092 = vpop.permute.xlu0 %3091
      %3093 = vrot.lane.b32.xlu0 %v3090, 32
      %v3094 = vpop.permute.xlu0 %3093
      %vm3095 = vcmask 261120
      %v3096 = vsel %vm3095, %v3092, %v3094
      %v3100 = vsel %vm2147, %v3061, %v2623
      %v3104 = vsel %vm2151, %v3083, %v3092
      %v3106 = vld [vmem:[%s25] sm:$0xf]
      %v3107 = vld [vmem:[%s25 + $0x4] sm:$0xf]
      %v3108 = vld [vmem:[%s25 + $0x8] sm:$0xf]
      %v3109 = vld [vmem:[%s25 + $0xc] sm:$0xf]
      %v3110 = vld [vmem:[%s25 + $0x10] sm:$0xf]
      %v3111 = vld [vmem:[%s25 + $0x14] sm:$0xf]
      %v3112 = vld [vmem:[%s25 + $0x18] sm:$0xf]
      %v3113 = vld [vmem:[%s25 + $0x1c] sm:$0xf]
      %v3114 = vld [vmem:[%s25 + $0x20] sm:$0xf]
      %v3115 = vld [vmem:[%s25 + $0x24] sm:$0xf]
      %v3116 = vld [vmem:[%s25 + $0x28] sm:$0xf]
      %v3117 = vld [vmem:[%s25 + $0x2c] sm:$0xf]
      %v3118 = vld [vmem:[%s25 + $0x30] sm:$0xf]
      %v3119 = vld [vmem:[%s25 + $0x34] sm:$0xf]
      %v3120 = vld [vmem:[%s25 + $0x38] sm:$0xf]
      %v3121 = vld [vmem:[%s25 + $0x3c] sm:$0xf]
      %v3122 = vld [vmem:[%s25 + $0x40] sm:$0xf]
      %v3123 = vld [vmem:[%s25 + $0x44] sm:$0xf]
      %v3124 = vld [vmem:[%s25 + $0x48] sm:$0xf]
      %v3125 = vld [vmem:[%s25 + $0x4c] sm:$0xf]
      %v3126 = vld [vmem:[%s25 + $0x50] sm:$0xf]
      %v3127 = vld [vmem:[%s25 + $0x54] sm:$0xf]
      %v3128 = vld [vmem:[%s25 + $0x58] sm:$0xf]
      %v3129 = vld [vmem:[%s25 + $0x5c] sm:$0xf]
      %v3130 = vld [vmem:[%s25 + $0x60] sm:$0xf]
      %v3131 = vld [vmem:[%s25 + $0x64] sm:$0xf]
      %v3132 = vld [vmem:[%s25 + $0x68] sm:$0xf]
      %v3133 = vld [vmem:[%s25 + $0x6c] sm:$0xf]
      %v3134 = vld [vmem:[%s25 + $0x70] sm:$0xf]
      %v3135 = vld [vmem:[%s25 + $0x74] sm:$0xf]
      %v3136 = vld [vmem:[%s25 + $0x78] sm:$0xf]
      %v3137 = vld [vmem:[%s25 + $0x7c] sm:$0xf]
      %v3138 = vld [vmem:[%s25 + $0x80] sm:$0xf]
      %v3139 = vld [vmem:[%s25 + $0x84] sm:$0xf]
      %v3140 = vld [vmem:[%s25 + $0x88] sm:$0xf]
      %v3141 = vld [vmem:[%s25 + $0x8c] sm:$0xf]
      %v3142 = vld [vmem:[%s25 + $0x90] sm:$0xf]
      %v3143 = vld [vmem:[%s25 + $0x94] sm:$0xf]
      %v3144 = vld [vmem:[%s25 + $0x98] sm:$0xf]
      %v3145 = vld [vmem:[%s25 + $0x9c] sm:$0xf]
      %v3146 = vld [vmem:[%s25 + $0xa0] sm:$0xf]
      %v3147 = vld [vmem:[%s25 + $0xa4] sm:$0xf]
      %v3148 = vld [vmem:[%s25 + $0xa8] sm:$0xf]
      %v3149 = vld [vmem:[%s25 + $0xac] sm:$0xf]
      %v3150 = vld [vmem:[%s25 + $0xb0] sm:$0xf]
      %v3151 = vld [vmem:[%s25 + $0xb4] sm:$0xf]
      %v3152 = vld [vmem:[%s25 + $0xb8] sm:$0xf]
      %v3153 = vld [vmem:[%s25 + $0xbc] sm:$0xf]
      %v3154 = vld [vmem:[%s25 + $0xc0] sm:$0xf]
      %v3155 = vld [vmem:[%s25 + $0xc4] sm:$0xf]
      %v3156 = vld [vmem:[%s25 + $0xc8] sm:$0xf]
      %v3157 = vld [vmem:[%s25 + $0xcc] sm:$0xf]
      %v3158 = vld [vmem:[%s25 + $0xd0] sm:$0xf]
      %v3159 = vld [vmem:[%s25 + $0xd4] sm:$0xf]
      %v3160 = vld [vmem:[%s25 + $0xd8] sm:$0xf]
      %v3161 = vld [vmem:[%s25 + $0xdc] sm:$0xf]
      %v3162 = vld [vmem:[%s25 + $0xe0] sm:$0xf]
      %v3163 = vld [vmem:[%s25 + $0xe4] sm:$0xf]
      %v3164 = vld [vmem:[%s25 + $0xe8] sm:$0xf]
      %v3165 = vld [vmem:[%s25 + $0xec] sm:$0xf]
      %v3166 = vld [vmem:[%s25 + $0xf0] sm:$0xf]
      %v3167 = vld [vmem:[%s25 + $0xf4] sm:$0xf]
      %v3168 = vld [vmem:[%s25 + $0xf8] sm:$0xf]
      %v3169 = vld [vmem:[%s25 + $0xfc] sm:$0xf]
      %v3170 = vld [vmem:[%s25 + $0x100] sm:$0xf]
      %v3171 = vld [vmem:[%s25 + $0x104] sm:$0xf]
      %v3172 = vld [vmem:[%s25 + $0x108] sm:$0xf]
      %v3173 = vld [vmem:[%s25 + $0x10c] sm:$0xf]
      %v3174 = vld [vmem:[%s25 + $0x110] sm:$0xf]
      %v3175 = vld [vmem:[%s25 + $0x114] sm:$0xf]
      %v3176 = vld [vmem:[%s25 + $0x118] sm:$0xf]
      %v3177 = vld [vmem:[%s25 + $0x11c] sm:$0xf]
      %v3178 = vld [vmem:[%s25 + $0x120] sm:$0xf]
      %v3179 = vld [vmem:[%s25 + $0x124] sm:$0xf]
      %v3180 = vld [vmem:[%s25 + $0x128] sm:$0xf]
      %v3181 = vld [vmem:[%s25 + $0x12c] sm:$0xf]
      %v3182 = vld [vmem:[%s25 + $0x130] sm:$0xf]
      %v3183 = vld [vmem:[%s25 + $0x134] sm:$0xf]
      %v3184 = vld [vmem:[%s25 + $0x138] sm:$0xf]
      %v3185 = vld [vmem:[%s25 + $0x13c] sm:$0xf]
      %v3186 = vld [vmem:[%s25 + $0x140] sm:$0xf]
      %v3187 = vld [vmem:[%s25 + $0x144] sm:$0xf]
      %v3188 = vld [vmem:[%s25 + $0x148] sm:$0xf]
      %v3189 = vld [vmem:[%s25 + $0x14c] sm:$0xf]
      %v3274 = vunpack.c.l.b16 %v3106
      %v3275 = vunpack.c.l.b16 %v3107
      %v3276 = vunpack.c.l.b16 %v3108
      %v3277 = vunpack.c.l.b16 %v3109
      %v3278 = vunpack.c.l.b16 %v3110
      %v3279 = vunpack.c.l.b16 %v3111
      %v3280 = vunpack.c.l.b16 %v3112
      %v3281 = vunpack.c.l.b16 %v3113
      %v3282 = vunpack.c.l.b16 %v3114
      %v3283 = vunpack.c.l.b16 %v3115
      %v3284 = vunpack.c.l.b16 %v3116
      %v3285 = vunpack.c.l.b16 %v3117
      %v3286 = vunpack.c.l.b16 %v3118
      %v3287 = vunpack.c.l.b16 %v3119
      %v3288 = vunpack.c.l.b16 %v3120
      %v3289 = vunpack.c.l.b16 %v3121
      %v3290 = vunpack.c.l.b16 %v3122
      %v3291 = vunpack.c.l.b16 %v3123
      %v3292 = vunpack.c.l.b16 %v3124
      %v3293 = vunpack.c.l.b16 %v3125
      %v3294 = vunpack.c.l.b16 %v3126
      %v3295 = vunpack.c.l.b16 %v3127
      %v3296 = vunpack.c.l.b16 %v3128
      %v3297 = vunpack.c.l.b16 %v3129
      %v3298 = vunpack.c.l.b16 %v3130
      %v3299 = vunpack.c.l.b16 %v3131
      %v3300 = vunpack.c.l.b16 %v3132
      %v3301 = vunpack.c.l.b16 %v3133
      %v3302 = vunpack.c.l.b16 %v3134
      %v3303 = vunpack.c.l.b16 %v3135
      %v3304 = vunpack.c.l.b16 %v3136
      %v3305 = vunpack.c.l.b16 %v3137
      %v3306 = vunpack.c.l.b16 %v3138
      %v3307 = vunpack.c.l.b16 %v3139
      %v3308 = vunpack.c.l.b16 %v3140
      %v3309 = vunpack.c.l.b16 %v3141
      %v3310 = vunpack.c.l.b16 %v3142
      %v3311 = vunpack.c.l.b16 %v3143
      %v3312 = vunpack.c.l.b16 %v3144
      %v3313 = vunpack.c.l.b16 %v3145
      %v3314 = vunpack.c.l.b16 %v3146
      %v3315 = vunpack.c.l.b16 %v3147
      %v3316 = vunpack.c.l.b16 %v3148
      %v3317 = vunpack.c.l.b16 %v3149
      %v3318 = vunpack.c.l.b16 %v3150
      %v3319 = vunpack.c.l.b16 %v3151
      %v3320 = vunpack.c.l.b16 %v3152
      %v3321 = vunpack.c.l.b16 %v3153
      %v3322 = vunpack.c.l.b16 %v3154
      %v3323 = vunpack.c.l.b16 %v3155
      %v3324 = vunpack.c.l.b16 %v3156
      %v3325 = vunpack.c.l.b16 %v3157
      %v3326 = vunpack.c.l.b16 %v3158
      %v3327 = vunpack.c.l.b16 %v3159
      %v3328 = vunpack.c.l.b16 %v3160
      %v3329 = vunpack.c.l.b16 %v3161
      %v3330 = vunpack.c.l.b16 %v3162
      %v3331 = vunpack.c.l.b16 %v3163
      %v3332 = vunpack.c.l.b16 %v3164
      %v3333 = vunpack.c.l.b16 %v3165
      %v3334 = vunpack.c.l.b16 %v3166
      %v3335 = vunpack.c.l.b16 %v3167
      %v3336 = vunpack.c.l.b16 %v3168
      %v3337 = vunpack.c.l.b16 %v3169
      %v3338 = vunpack.c.l.b16 %v3170
      %v3339 = vunpack.c.l.b16 %v3171
      %v3340 = vunpack.c.l.b16 %v3172
      %v3341 = vunpack.c.l.b16 %v3173
      %v3342 = vunpack.c.l.b16 %v3174
      %v3343 = vunpack.c.l.b16 %v3175
      %v3344 = vunpack.c.l.b16 %v3176
      %v3345 = vunpack.c.l.b16 %v3177
      %v3346 = vunpack.c.l.b16 %v3178
      %v3347 = vunpack.c.l.b16 %v3179
      %v3348 = vunpack.c.l.b16 %v3180
      %v3349 = vunpack.c.l.b16 %v3181
      %v3350 = vunpack.c.l.b16 %v3182
      %v3351 = vunpack.c.l.b16 %v3183
      %v3352 = vunpack.c.l.b16 %v3184
      %v3353 = vunpack.c.l.b16 %v3185
      %v3354 = vunpack.c.l.b16 %v3186
      %v3355 = vunpack.c.l.b16 %v3187
      %v3356 = vunpack.c.l.b16 %v3188
      %v3357 = vunpack.c.l.b16 %v3189
      %v3358 = vpack.c.b16 %v3275, %v3274
      %v3359 = vpack.c.b16 %v3277, %v3276
      %v3360 = vpack.c.b16 %v3279, %v3278
      %v3361 = vpack.c.b16 %v3281, %v3280
      %v3362 = vpack.c.b16 %v3283, %v3282
      %v3363 = vpack.c.b16 %v3285, %v3284
      %v3364 = vpack.c.b16 %v3287, %v3286
      %v3365 = vpack.c.b16 %v3289, %v3288
      %v3366 = vpack.c.b16 %v3291, %v3290
      %v3367 = vpack.c.b16 %v3293, %v3292
      %v3368 = vpack.c.b16 %v3295, %v3294
      %v3369 = vpack.c.b16 %v3297, %v3296
      %v3370 = vpack.c.b16 %v3299, %v3298
      %v3371 = vpack.c.b16 %v3301, %v3300
      %v3372 = vpack.c.b16 %v3303, %v3302
      %v3373 = vpack.c.b16 %v3305, %v3304
      %v3374 = vpack.c.b16 %v3307, %v3306
      %v3375 = vpack.c.b16 %v3309, %v3308
      %v3376 = vpack.c.b16 %v3311, %v3310
      %v3377 = vpack.c.b16 %v3313, %v3312
      %v3378 = vpack.c.b16 %v3315, %v3314
      %v3379 = vpack.c.b16 %v3317, %v3316
      %v3380 = vpack.c.b16 %v3319, %v3318
      %v3381 = vpack.c.b16 %v3321, %v3320
      %v3382 = vpack.c.b16 %v3323, %v3322
      %v3383 = vpack.c.b16 %v3325, %v3324
      %v3384 = vpack.c.b16 %v3327, %v3326
      %v3385 = vpack.c.b16 %v3329, %v3328
      %v3386 = vpack.c.b16 %v3331, %v3330
      %v3387 = vpack.c.b16 %v3333, %v3332
      %v3388 = vpack.c.b16 %v3335, %v3334
      %v3389 = vpack.c.b16 %v3337, %v3336
      %v3390 = vpack.c.b16 %v3339, %v3338
      %v3391 = vpack.c.b16 %v3341, %v3340
      %v3392 = vpack.c.b16 %v3343, %v3342
      %v3393 = vpack.c.b16 %v3345, %v3344
      %v3394 = vpack.c.b16 %v3347, %v3346
      %v3395 = vpack.c.b16 %v3349, %v3348
      %v3396 = vpack.c.b16 %v3351, %v3350
      %v3397 = vpack.c.b16 %v3353, %v3352
      %v3398 = vpack.c.b16 %v3355, %v3354
      %v3399 = vpack.c.b16 %v3357, %v3356
      %v3443 = vsel %vm2155, %v3094, 0
      %3445 = vmatprep.subr.bf16.mxu0 0
      %3446 = vmatpush1.bf16.msra.mxu0 %v3358
      %3447 = vmatprep.subr.bf16.mxu0 0
      %3448 = vmatpush1.bf16.msra.mxu0 %v3359
      %3449 = vmatprep.subr.bf16.mxu0 0
      %3450 = vmatpush1.bf16.msra.mxu0 %v3360
      %3451 = vmatprep.subr.bf16.mxu0 0
      %3452 = vmatpush1.bf16.msra.mxu0 %v3361
      %3453 = vmatprep.subr.bf16.mxu0 0
      %3454 = vmatpush1.bf16.msra.mxu0 %v3362
      %3455 = vmatprep.subr.bf16.mxu0 0
      %3456 = vmatpush1.bf16.msra.mxu0 %v3363
      %3457 = vmatprep.subr.bf16.mxu0 0
      %3458 = vmatpush1.bf16.msra.mxu0 %v3364
      %3459 = vmatprep.subr.bf16.mxu0 0
      %3460 = vmatpush1.bf16.msra.mxu0 %v3365
      %3461 = vmatprep.subr.bf16.mxu0 0
      %3462 = vmatpush1.bf16.msra.mxu0 %v3366
      %3463 = vmatprep.subr.bf16.mxu0 0
      %3464 = vmatpush1.bf16.msra.mxu0 %v3367
      %3465 = vmatprep.subr.bf16.mxu0 0
      %3466 = vmatpush1.bf16.msra.mxu0 %v3368
      %3467 = vmatprep.subr.bf16.mxu0 0
      %3468 = vmatpush1.bf16.msra.mxu0 %v3369
      %3469 = vmatprep.subr.bf16.mxu0 0
      %3470 = vmatpush1.bf16.msra.mxu0 %v3370
      %3471 = vmatprep.subr.bf16.mxu0 0
      %3472 = vmatpush1.bf16.msra.mxu0 %v3371
      %3473 = vmatprep.subr.bf16.mxu0 0
      %3474 = vmatpush1.bf16.msra.mxu0 %v3372
      %3475 = vmatprep.subr.bf16.mxu0 0
      %3476 = vmatpush1.bf16.msra.mxu0 %v3373
      %3477 = vmatprep.mubr.bf16.mxu0 %v3100
      %3478 = vmatmul.mubr.bf16.gmra.mrb[0].mxu0 %v3063
      %v3479 = vpop.f32.mrb[0].mxu0
      %v3480 = vadd.f32 0.0, %v3479
      %v3481 = vpop.f32.mrb[0].mxu0
      %v3482 = vpop.f32.mrb[0].mxu0
      %v3483 = vadd.f32 0.0, %v3482
      %v3484 = vpop.f32.mrb[0].mxu0
      %3485 = vdwg.mxu0
      %3486 = vmatprep.subr.bf16.mxu0 0
      %3487 = vmatpush1.bf16.msra.mxu0 %v3374
      %3488 = vmatprep.subr.bf16.mxu0 0
      %3489 = vmatpush1.bf16.msra.mxu0 %v3375
      %3490 = vmatprep.subr.bf16.mxu0 0
      %3491 = vmatpush1.bf16.msra.mxu0 %v3376
      %3492 = vmatprep.subr.bf16.mxu0 0
      %3493 = vmatpush1.bf16.msra.mxu0 %v3377
      %3494 = vmatprep.subr.bf16.mxu0 0
      %3495 = vmatpush1.bf16.msra.mxu0 %v3378
      %3496 = vmatprep.subr.bf16.mxu0 0
      %3497 = vmatpush1.bf16.msra.mxu0 %v3379
      %3498 = vmatprep.subr.bf16.mxu0 0
      %3499 = vmatpush1.bf16.msra.mxu0 %v3380
      %3500 = vmatprep.subr.bf16.mxu0 0
      %3501 = vmatpush1.bf16.msra.mxu0 %v3381
      %3502 = vmatprep.subr.bf16.mxu0 0
      %3503 = vmatpush1.bf16.msra.mxu0 %v3382
      %3504 = vmatprep.subr.bf16.mxu0 0
      %3505 = vmatpush1.bf16.msra.mxu0 %v3383
      %3506 = vmatprep.subr.bf16.mxu0 0
      %3507 = vmatpush1.bf16.msra.mxu0 %v3384
      %3508 = vmatprep.subr.bf16.mxu0 0
      %3509 = vmatpush1.bf16.msra.mxu0 %v3385
      %3510 = vmatprep.subr.bf16.mxu0 0
      %3511 = vmatpush1.bf16.msra.mxu0 %v3386
      %3512 = vmatprep.subr.bf16.mxu0 0
      %3513 = vmatpush1.bf16.msra.mxu0 %v3387
      %3514 = vmatprep.subr.bf16.mxu0 0
      %3515 = vmatpush1.bf16.msra.mxu0 %v3388
      %3516 = vmatprep.subr.bf16.mxu0 0
      %3517 = vmatpush1.bf16.msra.mxu0 %v3389
      %3518 = vmatprep.mubr.bf16.mxu0 %v3104
      %3519 = vmatmul.mubr.bf16.gmra.mrb[0].mxu0 %v3084
      %v3520 = vpop.f32.mrb[0].mxu0
      %v3521 = vadd.f32 %v3480, %v3520
      %v3522 = vpop.f32.mrb[0].mxu0
      %v3523 = vpop.f32.mrb[0].mxu0
      %v3524 = vadd.f32 %v3483, %v3523
      %v3525 = vpop.f32.mrb[0].mxu0
      %3526 = vdwg.mxu0
      %3527 = vmatprep.subr.bf16.mxu0 0
      %3528 = vmatpush1.bf16.msra.mxu0 %v3390
      %3529 = vmatprep.subr.bf16.mxu0 0
      %3530 = vmatpush1.bf16.msra.mxu0 %v3391
      %3531 = vmatprep.subr.bf16.mxu0 0
      %3532 = vmatpush1.bf16.msra.mxu0 %v3392
      %3533 = vmatprep.subr.bf16.mxu0 0
      %3534 = vmatpush1.bf16.msra.mxu0 %v3393
      %3535 = vmatprep.subr.bf16.mxu0 0
      %3536 = vmatpush1.bf16.msra.mxu0 %v3394
      %3537 = vmatprep.subr.bf16.mxu0 0
      %3538 = vmatpush1.bf16.msra.mxu0 %v3395
      %3539 = vmatprep.subr.bf16.mxu0 0
      %3540 = vmatpush1.bf16.msra.mxu0 %v3396
      %3541 = vmatprep.subr.bf16.mxu0 0
      %3542 = vmatpush1.bf16.msra.mxu0 %v3397
      %3543 = vmatprep.subr.bf16.mxu0 0
      %3544 = vmatpush1.bf16.msra.mxu0 %v3398
      %3545 = vmatprep.subr.bf16.mxu0 0
      %3546 = vmatpush1.bf16.msra.mxu0 %v3399
      %3547 = vmatprep.subr.bf16.mxu0 0
      %3548 = vmatpush1.bf16.msra.mxu0 0
      %3549 = vmatprep.subr.bf16.mxu0 0
      %3550 = vmatpush1.bf16.msra.mxu0 0
      %3551 = vmatprep.subr.bf16.mxu0 0
      %3552 = vmatpush1.bf16.msra.mxu0 0
      %3553 = vmatprep.subr.bf16.mxu0 0
      %3554 = vmatpush1.bf16.msra.mxu0 0
      %3555 = vmatprep.subr.bf16.mxu0 0
      %3556 = vmatpush1.bf16.msra.mxu0 0
      %3557 = vmatprep.subr.bf16.mxu0 0
      %3558 = vmatpush1.bf16.msra.mxu0 0
      %3559 = vmatprep.mubr.bf16.mxu0 %v3443
      %3560 = vmatmul.mubr.bf16.gmra.mrb[0].mxu0 %v3096
      %v3561 = vpop.f32.mrb[0].mxu0
      %v3562 = vadd.f32 %v3521, %v3561
      %v3563 = vpop.f32.mrb[0].mxu0
      %v3564 = vpop.f32.mrb[0].mxu0
      %v3565 = vadd.f32 %v3524, %v3564
      %v3566 = vpop.f32.mrb[0].mxu0
      %3567 = vdwg.mxu0
      %3570 = vrot.lane.b32.xlu0 %v2569, 32
      %v3571 = vpop.permute.xlu0 %3570
      %3572 = vrot.lane.b32.xlu0 %v2570, 32
      %v3573 = vpop.permute.xlu0 %3572
      %3574 = vrot.lane.b32.xlu0 %v2571, 32
      %v3575 = vpop.permute.xlu0 %3574
      %v3576 = vsel %vm3095, %v3571, %v3573
      %v3577 = vsel %vm3095, %v3573, %v3575
      %v3580 = vshrl.u32 %v2570, 16
      %v3582 = vrot.slane %v3580, 5
      %v3583 = vshll.u32 %v2570, 16
      %v3585 = vrot.slane %v3583, 6
      %v3586 = vor.u32 %v3582, %v3585
      %v3588 = vshrl.u32 %v2576, 16
      %v3590 = vrot.slane %v3588, 5
      %v3591 = vshll.u32 %v2576, 16
      %v3593 = vrot.slane %v3591, 6
      %v3594 = vor.u32 %v3590, %v3593
      %v3595 = vsel %vm2585, %v3586, %v3594
      %v3597 = vshrl.u32 %v2571, 16
      %v3599 = vrot.slane %v3597, 5
      %v3600 = vshll.u32 %v2571, 16
      %v3602 = vrot.slane %v3600, 6
      %v3603 = vor.u32 %v3599, %v3602
      %v3605 = vshrl.u32 %v2577, 16
      %v3607 = vrot.slane %v3605, 5
      %v3608 = vshll.u32 %v2577, 16
      %v3610 = vrot.slane %v3608, 6
      %v3611 = vor.u32 %v3607, %v3610
      %v3612 = vsel %vm2585, %v3603, %v3611
      %v3618 = vrot.slane %v2576, 3
      %v3619 = vrot.slane %v2582, 3
      %v3620 = vsel %vm2631, %v3618, %v3619
      %v3621 = vrot.slane %v2577, 3
      %v3622 = vrot.slane %v2583, 3
      %v3623 = vsel %vm2631, %v3621, %v3622
      %3624 = vrot.lane.b32.xlu0 %v3090, 96
      %v3625 = vpop.permute.xlu0 %3624
      %3626 = vrot.lane.b32.xlu0 %v3620, 96
      %v3627 = vpop.permute.xlu0 %3626
      %3628 = vrot.lane.b32.xlu0 %v3623, 96
      %v3629 = vpop.permute.xlu0 %3628
      %v3630 = vsel %vm3062, %v3625, %v3627
      %v3631 = vsel %vm3062, %v3627, %v3629
      %v3635 = vsel %vm2147, %v3577, %v3081
      %v3639 = vsel %vm2151, %v3612, %v3630
      %v3641 = vld [vmem:[%s27] sm:$0xf]
      %v3642 = vld [vmem:[%s27 + $0x4] sm:$0xf]
      %v3643 = vld [vmem:[%s27 + $0x8] sm:$0xf]
      %v3644 = vld [vmem:[%s27 + $0xc] sm:$0xf]
      %v3645 = vld [vmem:[%s27 + $0x10] sm:$0xf]
      %v3646 = vld [vmem:[%s27 + $0x14] sm:$0xf]
      %v3647 = vld [vmem:[%s27 + $0x18] sm:$0xf]
      %v3648 = vld [vmem:[%s27 + $0x1c] sm:$0xf]
      %v3649 = vld [vmem:[%s27 + $0x20] sm:$0xf]
      %v3650 = vld [vmem:[%s27 + $0x24] sm:$0xf]
      %v3651 = vld [vmem:[%s27 + $0x28] sm:$0xf]
      %v3652 = vld [vmem:[%s27 + $0x2c] sm:$0xf]
      %v3653 = vld [vmem:[%s27 + $0x30] sm:$0xf]
      %v3654 = vld [vmem:[%s27 + $0x34] sm:$0xf]
      %v3655 = vld [vmem:[%s27 + $0x38] sm:$0xf]
      %v3656 = vld [vmem:[%s27 + $0x3c] sm:$0xf]
      %v3657 = vld [vmem:[%s27 + $0x40] sm:$0xf]
      %v3658 = vld [vmem:[%s27 + $0x44] sm:$0xf]
      %v3659 = vld [vmem:[%s27 + $0x48] sm:$0xf]
      %v3660 = vld [vmem:[%s27 + $0x4c] sm:$0xf]
      %v3661 = vld [vmem:[%s27 + $0x50] sm:$0xf]
      %v3662 = vld [vmem:[%s27 + $0x54] sm:$0xf]
      %v3663 = vld [vmem:[%s27 + $0x58] sm:$0xf]
      %v3664 = vld [vmem:[%s27 + $0x5c] sm:$0xf]
      %v3665 = vld [vmem:[%s27 + $0x60] sm:$0xf]
      %v3666 = vld [vmem:[%s27 + $0x64] sm:$0xf]
      %v3667 = vld [vmem:[%s27 + $0x68] sm:$0xf]
      %v3668 = vld [vmem:[%s27 + $0x6c] sm:$0xf]
      %v3669 = vld [vmem:[%s27 + $0x70] sm:$0xf]
      %v3670 = vld [vmem:[%s27 + $0x74] sm:$0xf]
      %v3671 = vld [vmem:[%s27 + $0x78] sm:$0xf]
      %v3672 = vld [vmem:[%s27 + $0x7c] sm:$0xf]
      %v3673 = vld [vmem:[%s27 + $0x80] sm:$0xf]
      %v3674 = vld [vmem:[%s27 + $0x84] sm:$0xf]
      %v3675 = vld [vmem:[%s27 + $0x88] sm:$0xf]
      %v3676 = vld [vmem:[%s27 + $0x8c] sm:$0xf]
      %v3677 = vld [vmem:[%s27 + $0x90] sm:$0xf]
      %v3678 = vld [vmem:[%s27 + $0x94] sm:$0xf]
      %v3679 = vld [vmem:[%s27 + $0x98] sm:$0xf]
      %v3680 = vld [vmem:[%s27 + $0x9c] sm:$0xf]
      %v3681 = vld [vmem:[%s27 + $0xa0] sm:$0xf]
      %v3682 = vld [vmem:[%s27 + $0xa4] sm:$0xf]
      %v3683 = vld [vmem:[%s27 + $0xa8] sm:$0xf]
      %v3684 = vld [vmem:[%s27 + $0xac] sm:$0xf]
      %v3685 = vld [vmem:[%s27 + $0xb0] sm:$0xf]
      %v3686 = vld [vmem:[%s27 + $0xb4] sm:$0xf]
      %v3687 = vld [vmem:[%s27 + $0xb8] sm:$0xf]
      %v3688 = vld [vmem:[%s27 + $0xbc] sm:$0xf]
      %v3689 = vld [vmem:[%s27 + $0xc0] sm:$0xf]
      %v3690 = vld [vmem:[%s27 + $0xc4] sm:$0xf]
      %v3691 = vld [vmem:[%s27 + $0xc8] sm:$0xf]
      %v3692 = vld [vmem:[%s27 + $0xcc] sm:$0xf]
      %v3693 = vld [vmem:[%s27 + $0xd0] sm:$0xf]
      %v3694 = vld [vmem:[%s27 + $0xd4] sm:$0xf]
      %v3695 = vld [vmem:[%s27 + $0xd8] sm:$0xf]
      %v3696 = vld [vmem:[%s27 + $0xdc] sm:$0xf]
      %v3697 = vld [vmem:[%s27 + $0xe0] sm:$0xf]
      %v3698 = vld [vmem:[%s27 + $0xe4] sm:$0xf]
      %v3699 = vld [vmem:[%s27 + $0xe8] sm:$0xf]
      %v3700 = vld [vmem:[%s27 + $0xec] sm:$0xf]
      %v3701 = vld [vmem:[%s27 + $0xf0] sm:$0xf]
      %v3702 = vld [vmem:[%s27 + $0xf4] sm:$0xf]
      %v3703 = vld [vmem:[%s27 + $0xf8] sm:$0xf]
      %v3704 = vld [vmem:[%s27 + $0xfc] sm:$0xf]
      %v3705 = vld [vmem:[%s27 + $0x100] sm:$0xf]
      %v3706 = vld [vmem:[%s27 + $0x104] sm:$0xf]
      %v3707 = vld [vmem:[%s27 + $0x108] sm:$0xf]
      %v3708 = vld [vmem:[%s27 + $0x10c] sm:$0xf]
      %v3709 = vld [vmem:[%s27 + $0x110] sm:$0xf]
      %v3710 = vld [vmem:[%s27 + $0x114] sm:$0xf]
      %v3711 = vld [vmem:[%s27 + $0x118] sm:$0xf]
      %v3712 = vld [vmem:[%s27 + $0x11c] sm:$0xf]
      %v3713 = vld [vmem:[%s27 + $0x120] sm:$0xf]
      %v3714 = vld [vmem:[%s27 + $0x124] sm:$0xf]
      %v3715 = vld [vmem:[%s27 + $0x128] sm:$0xf]
      %v3716 = vld [vmem:[%s27 + $0x12c] sm:$0xf]
      %v3717 = vld [vmem:[%s27 + $0x130] sm:$0xf]
      %v3718 = vld [vmem:[%s27 + $0x134] sm:$0xf]
      %v3719 = vld [vmem:[%s27 + $0x138] sm:$0xf]
      %v3720 = vld [vmem:[%s27 + $0x13c] sm:$0xf]
      %v3721 = vld [vmem:[%s27 + $0x140] sm:$0xf]
      %v3722 = vld [vmem:[%s27 + $0x144] sm:$0xf]
      %v3723 = vld [vmem:[%s27 + $0x148] sm:$0xf]
      %v3724 = vld [vmem:[%s27 + $0x14c] sm:$0xf]
      %v3809 = vunpack.c.l.b16 %v3641
      %v3810 = vunpack.c.l.b16 %v3642
      %v3811 = vunpack.c.l.b16 %v3643
      %v3812 = vunpack.c.l.b16 %v3644
      %v3813 = vunpack.c.l.b16 %v3645
      %v3814 = vunpack.c.l.b16 %v3646
      %v3815 = vunpack.c.l.b16 %v3647
      %v3816 = vunpack.c.l.b16 %v3648
      %v3817 = vunpack.c.l.b16 %v3649
      %v3818 = vunpack.c.l.b16 %v3650
      %v3819 = vunpack.c.l.b16 %v3651
      %v3820 = vunpack.c.l.b16 %v3652
      %v3821 = vunpack.c.l.b16 %v3653
      %v3822 = vunpack.c.l.b16 %v3654
      %v3823 = vunpack.c.l.b16 %v3655
      %v3824 = vunpack.c.l.b16 %v3656
      %v3825 = vunpack.c.l.b16 %v3657
      %v3826 = vunpack.c.l.b16 %v3658
      %v3827 = vunpack.c.l.b16 %v3659
      %v3828 = vunpack.c.l.b16 %v3660
      %v3829 = vunpack.c.l.b16 %v3661
      %v3830 = vunpack.c.l.b16 %v3662
      %v3831 = vunpack.c.l.b16 %v3663
      %v3832 = vunpack.c.l.b16 %v3664
      %v3833 = vunpack.c.l.b16 %v3665
      %v3834 = vunpack.c.l.b16 %v3666
      %v3835 = vunpack.c.l.b16 %v3667
      %v3836 = vunpack.c.l.b16 %v3668
      %v3837 = vunpack.c.l.b16 %v3669
      %v3838 = vunpack.c.l.b16 %v3670
      %v3839 = vunpack.c.l.b16 %v3671
      %v3840 = vunpack.c.l.b16 %v3672
      %v3841 = vunpack.c.l.b16 %v3673
      %v3842 = vunpack.c.l.b16 %v3674
      %v3843 = vunpack.c.l.b16 %v3675
      %v3844 = vunpack.c.l.b16 %v3676
      %v3845 = vunpack.c.l.b16 %v3677
      %v3846 = vunpack.c.l.b16 %v3678
      %v3847 = vunpack.c.l.b16 %v3679
      %v3848 = vunpack.c.l.b16 %v3680
      %v3849 = vunpack.c.l.b16 %v3681
      %v3850 = vunpack.c.l.b16 %v3682
      %v3851 = vunpack.c.l.b16 %v3683
      %v3852 = vunpack.c.l.b16 %v3684
      %v3853 = vunpack.c.l.b16 %v3685
      %v3854 = vunpack.c.l.b16 %v3686
      %v3855 = vunpack.c.l.b16 %v3687
      %v3856 = vunpack.c.l.b16 %v3688
      %v3857 = vunpack.c.l.b16 %v3689
      %v3858 = vunpack.c.l.b16 %v3690
      %v3859 = vunpack.c.l.b16 %v3691
      %v3860 = vunpack.c.l.b16 %v3692
      %v3861 = vunpack.c.l.b16 %v3693
      %v3862 = vunpack.c.l.b16 %v3694
      %v3863 = vunpack.c.l.b16 %v3695
      %v3864 = vunpack.c.l.b16 %v3696
      %v3865 = vunpack.c.l.b16 %v3697
      %v3866 = vunpack.c.l.b16 %v3698
      %v3867 = vunpack.c.l.b16 %v3699
      %v3868 = vunpack.c.l.b16 %v3700
      %v3869 = vunpack.c.l.b16 %v3701
      %v3870 = vunpack.c.l.b16 %v3702
      %v3871 = vunpack.c.l.b16 %v3703
      %v3872 = vunpack.c.l.b16 %v3704
      %v3873 = vunpack.c.l.b16 %v3705
      %v3874 = vunpack.c.l.b16 %v3706
      %v3875 = vunpack.c.l.b16 %v3707
      %v3876 = vunpack.c.l.b16 %v3708
      %v3877 = vunpack.c.l.b16 %v3709
      %v3878 = vunpack.c.l.b16 %v3710
      %v3879 = vunpack.c.l.b16 %v3711
      %v3880 = vunpack.c.l.b16 %v3712
      %v3881 = vunpack.c.l.b16 %v3713
      %v3882 = vunpack.c.l.b16 %v3714
      %v3883 = vunpack.c.l.b16 %v3715
      %v3884 = vunpack.c.l.b16 %v3716
      %v3885 = vunpack.c.l.b16 %v3717
      %v3886 = vunpack.c.l.b16 %v3718
      %v3887 = vunpack.c.l.b16 %v3719
      %v3888 = vunpack.c.l.b16 %v3720
      %v3889 = vunpack.c.l.b16 %v3721
      %v3890 = vunpack.c.l.b16 %v3722
      %v3891 = vunpack.c.l.b16 %v3723
      %v3892 = vunpack.c.l.b16 %v3724
      %v3893 = vpack.c.b16 %v3810, %v3809
      %v3894 = vpack.c.b16 %v3812, %v3811
      %v3895 = vpack.c.b16 %v3814, %v3813
      %v3896 = vpack.c.b16 %v3816, %v3815
      %v3897 = vpack.c.b16 %v3818, %v3817
      %v3898 = vpack.c.b16 %v3820, %v3819
      %v3899 = vpack.c.b16 %v3822, %v3821
      %v3900 = vpack.c.b16 %v3824, %v3823
      %v3901 = vpack.c.b16 %v3826, %v3825
      %v3902 = vpack.c.b16 %v3828, %v3827
      %v3903 = vpack.c.b16 %v3830, %v3829
      %v3904 = vpack.c.b16 %v3832, %v3831
      %v3905 = vpack.c.b16 %v3834, %v3833
      %v3906 = vpack.c.b16 %v3836, %v3835
      %v3907 = vpack.c.b16 %v3838, %v3837
      %v3908 = vpack.c.b16 %v3840, %v3839
      %v3909 = vpack.c.b16 %v3842, %v3841
      %v3910 = vpack.c.b16 %v3844, %v3843
      %v3911 = vpack.c.b16 %v3846, %v3845
      %v3912 = vpack.c.b16 %v3848, %v3847
      %v3913 = vpack.c.b16 %v3850, %v3849
      %v3914 = vpack.c.b16 %v3852, %v3851
      %v3915 = vpack.c.b16 %v3854, %v3853
      %v3916 = vpack.c.b16 %v3856, %v3855
      %v3917 = vpack.c.b16 %v3858, %v3857
      %v3918 = vpack.c.b16 %v3860, %v3859
      %v3919 = vpack.c.b16 %v3862, %v3861
      %v3920 = vpack.c.b16 %v3864, %v3863
      %v3921 = vpack.c.b16 %v3866, %v3865
      %v3922 = vpack.c.b16 %v3868, %v3867
      %v3923 = vpack.c.b16 %v3870, %v3869
      %v3924 = vpack.c.b16 %v3872, %v3871
      %v3925 = vpack.c.b16 %v3874, %v3873
      %v3926 = vpack.c.b16 %v3876, %v3875
      %v3927 = vpack.c.b16 %v3878, %v3877
      %v3928 = vpack.c.b16 %v3880, %v3879
      %v3929 = vpack.c.b16 %v3882, %v3881
      %v3930 = vpack.c.b16 %v3884, %v3883
      %v3931 = vpack.c.b16 %v3886, %v3885
      %v3932 = vpack.c.b16 %v3888, %v3887
      %v3933 = vpack.c.b16 %v3890, %v3889
      %v3934 = vpack.c.b16 %v3892, %v3891
      %v3978 = vsel %vm2155, %v3629, 0
      %3980 = vmatprep.subr.bf16.mxu0 0
      %3981 = vmatpush1.bf16.msra.mxu0 %v3893
      %3982 = vmatprep.subr.bf16.mxu0 0
      %3983 = vmatpush1.bf16.msra.mxu0 %v3894
      %3984 = vmatprep.subr.bf16.mxu0 0
      %3985 = vmatpush1.bf16.msra.mxu0 %v3895
      %3986 = vmatprep.subr.bf16.mxu0 0
      %3987 = vmatpush1.bf16.msra.mxu0 %v3896
      %3988 = vmatprep.subr.bf16.mxu0 0
      %3989 = vmatpush1.bf16.msra.mxu0 %v3897
      %3990 = vmatprep.subr.bf16.mxu0 0
      %3991 = vmatpush1.bf16.msra.mxu0 %v3898
      %3992 = vmatprep.subr.bf16.mxu0 0
      %3993 = vmatpush1.bf16.msra.mxu0 %v3899
      %3994 = vmatprep.subr.bf16.mxu0 0
      %3995 = vmatpush1.bf16.msra.mxu0 %v3900
      %3996 = vmatprep.subr.bf16.mxu0 0
      %3997 = vmatpush1.bf16.msra.mxu0 %v3901
      %3998 = vmatprep.subr.bf16.mxu0 0
      %3999 = vmatpush1.bf16.msra.mxu0 %v3902
      %4000 = vmatprep.subr.bf16.mxu0 0
      %4001 = vmatpush1.bf16.msra.mxu0 %v3903
      %4002 = vmatprep.subr.bf16.mxu0 0
      %4003 = vmatpush1.bf16.msra.mxu0 %v3904
      %4004 = vmatprep.subr.bf16.mxu0 0
      %4005 = vmatpush1.bf16.msra.mxu0 %v3905
      %4006 = vmatprep.subr.bf16.mxu0 0
      %4007 = vmatpush1.bf16.msra.mxu0 %v3906
      %4008 = vmatprep.subr.bf16.mxu0 0
      %4009 = vmatpush1.bf16.msra.mxu0 %v3907
      %4010 = vmatprep.subr.bf16.mxu0 0
      %4011 = vmatpush1.bf16.msra.mxu0 %v3908
      %4012 = vmatprep.mubr.bf16.mxu0 %v3635
      %4013 = vmatmul.mubr.bf16.gmra.mrb[0].mxu0 %v3576
      %v4014 = vpop.f32.mrb[0].mxu0
      %v4015 = vadd.f32 0.0, %v4014
      %v4016 = vpop.f32.mrb[0].mxu0
      %v4017 = vpop.f32.mrb[0].mxu0
      %v4018 = vadd.f32 0.0, %v4017
      %v4019 = vpop.f32.mrb[0].mxu0
      %4020 = vdwg.mxu0
      %4021 = vmatprep.subr.bf16.mxu0 0
      %4022 = vmatpush1.bf16.msra.mxu0 %v3909
      %4023 = vmatprep.subr.bf16.mxu0 0
      %4024 = vmatpush1.bf16.msra.mxu0 %v3910
      %4025 = vmatprep.subr.bf16.mxu0 0
      %4026 = vmatpush1.bf16.msra.mxu0 %v3911
      %4027 = vmatprep.subr.bf16.mxu0 0
      %4028 = vmatpush1.bf16.msra.mxu0 %v3912
      %4029 = vmatprep.subr.bf16.mxu0 0
      %4030 = vmatpush1.bf16.msra.mxu0 %v3913
      %4031 = vmatprep.subr.bf16.mxu0 0
      %4032 = vmatpush1.bf16.msra.mxu0 %v3914
      %4033 = vmatprep.subr.bf16.mxu0 0
      %4034 = vmatpush1.bf16.msra.mxu0 %v3915
      %4035 = vmatprep.subr.bf16.mxu0 0
      %4036 = vmatpush1.bf16.msra.mxu0 %v3916
      %4037 = vmatprep.subr.bf16.mxu0 0
      %4038 = vmatpush1.bf16.msra.mxu0 %v3917
      %4039 = vmatprep.subr.bf16.mxu0 0
      %4040 = vmatpush1.bf16.msra.mxu0 %v3918
      %4041 = vmatprep.subr.bf16.mxu0 0
      %4042 = vmatpush1.bf16.msra.mxu0 %v3919
      %4043 = vmatprep.subr.bf16.mxu0 0
      %4044 = vmatpush1.bf16.msra.mxu0 %v3920
      %4045 = vmatprep.subr.bf16.mxu0 0
      %4046 = vmatpush1.bf16.msra.mxu0 %v3921
      %4047 = vmatprep.subr.bf16.mxu0 0
      %4048 = vmatpush1.bf16.msra.mxu0 %v3922
      %4049 = vmatprep.subr.bf16.mxu0 0
      %4050 = vmatpush1.bf16.msra.mxu0 %v3923
      %4051 = vmatprep.subr.bf16.mxu0 0
      %4052 = vmatpush1.bf16.msra.mxu0 %v3924
      %4053 = vmatprep.mubr.bf16.mxu0 %v3639
      %4054 = vmatmul.mubr.bf16.gmra.mrb[0].mxu0 %v3595
      %v4055 = vpop.f32.mrb[0].mxu0
      %v4056 = vadd.f32 %v4015, %v4055
      %v4057 = vpop.f32.mrb[0].mxu0
      %v4058 = vpop.f32.mrb[0].mxu0
      %v4059 = vadd.f32 %v4018, %v4058
      %v4060 = vpop.f32.mrb[0].mxu0
      %4061 = vdwg.mxu0
      %4062 = vmatprep.subr.bf16.mxu0 0
      %4063 = vmatpush1.bf16.msra.mxu0 %v3925
      %4064 = vmatprep.subr.bf16.mxu0 0
      %4065 = vmatpush1.bf16.msra.mxu0 %v3926
      %4066 = vmatprep.subr.bf16.mxu0 0
      %4067 = vmatpush1.bf16.msra.mxu0 %v3927
      %4068 = vmatprep.subr.bf16.mxu0 0
      %4069 = vmatpush1.bf16.msra.mxu0 %v3928
      %4070 = vmatprep.subr.bf16.mxu0 0
      %4071 = vmatpush1.bf16.msra.mxu0 %v3929
      %4072 = vmatprep.subr.bf16.mxu0 0
      %4073 = vmatpush1.bf16.msra.mxu0 %v3930
      %4074 = vmatprep.subr.bf16.mxu0 0
      %4075 = vmatpush1.bf16.msra.mxu0 %v3931
      %4076 = vmatprep.subr.bf16.mxu0 0
      %4077 = vmatpush1.bf16.msra.mxu0 %v3932
      %4078 = vmatprep.subr.bf16.mxu0 0
      %4079 = vmatpush1.bf16.msra.mxu0 %v3933
      %4080 = vmatprep.subr.bf16.mxu0 0
      %4081 = vmatpush1.bf16.msra.mxu0 %v3934
      %4082 = vmatprep.subr.bf16.mxu0 0
      %4083 = vmatpush1.bf16.msra.mxu0 0
      %4084 = vmatprep.subr.bf16.mxu0 0
      %4085 = vmatpush1.bf16.msra.mxu0 0
      %4086 = vmatprep.subr.bf16.mxu0 0
      %4087 = vmatpush1.bf16.msra.mxu0 0
      %4088 = vmatprep.subr.bf16.mxu0 0
      %4089 = vmatpush1.bf16.msra.mxu0 0
      %4090 = vmatprep.subr.bf16.mxu0 0
      %4091 = vmatpush1.bf16.msra.mxu0 0
      %4092 = vmatprep.subr.bf16.mxu0 0
      %4093 = vmatpush1.bf16.msra.mxu0 0
      %4094 = vmatprep.mubr.bf16.mxu0 %v3978
      %4095 = vmatmul.mubr.bf16.gmra.mrb[0].mxu0 %v3631
      %v4096 = vpop.f32.mrb[0].mxu0
      %v4097 = vadd.f32 %v4056, %v4096
      %v4098 = vpop.f32.mrb[0].mxu0
      %v4099 = vpop.f32.mrb[0].mxu0
      %v4100 = vadd.f32 %v4059, %v4099
      %v4101 = vpop.f32.mrb[0].mxu0
      %4102 = vdwg.mxu0
      %4104 = vrot.lane.b32.xlu0 %v2571, 96
      %v4105 = vpop.permute.xlu0 %4104
      %4106 = vrot.lane.b32.xlu0 %v2572, 96
      %v4107 = vpop.permute.xlu0 %4106
      %v4108 = vsel %vm3062, %v4105, %v4107
      %v4111 = vshrl.u32 %v2572, 16
      %v4113 = vrot.slane %v4111, 5
      %v4114 = vshll.u32 %v2572, 16
      %v4116 = vrot.slane %v4114, 6
      %v4117 = vor.u32 %v4113, %v4116
      %v4119 = vshrl.u32 %v2578, 16
      %v4121 = vrot.slane %v4119, 5
      %v4122 = vshll.u32 %v2578, 16
      %v4124 = vrot.slane %v4122, 6
      %v4125 = vor.u32 %v4121, %v4124
      %v4126 = vsel %vm2585, %v4117, %v4125
      %4127 = vrot.lane.b32.xlu0 %v3612, 96
      %v4128 = vpop.permute.xlu0 %4127
      %4129 = vrot.lane.b32.xlu0 %v4126, 96
      %v4130 = vpop.permute.xlu0 %4129
      %v4131 = vsel %vm3062, %v4128, %v4130
      %v4135 = vrot.slane %v2578, 3
      %v4136 = vrot.slane %v2584, 3
      %v4137 = vsel %vm2631, %v4135, %v4136
      %4138 = vrot.lane.b32.xlu0 %v4137, 96
      %v4139 = vpop.permute.xlu0 %4138
      %v4140 = vsel %vm3062, %v3629, %v4139
      %v4142 = vld [vmem:[%s29] sm:$0xf]
      %v4143 = vld [vmem:[%s29 + $0x4] sm:$0xf]
      %v4144 = vld [vmem:[%s29 + $0x8] sm:$0xf]
      %v4145 = vld [vmem:[%s29 + $0xc] sm:$0xf]
      %v4146 = vld [vmem:[%s29 + $0x10] sm:$0xf]
      %v4147 = vld [vmem:[%s29 + $0x14] sm:$0xf]
      %v4148 = vld [vmem:[%s29 + $0x18] sm:$0xf]
      %v4149 = vld [vmem:[%s29 + $0x1c] sm:$0xf]
      %v4150 = vld [vmem:[%s29 + $0x20] sm:$0xf]
      %v4151 = vld [vmem:[%s29 + $0x24] sm:$0xf]
      %v4152 = vld [vmem:[%s29 + $0x28] sm:$0xf]
      %v4153 = vld [vmem:[%s29 + $0x2c] sm:$0xf]
      %v4154 = vld [vmem:[%s29 + $0x30] sm:$0xf]
      %v4155 = vld [vmem:[%s29 + $0x34] sm:$0xf]
      %v4156 = vld [vmem:[%s29 + $0x38] sm:$0xf]
      %v4157 = vld [vmem:[%s29 + $0x3c] sm:$0xf]
      %v4158 = vld [vmem:[%s29 + $0x40] sm:$0xf]
      %v4159 = vld [vmem:[%s29 + $0x44] sm:$0xf]
      %v4160 = vld [vmem:[%s29 + $0x48] sm:$0xf]
      %v4161 = vld [vmem:[%s29 + $0x4c] sm:$0xf]
      %v4162 = vld [vmem:[%s29 + $0x50] sm:$0xf]
      %v4163 = vld [vmem:[%s29 + $0x54] sm:$0xf]
      %v4164 = vld [vmem:[%s29 + $0x58] sm:$0xf]
      %v4165 = vld [vmem:[%s29 + $0x5c] sm:$0xf]
      %v4166 = vld [vmem:[%s29 + $0x60] sm:$0xf]
      %v4167 = vld [vmem:[%s29 + $0x64] sm:$0xf]
      %v4168 = vld [vmem:[%s29 + $0x68] sm:$0xf]
      %v4169 = vld [vmem:[%s29 + $0x6c] sm:$0xf]
      %v4170 = vld [vmem:[%s29 + $0x70] sm:$0xf]
      %v4171 = vld [vmem:[%s29 + $0x74] sm:$0xf]
      %v4172 = vld [vmem:[%s29 + $0x78] sm:$0xf]
      %v4173 = vld [vmem:[%s29 + $0x7c] sm:$0xf]
      %v4174 = vld [vmem:[%s29 + $0x80] sm:$0xf]
      %v4175 = vld [vmem:[%s29 + $0x84] sm:$0xf]
      %v4176 = vld [vmem:[%s29 + $0x88] sm:$0xf]
      %v4177 = vld [vmem:[%s29 + $0x8c] sm:$0xf]
      %v4178 = vld [vmem:[%s29 + $0x90] sm:$0xf]
      %v4179 = vld [vmem:[%s29 + $0x94] sm:$0xf]
      %v4180 = vld [vmem:[%s29 + $0x98] sm:$0xf]
      %v4181 = vld [vmem:[%s29 + $0x9c] sm:$0xf]
      %v4182 = vld [vmem:[%s29 + $0xa0] sm:$0xf]
      %v4183 = vld [vmem:[%s29 + $0xa4] sm:$0xf]
      %v4184 = vld [vmem:[%s29 + $0xa8] sm:$0xf]
      %v4185 = vld [vmem:[%s29 + $0xac] sm:$0xf]
      %v4186 = vld [vmem:[%s29 + $0xb0] sm:$0xf]
      %v4187 = vld [vmem:[%s29 + $0xb4] sm:$0xf]
      %v4188 = vld [vmem:[%s29 + $0xb8] sm:$0xf]
      %v4189 = vld [vmem:[%s29 + $0xbc] sm:$0xf]
      %v4238 = vunpack.c.l.b16 %v4142
      %v4239 = vunpack.c.l.b16 %v4143
      %v4240 = vunpack.c.l.b16 %v4144
      %v4241 = vunpack.c.l.b16 %v4145
      %v4242 = vunpack.c.l.b16 %v4146
      %v4243 = vunpack.c.l.b16 %v4147
      %v4244 = vunpack.c.l.b16 %v4148
      %v4245 = vunpack.c.l.b16 %v4149
      %v4246 = vunpack.c.l.b16 %v4150
      %v4247 = vunpack.c.l.b16 %v4151
      %v4248 = vunpack.c.l.b16 %v4152
      %v4249 = vunpack.c.l.b16 %v4153
      %v4250 = vunpack.c.l.b16 %v4154
      %v4251 = vunpack.c.l.b16 %v4155
      %v4252 = vunpack.c.l.b16 %v4156
      %v4253 = vunpack.c.l.b16 %v4157
      %v4254 = vunpack.c.l.b16 %v4158
      %v4255 = vunpack.c.l.b16 %v4159
      %v4256 = vunpack.c.l.b16 %v4160
      %v4257 = vunpack.c.l.b16 %v4161
      %v4258 = vunpack.c.l.b16 %v4162
      %v4259 = vunpack.c.l.b16 %v4163
      %v4260 = vunpack.c.l.b16 %v4164
      %v4261 = vunpack.c.l.b16 %v4165
      %v4262 = vunpack.c.l.b16 %v4166
      %v4263 = vunpack.c.l.b16 %v4167
      %v4264 = vunpack.c.l.b16 %v4168
      %v4265 = vunpack.c.l.b16 %v4169
      %v4266 = vunpack.c.l.b16 %v4170
      %v4267 = vunpack.c.l.b16 %v4171
      %v4268 = vunpack.c.l.b16 %v4172
      %v4269 = vunpack.c.l.b16 %v4173
      %v4270 = vunpack.c.l.b16 %v4174
      %v4271 = vunpack.c.l.b16 %v4175
      %v4272 = vunpack.c.l.b16 %v4176
      %v4273 = vunpack.c.l.b16 %v4177
      %v4274 = vunpack.c.l.b16 %v4178
      %v4275 = vunpack.c.l.b16 %v4179
      %v4276 = vunpack.c.l.b16 %v4180
      %v4277 = vunpack.c.l.b16 %v4181
      %v4278 = vunpack.c.l.b16 %v4182
      %v4279 = vunpack.c.l.b16 %v4183
      %v4280 = vunpack.c.l.b16 %v4184
      %v4281 = vunpack.c.l.b16 %v4185
      %v4282 = vunpack.c.l.b16 %v4186
      %v4283 = vunpack.c.l.b16 %v4187
      %v4284 = vunpack.c.l.b16 %v4188
      %v4285 = vunpack.c.l.b16 %v4189
      %v4286 = vpack.c.b16 %v4239, %v4238
      %v4287 = vpack.c.b16 %v4241, %v4240
      %v4288 = vpack.c.b16 %v4243, %v4242
      %v4289 = vpack.c.b16 %v4245, %v4244
      %v4290 = vpack.c.b16 %v4247, %v4246
      %v4291 = vpack.c.b16 %v4249, %v4248
      %v4292 = vpack.c.b16 %v4251, %v4250
      %v4293 = vpack.c.b16 %v4253, %v4252
      %v4294 = vpack.c.b16 %v4255, %v4254
      %v4295 = vpack.c.b16 %v4257, %v4256
      %v4296 = vpack.c.b16 %v4259, %v4258
      %v4297 = vpack.c.b16 %v4261, %v4260
      %v4298 = vpack.c.b16 %v4263, %v4262
      %v4299 = vpack.c.b16 %v4265, %v4264
      %v4300 = vpack.c.b16 %v4267, %v4266
      %v4301 = vpack.c.b16 %v4269, %v4268
      %v4302 = vpack.c.b16 %v4271, %v4270
      %v4303 = vpack.c.b16 %v4273, %v4272
      %v4304 = vpack.c.b16 %v4275, %v4274
      %v4305 = vpack.c.b16 %v4277, %v4276
      %v4306 = vpack.c.b16 %v4279, %v4278
      %v4307 = vpack.c.b16 %v4281, %v4280
      %v4308 = vpack.c.b16 %v4283, %v4282
      %v4309 = vpack.c.b16 %v4285, %v4284
      %4334 = vmatprep.subr.bf16.mxu0 0
      %4335 = vmatpush1.bf16.msra.mxu0 %v4286
      %4336 = vmatprep.subr.bf16.mxu0 0
      %4337 = vmatpush1.bf16.msra.mxu0 %v4287
      %4338 = vmatprep.subr.bf16.mxu0 0
      %4339 = vmatpush1.bf16.msra.mxu0 %v4288
      %4340 = vmatprep.subr.bf16.mxu0 0
      %4341 = vmatpush1.bf16.msra.mxu0 %v4289
      %4342 = vmatprep.subr.bf16.mxu0 0
      %4343 = vmatpush1.bf16.msra.mxu0 %v4290
      %4344 = vmatprep.subr.bf16.mxu0 0
      %4345 = vmatpush1.bf16.msra.mxu0 %v4291
      %4346 = vmatprep.subr.bf16.mxu0 0
      %4347 = vmatpush1.bf16.msra.mxu0 %v4292
      %4348 = vmatprep.subr.bf16.mxu0 0
      %4349 = vmatpush1.bf16.msra.mxu0 %v4293
      %4350 = vmatprep.subr.bf16.mxu0 0
      %4351 = vmatpush1.bf16.msra.mxu0 %v4294
      %4352 = vmatprep.subr.bf16.mxu0 0
      %4353 = vmatpush1.bf16.msra.mxu0 %v4295
      %4354 = vmatprep.subr.bf16.mxu0 0
      %4355 = vmatpush1.bf16.msra.mxu0 %v4296
      %4356 = vmatprep.subr.bf16.mxu0 0
      %4357 = vmatpush1.bf16.msra.mxu0 %v4297
      %4358 = vmatprep.subr.bf16.mxu0 0
      %4359 = vmatpush1.bf16.msra.mxu0 %v4298
      %4360 = vmatprep.subr.bf16.mxu0 0
      %4361 = vmatpush1.bf16.msra.mxu0 %v4299
      %4362 = vmatprep.subr.bf16.mxu0 0
      %4363 = vmatpush1.bf16.msra.mxu0 %v4300
      %4364 = vmatprep.subr.bf16.mxu0 0
      %4365 = vmatpush1.bf16.msra.mxu0 %v4301
      %4366 = vmatprep.mubr.bf16.mxu0 %v4131
      %4367 = vmatmul.mubr.bf16.gmra.mrb[0].mxu0 %v4108
      %v4368 = vpop.f32.mrb[0].mxu0
      %v4369 = vadd.f32 0.0, %v4368
      %v4370 = vpop.f32.mrb[0].mxu0
      %v4371 = vpop.f32.mrb[0].mxu0
      %v4372 = vadd.f32 0.0, %v4371
      %v4373 = vpop.f32.mrb[0].mxu0
      %4374 = vdwg.mxu0
      %4375 = vmatprep.subr.bf16.mxu0 0
      %4376 = vmatpush1.bf16.msra.mxu0 %v4302
      %4377 = vmatprep.subr.bf16.mxu0 0
      %4378 = vmatpush1.bf16.msra.mxu0 %v4303
      %4379 = vmatprep.subr.bf16.mxu0 0
      %4380 = vmatpush1.bf16.msra.mxu0 %v4304
      %4381 = vmatprep.subr.bf16.mxu0 0
      %4382 = vmatpush1.bf16.msra.mxu0 %v4305
      %4383 = vmatprep.subr.bf16.mxu0 0
      %4384 = vmatpush1.bf16.msra.mxu0 %v4306
      %4385 = vmatprep.subr.bf16.mxu0 0
      %4386 = vmatpush1.bf16.msra.mxu0 %v4307
      %4387 = vmatprep.subr.bf16.mxu0 0
      %4388 = vmatpush1.bf16.msra.mxu0 %v4308
      %4389 = vmatprep.subr.bf16.mxu0 0
      %4390 = vmatpush1.bf16.msra.mxu0 %v4309
      %4391 = vmatprep.subr.bf16.mxu0 0
      %4392 = vmatpush1.bf16.msra.mxu0 0
      %4393 = vmatprep.subr.bf16.mxu0 0
      %4394 = vmatpush1.bf16.msra.mxu0 0
      %4395 = vmatprep.subr.bf16.mxu0 0
      %4396 = vmatpush1.bf16.msra.mxu0 0
      %4397 = vmatprep.subr.bf16.mxu0 0
      %4398 = vmatpush1.bf16.msra.mxu0 0
      %4399 = vmatprep.subr.bf16.mxu0 0
      %4400 = vmatpush1.bf16.msra.mxu0 0
      %4401 = vmatprep.subr.bf16.mxu0 0
      %4402 = vmatpush1.bf16.msra.mxu0 0
      %4403 = vmatprep.subr.bf16.mxu0 0
      %4404 = vmatpush1.bf16.msra.mxu0 0
      %4405 = vmatprep.subr.bf16.mxu0 0
      %4406 = vmatpush1.bf16.msra.mxu0 0
      %4407 = vmatprep.mubr.bf16.mxu0 0
      %4408 = vmatmul.mubr.bf16.gmra.mrb[0].mxu0 %v4140
      %v4409 = vpop.f32.mrb[0].mxu0
      %v4410 = vadd.f32 %v4369, %v4409
      %v4411 = vpop.f32.mrb[0].mxu0
      %v4412 = vpop.f32.mrb[0].mxu0
      %v4413 = vadd.f32 %v4372, %v4412
      %v4414 = vpop.f32.mrb[0].mxu0
      %4415 = vdwg.mxu0
      %4418 = vrot.lane.b32.xlu0 %v3562, 96
      %v4419 = vpop.permute.xlu0 %4418
      %4420 = vrot.lane.b32.xlu0 %v3565, 96
      %v4421 = vpop.permute.xlu0 %4420
      %4426 = vrot.lane.b32.xlu0 %v4097, 64
      %v4427 = vpop.permute.xlu0 %4426
      %4428 = vrot.lane.b32.xlu0 %v4100, 64
      %v4429 = vpop.permute.xlu0 %4428
      %4434 = vrot.lane.b32.xlu0 %v4410, 32
      %v4435 = vpop.permute.xlu0 %4434
      %4436 = vrot.lane.b32.xlu0 %v4413, 32
      %v4437 = vpop.permute.xlu0 %4436
      %v4440 = vsel %vm2147, %v3050, %v4419
      %v4441 = vsel %vm2147, %v3053, %v4421
      %v4442 = vsel %vm2151, %v4419, %v4427
      %v4443 = vsel %vm2151, %v4421, %v4429
      %v4444 = vsel %vm2155, %v4427, %v4435
      %v4445 = vsel %vm2155, %v4429, %v4437
      %v4446 = vld [vmem:[%s31] sm:$0x7]
      %v4448 = vlaneseq
      %v4449 = vshrl.u32 %v4448, 7
      %v4450 = vsub.s32 0, %v4449
      %v4451 = vrot.slane %v4446, %v4450
      %v4452 = vlaneseq
      %v4453 = vshrl.u32 %v4452, 7
      %v4454 = vsub.s32 1, %v4453
      %v4455 = vrot.slane %v4446, %v4454
      %v4456 = vlaneseq
      %v4457 = vshrl.u32 %v4456, 7
      %v4458 = vsub.s32 2, %v4457
      %v4459 = vrot.slane %v4446, %v4458
      %v4463 = vadd.f32 %v4440, %v4451
      %v4464 = vadd.f32 %v4442, %v4455
      %v4465 = vadd.f32 %v4444, %v4459
      %v4466 = vadd.f32 %v4441, %v4451
      %v4467 = vadd.f32 %v4443, %v4455
      %v4468 = vadd.f32 %v4445, %v4459
      %vm4469 = vcmp.gt.f32.partialorder %v4463, 0.0
      %vm4470 = vcmp.gt.f32.partialorder %v4464, 0.0
      %vm4471 = vcmp.gt.f32.partialorder %v4465, 0.0
      %vm4472 = vcmp.gt.f32.partialorder %v4466, 0.0
      %vm4473 = vcmp.gt.f32.partialorder %v4467, 0.0
      %vm4474 = vcmp.gt.f32.partialorder %v4468, 0.0
      %v4475 = vmin.f32 %v4463, 0.0
      %v4476 = vmin.f32 %v4464, 0.0
      %v4477 = vmin.f32 %v4465, 0.0
      %v4478 = vmin.f32 %v4466, 0.0
      %v4479 = vmin.f32 %v4467, 0.0
      %v4480 = vmin.f32 %v4468, 0.0
      %v4481 = vmul.f32 %v4475, 1.442695
      %v4482 = vpow.pop %v4481
      %v4483 = vmul.f32 %v4476, 1.442695
      %v4484 = vpow.pop %v4483
      %v4485 = vmul.f32 %v4477, 1.442695
      %v4486 = vpow.pop %v4485
      %v4487 = vmul.f32 %v4478, 1.442695
      %v4488 = vpow.pop %v4487
      %v4489 = vmul.f32 %v4479, 1.442695
      %v4490 = vpow.pop %v4489
      %v4491 = vmul.f32 %v4480, 1.442695
      %v4492 = vpow.pop %v4491
      %v4493 = vsub.f32 %v4482, 1.0
      %v4494 = vsub.f32 %v4484, 1.0
      %v4495 = vsub.f32 %v4486, 1.0
      %v4496 = vsub.f32 %v4488, 1.0
      %v4497 = vsub.f32 %v4490, 1.0
      %v4498 = vsub.f32 %v4492, 1.0
      %v4499 = vsel %vm4469, %v4463, %v4493
      %v4500 = vsel %vm4470, %v4464, %v4494
      %v4501 = vsel %vm4471, %v4465, %v4495
      %v4502 = vsel %vm4472, %v4466, %v4496
      %v4503 = vsel %vm4473, %v4467, %v4497
      %v4504 = vsel %vm4474, %v4468, %v4498
      %v4505 = vpack.c.bf16 %v4502, %v4499
      %v4506 = vpack.c.bf16 %v4503, %v4500
      %v4507 = vpack.c.bf16 %v4504, %v4501
      %v4508 = vld [vmem:[%s33] sm:$0xf]
      %v4509 = vld [vmem:[%s33 + $0x4] sm:$0xf]
      %v4510 = vld [vmem:[%s33 + $0x8] sm:$0x1]
      %v4514 = vunpack.c.l.b16 %v4508
      %v4515 = vunpack.c.l.b16 %v4509
      %v4516 = vunpack.c.l.b16 %v4510
      %v4517 = vpack.c.b16 %v4515, %v4514
      %v4518 = vpack.c.b16 %v4516, %v4516
      %vm4519 = vcmask 89088
      %v4521 = vsel %vm4519, %v4517, 0
      %v4524 = vsel %vm4519, %v4518, 0
      %vm4526 = vcmask 1045504
      %v4527 = vsel %vm1086, 4294967295, 65535
      %v4528 = vsel %vm4526, %v4527, 0
      %v4530 = vand.u32 %v4505, %v4528
      %v4533 = vand.u32 %v4506, %v4528
      %v4536 = vand.u32 %v4507, %v4528
      %4538 = vmatprep.subr.bf16.mxu0 %v4533
      %4539 = vmatpush1.bf16.msra.mxu0 %v4530
      %4540 = vmatprep.subr.bf16.mxu0 0
      %4541 = vmatpush1.bf16.msra.mxu0 0
      %4542 = vmatprep.subr.bf16.mxu0 0
      %4543 = vmatpush1.bf16.msra.mxu0 0
      %4544 = vmatprep.subr.bf16.mxu0 0
      %4545 = vmatpush1.bf16.msra.mxu0 0
      %4546 = vmatprep.subr.bf16.mxu0 0
      %4547 = vmatpush1.bf16.msra.mxu0 0
      %4548 = vmatprep.subr.bf16.mxu0 0
      %4549 = vmatpush1.bf16.msra.mxu0 0
      %4550 = vmatprep.subr.bf16.mxu0 0
      %4551 = vmatpush1.bf16.msra.mxu0 0
      %4552 = vmatprep.subr.bf16.mxu0 0
      %4553 = vmatpush1.bf16.msra.mxu0 0
      %4554 = vmatprep.subr.bf16.mxu0 0
      %4555 = vmatpush1.bf16.msra.mxu0 0
      %4556 = vmatprep.subr.bf16.mxu0 0
      %4557 = vmatpush1.bf16.msra.mxu0 0
      %4558 = vmatprep.subr.bf16.mxu0 0
      %4559 = vmatpush1.bf16.msra.mxu0 0
      %4560 = vmatprep.subr.bf16.mxu0 0
      %4561 = vmatpush1.bf16.msra.mxu0 0
      %4562 = vmatprep.subr.bf16.mxu0 0
      %4563 = vmatpush1.bf16.msra.mxu0 0
      %4564 = vmatprep.subr.bf16.mxu0 0
      %4565 = vmatpush1.bf16.msra.mxu0 0
      %4566 = vmatprep.subr.bf16.mxu0 0
      %4567 = vmatpush1.bf16.msra.mxu0 0
      %4568 = vmatprep.subr.bf16.mxu0 0
      %4569 = vmatpush1.bf16.msra.mxu0 0
      %4570 = vmatprep.mubr.bf16.mxu0 0
      %4571 = vmatmul.mubr.bf16.gmra.mrb[0].mxu0 %v4521
      %v4572 = vpop.f32.mrb[0].mxu0
      %v4573 = vadd.f32 0.0, %v4572
      %v4574 = vpop.f32.mrb[0].mxu0
      %v4575 = vadd.f32 0.0, %v4574
      %v4576 = vpop.f32.mrb[0].mxu0
      %v4577 = vadd.f32 0.0, %v4576
      %v4578 = vpop.f32.mrb[0].mxu0
      %v4579 = vadd.f32 0.0, %v4578
      %4580 = vmatprep.mubr.bf16.mxu0 0
      %4581 = vmatmul.mubr.bf16.gmra.mrb[0].mxu0 %v4524
      %v4582 = vpop.f32.mrb[0].mxu0
      %v4583 = vadd.f32 0.0, %v4582
      %v4584 = vpop.f32.mrb[0].mxu0
      %v4585 = vadd.f32 0.0, %v4584
      %v4586 = vpop.f32.mrb[0].mxu0
      %v4587 = vpop.f32.mrb[0].mxu0
      %4588 = vdwg.mxu0
      %4589 = vmatprep.subr.bf16.mxu0 0
      %4590 = vmatpush1.bf16.msra.mxu0 %v4536
      %4591 = vmatprep.subr.bf16.mxu0 0
      %4592 = vmatpush1.bf16.msra.mxu0 0
      %4593 = vmatprep.subr.bf16.mxu0 0
      %4594 = vmatpush1.bf16.msra.mxu0 0
      %4595 = vmatprep.subr.bf16.mxu0 0
      %4596 = vmatpush1.bf16.msra.mxu0 0
      %4597 = vmatprep.subr.bf16.mxu0 0
      %4598 = vmatpush1.bf16.msra.mxu0 0
      %4599 = vmatprep.subr.bf16.mxu0 0
      %4600 = vmatpush1.bf16.msra.mxu0 0
      %4601 = vmatprep.subr.bf16.mxu0 0
      %4602 = vmatpush1.bf16.msra.mxu0 0
      %4603 = vmatprep.subr.bf16.mxu0 0
      %4604 = vmatpush1.bf16.msra.mxu0 0
      %4605 = vmatprep.subr.bf16.mxu0 0
      %4606 = vmatpush1.bf16.msra.mxu0 0
      %4607 = vmatprep.subr.bf16.mxu0 0
      %4608 = vmatpush1.bf16.msra.mxu0 0
      %4609 = vmatprep.subr.bf16.mxu0 0
      %4610 = vmatpush1.bf16.msra.mxu0 0
      %4611 = vmatprep.subr.bf16.mxu0 0
      %4612 = vmatpush1.bf16.msra.mxu0 0
      %4613 = vmatprep.subr.bf16.mxu0 0
      %4614 = vmatpush1.bf16.msra.mxu0 0
      %4615 = vmatprep.subr.bf16.mxu0 0
      %4616 = vmatpush1.bf16.msra.mxu0 0
      %4617 = vmatprep.subr.bf16.mxu0 0
      %4618 = vmatpush1.bf16.msra.mxu0 0
      %4619 = vmatprep.subr.bf16.mxu0 0
      %4620 = vmatpush1.bf16.msra.mxu0 0
      %4621 = vmatprep.mubr.bf16.mxu0 0
      %4622 = vmatmul.mubr.bf16.gmra.mrb[0].mxu0 %v4521
      %v4623 = vpop.f32.mrb[0].mxu0
      %v4624 = vadd.f32 0.0, %v4623
      %v4625 = vpop.f32.mrb[0].mxu0
      %v4626 = vpop.f32.mrb[0].mxu0
      %v4627 = vadd.f32 0.0, %v4626
      %v4628 = vpop.f32.mrb[0].mxu0
      %4629 = vmatprep.mubr.bf16.mxu0 0
      %4630 = vmatmul.mubr.bf16.gmra.mrb[0].mxu0 %v4524
      %v4631 = vpop.f32.mrb[0].mxu0
      %v4632 = vadd.f32 0.0, %v4631
      %v4633 = vpop.f32.mrb[0].mxu0
      %v4634 = vpop.f32.mrb[0].mxu0
      %v4635 = vpop.f32.mrb[0].mxu0
      %4636 = vdwg.mxu0
      %v4637 = vpack.c.bf16 %v4577, %v4573
      %v4638 = vpack.c.bf16 %v4579, %v4575
      %v4639 = vpack.c.bf16 %v4627, %v4624
      %v4640 = vpack.c.bf16 %v4583, %v4583
      %v4641 = vpack.c.bf16 %v4585, %v4585
      %v4642 = vpack.c.bf16 %v4632, %v4632
      %v4645 = vrot.slane %v4637, 3
      %v4646 = vrot.slane %v4638, 3
      %4647 = vrot.lane.b32.xlu0 %v4645, 64
      %v4648 = vpop.permute.xlu0 %4647
      %4649 = vrot.lane.b32.xlu0 %v4646, 64
      %v4650 = vpop.permute.xlu0 %4649
      %v4651 = vsel %vm2624, %v4648, %v4650
      %vm4655 = vcmask 1041408
      %v4656 = vrot.slane %v4637, 6
      %v4657 = vrot.slane %v4640, 6
      %v4658 = vsel %vm4655, %v4656, %v4657
      %v4659 = vrot.slane %v4638, 6
      %v4660 = vrot.slane %v4641, 6
      %v4661 = vsel %vm4655, %v4659, %v4660
      %v4665 = vsel %vm2151, %v4638, %v4648
      %v4667 = vld [vmem:[%s35] sm:$0xf]
      %v4668 = vld [vmem:[%s35 + $0x4] sm:$0xf]
      %v4669 = vld [vmem:[%s35 + $0x8] sm:$0xf]
      %v4670 = vld [vmem:[%s35 + $0xc] sm:$0xf]
      %v4671 = vld [vmem:[%s35 + $0x10] sm:$0xf]
      %v4672 = vld [vmem:[%s35 + $0x14] sm:$0xf]
      %v4673 = vld [vmem:[%s35 + $0x18] sm:$0xf]
      %v4674 = vld [vmem:[%s35 + $0x1c] sm:$0xf]
      %v4675 = vld [vmem:[%s35 + $0x20] sm:$0xf]
      %v4676 = vld [vmem:[%s35 + $0x24] sm:$0xf]
      %v4677 = vld [vmem:[%s35 + $0x28] sm:$0xf]
      %v4678 = vld [vmem:[%s35 + $0x2c] sm:$0xf]
      %v4679 = vld [vmem:[%s35 + $0x30] sm:$0xf]
      %v4680 = vld [vmem:[%s35 + $0x34] sm:$0xf]
      %v4681 = vld [vmem:[%s35 + $0x38] sm:$0xf]
      %v4682 = vld [vmem:[%s35 + $0x3c] sm:$0xf]
      %v4683 = vld [vmem:[%s35 + $0x40] sm:$0xf]
      %v4684 = vld [vmem:[%s35 + $0x44] sm:$0xf]
      %v4685 = vld [vmem:[%s35 + $0x48] sm:$0xf]
      %v4686 = vld [vmem:[%s35 + $0x4c] sm:$0xf]
      %v4687 = vld [vmem:[%s35 + $0x50] sm:$0xf]
      %v4688 = vld [vmem:[%s35 + $0x54] sm:$0xf]
      %v4689 = vld [vmem:[%s35 + $0x58] sm:$0xf]
      %v4690 = vld [vmem:[%s35 + $0x5c] sm:$0xf]
      %v4691 = vld [vmem:[%s35 + $0x60] sm:$0xf]
      %v4692 = vld [vmem:[%s35 + $0x64] sm:$0xf]
      %v4693 = vld [vmem:[%s35 + $0x68] sm:$0xf]
      %v4694 = vld [vmem:[%s35 + $0x6c] sm:$0xf]
      %v4695 = vld [vmem:[%s35 + $0x70] sm:$0xf]
      %v4696 = vld [vmem:[%s35 + $0x74] sm:$0xf]
      %v4697 = vld [vmem:[%s35 + $0x78] sm:$0xf]
      %v4698 = vld [vmem:[%s35 + $0x7c] sm:$0xf]
      %v4699 = vld [vmem:[%s35 + $0x80] sm:$0xf]
      %v4700 = vld [vmem:[%s35 + $0x84] sm:$0xf]
      %v4701 = vld [vmem:[%s35 + $0x88] sm:$0xf]
      %v4702 = vld [vmem:[%s35 + $0x8c] sm:$0xf]
      %v4703 = vld [vmem:[%s35 + $0x90] sm:$0xf]
      %v4704 = vld [vmem:[%s35 + $0x94] sm:$0xf]
      %v4705 = vld [vmem:[%s35 + $0x98] sm:$0xf]
      %v4706 = vld [vmem:[%s35 + $0x9c] sm:$0xf]
      %v4707 = vld [vmem:[%s35 + $0xa0] sm:$0xf]
      %v4708 = vld [vmem:[%s35 + $0xa4] sm:$0xf]
      %v4709 = vld [vmem:[%s35 + $0xa8] sm:$0xf]
      %v4710 = vld [vmem:[%s35 + $0xac] sm:$0xf]
      %v4711 = vld [vmem:[%s35 + $0xb0] sm:$0xf]
      %v4712 = vld [vmem:[%s35 + $0xb4] sm:$0xf]
      %v4713 = vld [vmem:[%s35 + $0xb8] sm:$0xf]
      %v4714 = vld [vmem:[%s35 + $0xbc] sm:$0xf]
      %v4715 = vld [vmem:[%s35 + $0xc0] sm:$0xf]
      %v4716 = vld [vmem:[%s35 + $0xc4] sm:$0xf]
      %v4717 = vld [vmem:[%s35 + $0xc8] sm:$0xf]
      %v4718 = vld [vmem:[%s35 + $0xcc] sm:$0xf]
      %v4719 = vld [vmem:[%s35 + $0xd0] sm:$0xf]
      %v4720 = vld [vmem:[%s35 + $0xd4] sm:$0xf]
      %v4721 = vld [vmem:[%s35 + $0xd8] sm:$0xf]
      %v4722 = vld [vmem:[%s35 + $0xdc] sm:$0xf]
      %v4723 = vld [vmem:[%s35 + $0xe0] sm:$0xf]
      %v4724 = vld [vmem:[%s35 + $0xe4] sm:$0xf]
      %v4725 = vld [vmem:[%s35 + $0xe8] sm:$0xf]
      %v4726 = vld [vmem:[%s35 + $0xec] sm:$0xf]
      %v4727 = vld [vmem:[%s35 + $0xf0] sm:$0xf]
      %v4728 = vld [vmem:[%s35 + $0xf4] sm:$0xf]
      %v4729 = vld [vmem:[%s35 + $0xf8] sm:$0xf]
      %v4730 = vld [vmem:[%s35 + $0xfc] sm:$0xf]
      %v4731 = vld [vmem:[%s35 + $0x100] sm:$0xf]
      %v4732 = vld [vmem:[%s35 + $0x104] sm:$0xf]
      %v4733 = vld [vmem:[%s35 + $0x108] sm:$0xf]
      %v4734 = vld [vmem:[%s35 + $0x10c] sm:$0xf]
      %v4735 = vld [vmem:[%s35 + $0x110] sm:$0xf]
      %v4736 = vld [vmem:[%s35 + $0x114] sm:$0xf]
      %v4737 = vld [vmem:[%s35 + $0x118] sm:$0xf]
      %v4738 = vld [vmem:[%s35 + $0x11c] sm:$0xf]
      %v4811 = vunpack.c.l.b16 %v4667
      %v4812 = vunpack.c.l.b16 %v4668
      %v4813 = vunpack.c.l.b16 %v4669
      %v4814 = vunpack.c.l.b16 %v4670
      %v4815 = vunpack.c.l.b16 %v4671
      %v4816 = vunpack.c.l.b16 %v4672
      %v4817 = vunpack.c.l.b16 %v4673
      %v4818 = vunpack.c.l.b16 %v4674
      %v4819 = vunpack.c.l.b16 %v4675
      %v4820 = vunpack.c.l.b16 %v4676
      %v4821 = vunpack.c.l.b16 %v4677
      %v4822 = vunpack.c.l.b16 %v4678
      %v4823 = vunpack.c.l.b16 %v4679
      %v4824 = vunpack.c.l.b16 %v4680
      %v4825 = vunpack.c.l.b16 %v4681
      %v4826 = vunpack.c.l.b16 %v4682
      %v4827 = vunpack.c.l.b16 %v4683
      %v4828 = vunpack.c.l.b16 %v4684
      %v4829 = vunpack.c.l.b16 %v4685
      %v4830 = vunpack.c.l.b16 %v4686
      %v4831 = vunpack.c.l.b16 %v4687
      %v4832 = vunpack.c.l.b16 %v4688
      %v4833 = vunpack.c.l.b16 %v4689
      %v4834 = vunpack.c.l.b16 %v4690
      %v4835 = vunpack.c.l.b16 %v4691
      %v4836 = vunpack.c.l.b16 %v4692
      %v4837 = vunpack.c.l.b16 %v4693
      %v4838 = vunpack.c.l.b16 %v4694
      %v4839 = vunpack.c.l.b16 %v4695
      %v4840 = vunpack.c.l.b16 %v4696
      %v4841 = vunpack.c.l.b16 %v4697
      %v4842 = vunpack.c.l.b16 %v4698
      %v4843 = vunpack.c.l.b16 %v4699
      %v4844 = vunpack.c.l.b16 %v4700
      %v4845 = vunpack.c.l.b16 %v4701
      %v4846 = vunpack.c.l.b16 %v4702
      %v4847 = vunpack.c.l.b16 %v4703
      %v4848 = vunpack.c.l.b16 %v4704
      %v4849 = vunpack.c.l.b16 %v4705
      %v4850 = vunpack.c.l.b16 %v4706
      %v4851 = vunpack.c.l.b16 %v4707
      %v4852 = vunpack.c.l.b16 %v4708
      %v4853 = vunpack.c.l.b16 %v4709
      %v4854 = vunpack.c.l.b16 %v4710
      %v4855 = vunpack.c.l.b16 %v4711
      %v4856 = vunpack.c.l.b16 %v4712
      %v4857 = vunpack.c.l.b16 %v4713
      %v4858 = vunpack.c.l.b16 %v4714
      %v4859 = vunpack.c.l.b16 %v4715
      %v4860 = vunpack.c.l.b16 %v4716
      %v4861 = vunpack.c.l.b16 %v4717
      %v4862 = vunpack.c.l.b16 %v4718
      %v4863 = vunpack.c.l.b16 %v4719
      %v4864 = vunpack.c.l.b16 %v4720
      %v4865 = vunpack.c.l.b16 %v4721
      %v4866 = vunpack.c.l.b16 %v4722
      %v4867 = vunpack.c.l.b16 %v4723
      %v4868 = vunpack.c.l.b16 %v4724
      %v4869 = vunpack.c.l.b16 %v4725
      %v4870 = vunpack.c.l.b16 %v4726
      %v4871 = vunpack.c.l.b16 %v4727
      %v4872 = vunpack.c.l.b16 %v4728
      %v4873 = vunpack.c.l.b16 %v4729
      %v4874 = vunpack.c.l.b16 %v4730
      %v4875 = vunpack.c.l.b16 %v4731
      %v4876 = vunpack.c.l.b16 %v4732
      %v4877 = vunpack.c.l.b16 %v4733
      %v4878 = vunpack.c.l.b16 %v4734
      %v4879 = vunpack.c.l.b16 %v4735
      %v4880 = vunpack.c.l.b16 %v4736
      %v4881 = vunpack.c.l.b16 %v4737
      %v4882 = vunpack.c.l.b16 %v4738
      %v4883 = vpack.c.b16 %v4812, %v4811
      %v4884 = vpack.c.b16 %v4814, %v4813
      %v4885 = vpack.c.b16 %v4816, %v4815
      %v4886 = vpack.c.b16 %v4818, %v4817
      %v4887 = vpack.c.b16 %v4820, %v4819
      %v4888 = vpack.c.b16 %v4822, %v4821
      %v4889 = vpack.c.b16 %v4824, %v4823
      %v4890 = vpack.c.b16 %v4826, %v4825
      %v4891 = vpack.c.b16 %v4828, %v4827
      %v4892 = vpack.c.b16 %v4830, %v4829
      %v4893 = vpack.c.b16 %v4832, %v4831
      %v4894 = vpack.c.b16 %v4834, %v4833
      %v4895 = vpack.c.b16 %v4836, %v4835
      %v4896 = vpack.c.b16 %v4838, %v4837
      %v4897 = vpack.c.b16 %v4840, %v4839
      %v4898 = vpack.c.b16 %v4842, %v4841
      %v4899 = vpack.c.b16 %v4844, %v4843
      %v4900 = vpack.c.b16 %v4846, %v4845
      %v4901 = vpack.c.b16 %v4848, %v4847
      %v4902 = vpack.c.b16 %v4850, %v4849
      %v4903 = vpack.c.b16 %v4852, %v4851
      %v4904 = vpack.c.b16 %v4854, %v4853
      %v4905 = vpack.c.b16 %v4856, %v4855
      %v4906 = vpack.c.b16 %v4858, %v4857
      %v4907 = vpack.c.b16 %v4860, %v4859
      %v4908 = vpack.c.b16 %v4862, %v4861
      %v4909 = vpack.c.b16 %v4864, %v4863
      %v4910 = vpack.c.b16 %v4866, %v4865
      %v4911 = vpack.c.b16 %v4868, %v4867
      %v4912 = vpack.c.b16 %v4870, %v4869
      %v4913 = vpack.c.b16 %v4872, %v4871
      %v4914 = vpack.c.b16 %v4874, %v4873
      %v4915 = vpack.c.b16 %v4876, %v4875
      %v4916 = vpack.c.b16 %v4878, %v4877
      %v4917 = vpack.c.b16 %v4880, %v4879
      %v4918 = vpack.c.b16 %v4882, %v4881
      %v4956 = vsel %vm2151, %v4661, 0
      %4958 = vmatprep.subr.bf16.mxu0 0
      %4959 = vmatpush1.bf16.msra.mxu0 %v4883
      %4960 = vmatprep.subr.bf16.mxu0 0
      %4961 = vmatpush1.bf16.msra.mxu0 %v4884
      %4962 = vmatprep.subr.bf16.mxu0 0
      %4963 = vmatpush1.bf16.msra.mxu0 %v4885
      %4964 = vmatprep.subr.bf16.mxu0 0
      %4965 = vmatpush1.bf16.msra.mxu0 %v4886
      %4966 = vmatprep.subr.bf16.mxu0 0
      %4967 = vmatpush1.bf16.msra.mxu0 %v4887
      %4968 = vmatprep.subr.bf16.mxu0 0
      %4969 = vmatpush1.bf16.msra.mxu0 %v4888
      %4970 = vmatprep.subr.bf16.mxu0 0
      %4971 = vmatpush1.bf16.msra.mxu0 %v4889
      %4972 = vmatprep.subr.bf16.mxu0 0
      %4973 = vmatpush1.bf16.msra.mxu0 %v4890
      %4974 = vmatprep.subr.bf16.mxu0 0
      %4975 = vmatpush1.bf16.msra.mxu0 %v4891
      %4976 = vmatprep.subr.bf16.mxu0 0
      %4977 = vmatpush1.bf16.msra.mxu0 %v4892
      %4978 = vmatprep.subr.bf16.mxu0 0
      %4979 = vmatpush1.bf16.msra.mxu0 %v4893
      %4980 = vmatprep.subr.bf16.mxu0 0
      %4981 = vmatpush1.bf16.msra.mxu0 %v4894
      %4982 = vmatprep.subr.bf16.mxu0 0
      %4983 = vmatpush1.bf16.msra.mxu0 %v4895
      %4984 = vmatprep.subr.bf16.mxu0 0
      %4985 = vmatpush1.bf16.msra.mxu0 %v4896
      %4986 = vmatprep.subr.bf16.mxu0 0
      %4987 = vmatpush1.bf16.msra.mxu0 %v4897
      %4988 = vmatprep.subr.bf16.mxu0 0
      %4989 = vmatpush1.bf16.msra.mxu0 %v4898
      %4990 = vmatprep.mubr.bf16.mxu0 %v4665
      %4991 = vmatmul.mubr.bf16.gmra.mrb[0].mxu0 %v4637
      %v4992 = vpop.f32.mrb[0].mxu0
      %v4993 = vadd.f32 0.0, %v4992
      %v4994 = vpop.f32.mrb[0].mxu0
      %v4995 = vpop.f32.mrb[0].mxu0
      %v4996 = vpop.f32.mrb[0].mxu0
      %4997 = vdwg.mxu0
      %4998 = vmatprep.subr.bf16.mxu0 0
      %4999 = vmatpush1.bf16.msra.mxu0 %v4899
      %5000 = vmatprep.subr.bf16.mxu0 0
      %5001 = vmatpush1.bf16.msra.mxu0 %v4900
      %5002 = vmatprep.subr.bf16.mxu0 0
      %5003 = vmatpush1.bf16.msra.mxu0 %v4901
      %5004 = vmatprep.subr.bf16.mxu0 0
      %5005 = vmatpush1.bf16.msra.mxu0 %v4902
      %5006 = vmatprep.subr.bf16.mxu0 0
      %5007 = vmatpush1.bf16.msra.mxu0 %v4903
      %5008 = vmatprep.subr.bf16.mxu0 0
      %5009 = vmatpush1.bf16.msra.mxu0 %v4904
      %5010 = vmatprep.subr.bf16.mxu0 0
      %5011 = vmatpush1.bf16.msra.mxu0 %v4905
      %5012 = vmatprep.subr.bf16.mxu0 0
      %5013 = vmatpush1.bf16.msra.mxu0 %v4906
      %5014 = vmatprep.subr.bf16.mxu0 0
      %5015 = vmatpush1.bf16.msra.mxu0 %v4907
      %5016 = vmatprep.subr.bf16.mxu0 0
      %5017 = vmatpush1.bf16.msra.mxu0 %v4908
      %5018 = vmatprep.subr.bf16.mxu0 0
      %5019 = vmatpush1.bf16.msra.mxu0 %v4909
      %5020 = vmatprep.subr.bf16.mxu0 0
      %5021 = vmatpush1.bf16.msra.mxu0 %v4910
      %5022 = vmatprep.subr.bf16.mxu0 0
      %5023 = vmatpush1.bf16.msra.mxu0 %v4911
      %5024 = vmatprep.subr.bf16.mxu0 0
      %5025 = vmatpush1.bf16.msra.mxu0 %v4912
      %5026 = vmatprep.subr.bf16.mxu0 0
      %5027 = vmatpush1.bf16.msra.mxu0 %v4913
      %5028 = vmatprep.subr.bf16.mxu0 0
      %5029 = vmatpush1.bf16.msra.mxu0 %v4914
      %5030 = vmatprep.mubr.bf16.mxu0 %v4658
      %5031 = vmatmul.mubr.bf16.gmra.mrb[0].mxu0 %v4651
      %v5032 = vpop.f32.mrb[0].mxu0
      %v5033 = vadd.f32 %v4993, %v5032
      %v5034 = vpop.f32.mrb[0].mxu0
      %v5035 = vpop.f32.mrb[0].mxu0
      %v5036 = vpop.f32.mrb[0].mxu0
      %5037 = vdwg.mxu0
      %5038 = vmatprep.subr.bf16.mxu0 0
      %5039 = vmatpush1.bf16.msra.mxu0 %v4915
      %5040 = vmatprep.subr.bf16.mxu0 0
      %5041 = vmatpush1.bf16.msra.mxu0 %v4916
      %5042 = vmatprep.subr.bf16.mxu0 0
      %5043 = vmatpush1.bf16.msra.mxu0 %v4917
      %5044 = vmatprep.subr.bf16.mxu0 0
      %5045 = vmatpush1.bf16.msra.mxu0 %v4918
      %5046 = vmatprep.subr.bf16.mxu0 0
      %5047 = vmatpush1.bf16.msra.mxu0 0
      %5048 = vmatprep.subr.bf16.mxu0 0
      %5049 = vmatpush1.bf16.msra.mxu0 0
      %5050 = vmatprep.subr.bf16.mxu0 0
      %5051 = vmatpush1.bf16.msra.mxu0 0
      %5052 = vmatprep.subr.bf16.mxu0 0
      %5053 = vmatpush1.bf16.msra.mxu0 0
      %5054 = vmatprep.subr.bf16.mxu0 0
      %5055 = vmatpush1.bf16.msra.mxu0 0
      %5056 = vmatprep.subr.bf16.mxu0 0
      %5057 = vmatpush1.bf16.msra.mxu0 0
      %5058 = vmatprep.subr.bf16.mxu0 0
      %5059 = vmatpush1.bf16.msra.mxu0 0
      %5060 = vmatprep.subr.bf16.mxu0 0
      %5061 = vmatpush1.bf16.msra.mxu0 0
      %5062 = vmatprep.subr.bf16.mxu0 0
      %5063 = vmatpush1.bf16.msra.mxu0 0
      %5064 = vmatprep.subr.bf16.mxu0 0
      %5065 = vmatpush1.bf16.msra.mxu0 0
      %5066 = vmatprep.subr.bf16.mxu0 0
      %5067 = vmatpush1.bf16.msra.mxu0 0
      %5068 = vmatprep.subr.bf16.mxu0 0
      %5069 = vmatpush1.bf16.msra.mxu0 0
      %5070 = vmatprep.mubr.bf16.mxu0 0
      %5071 = vmatmul.mubr.bf16.gmra.mrb[0].mxu0 %v4956
      %v5072 = vpop.f32.mrb[0].mxu0
      %v5073 = vadd.f32 %v5033, %v5072
      %v5074 = vpop.f32.mrb[0].mxu0
      %v5075 = vpop.f32.mrb[0].mxu0
      %v5076 = vpop.f32.mrb[0].mxu0
      %5077 = vdwg.mxu0
      %5079 = vrot.lane.b32.xlu0 %v4638, 96
      %v5080 = vpop.permute.xlu0 %5079
      %5081 = vrot.lane.b32.xlu0 %v4639, 96
      %v5082 = vpop.permute.xlu0 %5081
      %v5083 = vsel %vm3062, %v5080, %v5082
      %v5085 = vrot.slane %v4639, 3
      %5086 = vrot.lane.b32.xlu0 %v4646, 32
      %v5087 = vpop.permute.xlu0 %5086
      %5088 = vrot.lane.b32.xlu0 %v5085, 32
      %v5089 = vpop.permute.xlu0 %5088
      %v5090 = vsel %vm3095, %v5087, %v5089
      %v5093 = vrot.slane %v4639, 6
      %v5094 = vrot.slane %v4642, 6
      %v5095 = vsel %vm4655, %v5093, %v5094
      %5096 = vrot.lane.b32.xlu0 %v4661, 96
      %v5097 = vpop.permute.xlu0 %5096
      %5098 = vrot.lane.b32.xlu0 %v5095, 96
      %v5099 = vpop.permute.xlu0 %5098
      %v5100 = vsel %vm3062, %v5097, %v5099
      %v5104 = vsel %vm2151, %v5082, %v5087
      %v5106 = vld [vmem:[%s37] sm:$0xf]
      %v5107 = vld [vmem:[%s37 + $0x4] sm:$0xf]
      %v5108 = vld [vmem:[%s37 + $0x8] sm:$0xf]
      %v5109 = vld [vmem:[%s37 + $0xc] sm:$0xf]
      %v5110 = vld [vmem:[%s37 + $0x10] sm:$0xf]
      %v5111 = vld [vmem:[%s37 + $0x14] sm:$0xf]
      %v5112 = vld [vmem:[%s37 + $0x18] sm:$0xf]
      %v5113 = vld [vmem:[%s37 + $0x1c] sm:$0xf]
      %v5114 = vld [vmem:[%s37 + $0x20] sm:$0xf]
      %v5115 = vld [vmem:[%s37 + $0x24] sm:$0xf]
      %v5116 = vld [vmem:[%s37 + $0x28] sm:$0xf]
      %v5117 = vld [vmem:[%s37 + $0x2c] sm:$0xf]
      %v5118 = vld [vmem:[%s37 + $0x30] sm:$0xf]
      %v5119 = vld [vmem:[%s37 + $0x34] sm:$0xf]
      %v5120 = vld [vmem:[%s37 + $0x38] sm:$0xf]
      %v5121 = vld [vmem:[%s37 + $0x3c] sm:$0xf]
      %v5122 = vld [vmem:[%s37 + $0x40] sm:$0xf]
      %v5123 = vld [vmem:[%s37 + $0x44] sm:$0xf]
      %v5124 = vld [vmem:[%s37 + $0x48] sm:$0xf]
      %v5125 = vld [vmem:[%s37 + $0x4c] sm:$0xf]
      %v5126 = vld [vmem:[%s37 + $0x50] sm:$0xf]
      %v5127 = vld [vmem:[%s37 + $0x54] sm:$0xf]
      %v5128 = vld [vmem:[%s37 + $0x58] sm:$0xf]
      %v5129 = vld [vmem:[%s37 + $0x5c] sm:$0xf]
      %v5130 = vld [vmem:[%s37 + $0x60] sm:$0xf]
      %v5131 = vld [vmem:[%s37 + $0x64] sm:$0xf]
      %v5132 = vld [vmem:[%s37 + $0x68] sm:$0xf]
      %v5133 = vld [vmem:[%s37 + $0x6c] sm:$0xf]
      %v5134 = vld [vmem:[%s37 + $0x70] sm:$0xf]
      %v5135 = vld [vmem:[%s37 + $0x74] sm:$0xf]
      %v5136 = vld [vmem:[%s37 + $0x78] sm:$0xf]
      %v5137 = vld [vmem:[%s37 + $0x7c] sm:$0xf]
      %v5138 = vld [vmem:[%s37 + $0x80] sm:$0xf]
      %v5139 = vld [vmem:[%s37 + $0x84] sm:$0xf]
      %v5140 = vld [vmem:[%s37 + $0x88] sm:$0xf]
      %v5141 = vld [vmem:[%s37 + $0x8c] sm:$0xf]
      %v5142 = vld [vmem:[%s37 + $0x90] sm:$0xf]
      %v5143 = vld [vmem:[%s37 + $0x94] sm:$0xf]
      %v5144 = vld [vmem:[%s37 + $0x98] sm:$0xf]
      %v5145 = vld [vmem:[%s37 + $0x9c] sm:$0xf]
      %v5146 = vld [vmem:[%s37 + $0xa0] sm:$0xf]
      %v5147 = vld [vmem:[%s37 + $0xa4] sm:$0xf]
      %v5148 = vld [vmem:[%s37 + $0xa8] sm:$0xf]
      %v5149 = vld [vmem:[%s37 + $0xac] sm:$0xf]
      %v5150 = vld [vmem:[%s37 + $0xb0] sm:$0xf]
      %v5151 = vld [vmem:[%s37 + $0xb4] sm:$0xf]
      %v5152 = vld [vmem:[%s37 + $0xb8] sm:$0xf]
      %v5153 = vld [vmem:[%s37 + $0xbc] sm:$0xf]
      %v5154 = vld [vmem:[%s37 + $0xc0] sm:$0xf]
      %v5155 = vld [vmem:[%s37 + $0xc4] sm:$0xf]
      %v5156 = vld [vmem:[%s37 + $0xc8] sm:$0xf]
      %v5157 = vld [vmem:[%s37 + $0xcc] sm:$0xf]
      %v5158 = vld [vmem:[%s37 + $0xd0] sm:$0xf]
      %v5159 = vld [vmem:[%s37 + $0xd4] sm:$0xf]
      %v5160 = vld [vmem:[%s37 + $0xd8] sm:$0xf]
      %v5161 = vld [vmem:[%s37 + $0xdc] sm:$0xf]
      %v5162 = vld [vmem:[%s37 + $0xe0] sm:$0xf]
      %v5163 = vld [vmem:[%s37 + $0xe4] sm:$0xf]
      %v5164 = vld [vmem:[%s37 + $0xe8] sm:$0xf]
      %v5165 = vld [vmem:[%s37 + $0xec] sm:$0xf]
      %v5166 = vld [vmem:[%s37 + $0xf0] sm:$0xf]
      %v5167 = vld [vmem:[%s37 + $0xf4] sm:$0xf]
      %v5168 = vld [vmem:[%s37 + $0xf8] sm:$0xf]
      %v5169 = vld [vmem:[%s37 + $0xfc] sm:$0xf]
      %v5170 = vld [vmem:[%s37 + $0x100] sm:$0xf]
      %v5171 = vld [vmem:[%s37 + $0x104] sm:$0xf]
      %v5172 = vld [vmem:[%s37 + $0x108] sm:$0xf]
      %v5173 = vld [vmem:[%s37 + $0x10c] sm:$0xf]
      %v5174 = vld [vmem:[%s37 + $0x110] sm:$0xf]
      %v5175 = vld [vmem:[%s37 + $0x114] sm:$0xf]
      %v5176 = vld [vmem:[%s37 + $0x118] sm:$0xf]
      %v5177 = vld [vmem:[%s37 + $0x11c] sm:$0xf]
      %v5250 = vunpack.c.l.b16 %v5106
      %v5251 = vunpack.c.l.b16 %v5107
      %v5252 = vunpack.c.l.b16 %v5108
      %v5253 = vunpack.c.l.b16 %v5109
      %v5254 = vunpack.c.l.b16 %v5110
      %v5255 = vunpack.c.l.b16 %v5111
      %v5256 = vunpack.c.l.b16 %v5112
      %v5257 = vunpack.c.l.b16 %v5113
      %v5258 = vunpack.c.l.b16 %v5114
      %v5259 = vunpack.c.l.b16 %v5115
      %v5260 = vunpack.c.l.b16 %v5116
      %v5261 = vunpack.c.l.b16 %v5117
      %v5262 = vunpack.c.l.b16 %v5118
      %v5263 = vunpack.c.l.b16 %v5119
      %v5264 = vunpack.c.l.b16 %v5120
      %v5265 = vunpack.c.l.b16 %v5121
      %v5266 = vunpack.c.l.b16 %v5122
      %v5267 = vunpack.c.l.b16 %v5123
      %v5268 = vunpack.c.l.b16 %v5124
      %v5269 = vunpack.c.l.b16 %v5125
      %v5270 = vunpack.c.l.b16 %v5126
      %v5271 = vunpack.c.l.b16 %v5127
      %v5272 = vunpack.c.l.b16 %v5128
      %v5273 = vunpack.c.l.b16 %v5129
      %v5274 = vunpack.c.l.b16 %v5130
      %v5275 = vunpack.c.l.b16 %v5131
      %v5276 = vunpack.c.l.b16 %v5132
      %v5277 = vunpack.c.l.b16 %v5133
      %v5278 = vunpack.c.l.b16 %v5134
      %v5279 = vunpack.c.l.b16 %v5135
      %v5280 = vunpack.c.l.b16 %v5136
      %v5281 = vunpack.c.l.b16 %v5137
      %v5282 = vunpack.c.l.b16 %v5138
      %v5283 = vunpack.c.l.b16 %v5139
      %v5284 = vunpack.c.l.b16 %v5140
      %v5285 = vunpack.c.l.b16 %v5141
      %v5286 = vunpack.c.l.b16 %v5142
      %v5287 = vunpack.c.l.b16 %v5143
      %v5288 = vunpack.c.l.b16 %v5144
      %v5289 = vunpack.c.l.b16 %v5145
      %v5290 = vunpack.c.l.b16 %v5146
      %v5291 = vunpack.c.l.b16 %v5147
      %v5292 = vunpack.c.l.b16 %v5148
      %v5293 = vunpack.c.l.b16 %v5149
      %v5294 = vunpack.c.l.b16 %v5150
      %v5295 = vunpack.c.l.b16 %v5151
      %v5296 = vunpack.c.l.b16 %v5152
      %v5297 = vunpack.c.l.b16 %v5153
      %v5298 = vunpack.c.l.b16 %v5154
      %v5299 = vunpack.c.l.b16 %v5155
      %v5300 = vunpack.c.l.b16 %v5156
      %v5301 = vunpack.c.l.b16 %v5157
      %v5302 = vunpack.c.l.b16 %v5158
      %v5303 = vunpack.c.l.b16 %v5159
      %v5304 = vunpack.c.l.b16 %v5160
      %v5305 = vunpack.c.l.b16 %v5161
      %v5306 = vunpack.c.l.b16 %v5162
      %v5307 = vunpack.c.l.b16 %v5163
      %v5308 = vunpack.c.l.b16 %v5164
      %v5309 = vunpack.c.l.b16 %v5165
      %v5310 = vunpack.c.l.b16 %v5166
      %v5311 = vunpack.c.l.b16 %v5167
      %v5312 = vunpack.c.l.b16 %v5168
      %v5313 = vunpack.c.l.b16 %v5169
      %v5314 = vunpack.c.l.b16 %v5170
      %v5315 = vunpack.c.l.b16 %v5171
      %v5316 = vunpack.c.l.b16 %v5172
      %v5317 = vunpack.c.l.b16 %v5173
      %v5318 = vunpack.c.l.b16 %v5174
      %v5319 = vunpack.c.l.b16 %v5175
      %v5320 = vunpack.c.l.b16 %v5176
      %v5321 = vunpack.c.l.b16 %v5177
      %v5322 = vpack.c.b16 %v5251, %v5250
      %v5323 = vpack.c.b16 %v5253, %v5252
      %v5324 = vpack.c.b16 %v5255, %v5254
      %v5325 = vpack.c.b16 %v5257, %v5256
      %v5326 = vpack.c.b16 %v5259, %v5258
      %v5327 = vpack.c.b16 %v5261, %v5260
      %v5328 = vpack.c.b16 %v5263, %v5262
      %v5329 = vpack.c.b16 %v5265, %v5264
      %v5330 = vpack.c.b16 %v5267, %v5266
      %v5331 = vpack.c.b16 %v5269, %v5268
      %v5332 = vpack.c.b16 %v5271, %v5270
      %v5333 = vpack.c.b16 %v5273, %v5272
      %v5334 = vpack.c.b16 %v5275, %v5274
      %v5335 = vpack.c.b16 %v5277, %v5276
      %v5336 = vpack.c.b16 %v5279, %v5278
      %v5337 = vpack.c.b16 %v5281, %v5280
      %v5338 = vpack.c.b16 %v5283, %v5282
      %v5339 = vpack.c.b16 %v5285, %v5284
      %v5340 = vpack.c.b16 %v5287, %v5286
      %v5341 = vpack.c.b16 %v5289, %v5288
      %v5342 = vpack.c.b16 %v5291, %v5290
      %v5343 = vpack.c.b16 %v5293, %v5292
      %v5344 = vpack.c.b16 %v5295, %v5294
      %v5345 = vpack.c.b16 %v5297, %v5296
      %v5346 = vpack.c.b16 %v5299, %v5298
      %v5347 = vpack.c.b16 %v5301, %v5300
      %v5348 = vpack.c.b16 %v5303, %v5302
      %v5349 = vpack.c.b16 %v5305, %v5304
      %v5350 = vpack.c.b16 %v5307, %v5306
      %v5351 = vpack.c.b16 %v5309, %v5308
      %v5352 = vpack.c.b16 %v5311, %v5310
      %v5353 = vpack.c.b16 %v5313, %v5312
      %v5354 = vpack.c.b16 %v5315, %v5314
      %v5355 = vpack.c.b16 %v5317, %v5316
      %v5356 = vpack.c.b16 %v5319, %v5318
      %v5357 = vpack.c.b16 %v5321, %v5320
      %v5395 = vsel %vm2151, %v5099, 0
      %5397 = vmatprep.subr.bf16.mxu0 0
      %5398 = vmatpush1.bf16.msra.mxu0 %v5322
      %5399 = vmatprep.subr.bf16.mxu0 0
      %5400 = vmatpush1.bf16.msra.mxu0 %v5323
      %5401 = vmatprep.subr.bf16.mxu0 0
      %5402 = vmatpush1.bf16.msra.mxu0 %v5324
      %5403 = vmatprep.subr.bf16.mxu0 0
      %5404 = vmatpush1.bf16.msra.mxu0 %v5325
      %5405 = vmatprep.subr.bf16.mxu0 0
      %5406 = vmatpush1.bf16.msra.mxu0 %v5326
      %5407 = vmatprep.subr.bf16.mxu0 0
      %5408 = vmatpush1.bf16.msra.mxu0 %v5327
      %5409 = vmatprep.subr.bf16.mxu0 0
      %5410 = vmatpush1.bf16.msra.mxu0 %v5328
      %5411 = vmatprep.subr.bf16.mxu0 0
      %5412 = vmatpush1.bf16.msra.mxu0 %v5329
      %5413 = vmatprep.subr.bf16.mxu0 0
      %5414 = vmatpush1.bf16.msra.mxu0 %v5330
      %5415 = vmatprep.subr.bf16.mxu0 0
      %5416 = vmatpush1.bf16.msra.mxu0 %v5331
      %5417 = vmatprep.subr.bf16.mxu0 0
      %5418 = vmatpush1.bf16.msra.mxu0 %v5332
      %5419 = vmatprep.subr.bf16.mxu0 0
      %5420 = vmatpush1.bf16.msra.mxu0 %v5333
      %5421 = vmatprep.subr.bf16.mxu0 0
      %5422 = vmatpush1.bf16.msra.mxu0 %v5334
      %5423 = vmatprep.subr.bf16.mxu0 0
      %5424 = vmatpush1.bf16.msra.mxu0 %v5335
      %5425 = vmatprep.subr.bf16.mxu0 0
      %5426 = vmatpush1.bf16.msra.mxu0 %v5336
      %5427 = vmatprep.subr.bf16.mxu0 0
      %5428 = vmatpush1.bf16.msra.mxu0 %v5337
      %5429 = vmatprep.mubr.bf16.mxu0 %v5104
      %5430 = vmatmul.mubr.bf16.gmra.mrb[0].mxu0 %v5083
      %v5431 = vpop.f32.mrb[0].mxu0
      %v5432 = vadd.f32 0.0, %v5431
      %v5433 = vpop.f32.mrb[0].mxu0
      %v5434 = vpop.f32.mrb[0].mxu0
      %v5435 = vpop.f32.mrb[0].mxu0
      %5436 = vdwg.mxu0
      %5437 = vmatprep.subr.bf16.mxu0 0
      %5438 = vmatpush1.bf16.msra.mxu0 %v5338
      %5439 = vmatprep.subr.bf16.mxu0 0
      %5440 = vmatpush1.bf16.msra.mxu0 %v5339
      %5441 = vmatprep.subr.bf16.mxu0 0
      %5442 = vmatpush1.bf16.msra.mxu0 %v5340
      %5443 = vmatprep.subr.bf16.mxu0 0
      %5444 = vmatpush1.bf16.msra.mxu0 %v5341
      %5445 = vmatprep.subr.bf16.mxu0 0
      %5446 = vmatpush1.bf16.msra.mxu0 %v5342
      %5447 = vmatprep.subr.bf16.mxu0 0
      %5448 = vmatpush1.bf16.msra.mxu0 %v5343
      %5449 = vmatprep.subr.bf16.mxu0 0
      %5450 = vmatpush1.bf16.msra.mxu0 %v5344
      %5451 = vmatprep.subr.bf16.mxu0 0
      %5452 = vmatpush1.bf16.msra.mxu0 %v5345
      %5453 = vmatprep.subr.bf16.mxu0 0
      %5454 = vmatpush1.bf16.msra.mxu0 %v5346
      %5455 = vmatprep.subr.bf16.mxu0 0
      %5456 = vmatpush1.bf16.msra.mxu0 %v5347
      %5457 = vmatprep.subr.bf16.mxu0 0
      %5458 = vmatpush1.bf16.msra.mxu0 %v5348
      %5459 = vmatprep.subr.bf16.mxu0 0
      %5460 = vmatpush1.bf16.msra.mxu0 %v5349
      %5461 = vmatprep.subr.bf16.mxu0 0
      %5462 = vmatpush1.bf16.msra.mxu0 %v5350
      %5463 = vmatprep.subr.bf16.mxu0 0
      %5464 = vmatpush1.bf16.msra.mxu0 %v5351
      %5465 = vmatprep.subr.bf16.mxu0 0
      %5466 = vmatpush1.bf16.msra.mxu0 %v5352
      %5467 = vmatprep.subr.bf16.mxu0 0
      %5468 = vmatpush1.bf16.msra.mxu0 %v5353
      %5469 = vmatprep.mubr.bf16.mxu0 %v5100
      %5470 = vmatmul.mubr.bf16.gmra.mrb[0].mxu0 %v5090
      %v5471 = vpop.f32.mrb[0].mxu0
      %v5472 = vadd.f32 %v5432, %v5471
      %v5473 = vpop.f32.mrb[0].mxu0
      %v5474 = vpop.f32.mrb[0].mxu0
      %v5475 = vpop.f32.mrb[0].mxu0
      %5476 = vdwg.mxu0
      %5477 = vmatprep.subr.bf16.mxu0 0
      %5478 = vmatpush1.bf16.msra.mxu0 %v5354
      %5479 = vmatprep.subr.bf16.mxu0 0
      %5480 = vmatpush1.bf16.msra.mxu0 %v5355
      %5481 = vmatprep.subr.bf16.mxu0 0
      %5482 = vmatpush1.bf16.msra.mxu0 %v5356
      %5483 = vmatprep.subr.bf16.mxu0 0
      %5484 = vmatpush1.bf16.msra.mxu0 %v5357
      %5485 = vmatprep.subr.bf16.mxu0 0
      %5486 = vmatpush1.bf16.msra.mxu0 0
      %5487 = vmatprep.subr.bf16.mxu0 0
      %5488 = vmatpush1.bf16.msra.mxu0 0
      %5489 = vmatprep.subr.bf16.mxu0 0
      %5490 = vmatpush1.bf16.msra.mxu0 0
      %5491 = vmatprep.subr.bf16.mxu0 0
      %5492 = vmatpush1.bf16.msra.mxu0 0
      %5493 = vmatprep.subr.bf16.mxu0 0
      %5494 = vmatpush1.bf16.msra.mxu0 0
      %5495 = vmatprep.subr.bf16.mxu0 0
      %5496 = vmatpush1.bf16.msra.mxu0 0
      %5497 = vmatprep.subr.bf16.mxu0 0
      %5498 = vmatpush1.bf16.msra.mxu0 0
      %5499 = vmatprep.subr.bf16.mxu0 0
      %5500 = vmatpush1.bf16.msra.mxu0 0
      %5501 = vmatprep.subr.bf16.mxu0 0
      %5502 = vmatpush1.bf16.msra.mxu0 0
      %5503 = vmatprep.subr.bf16.mxu0 0
      %5504 = vmatpush1.bf16.msra.mxu0 0
      %5505 = vmatprep.subr.bf16.mxu0 0
      %5506 = vmatpush1.bf16.msra.mxu0 0
      %5507 = vmatprep.subr.bf16.mxu0 0
      %5508 = vmatpush1.bf16.msra.mxu0 0
      %5509 = vmatprep.mubr.bf16.mxu0 0
      %5510 = vmatmul.mubr.bf16.gmra.mrb[0].mxu0 %v5395
      %v5511 = vpop.f32.mrb[0].mxu0
      %v5512 = vadd.f32 %v5472, %v5511
      %v5513 = vpop.f32.mrb[0].mxu0
      %v5514 = vpop.f32.mrb[0].mxu0
      %v5515 = vpop.f32.mrb[0].mxu0
      %5516 = vdwg.mxu0
      %5518 = vrot.lane.b32.xlu0 %v5512, 96
      %v5519 = vpop.permute.xlu0 %5518
      %v5521 = vsel %vm2147, %v5073, %v5519
      %v5522 = vld [vmem:[%s39] sm:$0x3]
      %v5524 = vlaneseq
      %v5525 = vshrl.u32 %v5524, 7
      %v5526 = vsub.s32 0, %v5525
      %v5527 = vrot.slane %v5522, %v5526
      %v5528 = vlaneseq
      %v5529 = vshrl.u32 %v5528, 7
      %v5530 = vsub.s32 1, %v5529
      %v5531 = vrot.slane %v5522, %v5530
      %v5534 = vadd.f32 %v5521, %v5527
      %v5535 = vadd.f32 %v5519, %v5531
      %vm5536 = vcmp.gt.f32.partialorder %v5534, 0.0
      %vm5537 = vcmp.gt.f32.partialorder %v5535, 0.0
      %v5538 = vmin.f32 %v5534, 0.0
      %v5539 = vmin.f32 %v5535, 0.0
      %v5540 = vmul.f32 %v5538, 1.442695
      %v5541 = vpow.pop %v5540
      %v5542 = vmul.f32 %v5539, 1.442695
      %v5543 = vpow.pop %v5542
      %v5544 = vsub.f32 %v5541, 1.0
      %v5545 = vsub.f32 %v5543, 1.0
      %v5546 = vsel %vm5536, %v5534, %v5544
      %v5547 = vsel %vm5537, %v5535, %v5545
      %v5548 = vpack.c.bf16 %v5546, %v5546
      %v5549 = vpack.c.bf16 %v5547, %v5547
      %v5550 = vld [vmem:[%s41] sm:$0xf]
      %v5551 = vld [vmem:[%s41 + $0x4] sm:$0x1]
      %v5554 = vunpack.c.l.b16 %v5550
      %v5555 = vunpack.c.l.b16 %v5551
      %v5556 = vpack.c.b16 %v5555, %v5554
      %vm5557 = vcmask 48128
      %v5559 = vsel %vm5557, %v5556, 0
      %v5562 = vsel %vm2363, %v5548, 0
      %v5565 = vsel %vm2363, %v5549, 0
      %5567 = vmatprep.subr.bf16.mxu0 %v5565
      %5568 = vmatpush1.bf16.msra.mxu0 %v5562
      %5569 = vmatprep.subr.bf16.mxu0 0
      %5570 = vmatpush1.bf16.msra.mxu0 0
      %5571 = vmatprep.subr.bf16.mxu0 0
      %5572 = vmatpush1.bf16.msra.mxu0 0
      %5573 = vmatprep.subr.bf16.mxu0 0
      %5574 = vmatpush1.bf16.msra.mxu0 0
      %5575 = vmatprep.subr.bf16.mxu0 0
      %5576 = vmatpush1.bf16.msra.mxu0 0
      %5577 = vmatprep.subr.bf16.mxu0 0
      %5578 = vmatpush1.bf16.msra.mxu0 0
      %5579 = vmatprep.subr.bf16.mxu0 0
      %5580 = vmatpush1.bf16.msra.mxu0 0
      %5581 = vmatprep.subr.bf16.mxu0 0
      %5582 = vmatpush1.bf16.msra.mxu0 0
      %5583 = vmatprep.subr.bf16.mxu0 0
      %5584 = vmatpush1.bf16.msra.mxu0 0
      %5585 = vmatprep.subr.bf16.mxu0 0
      %5586 = vmatpush1.bf16.msra.mxu0 0
      %5587 = vmatprep.subr.bf16.mxu0 0
      %5588 = vmatpush1.bf16.msra.mxu0 0
      %5589 = vmatprep.subr.bf16.mxu0 0
      %5590 = vmatpush1.bf16.msra.mxu0 0
      %5591 = vmatprep.subr.bf16.mxu0 0
      %5592 = vmatpush1.bf16.msra.mxu0 0
      %5593 = vmatprep.subr.bf16.mxu0 0
      %5594 = vmatpush1.bf16.msra.mxu0 0
      %5595 = vmatprep.subr.bf16.mxu0 0
      %5596 = vmatpush1.bf16.msra.mxu0 0
      %5597 = vmatprep.subr.bf16.mxu0 0
      %5598 = vmatpush1.bf16.msra.mxu0 0
      %5599 = vmatprep.mubr.bf16.mxu0 0
      %5600 = vmatmul.mubr.bf16.gmra.mrb[0].mxu0 %v5559
      %v5601 = vpop.f32.mrb[0].mxu0
      %v5602 = vadd.f32 0.0, %v5601
      %v5603 = vpop.f32.mrb[0].mxu0
      %v5604 = vadd.f32 0.0, %v5603
      %v5605 = vpop.f32.mrb[0].mxu0
      %v5606 = vadd.f32 0.0, %v5605
      %v5607 = vpop.f32.mrb[0].mxu0
      %v5608 = vadd.f32 0.0, %v5607
      %5609 = vdwg.mxu0
      %v5610 = vpack.c.bf16 %v5606, %v5602
      %v5611 = vpack.c.bf16 %v5608, %v5604
      %v5613 = vshrl.u32 %v5610, 16
      %v5615 = vrot.slane %v5613, 1
      %v5616 = vshll.u32 %v5610, 16
      %v5618 = vrot.slane %v5616, 2
      %v5619 = vor.u32 %v5615, %v5618
      %v5621 = vshrl.u32 %v5611, 16
      %v5623 = vrot.slane %v5621, 1
      %v5624 = vshll.u32 %v5611, 16
      %v5626 = vrot.slane %v5624, 2
      %v5627 = vor.u32 %v5623, %v5626
      %5628 = vrot.lane.b32.xlu0 %v5619, 64
      %v5629 = vpop.permute.xlu0 %5628
      %5630 = vrot.lane.b32.xlu0 %v5627, 64
      %v5631 = vpop.permute.xlu0 %5630
      %v5632 = vsel %vm2624, %v5629, %v5631
      %v5636 = vrot.slane %v5610, 3
      %v5637 = vrot.slane %v5611, 3
      %v5640 = vsel %vm2151, %v5611, %v5629
      %v5642 = vld [vmem:[%s43] sm:$0xf]
      %v5643 = vld [vmem:[%s43 + $0x4] sm:$0xf]
      %v5644 = vld [vmem:[%s43 + $0x8] sm:$0xf]
      %v5645 = vld [vmem:[%s43 + $0xc] sm:$0xf]
      %v5646 = vld [vmem:[%s43 + $0x10] sm:$0xf]
      %v5647 = vld [vmem:[%s43 + $0x14] sm:$0xf]
      %v5648 = vld [vmem:[%s43 + $0x18] sm:$0xf]
      %v5649 = vld [vmem:[%s43 + $0x1c] sm:$0xf]
      %v5650 = vld [vmem:[%s43 + $0x20] sm:$0xf]
      %v5651 = vld [vmem:[%s43 + $0x24] sm:$0xf]
      %v5652 = vld [vmem:[%s43 + $0x28] sm:$0xf]
      %v5653 = vld [vmem:[%s43 + $0x2c] sm:$0xf]
      %v5654 = vld [vmem:[%s43 + $0x30] sm:$0xf]
      %v5655 = vld [vmem:[%s43 + $0x34] sm:$0xf]
      %v5656 = vld [vmem:[%s43 + $0x38] sm:$0xf]
      %v5657 = vld [vmem:[%s43 + $0x3c] sm:$0xf]
      %v5658 = vld [vmem:[%s43 + $0x40] sm:$0xf]
      %v5659 = vld [vmem:[%s43 + $0x44] sm:$0xf]
      %v5660 = vld [vmem:[%s43 + $0x48] sm:$0xf]
      %v5661 = vld [vmem:[%s43 + $0x4c] sm:$0xf]
      %v5662 = vld [vmem:[%s43 + $0x50] sm:$0xf]
      %v5663 = vld [vmem:[%s43 + $0x54] sm:$0xf]
      %v5664 = vld [vmem:[%s43 + $0x58] sm:$0xf]
      %v5665 = vld [vmem:[%s43 + $0x5c] sm:$0xf]
      %v5666 = vld [vmem:[%s43 + $0x60] sm:$0xf]
      %v5667 = vld [vmem:[%s43 + $0x64] sm:$0xf]
      %v5668 = vld [vmem:[%s43 + $0x68] sm:$0xf]
      %v5669 = vld [vmem:[%s43 + $0x6c] sm:$0xf]
      %v5670 = vld [vmem:[%s43 + $0x70] sm:$0xf]
      %v5671 = vld [vmem:[%s43 + $0x74] sm:$0xf]
      %v5672 = vld [vmem:[%s43 + $0x78] sm:$0xf]
      %v5673 = vld [vmem:[%s43 + $0x7c] sm:$0xf]
      %v5674 = vld [vmem:[%s43 + $0x80] sm:$0xf]
      %v5675 = vld [vmem:[%s43 + $0x84] sm:$0xf]
      %v5676 = vld [vmem:[%s43 + $0x88] sm:$0xf]
      %v5677 = vld [vmem:[%s43 + $0x8c] sm:$0xf]
      %v5678 = vld [vmem:[%s43 + $0x90] sm:$0xf]
      %v5679 = vld [vmem:[%s43 + $0x94] sm:$0xf]
      %v5680 = vld [vmem:[%s43 + $0x98] sm:$0xf]
      %v5681 = vld [vmem:[%s43 + $0x9c] sm:$0xf]
      %v5682 = vld [vmem:[%s43 + $0xa0] sm:$0xf]
      %v5683 = vld [vmem:[%s43 + $0xa4] sm:$0xf]
      %v5684 = vld [vmem:[%s43 + $0xa8] sm:$0xf]
      %v5685 = vld [vmem:[%s43 + $0xac] sm:$0xf]
      %v5686 = vld [vmem:[%s43 + $0xb0] sm:$0xf]
      %v5687 = vld [vmem:[%s43 + $0xb4] sm:$0xf]
      %v5688 = vld [vmem:[%s43 + $0xb8] sm:$0xf]
      %v5689 = vld [vmem:[%s43 + $0xbc] sm:$0xf]
      %v5690 = vld [vmem:[%s43 + $0xc0] sm:$0xf]
      %v5691 = vld [vmem:[%s43 + $0xc4] sm:$0xf]
      %v5692 = vld [vmem:[%s43 + $0xc8] sm:$0xf]
      %v5693 = vld [vmem:[%s43 + $0xcc] sm:$0xf]
      %v5694 = vld [vmem:[%s43 + $0xd0] sm:$0xf]
      %v5695 = vld [vmem:[%s43 + $0xd4] sm:$0xf]
      %v5696 = vld [vmem:[%s43 + $0xd8] sm:$0xf]
      %v5697 = vld [vmem:[%s43 + $0xdc] sm:$0xf]
      %v5698 = vld [vmem:[%s43 + $0xe0] sm:$0xf]
      %v5699 = vld [vmem:[%s43 + $0xe4] sm:$0xf]
      %v5700 = vld [vmem:[%s43 + $0xe8] sm:$0xf]
      %v5701 = vld [vmem:[%s43 + $0xec] sm:$0xf]
      %v5702 = vld [vmem:[%s43 + $0xf0] sm:$0xf]
      %v5703 = vld [vmem:[%s43 + $0xf4] sm:$0xf]
      %v5704 = vld [vmem:[%s43 + $0xf8] sm:$0xf]
      %v5705 = vld [vmem:[%s43 + $0xfc] sm:$0xf]
      %v5706 = vld [vmem:[%s43 + $0x100] sm:$0xf]
      %v5707 = vld [vmem:[%s43 + $0x104] sm:$0xf]
      %v5708 = vld [vmem:[%s43 + $0x108] sm:$0xf]
      %v5709 = vld [vmem:[%s43 + $0x10c] sm:$0xf]
      %v5710 = vld [vmem:[%s43 + $0x110] sm:$0xf]
      %v5711 = vld [vmem:[%s43 + $0x114] sm:$0xf]
      %v5712 = vld [vmem:[%s43 + $0x118] sm:$0xf]
      %v5713 = vld [vmem:[%s43 + $0x11c] sm:$0xf]
      %v5714 = vld [vmem:[%s45] sm:$0x1]
      %v5716 = vlaneseq
      %v5717 = vshrl.u32 %v5716, 7
      %v5718 = vsub.s32 0, %v5717
      %v5719 = vrot.slane %v5714, %v5718
      %v5793 = vunpack.c.l.b16 %v5642
      %v5794 = vunpack.c.l.b16 %v5643
      %v5795 = vunpack.c.l.b16 %v5644
      %v5796 = vunpack.c.l.b16 %v5645
      %v5797 = vunpack.c.l.b16 %v5646
      %v5798 = vunpack.c.l.b16 %v5647
      %v5799 = vunpack.c.l.b16 %v5648
      %v5800 = vunpack.c.l.b16 %v5649
      %v5801 = vunpack.c.l.b16 %v5650
      %v5802 = vunpack.c.l.b16 %v5651
      %v5803 = vunpack.c.l.b16 %v5652
      %v5804 = vunpack.c.l.b16 %v5653
      %v5805 = vunpack.c.l.b16 %v5654
      %v5806 = vunpack.c.l.b16 %v5655
      %v5807 = vunpack.c.l.b16 %v5656
      %v5808 = vunpack.c.l.b16 %v5657
      %v5809 = vunpack.c.l.b16 %v5658
      %v5810 = vunpack.c.l.b16 %v5659
      %v5811 = vunpack.c.l.b16 %v5660
      %v5812 = vunpack.c.l.b16 %v5661
      %v5813 = vunpack.c.l.b16 %v5662
      %v5814 = vunpack.c.l.b16 %v5663
      %v5815 = vunpack.c.l.b16 %v5664
      %v5816 = vunpack.c.l.b16 %v5665
      %v5817 = vunpack.c.l.b16 %v5666
      %v5818 = vunpack.c.l.b16 %v5667
      %v5819 = vunpack.c.l.b16 %v5668
      %v5820 = vunpack.c.l.b16 %v5669
      %v5821 = vunpack.c.l.b16 %v5670
      %v5822 = vunpack.c.l.b16 %v5671
      %v5823 = vunpack.c.l.b16 %v5672
      %v5824 = vunpack.c.l.b16 %v5673
      %v5825 = vunpack.c.l.b16 %v5674
      %v5826 = vunpack.c.l.b16 %v5675
      %v5827 = vunpack.c.l.b16 %v5676
      %v5828 = vunpack.c.l.b16 %v5677
      %v5829 = vunpack.c.l.b16 %v5678
      %v5830 = vunpack.c.l.b16 %v5679
      %v5831 = vunpack.c.l.b16 %v5680
      %v5832 = vunpack.c.l.b16 %v5681
      %v5833 = vunpack.c.l.b16 %v5682
      %v5834 = vunpack.c.l.b16 %v5683
      %v5835 = vunpack.c.l.b16 %v5684
      %v5836 = vunpack.c.l.b16 %v5685
      %v5837 = vunpack.c.l.b16 %v5686
      %v5838 = vunpack.c.l.b16 %v5687
      %v5839 = vunpack.c.l.b16 %v5688
      %v5840 = vunpack.c.l.b16 %v5689
      %v5841 = vunpack.c.l.b16 %v5690
      %v5842 = vunpack.c.l.b16 %v5691
      %v5843 = vunpack.c.l.b16 %v5692
      %v5844 = vunpack.c.l.b16 %v5693
      %v5845 = vunpack.c.l.b16 %v5694
      %v5846 = vunpack.c.l.b16 %v5695
      %v5847 = vunpack.c.l.b16 %v5696
      %v5848 = vunpack.c.l.b16 %v5697
      %v5849 = vunpack.c.l.b16 %v5698
      %v5850 = vunpack.c.l.b16 %v5699
      %v5851 = vunpack.c.l.b16 %v5700
      %v5852 = vunpack.c.l.b16 %v5701
      %v5853 = vunpack.c.l.b16 %v5702
      %v5854 = vunpack.c.l.b16 %v5703
      %v5855 = vunpack.c.l.b16 %v5704
      %v5856 = vunpack.c.l.b16 %v5705
      %v5857 = vunpack.c.l.b16 %v5706
      %v5858 = vunpack.c.l.b16 %v5707
      %v5859 = vunpack.c.l.b16 %v5708
      %v5860 = vunpack.c.l.b16 %v5709
      %v5861 = vunpack.c.l.b16 %v5710
      %v5862 = vunpack.c.l.b16 %v5711
      %v5863 = vunpack.c.l.b16 %v5712
      %v5864 = vunpack.c.l.b16 %v5713
      %v5865 = vpack.c.b16 %v5794, %v5793
      %v5866 = vpack.c.b16 %v5796, %v5795
      %v5867 = vpack.c.b16 %v5798, %v5797
      %v5868 = vpack.c.b16 %v5800, %v5799
      %v5869 = vpack.c.b16 %v5802, %v5801
      %v5870 = vpack.c.b16 %v5804, %v5803
      %v5871 = vpack.c.b16 %v5806, %v5805
      %v5872 = vpack.c.b16 %v5808, %v5807
      %v5873 = vpack.c.b16 %v5810, %v5809
      %v5874 = vpack.c.b16 %v5812, %v5811
      %v5875 = vpack.c.b16 %v5814, %v5813
      %v5876 = vpack.c.b16 %v5816, %v5815
      %v5877 = vpack.c.b16 %v5818, %v5817
      %v5878 = vpack.c.b16 %v5820, %v5819
      %v5879 = vpack.c.b16 %v5822, %v5821
      %v5880 = vpack.c.b16 %v5824, %v5823
      %v5881 = vpack.c.b16 %v5826, %v5825
      %v5882 = vpack.c.b16 %v5828, %v5827
      %v5883 = vpack.c.b16 %v5830, %v5829
      %v5884 = vpack.c.b16 %v5832, %v5831
      %v5885 = vpack.c.b16 %v5834, %v5833
      %v5886 = vpack.c.b16 %v5836, %v5835
      %v5887 = vpack.c.b16 %v5838, %v5837
      %v5888 = vpack.c.b16 %v5840, %v5839
      %v5889 = vpack.c.b16 %v5842, %v5841
      %v5890 = vpack.c.b16 %v5844, %v5843
      %v5891 = vpack.c.b16 %v5846, %v5845
      %v5892 = vpack.c.b16 %v5848, %v5847
      %v5893 = vpack.c.b16 %v5850, %v5849
      %v5894 = vpack.c.b16 %v5852, %v5851
      %v5895 = vpack.c.b16 %v5854, %v5853
      %v5896 = vpack.c.b16 %v5856, %v5855
      %v5897 = vpack.c.b16 %v5858, %v5857
      %v5898 = vpack.c.b16 %v5860, %v5859
      %v5899 = vpack.c.b16 %v5862, %v5861
      %v5900 = vpack.c.b16 %v5864, %v5863
      %v5938 = vsel %vm2151, %v5637, 0
      %5940 = vmatprep.subr.bf16.mxu0 0
      %5941 = vmatpush1.bf16.msra.mxu0 %v5865
      %5942 = vmatprep.subr.bf16.mxu0 0
      %5943 = vmatpush1.bf16.msra.mxu0 %v5866
      %5944 = vmatprep.subr.bf16.mxu0 0
      %5945 = vmatpush1.bf16.msra.mxu0 %v5867
      %5946 = vmatprep.subr.bf16.mxu0 0
      %5947 = vmatpush1.bf16.msra.mxu0 %v5868
      %5948 = vmatprep.subr.bf16.mxu0 0
      %5949 = vmatpush1.bf16.msra.mxu0 %v5869
      %5950 = vmatprep.subr.bf16.mxu0 0
      %5951 = vmatpush1.bf16.msra.mxu0 %v5870
      %5952 = vmatprep.subr.bf16.mxu0 0
      %5953 = vmatpush1.bf16.msra.mxu0 %v5871
      %5954 = vmatprep.subr.bf16.mxu0 0
      %5955 = vmatpush1.bf16.msra.mxu0 %v5872
      %5956 = vmatprep.subr.bf16.mxu0 0
      %5957 = vmatpush1.bf16.msra.mxu0 %v5873
      %5958 = vmatprep.subr.bf16.mxu0 0
      %5959 = vmatpush1.bf16.msra.mxu0 %v5874
      %5960 = vmatprep.subr.bf16.mxu0 0
      %5961 = vmatpush1.bf16.msra.mxu0 %v5875
      %5962 = vmatprep.subr.bf16.mxu0 0
      %5963 = vmatpush1.bf16.msra.mxu0 %v5876
      %5964 = vmatprep.subr.bf16.mxu0 0
      %5965 = vmatpush1.bf16.msra.mxu0 %v5877
      %5966 = vmatprep.subr.bf16.mxu0 0
      %5967 = vmatpush1.bf16.msra.mxu0 %v5878
      %5968 = vmatprep.subr.bf16.mxu0 0
      %5969 = vmatpush1.bf16.msra.mxu0 %v5879
      %5970 = vmatprep.subr.bf16.mxu0 0
      %5971 = vmatpush1.bf16.msra.mxu0 %v5880
      %5972 = vmatprep.mubr.bf16.mxu0 %v5640
      %5973 = vmatmul.mubr.bf16.gmra.mrb[0].mxu0 %v5610
      %v5974 = vpop.f32.mrb[0].mxu0
      %v5975 = vadd.f32 %v5719, %v5974
      %v5976 = vpop.f32.mrb[0].mxu0
      %v5977 = vpop.f32.mrb[0].mxu0
      %v5978 = vpop.f32.mrb[0].mxu0
      %5979 = vdwg.mxu0
      %5980 = vmatprep.subr.bf16.mxu0 0
      %5981 = vmatpush1.bf16.msra.mxu0 %v5881
      %5982 = vmatprep.subr.bf16.mxu0 0
      %5983 = vmatpush1.bf16.msra.mxu0 %v5882
      %5984 = vmatprep.subr.bf16.mxu0 0
      %5985 = vmatpush1.bf16.msra.mxu0 %v5883
      %5986 = vmatprep.subr.bf16.mxu0 0
      %5987 = vmatpush1.bf16.msra.mxu0 %v5884
      %5988 = vmatprep.subr.bf16.mxu0 0
      %5989 = vmatpush1.bf16.msra.mxu0 %v5885
      %5990 = vmatprep.subr.bf16.mxu0 0
      %5991 = vmatpush1.bf16.msra.mxu0 %v5886
      %5992 = vmatprep.subr.bf16.mxu0 0
      %5993 = vmatpush1.bf16.msra.mxu0 %v5887
      %5994 = vmatprep.subr.bf16.mxu0 0
      %5995 = vmatpush1.bf16.msra.mxu0 %v5888
      %5996 = vmatprep.subr.bf16.mxu0 0
      %5997 = vmatpush1.bf16.msra.mxu0 %v5889
      %5998 = vmatprep.subr.bf16.mxu0 0
      %5999 = vmatpush1.bf16.msra.mxu0 %v5890
      %6000 = vmatprep.subr.bf16.mxu0 0
      %6001 = vmatpush1.bf16.msra.mxu0 %v5891
      %6002 = vmatprep.subr.bf16.mxu0 0
      %6003 = vmatpush1.bf16.msra.mxu0 %v5892
      %6004 = vmatprep.subr.bf16.mxu0 0
      %6005 = vmatpush1.bf16.msra.mxu0 %v5893
      %6006 = vmatprep.subr.bf16.mxu0 0
      %6007 = vmatpush1.bf16.msra.mxu0 %v5894
      %6008 = vmatprep.subr.bf16.mxu0 0
      %6009 = vmatpush1.bf16.msra.mxu0 %v5895
      %6010 = vmatprep.subr.bf16.mxu0 0
      %6011 = vmatpush1.bf16.msra.mxu0 %v5896
      %6012 = vmatprep.mubr.bf16.mxu0 %v5636
      %6013 = vmatmul.mubr.bf16.gmra.mrb[0].mxu0 %v5632
      %v6014 = vpop.f32.mrb[0].mxu0
      %v6015 = vadd.f32 %v5975, %v6014
      %v6016 = vpop.f32.mrb[0].mxu0
      %v6017 = vpop.f32.mrb[0].mxu0
      %v6018 = vpop.f32.mrb[0].mxu0
      %6019 = vdwg.mxu0
      %6020 = vmatprep.subr.bf16.mxu0 0
      %6021 = vmatpush1.bf16.msra.mxu0 %v5897
      %6022 = vmatprep.subr.bf16.mxu0 0
      %6023 = vmatpush1.bf16.msra.mxu0 %v5898
      %6024 = vmatprep.subr.bf16.mxu0 0
      %6025 = vmatpush1.bf16.msra.mxu0 %v5899
      %6026 = vmatprep.subr.bf16.mxu0 0
      %6027 = vmatpush1.bf16.msra.mxu0 %v5900
      %6028 = vmatprep.subr.bf16.mxu0 0
      %6029 = vmatpush1.bf16.msra.mxu0 0
      %6030 = vmatprep.subr.bf16.mxu0 0
      %6031 = vmatpush1.bf16.msra.mxu0 0
      %6032 = vmatprep.subr.bf16.mxu0 0
      %6033 = vmatpush1.bf16.msra.mxu0 0
      %6034 = vmatprep.subr.bf16.mxu0 0
      %6035 = vmatpush1.bf16.msra.mxu0 0
      %6036 = vmatprep.subr.bf16.mxu0 0
      %6037 = vmatpush1.bf16.msra.mxu0 0
      %6038 = vmatprep.subr.bf16.mxu0 0
      %6039 = vmatpush1.bf16.msra.mxu0 0
      %6040 = vmatprep.subr.bf16.mxu0 0
      %6041 = vmatpush1.bf16.msra.mxu0 0
      %6042 = vmatprep.subr.bf16.mxu0 0
      %6043 = vmatpush1.bf16.msra.mxu0 0
      %6044 = vmatprep.subr.bf16.mxu0 0
      %6045 = vmatpush1.bf16.msra.mxu0 0
      %6046 = vmatprep.subr.bf16.mxu0 0
      %6047 = vmatpush1.bf16.msra.mxu0 0
      %6048 = vmatprep.subr.bf16.mxu0 0
      %6049 = vmatpush1.bf16.msra.mxu0 0
      %6050 = vmatprep.subr.bf16.mxu0 0
      %6051 = vmatpush1.bf16.msra.mxu0 0
      %6052 = vmatprep.mubr.bf16.mxu0 0
      %6053 = vmatmul.mubr.bf16.gmra.mrb[0].mxu0 %v5938
      %v6054 = vpop.f32.mrb[0].mxu0
      %v6055 = vadd.f32 %v6015, %v6054
      %v6056 = vpop.f32.mrb[0].mxu0
      %v6057 = vpop.f32.mrb[0].mxu0
      %v6058 = vpop.f32.mrb[0].mxu0
      %6059 = vdwg.mxu0
      %vm6060 = vcmp.gt.f32.partialorder %v6055, 0.0
      %v6061 = vmin.f32 %v6055, 0.0
      %v6062 = vmul.f32 %v6061, 1.442695
      %v6063 = vpow.pop %v6062
      %v6064 = vsub.f32 %v6063, 1.0
      %v6065 = vsel %vm6060, %v6055, %v6064
      %v6066 = vpack.c.bf16 %v6065, %v6065
      %v6068 = vshrl.u32 %v6066, 16
      %6070 = vrot.lane.b32.xlu0 %v6068, 96
      %v6071 = vpop.permute.xlu0 %6070
      %v6073 = vrot.slane %v6066, 1
      %6074 = vrot.lane.b32.xlu0 %v6073, 64
      %v6075 = vpop.permute.xlu0 %6074
      %v6077 = vsel %vm2147, %v6066, %v6071
      %v6080 = vsel %vm2151, %v6071, %v6075
      %v6082 = vld [vmem:[%s994] sm:$0x3]
      %v6084 = vlaneseq
      %v6085 = vshrl.u32 %v6084, 7
      %v6086 = vsub.s32 0, %v6085
      %v6087 = vrot.slane %v6082, %v6086
      %v6088 = vlaneseq
      %v6089 = vshrl.u32 %v6088, 7
      %v6090 = vsub.s32 1, %v6089
      %v6091 = vrot.slane %v6082, %v6090
      %v6094 = vpack.c.bf16 %v6087, %v6087
      %v6095 = vpack.c.bf16 %v6091, %v6091
      %6098 = vrot.lane.b32.xlu0 %v6094, 32
      %v6099 = vpop.permute.xlu0 %6098
      %6100 = vrot.lane.b32.xlu0 %v6095, 32
      %v6101 = vpop.permute.xlu0 %6100
      %v6102 = vsel %vm3095, %v6099, %v6101
      %v6105 = vsel %vm2155, %v6075, %v6099
      %v6107 = vld [vmem:[%s47] sm:$0xff]
      %v6108 = vld [vmem:[%s47 + $0x8] sm:$0xff]
      %v6109 = vld [vmem:[%s47 + $0x10] sm:$0xff]
      %v6110 = vld [vmem:[%s47 + $0x18] sm:$0xff]
      %v6111 = vld [vmem:[%s47 + $0x20] sm:$0xff]
      %v6112 = vld [vmem:[%s47 + $0x28] sm:$0xff]
      %v6113 = vld [vmem:[%s47 + $0x30] sm:$0xff]
      %v6114 = vld [vmem:[%s47 + $0x38] sm:$0xff]
      %v6115 = vld [vmem:[%s47 + $0x40] sm:$0xff]
      %v6116 = vld [vmem:[%s47 + $0x48] sm:$0xff]
      %v6117 = vld [vmem:[%s47 + $0x50] sm:$0xff]
      %v6118 = vld [vmem:[%s47 + $0x58] sm:$0xff]
      %v6119 = vld [vmem:[%s47 + $0x60] sm:$0xff]
      %v6120 = vld [vmem:[%s47 + $0x68] sm:$0xff]
      %v6121 = vld [vmem:[%s47 + $0x70] sm:$0xff]
      %v6122 = vld [vmem:[%s47 + $0x78] sm:$0xff]
      %v6123 = vld [vmem:[%s47 + $0x80] sm:$0xff]
      %v6124 = vld [vmem:[%s47 + $0x88] sm:$0xff]
      %v6125 = vld [vmem:[%s47 + $0x90] sm:$0xff]
      %v6126 = vld [vmem:[%s47 + $0x98] sm:$0xff]
      %v6127 = vld [vmem:[%s47 + $0xa0] sm:$0xff]
      %v6128 = vld [vmem:[%s47 + $0xa8] sm:$0xff]
      %v6129 = vld [vmem:[%s47 + $0xb0] sm:$0xff]
      %v6130 = vld [vmem:[%s47 + $0xb8] sm:$0xff]
      %v6131 = vld [vmem:[%s47 + $0xc0] sm:$0xff]
      %v6132 = vld [vmem:[%s47 + $0xc8] sm:$0xff]
      %v6133 = vld [vmem:[%s47 + $0xd0] sm:$0xff]
      %v6134 = vld [vmem:[%s47 + $0xd8] sm:$0xff]
      %v6135 = vld [vmem:[%s47 + $0xe0] sm:$0xff]
      %v6136 = vld [vmem:[%s47 + $0xe8] sm:$0xff]
      %v6137 = vld [vmem:[%s47 + $0xf0] sm:$0xff]
      %v6138 = vld [vmem:[%s47 + $0xf8] sm:$0xff]
      %v6139 = vld [vmem:[%s47 + $0x100] sm:$0xff]
      %v6140 = vld [vmem:[%s47 + $0x108] sm:$0xff]
      %v6141 = vld [vmem:[%s47 + $0x110] sm:$0xff]
      %v6142 = vld [vmem:[%s47 + $0x118] sm:$0xff]
      %v6143 = vld [vmem:[%s47 + $0x120] sm:$0xff]
      %v6144 = vld [vmem:[%s47 + $0x128] sm:$0xff]
      %v6145 = vld [vmem:[%s47 + $0x130] sm:$0xff]
      %v6146 = vld [vmem:[%s47 + $0x138] sm:$0xff]
      %v6147 = vld [vmem:[%s47 + $0x140] sm:$0xff]
      %v6148 = vld [vmem:[%s47 + $0x148] sm:$0xff]
      %v6149 = vld [vmem:[%s47 + $0x150] sm:$0xff]
      %v6150 = vld [vmem:[%s47 + $0x158] sm:$0xff]
      %v6151 = vld [vmem:[%s47 + $0x160] sm:$0xff]
      %v6152 = vld [vmem:[%s47 + $0x168] sm:$0xff]
      %v6153 = vld [vmem:[%s47 + $0x170] sm:$0xff]
      %v6154 = vld [vmem:[%s47 + $0x178] sm:$0xff]
      %v6155 = vld [vmem:[%s47 + $0x180] sm:$0xff]
      %v6156 = vld [vmem:[%s47 + $0x188] sm:$0xff]
      %v6157 = vld [vmem:[%s47 + $0x190] sm:$0xff]
      %v6158 = vld [vmem:[%s47 + $0x198] sm:$0xff]
      %v6159 = vld [vmem:[%s47 + $0x1a0] sm:$0xff]
      %v6160 = vld [vmem:[%s47 + $0x1a8] sm:$0xff]
      %v6161 = vld [vmem:[%s47 + $0x1b0] sm:$0xff]
      %v6162 = vld [vmem:[%s47 + $0x1b8] sm:$0xff]
      %v6163 = vld [vmem:[%s47 + $0x1c0] sm:$0xff]
      %v6164 = vld [vmem:[%s47 + $0x1c8] sm:$0xff]
      %v6165 = vld [vmem:[%s47 + $0x1d0] sm:$0xff]
      %v6166 = vld [vmem:[%s47 + $0x1d8] sm:$0xff]
      %v6167 = vld [vmem:[%s47 + $0x1e0] sm:$0xff]
      %v6168 = vld [vmem:[%s47 + $0x1e8] sm:$0xff]
      %v6169 = vld [vmem:[%s47 + $0x1f0] sm:$0xff]
      %v6170 = vld [vmem:[%s47 + $0x1f8] sm:$0xff]
      %v6171 = vld [vmem:[%s47 + $0x200] sm:$0xff]
      %v6172 = vld [vmem:[%s47 + $0x208] sm:$0xff]
      %v6173 = vld [vmem:[%s47 + $0x210] sm:$0xff]
      %v6174 = vld [vmem:[%s47 + $0x218] sm:$0xff]
      %v6175 = vld [vmem:[%s47 + $0x220] sm:$0xff]
      %v6176 = vld [vmem:[%s47 + $0x228] sm:$0xff]
      %v6177 = vld [vmem:[%s47 + $0x230] sm:$0xff]
      %v6178 = vld [vmem:[%s47 + $0x238] sm:$0xff]
      %v6179 = vld [vmem:[%s47 + $0x240] sm:$0xff]
      %v6180 = vld [vmem:[%s47 + $0x248] sm:$0xff]
      %v6181 = vld [vmem:[%s47 + $0x250] sm:$0xff]
      %v6182 = vld [vmem:[%s47 + $0x258] sm:$0xff]
      %v6183 = vld [vmem:[%s47 + $0x260] sm:$0xff]
      %v6184 = vld [vmem:[%s47 + $0x268] sm:$0xff]
      %v6185 = vld [vmem:[%s47 + $0x270] sm:$0xff]
      %v6186 = vld [vmem:[%s47 + $0x278] sm:$0xff]
      %v6187 = vld [vmem:[%s47 + $0x280] sm:$0xff]
      %v6188 = vld [vmem:[%s47 + $0x288] sm:$0xff]
      %v6189 = vld [vmem:[%s47 + $0x290] sm:$0xff]
      %v6190 = vld [vmem:[%s47 + $0x298] sm:$0xff]
      %v6191 = vld [vmem:[%s47 + $0x2a0] sm:$0xff]
      %v6192 = vld [vmem:[%s47 + $0x2a8] sm:$0xff]
      %v6193 = vld [vmem:[%s47 + $0x2b0] sm:$0xff]
      %v6194 = vld [vmem:[%s47 + $0x2b8] sm:$0xff]
      %v6195 = vld [vmem:[%s47 + $0x2c0] sm:$0xff]
      %v6196 = vld [vmem:[%s47 + $0x2c8] sm:$0xff]
      %v6197 = vld [vmem:[%s47 + $0x2d0] sm:$0xff]
      %v6198 = vld [vmem:[%s47 + $0x2d8] sm:$0xff]
      %v6199 = vld [vmem:[%s47 + $0x2e0] sm:$0xff]
      %v6200 = vld [vmem:[%s47 + $0x2e8] sm:$0xff]
      %v6201 = vld [vmem:[%s47 + $0x2f0] sm:$0xff]
      %v6202 = vld [vmem:[%s47 + $0x2f8] sm:$0xff]
      %v6203 = vld [vmem:[%s47 + $0x300] sm:$0xff]
      %v6204 = vld [vmem:[%s47 + $0x308] sm:$0xff]
      %v6205 = vld [vmem:[%s47 + $0x310] sm:$0xff]
      %v6206 = vld [vmem:[%s47 + $0x318] sm:$0xff]
      %v6207 = vld [vmem:[%s47 + $0x320] sm:$0xff]
      %v6208 = vld [vmem:[%s47 + $0x328] sm:$0xff]
      %v6209 = vld [vmem:[%s47 + $0x330] sm:$0xff]
      %v6210 = vld [vmem:[%s47 + $0x338] sm:$0xff]
      %v6211 = vld [vmem:[%s47 + $0x340] sm:$0xff]
      %v6212 = vld [vmem:[%s47 + $0x348] sm:$0xff]
      %v6213 = vld [vmem:[%s47 + $0x350] sm:$0xff]
      %v6214 = vld [vmem:[%s47 + $0x358] sm:$0xff]
      %v6215 = vld [vmem:[%s47 + $0x360] sm:$0xff]
      %v6216 = vld [vmem:[%s47 + $0x368] sm:$0xff]
      %v6217 = vld [vmem:[%s47 + $0x370] sm:$0xff]
      %v6218 = vld [vmem:[%s47 + $0x378] sm:$0xff]
      %v6219 = vld [vmem:[%s47 + $0x380] sm:$0xff]
      %v6220 = vld [vmem:[%s47 + $0x388] sm:$0xff]
      %v6221 = vld [vmem:[%s47 + $0x390] sm:$0xff]
      %v6222 = vld [vmem:[%s47 + $0x398] sm:$0xff]
      %v6223 = vld [vmem:[%s47 + $0x3a0] sm:$0xff]
      %v6224 = vld [vmem:[%s47 + $0x3a8] sm:$0xff]
      %v6225 = vld [vmem:[%s47 + $0x3b0] sm:$0xff]
      %v6226 = vld [vmem:[%s47 + $0x3b8] sm:$0xff]
      %v6227 = vld [vmem:[%s47 + $0x3c0] sm:$0xff]
      %v6228 = vld [vmem:[%s47 + $0x3c8] sm:$0xff]
      %v6229 = vld [vmem:[%s47 + $0x3d0] sm:$0xff]
      %v6230 = vld [vmem:[%s47 + $0x3d8] sm:$0xff]
      %v6231 = vld [vmem:[%s47 + $0x3e0] sm:$0xff]
      %v6232 = vld [vmem:[%s47 + $0x3e8] sm:$0xff]
      %v6233 = vld [vmem:[%s47 + $0x3f0] sm:$0xff]
      %v6234 = vld [vmem:[%s47 + $0x3f8] sm:$0xff]
      %v6235 = vld [vmem:[%s47 + $0x400] sm:$0xff]
      %v6236 = vld [vmem:[%s47 + $0x408] sm:$0xff]
      %v6237 = vld [vmem:[%s47 + $0x410] sm:$0xff]
      %v6238 = vld [vmem:[%s47 + $0x418] sm:$0xff]
      %v6239 = vld [vmem:[%s47 + $0x420] sm:$0xff]
      %v6240 = vld [vmem:[%s47 + $0x428] sm:$0xff]
      %v6241 = vld [vmem:[%s47 + $0x430] sm:$0xff]
      %v6242 = vld [vmem:[%s47 + $0x438] sm:$0xff]
      %v6243 = vld [vmem:[%s47 + $0x440] sm:$0xff]
      %v6244 = vld [vmem:[%s47 + $0x448] sm:$0xff]
      %v6245 = vld [vmem:[%s47 + $0x450] sm:$0xff]
      %v6246 = vld [vmem:[%s47 + $0x458] sm:$0xff]
      %v6247 = vld [vmem:[%s47 + $0x460] sm:$0xff]
      %v6248 = vld [vmem:[%s47 + $0x468] sm:$0xff]
      %v6249 = vld [vmem:[%s47 + $0x470] sm:$0xff]
      %v6250 = vld [vmem:[%s47 + $0x478] sm:$0xff]
      %v6251 = vld [vmem:[%s47 + $0x480] sm:$0xff]
      %v6252 = vld [vmem:[%s47 + $0x488] sm:$0xff]
      %v6253 = vld [vmem:[%s47 + $0x490] sm:$0xff]
      %v6254 = vld [vmem:[%s47 + $0x498] sm:$0xff]
      %v6255 = vld [vmem:[%s47 + $0x4a0] sm:$0xff]
      %v6256 = vld [vmem:[%s47 + $0x4a8] sm:$0xff]
      %v6257 = vld [vmem:[%s47 + $0x4b0] sm:$0xff]
      %v6258 = vld [vmem:[%s47 + $0x4b8] sm:$0xff]
      %v6259 = vld [vmem:[%s47 + $0x4c0] sm:$0xff]
      %v6260 = vld [vmem:[%s47 + $0x4c8] sm:$0xff]
      %v6261 = vld [vmem:[%s47 + $0x4d0] sm:$0xff]
      %v6262 = vld [vmem:[%s47 + $0x4d8] sm:$0xff]
      %v6263 = vld [vmem:[%s47 + $0x4e0] sm:$0xff]
      %v6264 = vld [vmem:[%s47 + $0x4e8] sm:$0xff]
      %v6265 = vld [vmem:[%s47 + $0x4f0] sm:$0xff]
      %v6266 = vld [vmem:[%s47 + $0x4f8] sm:$0xff]
      %v6267 = vld [vmem:[%s47 + $0x500] sm:$0xff]
      %v6268 = vld [vmem:[%s47 + $0x508] sm:$0xff]
      %v6269 = vld [vmem:[%s47 + $0x510] sm:$0xff]
      %v6270 = vld [vmem:[%s47 + $0x518] sm:$0xff]
      %v6271 = vld [vmem:[%s47 + $0x520] sm:$0xff]
      %v6272 = vld [vmem:[%s47 + $0x528] sm:$0xff]
      %v6273 = vld [vmem:[%s47 + $0x530] sm:$0xff]
      %v6274 = vld [vmem:[%s47 + $0x538] sm:$0xff]
      %v6275 = vld [vmem:[%s47 + $0x540] sm:$0xff]
      %v6276 = vld [vmem:[%s47 + $0x548] sm:$0xff]
      %v6277 = vld [vmem:[%s47 + $0x550] sm:$0xff]
      %v6278 = vld [vmem:[%s47 + $0x558] sm:$0xff]
      %v6279 = vld [vmem:[%s47 + $0x560] sm:$0xff]
      %v6280 = vld [vmem:[%s47 + $0x568] sm:$0xff]
      %v6281 = vld [vmem:[%s47 + $0x570] sm:$0xff]
      %v6282 = vld [vmem:[%s47 + $0x578] sm:$0xff]
      %v6283 = vld [vmem:[%s47 + $0x580] sm:$0xff]
      %v6284 = vld [vmem:[%s47 + $0x588] sm:$0xff]
      %v6285 = vld [vmem:[%s47 + $0x590] sm:$0xff]
      %v6286 = vld [vmem:[%s47 + $0x598] sm:$0xff]
      %v6287 = vld [vmem:[%s47 + $0x5a0] sm:$0xff]
      %v6288 = vld [vmem:[%s47 + $0x5a8] sm:$0xff]
      %v6289 = vld [vmem:[%s47 + $0x5b0] sm:$0xff]
      %v6290 = vld [vmem:[%s47 + $0x5b8] sm:$0xff]
      %v6291 = vld [vmem:[%s47 + $0x5c0] sm:$0xff]
      %v6292 = vld [vmem:[%s47 + $0x5c8] sm:$0xff]
      %v6293 = vld [vmem:[%s47 + $0x5d0] sm:$0xff]
      %v6294 = vld [vmem:[%s47 + $0x5d8] sm:$0xff]
      %v6295 = vld [vmem:[%s47 + $0x5e0] sm:$0xff]
      %v6296 = vld [vmem:[%s47 + $0x5e8] sm:$0xff]
      %v6297 = vld [vmem:[%s47 + $0x5f0] sm:$0xff]
      %v6298 = vld [vmem:[%s47 + $0x5f8] sm:$0xff]
      %v6299 = vld [vmem:[%s47 + $0x600] sm:$0xff]
      %v6300 = vld [vmem:[%s47 + $0x608] sm:$0xff]
      %v6301 = vld [vmem:[%s47 + $0x610] sm:$0xff]
      %v6302 = vld [vmem:[%s47 + $0x618] sm:$0xff]
      %v6303 = vld [vmem:[%s47 + $0x620] sm:$0xff]
      %v6304 = vld [vmem:[%s47 + $0x628] sm:$0xff]
      %v6305 = vld [vmem:[%s47 + $0x630] sm:$0xff]
      %v6306 = vld [vmem:[%s47 + $0x638] sm:$0xff]
      %v6307 = vld [vmem:[%s47 + $0x640] sm:$0xff]
      %v6308 = vld [vmem:[%s47 + $0x648] sm:$0xff]
      %v6309 = vld [vmem:[%s47 + $0x650] sm:$0xff]
      %v6310 = vld [vmem:[%s47 + $0x658] sm:$0xff]
      %v6311 = vld [vmem:[%s47 + $0x660] sm:$0xff]
      %v6312 = vld [vmem:[%s47 + $0x668] sm:$0xff]
      %v6313 = vld [vmem:[%s47 + $0x670] sm:$0xff]
      %v6314 = vld [vmem:[%s47 + $0x678] sm:$0xff]
      %v6315 = vld [vmem:[%s47 + $0x680] sm:$0xff]
      %v6316 = vld [vmem:[%s47 + $0x688] sm:$0xff]
      %v6317 = vld [vmem:[%s47 + $0x690] sm:$0xff]
      %v6318 = vld [vmem:[%s47 + $0x698] sm:$0xff]
      %v6319 = vld [vmem:[%s47 + $0x6a0] sm:$0xff]
      %v6320 = vld [vmem:[%s47 + $0x6a8] sm:$0xff]
      %v6321 = vld [vmem:[%s47 + $0x6b0] sm:$0xff]
      %v6322 = vld [vmem:[%s47 + $0x6b8] sm:$0xff]
      %v6323 = vld [vmem:[%s47 + $0x6c0] sm:$0xff]
      %v6324 = vld [vmem:[%s47 + $0x6c8] sm:$0xff]
      %v6325 = vld [vmem:[%s47 + $0x6d0] sm:$0xff]
      %v6326 = vld [vmem:[%s47 + $0x6d8] sm:$0xff]
      %v6327 = vld [vmem:[%s47 + $0x6e0] sm:$0xff]
      %v6328 = vld [vmem:[%s47 + $0x6e8] sm:$0xff]
      %v6329 = vld [vmem:[%s47 + $0x6f0] sm:$0xff]
      %v6330 = vld [vmem:[%s47 + $0x6f8] sm:$0xff]
      %v6331 = vld [vmem:[%s47 + $0x700] sm:$0xff]
      %v6332 = vld [vmem:[%s47 + $0x708] sm:$0xff]
      %v6333 = vld [vmem:[%s47 + $0x710] sm:$0xff]
      %v6334 = vld [vmem:[%s47 + $0x718] sm:$0xff]
      %v6335 = vld [vmem:[%s47 + $0x720] sm:$0xff]
      %v6336 = vld [vmem:[%s47 + $0x728] sm:$0xff]
      %v6337 = vld [vmem:[%s47 + $0x730] sm:$0xff]
      %v6338 = vld [vmem:[%s47 + $0x738] sm:$0xff]
      %v6339 = vld [vmem:[%s47 + $0x740] sm:$0xff]
      %v6340 = vld [vmem:[%s47 + $0x748] sm:$0xff]
      %v6341 = vld [vmem:[%s47 + $0x750] sm:$0xff]
      %v6342 = vld [vmem:[%s47 + $0x758] sm:$0xff]
      %v6343 = vld [vmem:[%s47 + $0x760] sm:$0xff]
      %v6344 = vld [vmem:[%s47 + $0x768] sm:$0xff]
      %v6345 = vld [vmem:[%s47 + $0x770] sm:$0xff]
      %v6346 = vld [vmem:[%s47 + $0x778] sm:$0xff]
      %v6347 = vld [vmem:[%s47 + $0x780] sm:$0xff]
      %v6348 = vld [vmem:[%s47 + $0x788] sm:$0xff]
      %v6349 = vld [vmem:[%s47 + $0x790] sm:$0xff]
      %v6350 = vld [vmem:[%s47 + $0x798] sm:$0xff]
      %v6351 = vld [vmem:[%s47 + $0x7a0] sm:$0xff]
      %v6352 = vld [vmem:[%s47 + $0x7a8] sm:$0xff]
      %v6353 = vld [vmem:[%s47 + $0x7b0] sm:$0xff]
      %v6354 = vld [vmem:[%s47 + $0x7b8] sm:$0xff]
      %v6355 = vld [vmem:[%s47 + $0x7c0] sm:$0xff]
      %v6356 = vld [vmem:[%s47 + $0x7c8] sm:$0xff]
      %v6357 = vld [vmem:[%s47 + $0x7d0] sm:$0xff]
      %v6358 = vld [vmem:[%s47 + $0x7d8] sm:$0xff]
      %v6359 = vld [vmem:[%s47 + $0x7e0] sm:$0xff]
      %v6360 = vld [vmem:[%s47 + $0x7e8] sm:$0xff]
      %v6361 = vld [vmem:[%s47 + $0x7f0] sm:$0xff]
      %v6362 = vld [vmem:[%s47 + $0x7f8] sm:$0xff]
      %v6363 = vld [vmem:[%s47 + $0x800] sm:$0xff]
      %v6364 = vld [vmem:[%s47 + $0x808] sm:$0xff]
      %v6365 = vld [vmem:[%s47 + $0x810] sm:$0xff]
      %v6366 = vld [vmem:[%s47 + $0x818] sm:$0xff]
      %v6367 = vld [vmem:[%s47 + $0x820] sm:$0xff]
      %v6368 = vld [vmem:[%s47 + $0x828] sm:$0xff]
      %v6369 = vld [vmem:[%s47 + $0x830] sm:$0xff]
      %v6370 = vld [vmem:[%s47 + $0x838] sm:$0xff]
      %v6371 = vld [vmem:[%s47 + $0x840] sm:$0xff]
      %v6372 = vld [vmem:[%s47 + $0x848] sm:$0xff]
      %v6373 = vld [vmem:[%s47 + $0x850] sm:$0xff]
      %v6374 = vld [vmem:[%s47 + $0x858] sm:$0xff]
      %v6375 = vld [vmem:[%s47 + $0x860] sm:$0xff]
      %v6376 = vld [vmem:[%s47 + $0x868] sm:$0xff]
      %v6377 = vld [vmem:[%s47 + $0x870] sm:$0xff]
      %v6378 = vld [vmem:[%s47 + $0x878] sm:$0xff]
      %v6379 = vld [vmem:[%s49] sm:$0xff]
      %v6652 = vunpack.c.l.b16 %v6107
      %v6653 = vunpack.c.h.b16 %v6107
      %v6654 = vunpack.c.l.b16 %v6108
      %v6655 = vunpack.c.h.b16 %v6108
      %v6656 = vunpack.c.l.b16 %v6109
      %v6657 = vunpack.c.h.b16 %v6109
      %v6658 = vunpack.c.l.b16 %v6110
      %v6659 = vunpack.c.h.b16 %v6110
      %v6660 = vunpack.c.l.b16 %v6111
      %v6661 = vunpack.c.h.b16 %v6111
      %v6662 = vunpack.c.l.b16 %v6112
      %v6663 = vunpack.c.h.b16 %v6112
      %v6664 = vunpack.c.l.b16 %v6113
      %v6665 = vunpack.c.h.b16 %v6113
      %v6666 = vunpack.c.l.b16 %v6114
      %v6667 = vunpack.c.h.b16 %v6114
      %v6668 = vunpack.c.l.b16 %v6115
      %v6669 = vunpack.c.h.b16 %v6115
      %v6670 = vunpack.c.l.b16 %v6116
      %v6671 = vunpack.c.h.b16 %v6116
      %v6672 = vunpack.c.l.b16 %v6117
      %v6673 = vunpack.c.h.b16 %v6117
      %v6674 = vunpack.c.l.b16 %v6118
      %v6675 = vunpack.c.h.b16 %v6118
      %v6676 = vunpack.c.l.b16 %v6119
      %v6677 = vunpack.c.h.b16 %v6119
      %v6678 = vunpack.c.l.b16 %v6120
      %v6679 = vunpack.c.h.b16 %v6120
      %v6680 = vunpack.c.l.b16 %v6121
      %v6681 = vunpack.c.h.b16 %v6121
      %v6682 = vunpack.c.l.b16 %v6122
      %v6683 = vunpack.c.h.b16 %v6122
      %v6684 = vunpack.c.l.b16 %v6123
      %v6685 = vunpack.c.h.b16 %v6123
      %v6686 = vunpack.c.l.b16 %v6124
      %v6687 = vunpack.c.h.b16 %v6124
      %v6688 = vunpack.c.l.b16 %v6125
      %v6689 = vunpack.c.h.b16 %v6125
      %v6690 = vunpack.c.l.b16 %v6126
      %v6691 = vunpack.c.h.b16 %v6126
      %v6692 = vunpack.c.l.b16 %v6127
      %v6693 = vunpack.c.h.b16 %v6127
      %v6694 = vunpack.c.l.b16 %v6128
      %v6695 = vunpack.c.h.b16 %v6128
      %v6696 = vunpack.c.l.b16 %v6129
      %v6697 = vunpack.c.h.b16 %v6129
      %v6698 = vunpack.c.l.b16 %v6130
      %v6699 = vunpack.c.h.b16 %v6130
      %v6700 = vunpack.c.l.b16 %v6131
      %v6701 = vunpack.c.h.b16 %v6131
      %v6702 = vunpack.c.l.b16 %v6132
      %v6703 = vunpack.c.h.b16 %v6132
      %v6704 = vunpack.c.l.b16 %v6133
      %v6705 = vunpack.c.h.b16 %v6133
      %v6706 = vunpack.c.l.b16 %v6134
      %v6707 = vunpack.c.h.b16 %v6134
      %v6708 = vunpack.c.l.b16 %v6135
      %v6709 = vunpack.c.h.b16 %v6135
      %v6710 = vunpack.c.l.b16 %v6136
      %v6711 = vunpack.c.h.b16 %v6136
      %v6712 = vunpack.c.l.b16 %v6137
      %v6713 = vunpack.c.h.b16 %v6137
      %v6714 = vunpack.c.l.b16 %v6138
      %v6715 = vunpack.c.h.b16 %v6138
      %v6716 = vunpack.c.l.b16 %v6139
      %v6717 = vunpack.c.h.b16 %v6139
      %v6718 = vunpack.c.l.b16 %v6140
      %v6719 = vunpack.c.h.b16 %v6140
      %v6720 = vunpack.c.l.b16 %v6141
      %v6721 = vunpack.c.h.b16 %v6141
      %v6722 = vunpack.c.l.b16 %v6142
      %v6723 = vunpack.c.h.b16 %v6142
      %v6724 = vunpack.c.l.b16 %v6143
      %v6725 = vunpack.c.h.b16 %v6143
      %v6726 = vunpack.c.l.b16 %v6144
      %v6727 = vunpack.c.h.b16 %v6144
      %v6728 = vunpack.c.l.b16 %v6145
      %v6729 = vunpack.c.h.b16 %v6145
      %v6730 = vunpack.c.l.b16 %v6146
      %v6731 = vunpack.c.h.b16 %v6146
      %v6732 = vunpack.c.l.b16 %v6147
      %v6733 = vunpack.c.h.b16 %v6147
      %v6734 = vunpack.c.l.b16 %v6148
      %v6735 = vunpack.c.h.b16 %v6148
      %v6736 = vunpack.c.l.b16 %v6149
      %v6737 = vunpack.c.h.b16 %v6149
      %v6738 = vunpack.c.l.b16 %v6150
      %v6739 = vunpack.c.h.b16 %v6150
      %v6740 = vunpack.c.l.b16 %v6151
      %v6741 = vunpack.c.h.b16 %v6151
      %v6742 = vunpack.c.l.b16 %v6152
      %v6743 = vunpack.c.h.b16 %v6152
      %v6744 = vunpack.c.l.b16 %v6153
      %v6745 = vunpack.c.h.b16 %v6153
      %v6746 = vunpack.c.l.b16 %v6154
      %v6747 = vunpack.c.h.b16 %v6154
      %v6748 = vunpack.c.l.b16 %v6155
      %v6749 = vunpack.c.h.b16 %v6155
      %v6750 = vunpack.c.l.b16 %v6156
      %v6751 = vunpack.c.h.b16 %v6156
      %v6752 = vunpack.c.l.b16 %v6157
      %v6753 = vunpack.c.h.b16 %v6157
      %v6754 = vunpack.c.l.b16 %v6158
      %v6755 = vunpack.c.h.b16 %v6158
      %v6756 = vunpack.c.l.b16 %v6159
      %v6757 = vunpack.c.h.b16 %v6159
      %v6758 = vunpack.c.l.b16 %v6160
      %v6759 = vunpack.c.h.b16 %v6160
      %v6760 = vunpack.c.l.b16 %v6161
      %v6761 = vunpack.c.h.b16 %v6161
      %v6762 = vunpack.c.l.b16 %v6162
      %v6763 = vunpack.c.h.b16 %v6162
      %v6764 = vunpack.c.l.b16 %v6163
      %v6765 = vunpack.c.h.b16 %v6163
      %v6766 = vunpack.c.l.b16 %v6164
      %v6767 = vunpack.c.h.b16 %v6164
      %v6768 = vunpack.c.l.b16 %v6165
      %v6769 = vunpack.c.h.b16 %v6165
      %v6770 = vunpack.c.l.b16 %v6166
      %v6771 = vunpack.c.h.b16 %v6166
      %v6772 = vunpack.c.l.b16 %v6167
      %v6773 = vunpack.c.h.b16 %v6167
      %v6774 = vunpack.c.l.b16 %v6168
      %v6775 = vunpack.c.h.b16 %v6168
      %v6776 = vunpack.c.l.b16 %v6169
      %v6777 = vunpack.c.h.b16 %v6169
      %v6778 = vunpack.c.l.b16 %v6170
      %v6779 = vunpack.c.h.b16 %v6170
      %v6780 = vunpack.c.l.b16 %v6171
      %v6781 = vunpack.c.h.b16 %v6171
      %v6782 = vunpack.c.l.b16 %v6172
      %v6783 = vunpack.c.h.b16 %v6172
      %v6784 = vunpack.c.l.b16 %v6173
      %v6785 = vunpack.c.h.b16 %v6173
      %v6786 = vunpack.c.l.b16 %v6174
      %v6787 = vunpack.c.h.b16 %v6174
      %v6788 = vunpack.c.l.b16 %v6175
      %v6789 = vunpack.c.h.b16 %v6175
      %v6790 = vunpack.c.l.b16 %v6176
      %v6791 = vunpack.c.h.b16 %v6176
      %v6792 = vunpack.c.l.b16 %v6177
      %v6793 = vunpack.c.h.b16 %v6177
      %v6794 = vunpack.c.l.b16 %v6178
      %v6795 = vunpack.c.h.b16 %v6178
      %v6796 = vunpack.c.l.b16 %v6179
      %v6797 = vunpack.c.h.b16 %v6179
      %v6798 = vunpack.c.l.b16 %v6180
      %v6799 = vunpack.c.h.b16 %v6180
      %v6800 = vunpack.c.l.b16 %v6181
      %v6801 = vunpack.c.h.b16 %v6181
      %v6802 = vunpack.c.l.b16 %v6182
      %v6803 = vunpack.c.h.b16 %v6182
      %v6804 = vunpack.c.l.b16 %v6183
      %v6805 = vunpack.c.h.b16 %v6183
      %v6806 = vunpack.c.l.b16 %v6184
      %v6807 = vunpack.c.h.b16 %v6184
      %v6808 = vunpack.c.l.b16 %v6185
      %v6809 = vunpack.c.h.b16 %v6185
      %v6810 = vunpack.c.l.b16 %v6186
      %v6811 = vunpack.c.h.b16 %v6186
      %v6812 = vunpack.c.l.b16 %v6187
      %v6813 = vunpack.c.h.b16 %v6187
      %v6814 = vunpack.c.l.b16 %v6188
      %v6815 = vunpack.c.h.b16 %v6188
      %v6816 = vunpack.c.l.b16 %v6189
      %v6817 = vunpack.c.h.b16 %v6189
      %v6818 = vunpack.c.l.b16 %v6190
      %v6819 = vunpack.c.h.b16 %v6190
      %v6820 = vunpack.c.l.b16 %v6191
      %v6821 = vunpack.c.h.b16 %v6191
      %v6822 = vunpack.c.l.b16 %v6192
      %v6823 = vunpack.c.h.b16 %v6192
      %v6824 = vunpack.c.l.b16 %v6193
      %v6825 = vunpack.c.h.b16 %v6193
      %v6826 = vunpack.c.l.b16 %v6194
      %v6827 = vunpack.c.h.b16 %v6194
      %v6828 = vunpack.c.l.b16 %v6195
      %v6829 = vunpack.c.h.b16 %v6195
      %v6830 = vunpack.c.l.b16 %v6196
      %v6831 = vunpack.c.h.b16 %v6196
      %v6832 = vunpack.c.l.b16 %v6197
      %v6833 = vunpack.c.h.b16 %v6197
      %v6834 = vunpack.c.l.b16 %v6198
      %v6835 = vunpack.c.h.b16 %v6198
      %v6836 = vunpack.c.l.b16 %v6199
      %v6837 = vunpack.c.h.b16 %v6199
      %v6838 = vunpack.c.l.b16 %v6200
      %v6839 = vunpack.c.h.b16 %v6200
      %v6840 = vunpack.c.l.b16 %v6201
      %v6841 = vunpack.c.h.b16 %v6201
      %v6842 = vunpack.c.l.b16 %v6202
      %v6843 = vunpack.c.h.b16 %v6202
      %v6844 = vunpack.c.l.b16 %v6203
      %v6845 = vunpack.c.h.b16 %v6203
      %v6846 = vunpack.c.l.b16 %v6204
      %v6847 = vunpack.c.h.b16 %v6204
      %v6848 = vunpack.c.l.b16 %v6205
      %v6849 = vunpack.c.h.b16 %v6205
      %v6850 = vunpack.c.l.b16 %v6206
      %v6851 = vunpack.c.h.b16 %v6206
      %v6852 = vunpack.c.l.b16 %v6207
      %v6853 = vunpack.c.h.b16 %v6207
      %v6854 = vunpack.c.l.b16 %v6208
      %v6855 = vunpack.c.h.b16 %v6208
      %v6856 = vunpack.c.l.b16 %v6209
      %v6857 = vunpack.c.h.b16 %v6209
      %v6858 = vunpack.c.l.b16 %v6210
      %v6859 = vunpack.c.h.b16 %v6210
      %v6860 = vunpack.c.l.b16 %v6211
      %v6861 = vunpack.c.h.b16 %v6211
      %v6862 = vunpack.c.l.b16 %v6212
      %v6863 = vunpack.c.h.b16 %v6212
      %v6864 = vunpack.c.l.b16 %v6213
      %v6865 = vunpack.c.h.b16 %v6213
      %v6866 = vunpack.c.l.b16 %v6214
      %v6867 = vunpack.c.h.b16 %v6214
      %v6868 = vunpack.c.l.b16 %v6215
      %v6869 = vunpack.c.h.b16 %v6215
      %v6870 = vunpack.c.l.b16 %v6216
      %v6871 = vunpack.c.h.b16 %v6216
      %v6872 = vunpack.c.l.b16 %v6217
      %v6873 = vunpack.c.h.b16 %v6217
      %v6874 = vunpack.c.l.b16 %v6218
      %v6875 = vunpack.c.h.b16 %v6218
      %v6876 = vunpack.c.l.b16 %v6219
      %v6877 = vunpack.c.h.b16 %v6219
      %v6878 = vunpack.c.l.b16 %v6220
      %v6879 = vunpack.c.h.b16 %v6220
      %v6880 = vunpack.c.l.b16 %v6221
      %v6881 = vunpack.c.h.b16 %v6221
      %v6882 = vunpack.c.l.b16 %v6222
      %v6883 = vunpack.c.h.b16 %v6222
      %v6884 = vunpack.c.l.b16 %v6223
      %v6885 = vunpack.c.h.b16 %v6223
      %v6886 = vunpack.c.l.b16 %v6224
      %v6887 = vunpack.c.h.b16 %v6224
      %v6888 = vunpack.c.l.b16 %v6225
      %v6889 = vunpack.c.h.b16 %v6225
      %v6890 = vunpack.c.l.b16 %v6226
      %v6891 = vunpack.c.h.b16 %v6226
      %v6892 = vunpack.c.l.b16 %v6227
      %v6893 = vunpack.c.h.b16 %v6227
      %v6894 = vunpack.c.l.b16 %v6228
      %v6895 = vunpack.c.h.b16 %v6228
      %v6896 = vunpack.c.l.b16 %v6229
      %v6897 = vunpack.c.h.b16 %v6229
      %v6898 = vunpack.c.l.b16 %v6230
      %v6899 = vunpack.c.h.b16 %v6230
      %v6900 = vunpack.c.l.b16 %v6231
      %v6901 = vunpack.c.h.b16 %v6231
      %v6902 = vunpack.c.l.b16 %v6232
      %v6903 = vunpack.c.h.b16 %v6232
      %v6904 = vunpack.c.l.b16 %v6233
      %v6905 = vunpack.c.h.b16 %v6233
      %v6906 = vunpack.c.l.b16 %v6234
      %v6907 = vunpack.c.h.b16 %v6234
      %v6908 = vunpack.c.l.b16 %v6235
      %v6909 = vunpack.c.h.b16 %v6235
      %v6910 = vunpack.c.l.b16 %v6236
      %v6911 = vunpack.c.h.b16 %v6236
      %v6912 = vunpack.c.l.b16 %v6237
      %v6913 = vunpack.c.h.b16 %v6237
      %v6914 = vunpack.c.l.b16 %v6238
      %v6915 = vunpack.c.h.b16 %v6238
      %v6916 = vunpack.c.l.b16 %v6239
      %v6917 = vunpack.c.h.b16 %v6239
      %v6918 = vunpack.c.l.b16 %v6240
      %v6919 = vunpack.c.h.b16 %v6240
      %v6920 = vunpack.c.l.b16 %v6241
      %v6921 = vunpack.c.h.b16 %v6241
      %v6922 = vunpack.c.l.b16 %v6242
      %v6923 = vunpack.c.h.b16 %v6242
      %v6924 = vunpack.c.l.b16 %v6243
      %v6925 = vunpack.c.h.b16 %v6243
      %v6926 = vunpack.c.l.b16 %v6244
      %v6927 = vunpack.c.h.b16 %v6244
      %v6928 = vunpack.c.l.b16 %v6245
      %v6929 = vunpack.c.h.b16 %v6245
      %v6930 = vunpack.c.l.b16 %v6246
      %v6931 = vunpack.c.h.b16 %v6246
      %v6932 = vunpack.c.l.b16 %v6247
      %v6933 = vunpack.c.h.b16 %v6247
      %v6934 = vunpack.c.l.b16 %v6248
      %v6935 = vunpack.c.h.b16 %v6248
      %v6936 = vunpack.c.l.b16 %v6249
      %v6937 = vunpack.c.h.b16 %v6249
      %v6938 = vunpack.c.l.b16 %v6250
      %v6939 = vunpack.c.h.b16 %v6250
      %v6940 = vunpack.c.l.b16 %v6251
      %v6941 = vunpack.c.h.b16 %v6251
      %v6942 = vunpack.c.l.b16 %v6252
      %v6943 = vunpack.c.h.b16 %v6252
      %v6944 = vunpack.c.l.b16 %v6253
      %v6945 = vunpack.c.h.b16 %v6253
      %v6946 = vunpack.c.l.b16 %v6254
      %v6947 = vunpack.c.h.b16 %v6254
      %v6948 = vunpack.c.l.b16 %v6255
      %v6949 = vunpack.c.h.b16 %v6255
      %v6950 = vunpack.c.l.b16 %v6256
      %v6951 = vunpack.c.h.b16 %v6256
      %v6952 = vunpack.c.l.b16 %v6257
      %v6953 = vunpack.c.h.b16 %v6257
      %v6954 = vunpack.c.l.b16 %v6258
      %v6955 = vunpack.c.h.b16 %v6258
      %v6956 = vunpack.c.l.b16 %v6259
      %v6957 = vunpack.c.h.b16 %v6259
      %v6958 = vunpack.c.l.b16 %v6260
      %v6959 = vunpack.c.h.b16 %v6260
      %v6960 = vunpack.c.l.b16 %v6261
      %v6961 = vunpack.c.h.b16 %v6261
      %v6962 = vunpack.c.l.b16 %v6262
      %v6963 = vunpack.c.h.b16 %v6262
      %v6964 = vunpack.c.l.b16 %v6263
      %v6965 = vunpack.c.h.b16 %v6263
      %v6966 = vunpack.c.l.b16 %v6264
      %v6967 = vunpack.c.h.b16 %v6264
      %v6968 = vunpack.c.l.b16 %v6265
      %v6969 = vunpack.c.h.b16 %v6265
      %v6970 = vunpack.c.l.b16 %v6266
      %v6971 = vunpack.c.h.b16 %v6266
      %v6972 = vunpack.c.l.b16 %v6267
      %v6973 = vunpack.c.h.b16 %v6267
      %v6974 = vunpack.c.l.b16 %v6268
      %v6975 = vunpack.c.h.b16 %v6268
      %v6976 = vunpack.c.l.b16 %v6269
      %v6977 = vunpack.c.h.b16 %v6269
      %v6978 = vunpack.c.l.b16 %v6270
      %v6979 = vunpack.c.h.b16 %v6270
      %v6980 = vunpack.c.l.b16 %v6271
      %v6981 = vunpack.c.h.b16 %v6271
      %v6982 = vunpack.c.l.b16 %v6272
      %v6983 = vunpack.c.h.b16 %v6272
      %v6984 = vunpack.c.l.b16 %v6273
      %v6985 = vunpack.c.h.b16 %v6273
      %v6986 = vunpack.c.l.b16 %v6274
      %v6987 = vunpack.c.h.b16 %v6274
      %v6988 = vunpack.c.l.b16 %v6275
      %v6989 = vunpack.c.h.b16 %v6275
      %v6990 = vunpack.c.l.b16 %v6276
      %v6991 = vunpack.c.h.b16 %v6276
      %v6992 = vunpack.c.l.b16 %v6277
      %v6993 = vunpack.c.h.b16 %v6277
      %v6994 = vunpack.c.l.b16 %v6278
      %v6995 = vunpack.c.h.b16 %v6278
      %v6996 = vunpack.c.l.b16 %v6279
      %v6997 = vunpack.c.h.b16 %v6279
      %v6998 = vunpack.c.l.b16 %v6280
      %v6999 = vunpack.c.h.b16 %v6280
      %v7000 = vunpack.c.l.b16 %v6281
      %v7001 = vunpack.c.h.b16 %v6281
      %v7002 = vunpack.c.l.b16 %v6282
      %v7003 = vunpack.c.h.b16 %v6282
      %v7004 = vunpack.c.l.b16 %v6283
      %v7005 = vunpack.c.h.b16 %v6283
      %v7006 = vunpack.c.l.b16 %v6284
      %v7007 = vunpack.c.h.b16 %v6284
      %v7008 = vunpack.c.l.b16 %v6285
      %v7009 = vunpack.c.h.b16 %v6285
      %v7010 = vunpack.c.l.b16 %v6286
      %v7011 = vunpack.c.h.b16 %v6286
      %v7012 = vunpack.c.l.b16 %v6287
      %v7013 = vunpack.c.h.b16 %v6287
      %v7014 = vunpack.c.l.b16 %v6288
      %v7015 = vunpack.c.h.b16 %v6288
      %v7016 = vunpack.c.l.b16 %v6289
      %v7017 = vunpack.c.h.b16 %v6289
      %v7018 = vunpack.c.l.b16 %v6290
      %v7019 = vunpack.c.h.b16 %v6290
      %v7020 = vunpack.c.l.b16 %v6291
      %v7021 = vunpack.c.h.b16 %v6291
      %v7022 = vunpack.c.l.b16 %v6292
      %v7023 = vunpack.c.h.b16 %v6292
      %v7024 = vunpack.c.l.b16 %v6293
      %v7025 = vunpack.c.h.b16 %v6293
      %v7026 = vunpack.c.l.b16 %v6294
      %v7027 = vunpack.c.h.b16 %v6294
      %v7028 = vunpack.c.l.b16 %v6295
      %v7029 = vunpack.c.h.b16 %v6295
      %v7030 = vunpack.c.l.b16 %v6296
      %v7031 = vunpack.c.h.b16 %v6296
      %v7032 = vunpack.c.l.b16 %v6297
      %v7033 = vunpack.c.h.b16 %v6297
      %v7034 = vunpack.c.l.b16 %v6298
      %v7035 = vunpack.c.h.b16 %v6298
      %v7036 = vunpack.c.l.b16 %v6299
      %v7037 = vunpack.c.h.b16 %v6299
      %v7038 = vunpack.c.l.b16 %v6300
      %v7039 = vunpack.c.h.b16 %v6300
      %v7040 = vunpack.c.l.b16 %v6301
      %v7041 = vunpack.c.h.b16 %v6301
      %v7042 = vunpack.c.l.b16 %v6302
      %v7043 = vunpack.c.h.b16 %v6302
      %v7044 = vunpack.c.l.b16 %v6303
      %v7045 = vunpack.c.h.b16 %v6303
      %v7046 = vunpack.c.l.b16 %v6304
      %v7047 = vunpack.c.h.b16 %v6304
      %v7048 = vunpack.c.l.b16 %v6305
      %v7049 = vunpack.c.h.b16 %v6305
      %v7050 = vunpack.c.l.b16 %v6306
      %v7051 = vunpack.c.h.b16 %v6306
      %v7052 = vunpack.c.l.b16 %v6307
      %v7053 = vunpack.c.h.b16 %v6307
      %v7054 = vunpack.c.l.b16 %v6308
      %v7055 = vunpack.c.h.b16 %v6308
      %v7056 = vunpack.c.l.b16 %v6309
      %v7057 = vunpack.c.h.b16 %v6309
      %v7058 = vunpack.c.l.b16 %v6310
      %v7059 = vunpack.c.h.b16 %v6310
      %v7060 = vunpack.c.l.b16 %v6311
      %v7061 = vunpack.c.h.b16 %v6311
      %v7062 = vunpack.c.l.b16 %v6312
      %v7063 = vunpack.c.h.b16 %v6312
      %v7064 = vunpack.c.l.b16 %v6313
      %v7065 = vunpack.c.h.b16 %v6313
      %v7066 = vunpack.c.l.b16 %v6314
      %v7067 = vunpack.c.h.b16 %v6314
      %v7068 = vunpack.c.l.b16 %v6315
      %v7069 = vunpack.c.h.b16 %v6315
      %v7070 = vunpack.c.l.b16 %v6316
      %v7071 = vunpack.c.h.b16 %v6316
      %v7072 = vunpack.c.l.b16 %v6317
      %v7073 = vunpack.c.h.b16 %v6317
      %v7074 = vunpack.c.l.b16 %v6318
      %v7075 = vunpack.c.h.b16 %v6318
      %v7076 = vunpack.c.l.b16 %v6319
      %v7077 = vunpack.c.h.b16 %v6319
      %v7078 = vunpack.c.l.b16 %v6320
      %v7079 = vunpack.c.h.b16 %v6320
      %v7080 = vunpack.c.l.b16 %v6321
      %v7081 = vunpack.c.h.b16 %v6321
      %v7082 = vunpack.c.l.b16 %v6322
      %v7083 = vunpack.c.h.b16 %v6322
      %v7084 = vunpack.c.l.b16 %v6323
      %v7085 = vunpack.c.h.b16 %v6323
      %v7086 = vunpack.c.l.b16 %v6324
      %v7087 = vunpack.c.h.b16 %v6324
      %v7088 = vunpack.c.l.b16 %v6325
      %v7089 = vunpack.c.h.b16 %v6325
      %v7090 = vunpack.c.l.b16 %v6326
      %v7091 = vunpack.c.h.b16 %v6326
      %v7092 = vunpack.c.l.b16 %v6327
      %v7093 = vunpack.c.h.b16 %v6327
      %v7094 = vunpack.c.l.b16 %v6328
      %v7095 = vunpack.c.h.b16 %v6328
      %v7096 = vunpack.c.l.b16 %v6329
      %v7097 = vunpack.c.h.b16 %v6329
      %v7098 = vunpack.c.l.b16 %v6330
      %v7099 = vunpack.c.h.b16 %v6330
      %v7100 = vunpack.c.l.b16 %v6331
      %v7101 = vunpack.c.h.b16 %v6331
      %v7102 = vunpack.c.l.b16 %v6332
      %v7103 = vunpack.c.h.b16 %v6332
      %v7104 = vunpack.c.l.b16 %v6333
      %v7105 = vunpack.c.h.b16 %v6333
      %v7106 = vunpack.c.l.b16 %v6334
      %v7107 = vunpack.c.h.b16 %v6334
      %v7108 = vunpack.c.l.b16 %v6335
      %v7109 = vunpack.c.h.b16 %v6335
      %v7110 = vunpack.c.l.b16 %v6336
      %v7111 = vunpack.c.h.b16 %v6336
      %v7112 = vunpack.c.l.b16 %v6337
      %v7113 = vunpack.c.h.b16 %v6337
      %v7114 = vunpack.c.l.b16 %v6338
      %v7115 = vunpack.c.h.b16 %v6338
      %v7116 = vunpack.c.l.b16 %v6339
      %v7117 = vunpack.c.h.b16 %v6339
      %v7118 = vunpack.c.l.b16 %v6340
      %v7119 = vunpack.c.h.b16 %v6340
      %v7120 = vunpack.c.l.b16 %v6341
      %v7121 = vunpack.c.h.b16 %v6341
      %v7122 = vunpack.c.l.b16 %v6342
      %v7123 = vunpack.c.h.b16 %v6342
      %v7124 = vunpack.c.l.b16 %v6343
      %v7125 = vunpack.c.h.b16 %v6343
      %v7126 = vunpack.c.l.b16 %v6344
      %v7127 = vunpack.c.h.b16 %v6344
      %v7128 = vunpack.c.l.b16 %v6345
      %v7129 = vunpack.c.h.b16 %v6345
      %v7130 = vunpack.c.l.b16 %v6346
      %v7131 = vunpack.c.h.b16 %v6346
      %v7132 = vunpack.c.l.b16 %v6347
      %v7133 = vunpack.c.h.b16 %v6347
      %v7134 = vunpack.c.l.b16 %v6348
      %v7135 = vunpack.c.h.b16 %v6348
      %v7136 = vunpack.c.l.b16 %v6349
      %v7137 = vunpack.c.h.b16 %v6349
      %v7138 = vunpack.c.l.b16 %v6350
      %v7139 = vunpack.c.h.b16 %v6350
      %v7140 = vunpack.c.l.b16 %v6351
      %v7141 = vunpack.c.h.b16 %v6351
      %v7142 = vunpack.c.l.b16 %v6352
      %v7143 = vunpack.c.h.b16 %v6352
      %v7144 = vunpack.c.l.b16 %v6353
      %v7145 = vunpack.c.h.b16 %v6353
      %v7146 = vunpack.c.l.b16 %v6354
      %v7147 = vunpack.c.h.b16 %v6354
      %v7148 = vunpack.c.l.b16 %v6355
      %v7149 = vunpack.c.h.b16 %v6355
      %v7150 = vunpack.c.l.b16 %v6356
      %v7151 = vunpack.c.h.b16 %v6356
      %v7152 = vunpack.c.l.b16 %v6357
      %v7153 = vunpack.c.h.b16 %v6357
      %v7154 = vunpack.c.l.b16 %v6358
      %v7155 = vunpack.c.h.b16 %v6358
      %v7156 = vunpack.c.l.b16 %v6359
      %v7157 = vunpack.c.h.b16 %v6359
      %v7158 = vunpack.c.l.b16 %v6360
      %v7159 = vunpack.c.h.b16 %v6360
      %v7160 = vunpack.c.l.b16 %v6361
      %v7161 = vunpack.c.h.b16 %v6361
      %v7162 = vunpack.c.l.b16 %v6362
      %v7163 = vunpack.c.h.b16 %v6362
      %v7164 = vunpack.c.l.b16 %v6363
      %v7165 = vunpack.c.h.b16 %v6363
      %v7166 = vunpack.c.l.b16 %v6364
      %v7167 = vunpack.c.h.b16 %v6364
      %v7168 = vunpack.c.l.b16 %v6365
      %v7169 = vunpack.c.h.b16 %v6365
      %v7170 = vunpack.c.l.b16 %v6366
      %v7171 = vunpack.c.h.b16 %v6366
      %v7172 = vunpack.c.l.b16 %v6367
      %v7173 = vunpack.c.h.b16 %v6367
      %v7174 = vunpack.c.l.b16 %v6368
      %v7175 = vunpack.c.h.b16 %v6368
      %v7176 = vunpack.c.l.b16 %v6369
      %v7177 = vunpack.c.h.b16 %v6369
      %v7178 = vunpack.c.l.b16 %v6370
      %v7179 = vunpack.c.h.b16 %v6370
      %v7180 = vunpack.c.l.b16 %v6371
      %v7181 = vunpack.c.h.b16 %v6371
      %v7182 = vunpack.c.l.b16 %v6372
      %v7183 = vunpack.c.h.b16 %v6372
      %v7184 = vunpack.c.l.b16 %v6373
      %v7185 = vunpack.c.h.b16 %v6373
      %v7186 = vunpack.c.l.b16 %v6374
      %v7187 = vunpack.c.h.b16 %v6374
      %v7188 = vunpack.c.l.b16 %v6375
      %v7189 = vunpack.c.h.b16 %v6375
      %v7190 = vunpack.c.l.b16 %v6376
      %v7191 = vunpack.c.h.b16 %v6376
      %v7192 = vunpack.c.l.b16 %v6377
      %v7193 = vunpack.c.h.b16 %v6377
      %v7194 = vunpack.c.l.b16 %v6378
      %v7195 = vunpack.c.h.b16 %v6378
      %v7196 = vpack.c.b16 %v6660, %v6652
      %v7197 = vpack.c.b16 %v6661, %v6653
      %v7198 = vpack.c.b16 %v6662, %v6654
      %v7199 = vpack.c.b16 %v6663, %v6655
      %v7200 = vpack.c.b16 %v6664, %v6656
      %v7201 = vpack.c.b16 %v6665, %v6657
      %v7202 = vpack.c.b16 %v6666, %v6658
      %v7203 = vpack.c.b16 %v6667, %v6659
      %v7204 = vpack.c.b16 %v6676, %v6668
      %v7205 = vpack.c.b16 %v6677, %v6669
      %v7206 = vpack.c.b16 %v6678, %v6670
      %v7207 = vpack.c.b16 %v6679, %v6671
      %v7208 = vpack.c.b16 %v6680, %v6672
      %v7209 = vpack.c.b16 %v6681, %v6673
      %v7210 = vpack.c.b16 %v6682, %v6674
      %v7211 = vpack.c.b16 %v6683, %v6675
      %v7212 = vpack.c.b16 %v6692, %v6684
      %v7213 = vpack.c.b16 %v6693, %v6685
      %v7214 = vpack.c.b16 %v6694, %v6686
      %v7215 = vpack.c.b16 %v6695, %v6687
      %v7216 = vpack.c.b16 %v6696, %v6688
      %v7217 = vpack.c.b16 %v6697, %v6689
      %v7218 = vpack.c.b16 %v6698, %v6690
      %v7219 = vpack.c.b16 %v6699, %v6691
      %v7220 = vpack.c.b16 %v6708, %v6700
      %v7221 = vpack.c.b16 %v6709, %v6701
      %v7222 = vpack.c.b16 %v6710, %v6702
      %v7223 = vpack.c.b16 %v6711, %v6703
      %v7224 = vpack.c.b16 %v6712, %v6704
      %v7225 = vpack.c.b16 %v6713, %v6705
      %v7226 = vpack.c.b16 %v6714, %v6706
      %v7227 = vpack.c.b16 %v6715, %v6707
      %v7228 = vpack.c.b16 %v6724, %v6716
      %v7229 = vpack.c.b16 %v6725, %v6717
      %v7230 = vpack.c.b16 %v6726, %v6718
      %v7231 = vpack.c.b16 %v6727, %v6719
      %v7232 = vpack.c.b16 %v6728, %v6720
      %v7233 = vpack.c.b16 %v6729, %v6721
      %v7234 = vpack.c.b16 %v6730, %v6722
      %v7235 = vpack.c.b16 %v6731, %v6723
      %v7236 = vpack.c.b16 %v6740, %v6732
      %v7237 = vpack.c.b16 %v6741, %v6733
      %v7238 = vpack.c.b16 %v6742, %v6734
      %v7239 = vpack.c.b16 %v6743, %v6735
      %v7240 = vpack.c.b16 %v6744, %v6736
      %v7241 = vpack.c.b16 %v6745, %v6737
      %v7242 = vpack.c.b16 %v6746, %v6738
      %v7243 = vpack.c.b16 %v6747, %v6739
      %v7244 = vpack.c.b16 %v6756, %v6748
      %v7245 = vpack.c.b16 %v6757, %v6749
      %v7246 = vpack.c.b16 %v6758, %v6750
      %v7247 = vpack.c.b16 %v6759, %v6751
      %v7248 = vpack.c.b16 %v6760, %v6752
      %v7249 = vpack.c.b16 %v6761, %v6753
      %v7250 = vpack.c.b16 %v6762, %v6754
      %v7251 = vpack.c.b16 %v6763, %v6755
      %v7252 = vpack.c.b16 %v6772, %v6764
      %v7253 = vpack.c.b16 %v6773, %v6765
      %v7254 = vpack.c.b16 %v6774, %v6766
      %v7255 = vpack.c.b16 %v6775, %v6767
      %v7256 = vpack.c.b16 %v6776, %v6768
      %v7257 = vpack.c.b16 %v6777, %v6769
      %v7258 = vpack.c.b16 %v6778, %v6770
      %v7259 = vpack.c.b16 %v6779, %v6771
      %v7260 = vpack.c.b16 %v6788, %v6780
      %v7261 = vpack.c.b16 %v6789, %v6781
      %v7262 = vpack.c.b16 %v6790, %v6782
      %v7263 = vpack.c.b16 %v6791, %v6783
      %v7264 = vpack.c.b16 %v6792, %v6784
      %v7265 = vpack.c.b16 %v6793, %v6785
      %v7266 = vpack.c.b16 %v6794, %v6786
      %v7267 = vpack.c.b16 %v6795, %v6787
      %v7268 = vpack.c.b16 %v6804, %v6796
      %v7269 = vpack.c.b16 %v6805, %v6797
      %v7270 = vpack.c.b16 %v6806, %v6798
      %v7271 = vpack.c.b16 %v6807, %v6799
      %v7272 = vpack.c.b16 %v6808, %v6800
      %v7273 = vpack.c.b16 %v6809, %v6801
      %v7274 = vpack.c.b16 %v6810, %v6802
      %v7275 = vpack.c.b16 %v6811, %v6803
      %v7276 = vpack.c.b16 %v6820, %v6812
      %v7277 = vpack.c.b16 %v6821, %v6813
      %v7278 = vpack.c.b16 %v6822, %v6814
      %v7279 = vpack.c.b16 %v6823, %v6815
      %v7280 = vpack.c.b16 %v6824, %v6816
      %v7281 = vpack.c.b16 %v6825, %v6817
      %v7282 = vpack.c.b16 %v6826, %v6818
      %v7283 = vpack.c.b16 %v6827, %v6819
      %v7284 = vpack.c.b16 %v6836, %v6828
      %v7285 = vpack.c.b16 %v6837, %v6829
      %v7286 = vpack.c.b16 %v6838, %v6830
      %v7287 = vpack.c.b16 %v6839, %v6831
      %v7288 = vpack.c.b16 %v6840, %v6832
      %v7289 = vpack.c.b16 %v6841, %v6833
      %v7290 = vpack.c.b16 %v6842, %v6834
      %v7291 = vpack.c.b16 %v6843, %v6835
      %v7292 = vpack.c.b16 %v6852, %v6844
      %v7293 = vpack.c.b16 %v6853, %v6845
      %v7294 = vpack.c.b16 %v6854, %v6846
      %v7295 = vpack.c.b16 %v6855, %v6847
      %v7296 = vpack.c.b16 %v6856, %v6848
      %v7297 = vpack.c.b16 %v6857, %v6849
      %v7298 = vpack.c.b16 %v6858, %v6850
      %v7299 = vpack.c.b16 %v6859, %v6851
      %v7300 = vpack.c.b16 %v6868, %v6860
      %v7301 = vpack.c.b16 %v6869, %v6861
      %v7302 = vpack.c.b16 %v6870, %v6862
      %v7303 = vpack.c.b16 %v6871, %v6863
      %v7304 = vpack.c.b16 %v6872, %v6864
      %v7305 = vpack.c.b16 %v6873, %v6865
      %v7306 = vpack.c.b16 %v6874, %v6866
      %v7307 = vpack.c.b16 %v6875, %v6867
      %v7308 = vpack.c.b16 %v6884, %v6876
      %v7309 = vpack.c.b16 %v6885, %v6877
      %v7310 = vpack.c.b16 %v6886, %v6878
      %v7311 = vpack.c.b16 %v6887, %v6879
      %v7312 = vpack.c.b16 %v6888, %v6880
      %v7313 = vpack.c.b16 %v6889, %v6881
      %v7314 = vpack.c.b16 %v6890, %v6882
      %v7315 = vpack.c.b16 %v6891, %v6883
      %v7316 = vpack.c.b16 %v6900, %v6892
      %v7317 = vpack.c.b16 %v6901, %v6893
      %v7318 = vpack.c.b16 %v6902, %v6894
      %v7319 = vpack.c.b16 %v6903, %v6895
      %v7320 = vpack.c.b16 %v6904, %v6896
      %v7321 = vpack.c.b16 %v6905, %v6897
      %v7322 = vpack.c.b16 %v6906, %v6898
      %v7323 = vpack.c.b16 %v6907, %v6899
      %v7324 = vpack.c.b16 %v6916, %v6908
      %v7325 = vpack.c.b16 %v6917, %v6909
      %v7326 = vpack.c.b16 %v6918, %v6910
      %v7327 = vpack.c.b16 %v6919, %v6911
      %v7328 = vpack.c.b16 %v6920, %v6912
      %v7329 = vpack.c.b16 %v6921, %v6913
      %v7330 = vpack.c.b16 %v6922, %v6914
      %v7331 = vpack.c.b16 %v6923, %v6915
      %v7332 = vpack.c.b16 %v6932, %v6924
      %v7333 = vpack.c.b16 %v6933, %v6925
      %v7334 = vpack.c.b16 %v6934, %v6926
      %v7335 = vpack.c.b16 %v6935, %v6927
      %v7336 = vpack.c.b16 %v6936, %v6928
      %v7337 = vpack.c.b16 %v6937, %v6929
      %v7338 = vpack.c.b16 %v6938, %v6930
      %v7339 = vpack.c.b16 %v6939, %v6931
      %v7340 = vpack.c.b16 %v6948, %v6940
      %v7341 = vpack.c.b16 %v6949, %v6941
      %v7342 = vpack.c.b16 %v6950, %v6942
      %v7343 = vpack.c.b16 %v6951, %v6943
      %v7344 = vpack.c.b16 %v6952, %v6944
      %v7345 = vpack.c.b16 %v6953, %v6945
      %v7346 = vpack.c.b16 %v6954, %v6946
      %v7347 = vpack.c.b16 %v6955, %v6947
      %v7348 = vpack.c.b16 %v6964, %v6956
      %v7349 = vpack.c.b16 %v6965, %v6957
      %v7350 = vpack.c.b16 %v6966, %v6958
      %v7351 = vpack.c.b16 %v6967, %v6959
      %v7352 = vpack.c.b16 %v6968, %v6960
      %v7353 = vpack.c.b16 %v6969, %v6961
      %v7354 = vpack.c.b16 %v6970, %v6962
      %v7355 = vpack.c.b16 %v6971, %v6963
      %v7356 = vpack.c.b16 %v6980, %v6972
      %v7357 = vpack.c.b16 %v6981, %v6973
      %v7358 = vpack.c.b16 %v6982, %v6974
      %v7359 = vpack.c.b16 %v6983, %v6975
      %v7360 = vpack.c.b16 %v6984, %v6976
      %v7361 = vpack.c.b16 %v6985, %v6977
      %v7362 = vpack.c.b16 %v6986, %v6978
      %v7363 = vpack.c.b16 %v6987, %v6979
      %v7364 = vpack.c.b16 %v6996, %v6988
      %v7365 = vpack.c.b16 %v6997, %v6989
      %v7366 = vpack.c.b16 %v6998, %v6990
      %v7367 = vpack.c.b16 %v6999, %v6991
      %v7368 = vpack.c.b16 %v7000, %v6992
      %v7369 = vpack.c.b16 %v7001, %v6993
      %v7370 = vpack.c.b16 %v7002, %v6994
      %v7371 = vpack.c.b16 %v7003, %v6995
      %v7372 = vpack.c.b16 %v7012, %v7004
      %v7373 = vpack.c.b16 %v7013, %v7005
      %v7374 = vpack.c.b16 %v7014, %v7006
      %v7375 = vpack.c.b16 %v7015, %v7007
      %v7376 = vpack.c.b16 %v7016, %v7008
      %v7377 = vpack.c.b16 %v7017, %v7009
      %v7378 = vpack.c.b16 %v7018, %v7010
      %v7379 = vpack.c.b16 %v7019, %v7011
      %v7380 = vpack.c.b16 %v7028, %v7020
      %v7381 = vpack.c.b16 %v7029, %v7021
      %v7382 = vpack.c.b16 %v7030, %v7022
      %v7383 = vpack.c.b16 %v7031, %v7023
      %v7384 = vpack.c.b16 %v7032, %v7024
      %v7385 = vpack.c.b16 %v7033, %v7025
      %v7386 = vpack.c.b16 %v7034, %v7026
      %v7387 = vpack.c.b16 %v7035, %v7027
      %v7388 = vpack.c.b16 %v7044, %v7036
      %v7389 = vpack.c.b16 %v7045, %v7037
      %v7390 = vpack.c.b16 %v7046, %v7038
      %v7391 = vpack.c.b16 %v7047, %v7039
      %v7392 = vpack.c.b16 %v7048, %v7040
      %v7393 = vpack.c.b16 %v7049, %v7041
      %v7394 = vpack.c.b16 %v7050, %v7042
      %v7395 = vpack.c.b16 %v7051, %v7043
      %v7396 = vpack.c.b16 %v7060, %v7052
      %v7397 = vpack.c.b16 %v7061, %v7053
      %v7398 = vpack.c.b16 %v7062, %v7054
      %v7399 = vpack.c.b16 %v7063, %v7055
      %v7400 = vpack.c.b16 %v7064, %v7056
      %v7401 = vpack.c.b16 %v7065, %v7057
      %v7402 = vpack.c.b16 %v7066, %v7058
      %v7403 = vpack.c.b16 %v7067, %v7059
      %v7404 = vpack.c.b16 %v7076, %v7068
      %v7405 = vpack.c.b16 %v7077, %v7069
      %v7406 = vpack.c.b16 %v7078, %v7070
      %v7407 = vpack.c.b16 %v7079, %v7071
      %v7408 = vpack.c.b16 %v7080, %v7072
      %v7409 = vpack.c.b16 %v7081, %v7073
      %v7410 = vpack.c.b16 %v7082, %v7074
      %v7411 = vpack.c.b16 %v7083, %v7075
      %v7412 = vpack.c.b16 %v7092, %v7084
      %v7413 = vpack.c.b16 %v7093, %v7085
      %v7414 = vpack.c.b16 %v7094, %v7086
      %v7415 = vpack.c.b16 %v7095, %v7087
      %v7416 = vpack.c.b16 %v7096, %v7088
      %v7417 = vpack.c.b16 %v7097, %v7089
      %v7418 = vpack.c.b16 %v7098, %v7090
      %v7419 = vpack.c.b16 %v7099, %v7091
      %v7420 = vpack.c.b16 %v7108, %v7100
      %v7421 = vpack.c.b16 %v7109, %v7101
      %v7422 = vpack.c.b16 %v7110, %v7102
      %v7423 = vpack.c.b16 %v7111, %v7103
      %v7424 = vpack.c.b16 %v7112, %v7104
      %v7425 = vpack.c.b16 %v7113, %v7105
      %v7426 = vpack.c.b16 %v7114, %v7106
      %v7427 = vpack.c.b16 %v7115, %v7107
      %v7428 = vpack.c.b16 %v7124, %v7116
      %v7429 = vpack.c.b16 %v7125, %v7117
      %v7430 = vpack.c.b16 %v7126, %v7118
      %v7431 = vpack.c.b16 %v7127, %v7119
      %v7432 = vpack.c.b16 %v7128, %v7120
      %v7433 = vpack.c.b16 %v7129, %v7121
      %v7434 = vpack.c.b16 %v7130, %v7122
      %v7435 = vpack.c.b16 %v7131, %v7123
      %v7436 = vpack.c.b16 %v7140, %v7132
      %v7437 = vpack.c.b16 %v7141, %v7133
      %v7438 = vpack.c.b16 %v7142, %v7134
      %v7439 = vpack.c.b16 %v7143, %v7135
      %v7440 = vpack.c.b16 %v7144, %v7136
      %v7441 = vpack.c.b16 %v7145, %v7137
      %v7442 = vpack.c.b16 %v7146, %v7138
      %v7443 = vpack.c.b16 %v7147, %v7139
      %v7444 = vpack.c.b16 %v7156, %v7148
      %v7445 = vpack.c.b16 %v7157, %v7149
      %v7446 = vpack.c.b16 %v7158, %v7150
      %v7447 = vpack.c.b16 %v7159, %v7151
      %v7448 = vpack.c.b16 %v7160, %v7152
      %v7449 = vpack.c.b16 %v7161, %v7153
      %v7450 = vpack.c.b16 %v7162, %v7154
      %v7451 = vpack.c.b16 %v7163, %v7155
      %v7452 = vpack.c.b16 %v7172, %v7164
      %v7453 = vpack.c.b16 %v7173, %v7165
      %v7454 = vpack.c.b16 %v7174, %v7166
      %v7455 = vpack.c.b16 %v7175, %v7167
      %v7456 = vpack.c.b16 %v7176, %v7168
      %v7457 = vpack.c.b16 %v7177, %v7169
      %v7458 = vpack.c.b16 %v7178, %v7170
      %v7459 = vpack.c.b16 %v7179, %v7171
      %v7460 = vpack.c.b16 %v7188, %v7180
      %v7461 = vpack.c.b16 %v7189, %v7181
      %v7462 = vpack.c.b16 %v7190, %v7182
      %v7463 = vpack.c.b16 %v7191, %v7183
      %v7464 = vpack.c.b16 %v7192, %v7184
      %v7465 = vpack.c.b16 %v7193, %v7185
      %v7466 = vpack.c.b16 %v7194, %v7186
      %v7467 = vpack.c.b16 %v7195, %v7187
      %v7741 = vlaneseq
      %v7742 = vshrl.u32 %v7741, 7
      %v7743 = vsub.s32 0, %v7742
      %v7744 = vrot.slane %v6379, %v7743
      %v7745 = vlaneseq
      %v7746 = vshrl.u32 %v7745, 7
      %v7747 = vsub.s32 1, %v7746
      %v7748 = vrot.slane %v6379, %v7747
      %v7749 = vlaneseq
      %v7750 = vshrl.u32 %v7749, 7
      %v7751 = vsub.s32 2, %v7750
      %v7752 = vrot.slane %v6379, %v7751
      %v7753 = vlaneseq
      %v7754 = vshrl.u32 %v7753, 7
      %v7755 = vsub.s32 3, %v7754
      %v7756 = vrot.slane %v6379, %v7755
      %v7757 = vlaneseq
      %v7758 = vshrl.u32 %v7757, 7
      %v7759 = vsub.s32 4, %v7758
      %v7760 = vrot.slane %v6379, %v7759
      %v7761 = vlaneseq
      %v7762 = vshrl.u32 %v7761, 7
      %v7763 = vsub.s32 5, %v7762
      %v7764 = vrot.slane %v6379, %v7763
      %v7765 = vlaneseq
      %v7766 = vshrl.u32 %v7765, 7
      %v7767 = vsub.s32 6, %v7766
      %v7768 = vrot.slane %v6379, %v7767
      %v7769 = vlaneseq
      %v7770 = vshrl.u32 %v7769, 7
      %v7771 = vsub.s32 7, %v7770
      %v7772 = vrot.slane %v6379, %v7771
      %v7782 = vsel %vm2155, %v6101, 0
      %7784 = vmatprep.subr.bf16.mxu0 %v7197
      %7785 = vmatpush1.bf16.msra.mxu0 %v7196
      %7786 = vmatprep.subr.bf16.mxu0 %v7205
      %7787 = vmatpush1.bf16.msra.mxu0 %v7204
      %7788 = vmatprep.subr.bf16.mxu0 %v7213
      %7789 = vmatpush1.bf16.msra.mxu0 %v7212
      %7790 = vmatprep.subr.bf16.mxu0 %v7221
      %7791 = vmatpush1.bf16.msra.mxu0 %v7220
      %7792 = vmatprep.subr.bf16.mxu0 %v7229
      %7793 = vmatpush1.bf16.msra.mxu0 %v7228
      %7794 = vmatprep.subr.bf16.mxu0 %v7237
      %7795 = vmatpush1.bf16.msra.mxu0 %v7236
      %7796 = vmatprep.subr.bf16.mxu0 %v7245
      %7797 = vmatpush1.bf16.msra.mxu0 %v7244
      %7798 = vmatprep.subr.bf16.mxu0 %v7253
      %7799 = vmatpush1.bf16.msra.mxu0 %v7252
      %7800 = vmatprep.subr.bf16.mxu0 %v7261
      %7801 = vmatpush1.bf16.msra.mxu0 %v7260
      %7802 = vmatprep.subr.bf16.mxu0 %v7269
      %7803 = vmatpush1.bf16.msra.mxu0 %v7268
      %7804 = vmatprep.subr.bf16.mxu0 %v7277
      %7805 = vmatpush1.bf16.msra.mxu0 %v7276
      %7806 = vmatprep.subr.bf16.mxu0 %v7285
      %7807 = vmatpush1.bf16.msra.mxu0 %v7284
      %7808 = vmatprep.subr.bf16.mxu0 %v7293
      %7809 = vmatpush1.bf16.msra.mxu0 %v7292
      %7810 = vmatprep.subr.bf16.mxu0 %v7301
      %7811 = vmatpush1.bf16.msra.mxu0 %v7300
      %7812 = vmatprep.subr.bf16.mxu0 %v7309
      %7813 = vmatpush1.bf16.msra.mxu0 %v7308
      %7814 = vmatprep.subr.bf16.mxu0 %v7317
      %7815 = vmatpush1.bf16.msra.mxu0 %v7316
      %7816 = vmatprep.mubr.bf16.mxu0 %v6080
      %7817 = vmatmul.mubr.bf16.gmra.mrb[0].mxu0 %v6077
      %v7818 = vpop.f32.mrb[0].mxu0
      %v7819 = vadd.f32 %v7744, %v7818
      %v7820 = vpop.f32.mrb[0].mxu0
      %v7821 = vadd.f32 %v7748, %v7820
      %v7822 = vpop.f32.mrb[0].mxu0
      %v7823 = vpop.f32.mrb[0].mxu0
      %7824 = vdwg.mxu0
      %7825 = vmatprep.subr.bf16.mxu0 %v7325
      %7826 = vmatpush1.bf16.msra.mxu0 %v7324
      %7827 = vmatprep.subr.bf16.mxu0 %v7333
      %7828 = vmatpush1.bf16.msra.mxu0 %v7332
      %7829 = vmatprep.subr.bf16.mxu0 %v7341
      %7830 = vmatpush1.bf16.msra.mxu0 %v7340
      %7831 = vmatprep.subr.bf16.mxu0 %v7349
      %7832 = vmatpush1.bf16.msra.mxu0 %v7348
      %7833 = vmatprep.subr.bf16.mxu0 %v7357
      %7834 = vmatpush1.bf16.msra.mxu0 %v7356
      %7835 = vmatprep.subr.bf16.mxu0 %v7365
      %7836 = vmatpush1.bf16.msra.mxu0 %v7364
      %7837 = vmatprep.subr.bf16.mxu0 %v7373
      %7838 = vmatpush1.bf16.msra.mxu0 %v7372
      %7839 = vmatprep.subr.bf16.mxu0 %v7381
      %7840 = vmatpush1.bf16.msra.mxu0 %v7380
      %7841 = vmatprep.subr.bf16.mxu0 %v7389
      %7842 = vmatpush1.bf16.msra.mxu0 %v7388
      %7843 = vmatprep.subr.bf16.mxu0 %v7397
      %7844 = vmatpush1.bf16.msra.mxu0 %v7396
      %7845 = vmatprep.subr.bf16.mxu0 %v7405
      %7846 = vmatpush1.bf16.msra.mxu0 %v7404
      %7847 = vmatprep.subr.bf16.mxu0 %v7413
      %7848 = vmatpush1.bf16.msra.mxu0 %v7412
      %7849 = vmatprep.subr.bf16.mxu0 %v7421
      %7850 = vmatpush1.bf16.msra.mxu0 %v7420
      %7851 = vmatprep.subr.bf16.mxu0 %v7429
      %7852 = vmatpush1.bf16.msra.mxu0 %v7428
      %7853 = vmatprep.subr.bf16.mxu0 %v7437
      %7854 = vmatpush1.bf16.msra.mxu0 %v7436
      %7855 = vmatprep.subr.bf16.mxu0 %v7445
      %7856 = vmatpush1.bf16.msra.mxu0 %v7444
      %7857 = vmatprep.mubr.bf16.mxu0 %v6102
      %7858 = vmatmul.mubr.bf16.gmra.mrb[0].mxu0 %v6105
      %v7859 = vpop.f32.mrb[0].mxu0
      %v7860 = vadd.f32 %v7819, %v7859
      %v7861 = vpop.f32.mrb[0].mxu0
      %v7862 = vadd.f32 %v7821, %v7861
      %v7863 = vpop.f32.mrb[0].mxu0
      %v7864 = vpop.f32.mrb[0].mxu0
      %7865 = vdwg.mxu0
      %7866 = vmatprep.subr.bf16.mxu0 %v7453
      %7867 = vmatpush1.bf16.msra.mxu0 %v7452
      %7868 = vmatprep.subr.bf16.mxu0 %v7461
      %7869 = vmatpush1.bf16.msra.mxu0 %v7460
      %7870 = vmatprep.subr.bf16.mxu0 0
      %7871 = vmatpush1.bf16.msra.mxu0 0
      %7872 = vmatprep.subr.bf16.mxu0 0
      %7873 = vmatpush1.bf16.msra.mxu0 0
      %7874 = vmatprep.subr.bf16.mxu0 0
      %7875 = vmatpush1.bf16.msra.mxu0 0
      %7876 = vmatprep.subr.bf16.mxu0 0
      %7877 = vmatpush1.bf16.msra.mxu0 0
      %7878 = vmatprep.subr.bf16.mxu0 0
      %7879 = vmatpush1.bf16.msra.mxu0 0
      %7880 = vmatprep.subr.bf16.mxu0 0
      %7881 = vmatpush1.bf16.msra.mxu0 0
      %7882 = vmatprep.subr.bf16.mxu0 0
      %7883 = vmatpush1.bf16.msra.mxu0 0
      %7884 = vmatprep.subr.bf16.mxu0 0
      %7885 = vmatpush1.bf16.msra.mxu0 0
      %7886 = vmatprep.subr.bf16.mxu0 0
      %7887 = vmatpush1.bf16.msra.mxu0 0
      %7888 = vmatprep.subr.bf16.mxu0 0
      %7889 = vmatpush1.bf16.msra.mxu0 0
      %7890 = vmatprep.subr.bf16.mxu0 0
      %7891 = vmatpush1.bf16.msra.mxu0 0
      %7892 = vmatprep.subr.bf16.mxu0 0
      %7893 = vmatpush1.bf16.msra.mxu0 0
      %7894 = vmatprep.subr.bf16.mxu0 0
      %7895 = vmatpush1.bf16.msra.mxu0 0
      %7896 = vmatprep.subr.bf16.mxu0 0
      %7897 = vmatpush1.bf16.msra.mxu0 0
      %7898 = vmatprep.mubr.bf16.mxu0 0
      %7899 = vmatmul.mubr.bf16.gmra.mrb[0].mxu0 %v7782
      %v7900 = vpop.f32.mrb[0].mxu0
      %v7901 = vadd.f32 %v7860, %v7900
      %v7902 = vpop.f32.mrb[0].mxu0
      %v7903 = vadd.f32 %v7862, %v7902
      %v7904 = vpop.f32.mrb[0].mxu0
      %v7905 = vpop.f32.mrb[0].mxu0
      %7906 = vdwg.mxu0
      %7907 = vmatprep.subr.bf16.mxu0 %v7199
      %7908 = vmatpush1.bf16.msra.mxu0 %v7198
      %7909 = vmatprep.subr.bf16.mxu0 %v7207
      %7910 = vmatpush1.bf16.msra.mxu0 %v7206
      %7911 = vmatprep.subr.bf16.mxu0 %v7215
      %7912 = vmatpush1.bf16.msra.mxu0 %v7214
      %7913 = vmatprep.subr.bf16.mxu0 %v7223
      %7914 = vmatpush1.bf16.msra.mxu0 %v7222
      %7915 = vmatprep.subr.bf16.mxu0 %v7231
      %7916 = vmatpush1.bf16.msra.mxu0 %v7230
      %7917 = vmatprep.subr.bf16.mxu0 %v7239
      %7918 = vmatpush1.bf16.msra.mxu0 %v7238
      %7919 = vmatprep.subr.bf16.mxu0 %v7247
      %7920 = vmatpush1.bf16.msra.mxu0 %v7246
      %7921 = vmatprep.subr.bf16.mxu0 %v7255
      %7922 = vmatpush1.bf16.msra.mxu0 %v7254
      %7923 = vmatprep.subr.bf16.mxu0 %v7263
      %7924 = vmatpush1.bf16.msra.mxu0 %v7262
      %7925 = vmatprep.subr.bf16.mxu0 %v7271
      %7926 = vmatpush1.bf16.msra.mxu0 %v7270
      %7927 = vmatprep.subr.bf16.mxu0 %v7279
      %7928 = vmatpush1.bf16.msra.mxu0 %v7278
      %7929 = vmatprep.subr.bf16.mxu0 %v7287
      %7930 = vmatpush1.bf16.msra.mxu0 %v7286
      %7931 = vmatprep.subr.bf16.mxu0 %v7295
      %7932 = vmatpush1.bf16.msra.mxu0 %v7294
      %7933 = vmatprep.subr.bf16.mxu0 %v7303
      %7934 = vmatpush1.bf16.msra.mxu0 %v7302
      %7935 = vmatprep.subr.bf16.mxu0 %v7311
      %7936 = vmatpush1.bf16.msra.mxu0 %v7310
      %7937 = vmatprep.subr.bf16.mxu0 %v7319
      %7938 = vmatpush1.bf16.msra.mxu0 %v7318
      %7939 = vmatprep.mubr.bf16.mxu0 %v6080
      %7940 = vmatmul.mubr.bf16.gmra.mrb[0].mxu0 %v6077
      %v7941 = vpop.f32.mrb[0].mxu0
      %v7942 = vadd.f32 %v7752, %v7941
      %v7943 = vpop.f32.mrb[0].mxu0
      %v7944 = vadd.f32 %v7756, %v7943
      %v7945 = vpop.f32.mrb[0].mxu0
      %v7946 = vpop.f32.mrb[0].mxu0
      %7947 = vdwg.mxu0
      %7948 = vmatprep.subr.bf16.mxu0 %v7327
      %7949 = vmatpush1.bf16.msra.mxu0 %v7326
      %7950 = vmatprep.subr.bf16.mxu0 %v7335
      %7951 = vmatpush1.bf16.msra.mxu0 %v7334
      %7952 = vmatprep.subr.bf16.mxu0 %v7343
      %7953 = vmatpush1.bf16.msra.mxu0 %v7342
      %7954 = vmatprep.subr.bf16.mxu0 %v7351
      %7955 = vmatpush1.bf16.msra.mxu0 %v7350
      %7956 = vmatprep.subr.bf16.mxu0 %v7359
      %7957 = vmatpush1.bf16.msra.mxu0 %v7358
      %7958 = vmatprep.subr.bf16.mxu0 %v7367
      %7959 = vmatpush1.bf16.msra.mxu0 %v7366
      %7960 = vmatprep.subr.bf16.mxu0 %v7375
      %7961 = vmatpush1.bf16.msra.mxu0 %v7374
      %7962 = vmatprep.subr.bf16.mxu0 %v7383
      %7963 = vmatpush1.bf16.msra.mxu0 %v7382
      %7964 = vmatprep.subr.bf16.mxu0 %v7391
      %7965 = vmatpush1.bf16.msra.mxu0 %v7390
      %7966 = vmatprep.subr.bf16.mxu0 %v7399
      %7967 = vmatpush1.bf16.msra.mxu0 %v7398
      %7968 = vmatprep.subr.bf16.mxu0 %v7407
      %7969 = vmatpush1.bf16.msra.mxu0 %v7406
      %7970 = vmatprep.subr.bf16.mxu0 %v7415
      %7971 = vmatpush1.bf16.msra.mxu0 %v7414
      %7972 = vmatprep.subr.bf16.mxu0 %v7423
      %7973 = vmatpush1.bf16.msra.mxu0 %v7422
      %7974 = vmatprep.subr.bf16.mxu0 %v7431
      %7975 = vmatpush1.bf16.msra.mxu0 %v7430
      %7976 = vmatprep.subr.bf16.mxu0 %v7439
      %7977 = vmatpush1.bf16.msra.mxu0 %v7438
      %7978 = vmatprep.subr.bf16.mxu0 %v7447
      %7979 = vmatpush1.bf16.msra.mxu0 %v7446
      %7980 = vmatprep.mubr.bf16.mxu0 %v6102
      %7981 = vmatmul.mubr.bf16.gmra.mrb[0].mxu0 %v6105
      %v7982 = vpop.f32.mrb[0].mxu0
      %v7983 = vadd.f32 %v7942, %v7982
      %v7984 = vpop.f32.mrb[0].mxu0
      %v7985 = vadd.f32 %v7944, %v7984
      %v7986 = vpop.f32.mrb[0].mxu0
      %v7987 = vpop.f32.mrb[0].mxu0
      %7988 = vdwg.mxu0
      %7989 = vmatprep.subr.bf16.mxu0 %v7455
      %7990 = vmatpush1.bf16.msra.mxu0 %v7454
      %7991 = vmatprep.subr.bf16.mxu0 %v7463
      %7992 = vmatpush1.bf16.msra.mxu0 %v7462
      %7993 = vmatprep.subr.bf16.mxu0 0
      %7994 = vmatpush1.bf16.msra.mxu0 0
      %7995 = vmatprep.subr.bf16.mxu0 0
      %7996 = vmatpush1.bf16.msra.mxu0 0
      %7997 = vmatprep.subr.bf16.mxu0 0
      %7998 = vmatpush1.bf16.msra.mxu0 0
      %7999 = vmatprep.subr.bf16.mxu0 0
      %8000 = vmatpush1.bf16.msra.mxu0 0
      %8001 = vmatprep.subr.bf16.mxu0 0
      %8002 = vmatpush1.bf16.msra.mxu0 0
      %8003 = vmatprep.subr.bf16.mxu0 0
      %8004 = vmatpush1.bf16.msra.mxu0 0
      %8005 = vmatprep.subr.bf16.mxu0 0
      %8006 = vmatpush1.bf16.msra.mxu0 0
      %8007 = vmatprep.subr.bf16.mxu0 0
      %8008 = vmatpush1.bf16.msra.mxu0 0
      %8009 = vmatprep.subr.bf16.mxu0 0
      %8010 = vmatpush1.bf16.msra.mxu0 0
      %8011 = vmatprep.subr.bf16.mxu0 0
      %8012 = vmatpush1.bf16.msra.mxu0 0
      %8013 = vmatprep.subr.bf16.mxu0 0
      %8014 = vmatpush1.bf16.msra.mxu0 0
      %8015 = vmatprep.subr.bf16.mxu0 0
      %8016 = vmatpush1.bf16.msra.mxu0 0
      %8017 = vmatprep.subr.bf16.mxu0 0
      %8018 = vmatpush1.bf16.msra.mxu0 0
      %8019 = vmatprep.subr.bf16.mxu0 0
      %8020 = vmatpush1.bf16.msra.mxu0 0
      %8021 = vmatprep.mubr.bf16.mxu0 0
      %8022 = vmatmul.mubr.bf16.gmra.mrb[0].mxu0 %v7782
      %v8023 = vpop.f32.mrb[0].mxu0
      %v8024 = vadd.f32 %v7983, %v8023
      %v8025 = vpop.f32.mrb[0].mxu0
      %v8026 = vadd.f32 %v7985, %v8025
      %v8027 = vpop.f32.mrb[0].mxu0
      %v8028 = vpop.f32.mrb[0].mxu0
      %8029 = vdwg.mxu0
      %8030 = vmatprep.subr.bf16.mxu0 %v7201
      %8031 = vmatpush1.bf16.msra.mxu0 %v7200
      %8032 = vmatprep.subr.bf16.mxu0 %v7209
      %8033 = vmatpush1.bf16.msra.mxu0 %v7208
      %8034 = vmatprep.subr.bf16.mxu0 %v7217
      %8035 = vmatpush1.bf16.msra.mxu0 %v7216
      %8036 = vmatprep.subr.bf16.mxu0 %v7225
      %8037 = vmatpush1.bf16.msra.mxu0 %v7224
      %8038 = vmatprep.subr.bf16.mxu0 %v7233
      %8039 = vmatpush1.bf16.msra.mxu0 %v7232
      %8040 = vmatprep.subr.bf16.mxu0 %v7241
      %8041 = vmatpush1.bf16.msra.mxu0 %v7240
      %8042 = vmatprep.subr.bf16.mxu0 %v7249
      %8043 = vmatpush1.bf16.msra.mxu0 %v7248
      %8044 = vmatprep.subr.bf16.mxu0 %v7257
      %8045 = vmatpush1.bf16.msra.mxu0 %v7256
      %8046 = vmatprep.subr.bf16.mxu0 %v7265
      %8047 = vmatpush1.bf16.msra.mxu0 %v7264
      %8048 = vmatprep.subr.bf16.mxu0 %v7273
      %8049 = vmatpush1.bf16.msra.mxu0 %v7272
      %8050 = vmatprep.subr.bf16.mxu0 %v7281
      %8051 = vmatpush1.bf16.msra.mxu0 %v7280
      %8052 = vmatprep.subr.bf16.mxu0 %v7289
      %8053 = vmatpush1.bf16.msra.mxu0 %v7288
      %8054 = vmatprep.subr.bf16.mxu0 %v7297
      %8055 = vmatpush1.bf16.msra.mxu0 %v7296
      %8056 = vmatprep.subr.bf16.mxu0 %v7305
      %8057 = vmatpush1.bf16.msra.mxu0 %v7304
      %8058 = vmatprep.subr.bf16.mxu0 %v7313
      %8059 = vmatpush1.bf16.msra.mxu0 %v7312
      %8060 = vmatprep.subr.bf16.mxu0 %v7321
      %8061 = vmatpush1.bf16.msra.mxu0 %v7320
      %8062 = vmatprep.mubr.bf16.mxu0 %v6080
      %8063 = vmatmul.mubr.bf16.gmra.mrb[0].mxu0 %v6077
      %v8064 = vpop.f32.mrb[0].mxu0
      %v8065 = vadd.f32 %v7760, %v8064
      %v8066 = vpop.f32.mrb[0].mxu0
      %v8067 = vadd.f32 %v7764, %v8066
      %v8068 = vpop.f32.mrb[0].mxu0
      %v8069 = vpop.f32.mrb[0].mxu0
      %8070 = vdwg.mxu0
      %8071 = vmatprep.subr.bf16.mxu0 %v7329
      %8072 = vmatpush1.bf16.msra.mxu0 %v7328
      %8073 = vmatprep.subr.bf16.mxu0 %v7337
      %8074 = vmatpush1.bf16.msra.mxu0 %v7336
      %8075 = vmatprep.subr.bf16.mxu0 %v7345
      %8076 = vmatpush1.bf16.msra.mxu0 %v7344
      %8077 = vmatprep.subr.bf16.mxu0 %v7353
      %8078 = vmatpush1.bf16.msra.mxu0 %v7352
      %8079 = vmatprep.subr.bf16.mxu0 %v7361
      %8080 = vmatpush1.bf16.msra.mxu0 %v7360
      %8081 = vmatprep.subr.bf16.mxu0 %v7369
      %8082 = vmatpush1.bf16.msra.mxu0 %v7368
      %8083 = vmatprep.subr.bf16.mxu0 %v7377
      %8084 = vmatpush1.bf16.msra.mxu0 %v7376
      %8085 = vmatprep.subr.bf16.mxu0 %v7385
      %8086 = vmatpush1.bf16.msra.mxu0 %v7384
      %8087 = vmatprep.subr.bf16.mxu0 %v7393
      %8088 = vmatpush1.bf16.msra.mxu0 %v7392
      %8089 = vmatprep.subr.bf16.mxu0 %v7401
      %8090 = vmatpush1.bf16.msra.mxu0 %v7400
      %8091 = vmatprep.subr.bf16.mxu0 %v7409
      %8092 = vmatpush1.bf16.msra.mxu0 %v7408
      %8093 = vmatprep.subr.bf16.mxu0 %v7417
      %8094 = vmatpush1.bf16.msra.mxu0 %v7416
      %8095 = vmatprep.subr.bf16.mxu0 %v7425
      %8096 = vmatpush1.bf16.msra.mxu0 %v7424
      %8097 = vmatprep.subr.bf16.mxu0 %v7433
      %8098 = vmatpush1.bf16.msra.mxu0 %v7432
      %8099 = vmatprep.subr.bf16.mxu0 %v7441
      %8100 = vmatpush1.bf16.msra.mxu0 %v7440
      %8101 = vmatprep.subr.bf16.mxu0 %v7449
      %8102 = vmatpush1.bf16.msra.mxu0 %v7448
      %8103 = vmatprep.mubr.bf16.mxu0 %v6102
      %8104 = vmatmul.mubr.bf16.gmra.mrb[0].mxu0 %v6105
      %v8105 = vpop.f32.mrb[0].mxu0
      %v8106 = vadd.f32 %v8065, %v8105
      %v8107 = vpop.f32.mrb[0].mxu0
      %v8108 = vadd.f32 %v8067, %v8107
      %v8109 = vpop.f32.mrb[0].mxu0
      %v8110 = vpop.f32.mrb[0].mxu0
      %8111 = vdwg.mxu0
      %8112 = vmatprep.subr.bf16.mxu0 %v7457
      %8113 = vmatpush1.bf16.msra.mxu0 %v7456
      %8114 = vmatprep.subr.bf16.mxu0 %v7465
      %8115 = vmatpush1.bf16.msra.mxu0 %v7464
      %8116 = vmatprep.subr.bf16.mxu0 0
      %8117 = vmatpush1.bf16.msra.mxu0 0
      %8118 = vmatprep.subr.bf16.mxu0 0
      %8119 = vmatpush1.bf16.msra.mxu0 0
      %8120 = vmatprep.subr.bf16.mxu0 0
      %8121 = vmatpush1.bf16.msra.mxu0 0
      %8122 = vmatprep.subr.bf16.mxu0 0
      %8123 = vmatpush1.bf16.msra.mxu0 0
      %8124 = vmatprep.subr.bf16.mxu0 0
      %8125 = vmatpush1.bf16.msra.mxu0 0
      %8126 = vmatprep.subr.bf16.mxu0 0
      %8127 = vmatpush1.bf16.msra.mxu0 0
      %8128 = vmatprep.subr.bf16.mxu0 0
      %8129 = vmatpush1.bf16.msra.mxu0 0
      %8130 = vmatprep.subr.bf16.mxu0 0
      %8131 = vmatpush1.bf16.msra.mxu0 0
      %8132 = vmatprep.subr.bf16.mxu0 0
      %8133 = vmatpush1.bf16.msra.mxu0 0
      %8134 = vmatprep.subr.bf16.mxu0 0
      %8135 = vmatpush1.bf16.msra.mxu0 0
      %8136 = vmatprep.subr.bf16.mxu0 0
      %8137 = vmatpush1.bf16.msra.mxu0 0
      %8138 = vmatprep.subr.bf16.mxu0 0
      %8139 = vmatpush1.bf16.msra.mxu0 0
      %8140 = vmatprep.subr.bf16.mxu0 0
      %8141 = vmatpush1.bf16.msra.mxu0 0
      %8142 = vmatprep.subr.bf16.mxu0 0
      %8143 = vmatpush1.bf16.msra.mxu0 0
      %8144 = vmatprep.mubr.bf16.mxu0 0
      %8145 = vmatmul.mubr.bf16.gmra.mrb[0].mxu0 %v7782
      %v8146 = vpop.f32.mrb[0].mxu0
      %v8147 = vadd.f32 %v8106, %v8146
      %v8148 = vpop.f32.mrb[0].mxu0
      %v8149 = vadd.f32 %v8108, %v8148
      %v8150 = vpop.f32.mrb[0].mxu0
      %v8151 = vpop.f32.mrb[0].mxu0
      %8152 = vdwg.mxu0
      %8153 = vmatprep.subr.bf16.mxu0 %v7203
      %8154 = vmatpush1.bf16.msra.mxu0 %v7202
      %8155 = vmatprep.subr.bf16.mxu0 %v7211
      %8156 = vmatpush1.bf16.msra.mxu0 %v7210
      %8157 = vmatprep.subr.bf16.mxu0 %v7219
      %8158 = vmatpush1.bf16.msra.mxu0 %v7218
      %8159 = vmatprep.subr.bf16.mxu0 %v7227
      %8160 = vmatpush1.bf16.msra.mxu0 %v7226
      %8161 = vmatprep.subr.bf16.mxu0 %v7235
      %8162 = vmatpush1.bf16.msra.mxu0 %v7234
      %8163 = vmatprep.subr.bf16.mxu0 %v7243
      %8164 = vmatpush1.bf16.msra.mxu0 %v7242
      %8165 = vmatprep.subr.bf16.mxu0 %v7251
      %8166 = vmatpush1.bf16.msra.mxu0 %v7250
      %8167 = vmatprep.subr.bf16.mxu0 %v7259
      %8168 = vmatpush1.bf16.msra.mxu0 %v7258
      %8169 = vmatprep.subr.bf16.mxu0 %v7267
      %8170 = vmatpush1.bf16.msra.mxu0 %v7266
      %8171 = vmatprep.subr.bf16.mxu0 %v7275
      %8172 = vmatpush1.bf16.msra.mxu0 %v7274
      %8173 = vmatprep.subr.bf16.mxu0 %v7283
      %8174 = vmatpush1.bf16.msra.mxu0 %v7282
      %8175 = vmatprep.subr.bf16.mxu0 %v7291
      %8176 = vmatpush1.bf16.msra.mxu0 %v7290
      %8177 = vmatprep.subr.bf16.mxu0 %v7299
      %8178 = vmatpush1.bf16.msra.mxu0 %v7298
      %8179 = vmatprep.subr.bf16.mxu0 %v7307
      %8180 = vmatpush1.bf16.msra.mxu0 %v7306
      %8181 = vmatprep.subr.bf16.mxu0 %v7315
      %8182 = vmatpush1.bf16.msra.mxu0 %v7314
      %8183 = vmatprep.subr.bf16.mxu0 %v7323
      %8184 = vmatpush1.bf16.msra.mxu0 %v7322
      %8185 = vmatprep.mubr.bf16.mxu0 %v6080
      %8186 = vmatmul.mubr.bf16.gmra.mrb[0].mxu0 %v6077
      %v8187 = vpop.f32.mrb[0].mxu0
      %v8188 = vadd.f32 %v7768, %v8187
      %v8189 = vpop.f32.mrb[0].mxu0
      %v8190 = vadd.f32 %v7772, %v8189
      %v8191 = vpop.f32.mrb[0].mxu0
      %v8192 = vpop.f32.mrb[0].mxu0
      %8193 = vdwg.mxu0
      %8194 = vmatprep.subr.bf16.mxu0 %v7331
      %8195 = vmatpush1.bf16.msra.mxu0 %v7330
      %8196 = vmatprep.subr.bf16.mxu0 %v7339
      %8197 = vmatpush1.bf16.msra.mxu0 %v7338
      %8198 = vmatprep.subr.bf16.mxu0 %v7347
      %8199 = vmatpush1.bf16.msra.mxu0 %v7346
      %8200 = vmatprep.subr.bf16.mxu0 %v7355
      %8201 = vmatpush1.bf16.msra.mxu0 %v7354
      %8202 = vmatprep.subr.bf16.mxu0 %v7363
      %8203 = vmatpush1.bf16.msra.mxu0 %v7362
      %8204 = vmatprep.subr.bf16.mxu0 %v7371
      %8205 = vmatpush1.bf16.msra.mxu0 %v7370
      %8206 = vmatprep.subr.bf16.mxu0 %v7379
      %8207 = vmatpush1.bf16.msra.mxu0 %v7378
      %8208 = vmatprep.subr.bf16.mxu0 %v7387
      %8209 = vmatpush1.bf16.msra.mxu0 %v7386
      %8210 = vmatprep.subr.bf16.mxu0 %v7395
      %8211 = vmatpush1.bf16.msra.mxu0 %v7394
      %8212 = vmatprep.subr.bf16.mxu0 %v7403
      %8213 = vmatpush1.bf16.msra.mxu0 %v7402
      %8214 = vmatprep.subr.bf16.mxu0 %v7411
      %8215 = vmatpush1.bf16.msra.mxu0 %v7410
      %8216 = vmatprep.subr.bf16.mxu0 %v7419
      %8217 = vmatpush1.bf16.msra.mxu0 %v7418
      %8218 = vmatprep.subr.bf16.mxu0 %v7427
      %8219 = vmatpush1.bf16.msra.mxu0 %v7426
      %8220 = vmatprep.subr.bf16.mxu0 %v7435
      %8221 = vmatpush1.bf16.msra.mxu0 %v7434
      %8222 = vmatprep.subr.bf16.mxu0 %v7443
      %8223 = vmatpush1.bf16.msra.mxu0 %v7442
      %8224 = vmatprep.subr.bf16.mxu0 %v7451
      %8225 = vmatpush1.bf16.msra.mxu0 %v7450
      %8226 = vmatprep.mubr.bf16.mxu0 %v6102
      %8227 = vmatmul.mubr.bf16.gmra.mrb[0].mxu0 %v6105
      %v8228 = vpop.f32.mrb[0].mxu0
      %v8229 = vadd.f32 %v8188, %v8228
      %v8230 = vpop.f32.mrb[0].mxu0
      %v8231 = vadd.f32 %v8190, %v8230
      %v8232 = vpop.f32.mrb[0].mxu0
      %v8233 = vpop.f32.mrb[0].mxu0
      %8234 = vdwg.mxu0
      %8235 = vmatprep.subr.bf16.mxu0 %v7459
      %8236 = vmatpush1.bf16.msra.mxu0 %v7458
      %8237 = vmatprep.subr.bf16.mxu0 %v7467
      %8238 = vmatpush1.bf16.msra.mxu0 %v7466
      %8239 = vmatprep.subr.bf16.mxu0 0
      %8240 = vmatpush1.bf16.msra.mxu0 0
      %8241 = vmatprep.subr.bf16.mxu0 0
      %8242 = vmatpush1.bf16.msra.mxu0 0
      %8243 = vmatprep.subr.bf16.mxu0 0
      %8244 = vmatpush1.bf16.msra.mxu0 0
      %8245 = vmatprep.subr.bf16.mxu0 0
      %8246 = vmatpush1.bf16.msra.mxu0 0
      %8247 = vmatprep.subr.bf16.mxu0 0
      %8248 = vmatpush1.bf16.msra.mxu0 0
      %8249 = vmatprep.subr.bf16.mxu0 0
      %8250 = vmatpush1.bf16.msra.mxu0 0
      %8251 = vmatprep.subr.bf16.mxu0 0
      %8252 = vmatpush1.bf16.msra.mxu0 0
      %8253 = vmatprep.subr.bf16.mxu0 0
      %8254 = vmatpush1.bf16.msra.mxu0 0
      %8255 = vmatprep.subr.bf16.mxu0 0
      %8256 = vmatpush1.bf16.msra.mxu0 0
      %8257 = vmatprep.subr.bf16.mxu0 0
      %8258 = vmatpush1.bf16.msra.mxu0 0
      %8259 = vmatprep.subr.bf16.mxu0 0
      %8260 = vmatpush1.bf16.msra.mxu0 0
      %8261 = vmatprep.subr.bf16.mxu0 0
      %8262 = vmatpush1.bf16.msra.mxu0 0
      %8263 = vmatprep.subr.bf16.mxu0 0
      %8264 = vmatpush1.bf16.msra.mxu0 0
      %8265 = vmatprep.subr.bf16.mxu0 0
      %8266 = vmatpush1.bf16.msra.mxu0 0
      %8267 = vmatprep.mubr.bf16.mxu0 0
      %8268 = vmatmul.mubr.bf16.gmra.mrb[0].mxu0 %v7782
      %v8269 = vpop.f32.mrb[0].mxu0
      %v8270 = vadd.f32 %v8229, %v8269
      %v8271 = vpop.f32.mrb[0].mxu0
      %v8272 = vadd.f32 %v8231, %v8271
      %v8273 = vpop.f32.mrb[0].mxu0
      %v8274 = vpop.f32.mrb[0].mxu0
      %8275 = vdwg.mxu0
      %v8276 = vxor.u32 %v7901, 2147483648
      %v8277 = vxor.u32 %v7903, 2147483648
      %v8278 = vmul.f32 %v8276, 1.442695
      %v8279 = vpow.pop %v8278
      %v8280 = vmul.f32 %v8277, 1.442695
      %v8281 = vpow.pop %v8280
      %v8282 = vadd.f32 %v8279, 1.0
      %v8283 = vadd.f32 %v8281, 1.0
      %v8284 = vrcp.pop %v8282
      %v8285 = vmul.f32 1.0, %v8284
      %v8286 = vrcp.pop %v8283
      %v8287 = vmul.f32 1.0, %v8286
      %v8288 = vxor.u32 %v8024, 2147483648
      %v8289 = vxor.u32 %v8026, 2147483648
      %v8290 = vmul.f32 %v8288, 1.442695
      %v8291 = vpow.pop %v8290
      %v8292 = vmul.f32 %v8289, 1.442695
      %v8293 = vpow.pop %v8292
      %v8294 = vadd.f32 %v8291, 1.0
      %v8295 = vadd.f32 %v8293, 1.0
      %v8296 = vrcp.pop %v8294
      %v8297 = vmul.f32 1.0, %v8296
      %v8298 = vrcp.pop %v8295
      %v8299 = vmul.f32 1.0, %v8298
      %v8300 = vtanh.pop %v8147
      %v8301 = vtanh.pop %v8149
      %v8302 = vxor.u32 %v8270, 2147483648
      %v8303 = vxor.u32 %v8272, 2147483648
      %v8304 = vmul.f32 %v8302, 1.442695
      %v8305 = vpow.pop %v8304
      %v8306 = vmul.f32 %v8303, 1.442695
      %v8307 = vpow.pop %v8306
      %v8308 = vadd.f32 %v8305, 1.0
      %v8309 = vadd.f32 %v8307, 1.0
      %v8310 = vrcp.pop %v8308
      %v8311 = vmul.f32 1.0, %v8310
      %v8312 = vrcp.pop %v8309
      %v8313 = vmul.f32 1.0, %v8312
      %v8314 = vld [vmem:[%s998] sm:$0x3]
      %v8316 = vlaneseq
      %v8317 = vshrl.u32 %v8316, 7
      %v8318 = vsub.s32 0, %v8317
      %v8319 = vrot.slane %v8314, %v8318
      %v8320 = vlaneseq
      %v8321 = vshrl.u32 %v8320, 7
      %v8322 = vsub.s32 1, %v8321
      %v8323 = vrot.slane %v8314, %v8322
      %v8326 = vmul.f32 %v8297, %v8319
      %v8327 = vmul.f32 %v8299, %v8323
      %v8328 = vmul.f32 %v8285, %v8300
      %v8329 = vmul.f32 %v8287, %v8301
      %v8330 = vadd.f32 %v8326, %v8328
      %v8331 = vadd.f32 %v8327, %v8329
      %v8332 = vtanh.pop %v8330
      %v8333 = vtanh.pop %v8331
      %v8334 = vmul.f32 %v8311, %v8332
      %v8335 = vmul.f32 %v8313, %v8333
      %v8338 = vcombine.low %v8330, %v8331
      %v8340 = vunpack.c.l.s4 1966171168
      %v8341 = vunpack.c.0.s8 %v8340
      %v8342 = vlaneseq
      %v8343 = vshrl.u32 %v8342, 7
      %v8344 = vsub.s32 %v8341, %v8343
      %v8345 = vrot.slane %v8338, %v8344
      %v8347 = vunpack.c.l.s4 1966171168
      %v8348 = vunpack.c.0.s8 %v8347
      %v8349 = vlaneseq
      %v8350 = vshrl.u32 %v8349, 7
      %v8351 = vsub.s32 %v8348, %v8350
      %v8352 = vrot.slane %v8345, %v8351
      %v8354 = vlaneseq
      %vm8355 = vcmp.ge.s32.totalorder %v8354, 0
      %vm8356 = vcmp.lt.s32.totalorder %v8354, 256
      %vm8357 = vmand %vm8355, %vm8356
      %8358 = vst.msk [vmem:[%s1009] sm:$0x3] %vm8357, %v8352
      %v8361 = vcombine.low %v8334, %v8335
      %v8363 = vunpack.c.l.s4 1966171168
      %v8364 = vunpack.c.0.s8 %v8363
      %v8365 = vlaneseq
      %v8366 = vshrl.u32 %v8365, 7
      %v8367 = vsub.s32 %v8364, %v8366
      %v8368 = vrot.slane %v8361, %v8367
      %v8370 = vunpack.c.l.s4 1966171168
      %v8371 = vunpack.c.0.s8 %v8370
      %v8372 = vlaneseq
      %v8373 = vshrl.u32 %v8372, 7
      %v8374 = vsub.s32 %v8371, %v8373
      %v8375 = vrot.slane %v8368, %v8374
      %8377 = vst.msk [vmem:[%s1005] sm:$0x3] %vm8357, %v8375
      %v8378 = vpack.c.bf16 %v8334, %v8334
      %v8379 = vpack.c.bf16 %v8335, %v8335
      %v8380 = vld [vmem:[%s55] sm:$0xf]
      %v8381 = vld [vmem:[%s55 + $0x4] sm:$0xf]
      %v8382 = vld [vmem:[%s55 + $0x8] sm:$0xf]
      %v8383 = vld [vmem:[%s55 + $0xc] sm:$0xf]
      %v8384 = vld [vmem:[%s55 + $0x10] sm:$0xf]
      %v8385 = vld [vmem:[%s55 + $0x14] sm:$0xf]
      %v8386 = vld [vmem:[%s55 + $0x18] sm:$0xf]
      %v8387 = vld [vmem:[%s55 + $0x1c] sm:$0xf]
      %v8388 = vld [vmem:[%s55 + $0x20] sm:$0xf]
      %v8389 = vld [vmem:[%s55 + $0x24] sm:$0xf]
      %v8390 = vld [vmem:[%s55 + $0x28] sm:$0xf]
      %v8391 = vld [vmem:[%s55 + $0x2c] sm:$0xf]
      %v8392 = vld [vmem:[%s55 + $0x30] sm:$0xf]
      %v8393 = vld [vmem:[%s55 + $0x34] sm:$0xf]
      %v8394 = vld [vmem:[%s55 + $0x38] sm:$0xf]
      %v8395 = vld [vmem:[%s55 + $0x3c] sm:$0xf]
      %v8396 = vld [vmem:[%s55 + $0x40] sm:$0xf]
      %v8397 = vld [vmem:[%s55 + $0x44] sm:$0xf]
      %v8398 = vld [vmem:[%s55 + $0x48] sm:$0xf]
      %v8399 = vld [vmem:[%s55 + $0x4c] sm:$0xf]
      %v8400 = vld [vmem:[%s55 + $0x50] sm:$0xf]
      %v8401 = vld [vmem:[%s55 + $0x54] sm:$0xf]
      %v8402 = vld [vmem:[%s55 + $0x58] sm:$0xf]
      %v8403 = vld [vmem:[%s55 + $0x5c] sm:$0xf]
      %v8404 = vld [vmem:[%s55 + $0x60] sm:$0xf]
      %v8405 = vld [vmem:[%s55 + $0x64] sm:$0xf]
      %v8406 = vld [vmem:[%s55 + $0x68] sm:$0xf]
      %v8407 = vld [vmem:[%s55 + $0x6c] sm:$0xf]
      %v8408 = vld [vmem:[%s55 + $0x70] sm:$0xf]
      %v8409 = vld [vmem:[%s55 + $0x74] sm:$0xf]
      %v8410 = vld [vmem:[%s55 + $0x78] sm:$0xf]
      %v8411 = vld [vmem:[%s55 + $0x7c] sm:$0xf]
      %v8412 = vld [vmem:[%s57] sm:$0x1]
      %v8445 = vunpack.c.l.b16 %v8380
      %v8446 = vunpack.c.l.b16 %v8381
      %v8447 = vunpack.c.l.b16 %v8382
      %v8448 = vunpack.c.l.b16 %v8383
      %v8449 = vunpack.c.l.b16 %v8384
      %v8450 = vunpack.c.l.b16 %v8385
      %v8451 = vunpack.c.l.b16 %v8386
      %v8452 = vunpack.c.l.b16 %v8387
      %v8453 = vunpack.c.l.b16 %v8388
      %v8454 = vunpack.c.l.b16 %v8389
      %v8455 = vunpack.c.l.b16 %v8390
      %v8456 = vunpack.c.l.b16 %v8391
      %v8457 = vunpack.c.l.b16 %v8392
      %v8458 = vunpack.c.l.b16 %v8393
      %v8459 = vunpack.c.l.b16 %v8394
      %v8460 = vunpack.c.l.b16 %v8395
      %v8461 = vunpack.c.l.b16 %v8396
      %v8462 = vunpack.c.l.b16 %v8397
      %v8463 = vunpack.c.l.b16 %v8398
      %v8464 = vunpack.c.l.b16 %v8399
      %v8465 = vunpack.c.l.b16 %v8400
      %v8466 = vunpack.c.l.b16 %v8401
      %v8467 = vunpack.c.l.b16 %v8402
      %v8468 = vunpack.c.l.b16 %v8403
      %v8469 = vunpack.c.l.b16 %v8404
      %v8470 = vunpack.c.l.b16 %v8405
      %v8471 = vunpack.c.l.b16 %v8406
      %v8472 = vunpack.c.l.b16 %v8407
      %v8473 = vunpack.c.l.b16 %v8408
      %v8474 = vunpack.c.l.b16 %v8409
      %v8475 = vunpack.c.l.b16 %v8410
      %v8476 = vunpack.c.l.b16 %v8411
      %v8477 = vpack.c.b16 %v8446, %v8445
      %v8478 = vpack.c.b16 %v8448, %v8447
      %v8479 = vpack.c.b16 %v8450, %v8449
      %v8480 = vpack.c.b16 %v8452, %v8451
      %v8481 = vpack.c.b16 %v8454, %v8453
      %v8482 = vpack.c.b16 %v8456, %v8455
      %v8483 = vpack.c.b16 %v8458, %v8457
      %v8484 = vpack.c.b16 %v8460, %v8459
      %v8485 = vpack.c.b16 %v8462, %v8461
      %v8486 = vpack.c.b16 %v8464, %v8463
      %v8487 = vpack.c.b16 %v8466, %v8465
      %v8488 = vpack.c.b16 %v8468, %v8467
      %v8489 = vpack.c.b16 %v8470, %v8469
      %v8490 = vpack.c.b16 %v8472, %v8471
      %v8491 = vpack.c.b16 %v8474, %v8473
      %v8492 = vpack.c.b16 %v8476, %v8475
      %8509 = vmatprep.subr.bf16.mxu0 0
      %8510 = vmatpush1.bf16.msra.mxu0 %v8477
      %8511 = vmatprep.subr.bf16.mxu0 0
      %8512 = vmatpush1.bf16.msra.mxu0 %v8478
      %8513 = vmatprep.subr.bf16.mxu0 0
      %8514 = vmatpush1.bf16.msra.mxu0 %v8479
      %8515 = vmatprep.subr.bf16.mxu0 0
      %8516 = vmatpush1.bf16.msra.mxu0 %v8480
      %8517 = vmatprep.subr.bf16.mxu0 0
      %8518 = vmatpush1.bf16.msra.mxu0 %v8481
      %8519 = vmatprep.subr.bf16.mxu0 0
      %8520 = vmatpush1.bf16.msra.mxu0 %v8482
      %8521 = vmatprep.subr.bf16.mxu0 0
      %8522 = vmatpush1.bf16.msra.mxu0 %v8483
      %8523 = vmatprep.subr.bf16.mxu0 0
      %8524 = vmatpush1.bf16.msra.mxu0 %v8484
      %8525 = vmatprep.subr.bf16.mxu0 0
      %8526 = vmatpush1.bf16.msra.mxu0 %v8485
      %8527 = vmatprep.subr.bf16.mxu0 0
      %8528 = vmatpush1.bf16.msra.mxu0 %v8486
      %8529 = vmatprep.subr.bf16.mxu0 0
      %8530 = vmatpush1.bf16.msra.mxu0 %v8487
      %8531 = vmatprep.subr.bf16.mxu0 0
      %8532 = vmatpush1.bf16.msra.mxu0 %v8488
      %8533 = vmatprep.subr.bf16.mxu0 0
      %8534 = vmatpush1.bf16.msra.mxu0 %v8489
      %8535 = vmatprep.subr.bf16.mxu0 0
      %8536 = vmatpush1.bf16.msra.mxu0 %v8490
      %8537 = vmatprep.subr.bf16.mxu0 0
      %8538 = vmatpush1.bf16.msra.mxu0 %v8491
      %8539 = vmatprep.subr.bf16.mxu0 0
      %8540 = vmatpush1.bf16.msra.mxu0 %v8492
      %8541 = vmatprep.mubr.bf16.mxu0 %v8379
      %8542 = vmatmul.mubr.bf16.gmra.mrb[0].mxu0 %v8378
      %v8543 = vpop.f32.mrb[0].mxu0
      %v8544 = vadd.f32 %v8412, %v8543
      %v8545 = vpop.f32.mrb[0].mxu0
      %v8546 = vpop.f32.mrb[0].mxu0
      %v8547 = vpop.f32.mrb[0].mxu0
      %8548 = vdwg.mxu0
      %8549 = vst [vmem:[%s1001] sm:$0x1] %v8544
      %p8550 = scmp.lt.s32.totalorder %s75, 1
      %s8551 = scalar_select %p8550, %s75, 1
      %s8552 = scalar_lea.vmem %s59, %s8551
      %p8553 = scmp.lt.s32.totalorder %s75, 1
      %s8554 = scalar_select %p8553, %s75, 1
      %s8555 = smul.addr %s8554, 2
      %s8556 = scalar_lea.vmem %s61, %s8555
      %p8557 = scmp.lt.s32.totalorder %s75, 1
      %s8558 = scalar_select %p8557, %s75, 1
      %s8559 = smul.addr %s8558, 2
      %s8560 = scalar_lea.vmem %s63, %s8559
      // Predicated region
      $region137: #{actor_critic_forward.1} parent=135 // pred_check
        %p8561 = pneg %p717
      $region138: #{actor_critic_forward.1} parent=135 // pred_check_branch
        %8563 = sbr.rel (%p8561) target = $region140
      $region139: #{actor_critic_forward.1} parent=135 // pred_region
        _
      $region140: #{actor_critic_forward.1} parent=135 // pred_fallthru
        _
      // Predicated region
      $region141: #{actor_critic_forward.1} parent=135 // pred_check
        %p8564 = pneg %p743
      $region142: #{actor_critic_forward.1} parent=135 // pred_check_branch
        %8566 = sbr.rel (%p8564) target = $region144
      $region143: #{actor_critic_forward.1} parent=135 // pred_region
        _
      $region144: #{actor_critic_forward.1} parent=135 // pred_fallthru
        _
      // Predicated region
      $region145: #{actor_critic_forward.1} parent=135 // pred_check
        %p8567 = pneg %p769
      $region146: #{actor_critic_forward.1} parent=135 // pred_check_branch
        %8569 = sbr.rel (%p8567) target = $region148
      $region147: #{actor_critic_forward.1} parent=135 // pred_region
        _
      $region148: #{actor_critic_forward.1} parent=135 // pred_fallthru
        _
    $region136: #{actor_critic_forward.1} parent=5 // pred_fallthru
      _
    %p8570 = scmp.le.s32.totalorder 2, %s70
    // Predicated region
    $region149: #{actor_critic_forward.1} parent=5 // pred_check
      %p8571 = pneg %p8570
    $region150: #{actor_critic_forward.1} parent=5 // pred_check_branch
      %8573 = sbr.rel (%p8571) target = $region152
    $region151: #{actor_critic_forward.1} parent=5 // pred_region
      %s8574 = ssub.s32 %s70, 2
      // Predicated region
      $region153: #{actor_critic_forward.1} parent=151 // pred_check
        %p8575 = pneg %p723
      $region154: #{actor_critic_forward.1} parent=151 // pred_check_branch
        %8577 = sbr.rel (%p8575) target = $region156
      $region155: #{actor_critic_forward.1} parent=151 // pred_region
        %p8578 = scmp.lt.s32.totalorder %s76, 1
        %s8579 = scalar_select %p8578, %s76, 1
        %s8580 = scalar_lea.vmem %s59, %s8579
      $region156: #{actor_critic_forward.1} parent=151 // pred_fallthru
        _
      // Predicated region
      $region157: #{actor_critic_forward.1} parent=151 // pred_check
        %p8581 = pneg %p749
      $region158: #{actor_critic_forward.1} parent=151 // pred_check_branch
        %8583 = sbr.rel (%p8581) target = $region160
      $region159: #{actor_critic_forward.1} parent=151 // pred_region
        %p8584 = scmp.lt.s32.totalorder %s76, 1
        %s8585 = scalar_select %p8584, %s76, 1
        %s8586 = smul.addr %s8585, 2
        %s8587 = scalar_lea.vmem %s61, %s8586
      $region160: #{actor_critic_forward.1} parent=151 // pred_fallthru
        _
      // Predicated region
      $region161: #{actor_critic_forward.1} parent=151 // pred_check
        %p8588 = pneg %p775
      $region162: #{actor_critic_forward.1} parent=151 // pred_check_branch
        %8590 = sbr.rel (%p8588) target = $region164
      $region163: #{actor_critic_forward.1} parent=151 // pred_region
        %p8591 = scmp.lt.s32.totalorder %s76, 1
        %s8592 = scalar_select %p8591, %s76, 1
        %s8593 = smul.addr %s8592, 2
        %s8594 = scalar_lea.vmem %s63, %s8593
      $region164: #{actor_critic_forward.1} parent=151 // pred_fallthru
        _
    $region152: #{actor_critic_forward.1} parent=5 // pred_fallthru
      _
  $region6: #{actor_critic_forward.1} parent=0 // loop_footer
    %s74 = sadd.s32 1, %s70
  $region7: #{actor_critic_forward.1} parent=0 // loop_footer_branch
    %69 = sbr.rel target = $region3
  $region8: #{actor_critic_forward.1} parent=0 // loop_exit
    _

</llo_original>
